<compile_context>
chip_gen: v6e
topology: v6e:2x2x1
jax: 0.10.0
libtpu: 0.0.40
codegen_flags: <defaults>
</compile_context>

<pallas_src>
import functools

import jax
import jax.numpy as jnp
from jax.experimental import pallas as pl
from jax.experimental.pallas import tpu as pltpu

EPS = 1e-5


def round_up(x, m):
    return ((x + m - 1) // m) * m


def pick_tk(kp):
    for tk in (512, 256, 128):
        if kp % tk == 0:
            return tk
    return 128


def pick_tn(np_, m_tiles):
    # Prefer wide (512/256) N tiles for full MXU lane utilization, but keep at
    # least 2 parallel grid tiles when possible so v7x's two TensorCores both
    # get work.
    for tn in (512, 256, 128):
        if np_ % tn == 0 and m_tiles * (np_ // tn) >= 2:
            return tn
    return 128


# ---------------------------------------------------------------------------
# Fused matmul kernels:  out = act(X @ W + bias [+ residual])
# (BN scale is pre-folded into W, so there is no scale stream.)
# ---------------------------------------------------------------------------
def _mm_kernel(x_ref, w_ref, b_ref, o_ref, acc_ref, *, relu):
    @pl.when(pl.program_id(2) == 0)
    def _():
        acc_ref[...] = jnp.zeros_like(acc_ref)

    acc_ref[...] += jnp.dot(x_ref[...], w_ref[...],
                            preferred_element_type=jnp.float32)

    @pl.when(pl.program_id(2) == pl.num_programs(2) - 1)
    def _():
        out = acc_ref[...] + b_ref[...]
        if relu:
            out = jnp.maximum(out, 0.0)
        o_ref[...] = out.astype(o_ref.dtype)


def _mm_res_kernel(x_ref, w_ref, b_ref, r_ref, o_ref, acc_ref, *, relu):
    @pl.when(pl.program_id(2) == 0)
    def _():
        acc_ref[...] = jnp.zeros_like(acc_ref)

    acc_ref[...] += jnp.dot(x_ref[...], w_ref[...],
                            preferred_element_type=jnp.float32)

    @pl.when(pl.program_id(2) == pl.num_programs(2) - 1)
    def _():
        out = acc_ref[...] + b_ref[...] + r_ref[...].astype(jnp.float32)
        if relu:
            out = jnp.maximum(out, 0.0)
        o_ref[...] = out.astype(o_ref.dtype)


def fused_matmul(x, w_pad, b_pad, n_valid, residual=None, relu=True,
                 out_dtype=jnp.bfloat16):
    """x: (M, K) bf16; w_pad: (Kp, Np) bf16 (scale folded); b_pad: (1, Np) f32.

    Returns (M, n_valid) in out_dtype.
    """
    M, K = x.shape
    Kp, Np = w_pad.shape

    Mp = round_up(M, 8) if M <= 128 else round_up(M, 128)
    TM = min(Mp, 128)
    TK = pick_tk(Kp)
    TN = pick_tn(Np, Mp // TM)

    xp = jnp.pad(x.astype(jnp.bfloat16), ((0, Mp - M), (0, Kp - K)))
    grid = (Mp // TM, Np // TN, Kp // TK)

    if residual is None:
        kernel = functools.partial(_mm_kernel, relu=relu)
        in_specs = [
            pl.BlockSpec((TM, TK), lambda i, j, k: (i, k)),
            pl.BlockSpec((TK, TN), lambda i, j, k: (k, j)),
            pl.BlockSpec((1, TN), lambda i, j, k: (0, j)),
        ]
        args = (xp, w_pad, b_pad)
    else:
        rp = jnp.pad(residual.astype(jnp.bfloat16),
                     ((0, Mp - M), (0, Np - residual.shape[1])))
        kernel = functools.partial(_mm_res_kernel, relu=relu)
        in_specs = [
            pl.BlockSpec((TM, TK), lambda i, j, k: (i, k)),
            pl.BlockSpec((TK, TN), lambda i, j, k: (k, j)),
            pl.BlockSpec((1, TN), lambda i, j, k: (0, j)),
            pl.BlockSpec((TM, TN), lambda i, j, k: (i, j)),
        ]
        args = (xp, w_pad, b_pad, rp)

    out = pl.pallas_call(
        kernel,
        out_shape=jax.ShapeDtypeStruct((Mp, Np), out_dtype),
        grid_spec=pltpu.PrefetchScalarGridSpec(
            num_scalar_prefetch=0,
            grid=grid,
            in_specs=in_specs,
            out_specs=pl.BlockSpec((TM, TN), lambda i, j, k: (i, j)),
            scratch_shapes=[pltpu.VMEM((TM, TN), jnp.float32)],
        ),
        compiler_params=pltpu.CompilerParams(
            dimension_semantics=("parallel", "parallel", "arbitrary")),
    )(*args)
    return out[:M, :n_valid]


# ---------------------------------------------------------------------------
# 3x3 conv kernel: in-kernel accumulation of the 9 shifted-window matmuls.
# The padded activation is parity-decomposed in the wrapper so every in-kernel
# slice is static and unit-stride; no 9x im2col blowup is written to HBM.
# ---------------------------------------------------------------------------
def _conv3x3_kernel(x_ref, w_ref, b_ref, o_ref, acc_ref, *,
                    stride, nb, ho, wo, relu):
    # x_ref: (s*s*nb, Hd, Wd, Cp) parity-decomposed padded activation
    # w_ref: (9, Cp, TN) scale-folded weights for this N tile
    s = stride
    cp = x_ref.shape[3]
    acc_ref[...] = jnp.zeros_like(acc_ref)
    for k in range(9):                       # statically unrolled window loop
        ki, kj = k // 3, k % 3
        pidx = (ki % s) * s + (kj % s)       # parity class (static)
        oi, oj = ki // s, kj // s            # offset inside parity class
        slab = x_ref[pidx * nb:(pidx + 1) * nb, oi:oi + ho, oj:oj + wo, :]
        slab = slab.reshape(nb * ho * wo, cp)
        acc_ref[...] += jnp.dot(slab, w_ref[k],
                                preferred_element_type=jnp.float32)
    out = acc_ref[...] + b_ref[...]
    if relu:
        out = jnp.maximum(out, 0.0)
    o_ref[...] = out.astype(o_ref.dtype)


def conv3x3_fused(x, w9_pad, b_pad, cout, stride, relu=True,
                  out_dtype=jnp.bfloat16):
    """x: (N, H, W, C) bf16; w9_pad: (9, Cp, Np) bf16; b_pad: (1, Np) f32."""
    n, H, W, C = x.shape
    _, Cp, Np = w9_pad.shape
    s = stride
    pad = 1
    Ho = (H + 2 * pad - 3) // s + 1
    Wo = (W + 2 * pad - 3) // s + 1
    Hp, Wp = H + 2 * pad, W + 2 * pad
    Hd, Wd = -(-Hp // s), -(-Wp // s)

    xpad = jnp.pad(x.astype(jnp.bfloat16),
                   ((0, 0), (pad, pad), (pad, pad), (0, Cp - C)))
    parts = []
    for ph in range(s):
        for pw in range(s):
            sub = xpad[:, ph::s, pw::s, :]
            sub = jnp.pad(sub, ((0, 0), (0, Hd - sub.shape[1]),
                                (0, Wd - sub.shape[2]), (0, 0)))
            parts.append(sub)
    xstack = jnp.concatenate(parts, axis=0)          # (s*s*N, Hd, Wd, Cp)

    M = n * Ho * Wo
    TN = pick_tn(Np, 1)
    grid = (Np // TN,)

    kernel = functools.partial(_conv3x3_kernel, stride=s, nb=n,
                               ho=Ho, wo=Wo, relu=relu)
    out = pl.pallas_call(
        kernel,
        out_shape=jax.ShapeDtypeStruct((M, Np), out_dtype),
        grid_spec=pltpu.PrefetchScalarGridSpec(
            num_scalar_prefetch=0,
            grid=grid,
            in_specs=[
                pl.BlockSpec((s * s * n, Hd, Wd, Cp),
                             lambda j: (0, 0, 0, 0)),
                pl.BlockSpec((9, Cp, TN), lambda j: (0, 0, j)),
                pl.BlockSpec((1, TN), lambda j: (0, j)),
            ],
            out_specs=pl.BlockSpec((M, TN), lambda j: (0, j)),
            scratch_shapes=[pltpu.VMEM((M, TN), jnp.float32)],
        ),
        compiler_params=pltpu.CompilerParams(
            dimension_semantics=("parallel",)),
    )(xstack, w9_pad, b_pad)
    return out[:, :cout].reshape(n, Ho, Wo, cout)


# ---------------------------------------------------------------------------
# Parameter construction / one-time weight preparation (BN fold, pad, bf16)
# ---------------------------------------------------------------------------
def fold_bn(conv_b, bn):
    scale = bn["gamma"] / jnp.sqrt(bn["var"] + EPS)
    bias = bn["beta"] + (conv_b - bn["mean"]) * scale
    return scale, bias


def _pad_matmul_weight(w2d, bias):
    K, N = w2d.shape
    Kp, Np = round_up(K, 128), round_up(N, 128)
    wp = jnp.pad(w2d, ((0, Kp - K), (0, Np - N))).astype(jnp.bfloat16)
    bp = jnp.pad(bias, (0, Np - N)).astype(jnp.float32).reshape(1, Np)
    return wp, bp


def prepare_block(raw, downsample):
    """Fold BN scale into weights, flatten, pad, cast to bf16 - once."""
    p = {}
    s1, b1 = fold_bn(raw["b1"], raw["bn1"])
    p["w1"], p["b1"] = _pad_matmul_weight(raw["w1"][0, 0] * s1[None, :], b1)

    # NOTE: the reference module applies bn1 after conv2 as well.
    s1b, b2 = fold_bn(raw["b2"], raw["bn1"])
    w2 = raw["w2"] * s1b[None, None, None, :]            # (3,3,mid_c,mid_c)
    kh, kw, cin, cout = w2.shape
    Cp, Np = round_up(cin, 128), round_up(cout, 128)
    p["w2"] = jnp.pad(w2.reshape(kh * kw, cin, cout),
                      ((0, 0), (0, Cp - cin), (0, Np - cout))
                      ).astype(jnp.bfloat16)
    p["b2"] = jnp.pad(b2, (0, Np - cout)).astype(jnp.float32).reshape(1, Np)

    s2, b3 = fold_bn(raw["b3"], raw["bn2"])
    p["w3"], p["b3"] = _pad_matmul_weight(raw["w3"][0, 0] * s2[None, :], b3)

    if downsample:
        # conv_c has no BatchNorm in the reference module.
        p["wc"], p["bc"] = _pad_matmul_weight(raw["wc"][0, 0], raw["bc"])
    return p


def init_params(key, in_c, mid_c, out_c, downsample):
    ks = jax.random.split(key, 10)

    def conv_w(k, kh, kw, ci, co):
        bound = (1.0 / (ci * kh * kw)) ** 0.5
        return jax.random.uniform(k, (kh, kw, ci, co), jnp.float32,
                                  -bound, bound)

    def conv_b(k, co, fan_in):
        bound = (1.0 / fan_in) ** 0.5
        return jax.random.uniform(k, (co,), jnp.float32, -bound, bound)

    def bn_stats(k, c):
        k1, k2, k3, k4 = jax.random.split(k, 4)
        return dict(gamma=jax.random.uniform(k1, (c,), jnp.float32, 0.5, 1.5),
                    beta=0.1 * jax.random.normal(k2, (c,), jnp.float32),
                    mean=0.1 * jax.random.normal(k3, (c,), jnp.float32),
                    var=jax.random.uniform(k4, (c,), jnp.float32, 0.5, 1.5))

    p = dict(
        w1=conv_w(ks[0], 1, 1, in_c, mid_c), b1=conv_b(ks[1], mid_c, in_c),
        w2=conv_w(ks[2], 3, 3, mid_c, mid_c), b2=conv_b(ks[3], mid_c, 9 * mid_c),
        w3=conv_w(ks[4], 1, 1, mid_c, out_c), b3=conv_b(ks[5], out_c, mid_c),
        bn1=bn_stats(ks[6], mid_c), bn2=bn_stats(ks[7], out_c),
    )
    if downsample:
        p["wc"] = conv_w(ks[8], 1, 1, in_c, out_c)
        p["bc"] = conv_b(ks[9], out_c, in_c)
    return p


# ---------------------------------------------------------------------------
# Forward pass (matches the PyTorch ResidualBlock.forward)
# ---------------------------------------------------------------------------
def residual_block_forward(x_nchw, prep, *, mid_c, out_c, downsample, strides):
    x = jnp.transpose(x_nchw, (0, 2, 3, 1)).astype(jnp.bfloat16)   # NHWC bf16
    n, H, W, in_c = x.shape

    # y = relu(bn1(conv1(x)))            1x1, stride 1
    y = fused_matmul(x.reshape(n * H * W, in_c), prep["w1"], prep["b1"],
                     mid_c, relu=True).reshape(n, H, W, mid_c)

    # y = relu(bn1(conv2(y)))            3x3, stride=strides, pad=1
    y = conv3x3_fused(y, prep["w2"], prep["b2"], mid_c, strides, relu=True)

    # shortcut
    if downsample:
        xs = x[:, ::strides, ::strides, :] if strides > 1 else x
        ns, hs, ws, _ = xs.shape
        sc = fused_matmul(xs.reshape(ns * hs * ws, in_c), prep["wc"],
                          prep["bc"], out_c, relu=False
                          ).reshape(ns, hs, ws, out_c)
    else:
        sc = x                                      # requires in_c == out_c

    # relu(bn2(conv3(y)) + shortcut)     residual add + ReLU fused in epilogue
    nb, Ho, Wo, _ = y.shape
    out = fused_matmul(y.reshape(nb * Ho * Wo, mid_c), prep["w3"], prep["b3"],
                       out_c, residual=sc.reshape(nb * Ho * Wo, out_c),
                       relu=True, out_dtype=jnp.float32)
    out = out.reshape(nb, Ho, Wo, out_c)
    return jnp.transpose(out, (0, 3, 1, 2))         # back to NCHW


# ---------------------------------------------------------------------------
# Pure-JAX reference (mirrors the same bf16 rounding points) for validation
# ---------------------------------------------------------------------------
def reference_forward(x_nchw, raw, downsample, strides):
    f32, bf16 = jnp.float32, jnp.bfloat16

    def conv(xx, ww, bb, stride, pad):
        yy = jax.lax.conv_general_dilated(
            xx, ww.astype(bf16).astype(f32),
            window_strides=(stride, stride),
            padding=((pad, pad), (pad, pad)),
            dimension_numbers=("NHWC", "HWIO", "NHWC"),
            precision=jax.lax.Precision.HIGHEST)
        return yy + bb[None, None, None, :]

    x = jnp.transpose(x_nchw, (0, 2, 3, 1)).astype(bf16).astype(f32)

    s1, b1 = fold_bn(raw["b1"], raw["bn1"])
    y = jnp.maximum(conv(x, raw["w1"] * s1[None, None, None, :], b1, 1, 0), 0.)
    y = y.astype(bf16).astype(f32)

    s1b, b2 = fold_bn(raw["b2"], raw["bn1"])
    y = jnp.maximum(conv(y, raw["w2"] * s1b[None, None, None, :], b2,
                         strides, 1), 0.)
    y = y.astype(bf16).astype(f32)

    if downsample:
        sc = conv(x, raw["wc"], raw["bc"], strides, 0).astype(bf16).astype(f32)
    else:
        sc = x

    s2, b3 = fold_bn(raw["b3"], raw["bn2"])
    y = conv(y, raw["w3"] * s2[None, None, None, :], b3, 1, 0)
    out = jnp.maximum(y + sc, 0.)
    return jnp.transpose(out, (0, 3, 1, 2))


if __name__ == "__main__":
    key = jax.random.PRNGKey(0)
    kx, kp1, kp2 = jax.random.split(key, 3)

    x = jax.random.normal(kx, (2, 64, 16, 16), jnp.float32)     # NCHW

    # Case 1: identity shortcut (downsample=False, strides=1, in_c == out_c)
    raw1 = init_params(kp1, in_c=64, mid_c=32, out_c=64, downsample=False)
    prep1 = prepare_block(raw1, downsample=False)
    fwd1 = jax.jit(functools.partial(residual_block_forward,
                                     mid_c=32, out_c=64,
                                     downsample=False, strides=1))
    out1 = jax.block_until_ready(fwd1(x, prep1))
    ref1 = reference_forward(x, raw1, False, 1)
    assert out1.shape == (2, 64, 16, 16)
    assert bool(jnp.all(jnp.isfinite(out1)))
    assert bool(jnp.allclose(out1, ref1, rtol=1e-2, atol=1e-2))

    # Case 2: projection shortcut (downsample=True, strides=2)
    raw2 = init_params(kp2, in_c=64, mid_c=32, out_c=128, downsample=True)
    prep2 = prepare_block(raw2, downsample=True)
    fwd2 = jax.jit(functools.partial(residual_block_forward,
                                     mid_c=32, out_c=128,
                                     downsample=True, strides=2))
    out2 = jax.block_until_ready(fwd2(x, prep2))
    ref2 = reference_forward(x, raw2, True, 2)
    assert out2.shape == (2, 128, 8, 8)
    assert bool(jnp.all(jnp.isfinite(out2)))
    assert bool(jnp.allclose(out2, ref2, rtol=1e-2, atol=1e-2))

    print("KERNEL_OK")
</pallas_src>

<mosaic_0001>
module attributes {stable_mosaic.version = 11 : i64} {
  func.func @_mm_kernel(%arg0: i32, %arg1: i32, %arg2: i32, %arg3: memref<128x128xbf16, #tpu.memory_space<vmem>>, %arg4: memref<128x128xbf16, #tpu.memory_space<vmem>>, %arg5: memref<1x128xf32, #tpu.memory_space<vmem>>, %arg6: memref<128x128xbf16, #tpu.memory_space<vmem>>, %arg7: memref<128x128xf32, #tpu.memory_space<vmem>>) attributes {dimension_semantics = [#tpu.dimension_semantics<parallel>, #tpu.dimension_semantics<parallel>, #tpu.dimension_semantics<arbitrary>], iteration_bounds = array<i64: 4, 1, 1>, scalar_prefetch = 0 : i64, scratch_operands = 1 : i64, tpu.core_type = #tpu.core_type<tc>, window_params = [{transform_indices = @transform_0, window_bounds = array<i64: 128, 128>}, {transform_indices = @transform_1, window_bounds = array<i64: 128, 128>}, {transform_indices = @transform_2, window_bounds = array<i64: 1, 128>}, {transform_indices = @transform_3, window_bounds = array<i64: 128, 128>}]} {
    %c0_i32 = arith.constant 0 : i32
    %0 = arith.cmpi eq, %arg2, %c0_i32 : i32
    %1 = arith.extui %0 : i1 to i32
    %c0_i32_0 = arith.constant 0 : i32
    %2 = arith.cmpi ne, %1, %c0_i32_0 : i32
    scf.if %2 {
      %cst_10 = arith.constant 0.000000e+00 : f32
      %12 = vector.broadcast %cst_10 : f32 to vector<128x128xf32>
      %c0_11 = arith.constant 0 : index
      %c0_12 = arith.constant 0 : index
      %13 = vector.load %arg7[%c0_11, %c0_12] : memref<128x128xf32, #tpu.memory_space<vmem>>, vector<128x128xf32>
      tpu.vector_store %arg7[%c0_11, %c0_12], %12 {strides = array<i32>} : memref<128x128xf32, #tpu.memory_space<vmem>>, vector<128x128xf32>,
    } else {
    }
    %c0 = arith.constant 0 : index
    %c0_1 = arith.constant 0 : index
    %3 = vector.load %arg7[%c0, %c0_1] : memref<128x128xf32, #tpu.memory_space<vmem>>, vector<128x128xf32>
    %c0_2 = arith.constant 0 : index
    %c0_3 = arith.constant 0 : index
    %4 = vector.load %arg3[%c0_2, %c0_3] : memref<128x128xbf16, #tpu.memory_space<vmem>>, vector<128x128xbf16>
    %c0_4 = arith.constant 0 : index
    %c0_5 = arith.constant 0 : index
    %5 = vector.load %arg4[%c0_4, %c0_5] : memref<128x128xbf16, #tpu.memory_space<vmem>>, vector<128x128xbf16>
    %cst = arith.constant dense<0.000000e+00> : vector<128x128xf32>
    %6 = tpu.matmul %4, %5, %cst {dimension_numbers = #tpu.dot_dimension_numbers<[1], [0], [0], [1], [0, 0, 1, 1], [], []>} : vector<128x128xbf16>, vector<128x128xbf16>, vector<128x128xf32> -> vector<128x128xf32>
    %7 = arith.addf %3, %6 : vector<128x128xf32>
    %c0_6 = arith.constant 0 : index
    %c0_7 = arith.constant 0 : index
    %8 = vector.load %arg7[%c0_6, %c0_7] : memref<128x128xf32, #tpu.memory_space<vmem>>, vector<128x128xf32>
    tpu.vector_store %arg7[%c0_6, %c0_7], %7 {strides = array<i32>} : memref<128x128xf32, #tpu.memory_space<vmem>>, vector<128x128xf32>,
    %c0_i32_8 = arith.constant 0 : i32
    %9 = arith.cmpi eq, %arg2, %c0_i32_8 : i32
    %10 = arith.extui %9 : i1 to i32
    %c0_i32_9 = arith.constant 0 : i32
    %11 = arith.cmpi ne, %10, %c0_i32_9 : i32
    scf.if %11 {
      %c0_10 = arith.constant 0 : index
      %c0_11 = arith.constant 0 : index
      %12 = vector.load %arg7[%c0_10, %c0_11] : memref<128x128xf32, #tpu.memory_space<vmem>>, vector<128x128xf32>
      %c0_12 = arith.constant 0 : index
      %c0_13 = arith.constant 0 : index
      %13 = vector.load %arg5[%c0_12, %c0_13] : memref<1x128xf32, #tpu.memory_space<vmem>>, vector<1x128xf32>
      %14 = vector.broadcast %13 : vector<1x128xf32> to vector<128x128xf32>
      %15 = arith.addf %12, %14 : vector<128x128xf32>
      %cst_14 = arith.constant 0.000000e+00 : f32
      %16 = vector.broadcast %cst_14 : f32 to vector<128x128xf32>
      %17 = arith.maximumf %15, %16 : vector<128x128xf32>
      %18 = arith.truncf %17 : vector<128x128xf32> to vector<128x128xbf16>
      %c0_15 = arith.constant 0 : index
      %c0_16 = arith.constant 0 : index
      %19 = vector.load %arg6[%c0_15, %c0_16] : memref<128x128xbf16, #tpu.memory_space<vmem>>, vector<128x128xbf16>
      tpu.vector_store %arg6[%c0_15, %c0_16], %18 {strides = array<i32>} : memref<128x128xbf16, #tpu.memory_space<vmem>>, vector<128x128xbf16>,
    } else {
    }
    return
  }
  func.func @transform_0(%arg0: i32, %arg1: i32, %arg2: i32) -> (i32, i32) {
    %c0_i32 = arith.constant 0 : i32
    return %arg0, %arg2 : i32, i32
  }
  func.func @transform_1(%arg0: i32, %arg1: i32, %arg2: i32) -> (i32, i32) {
    %c0_i32 = arith.constant 0 : i32
    return %arg2, %arg1 : i32, i32
  }
  func.func @transform_2(%arg0: i32, %arg1: i32, %arg2: i32) -> (i32, i32) {
    %c0_i32 = arith.constant 0 : i32
    %c0_i32_0 = arith.constant 0 : i32
    return %c0_i32, %arg1 : i32, i32
  }
  func.func @transform_3(%arg0: i32, %arg1: i32, %arg2: i32) -> (i32, i32) {
    %c0_i32 = arith.constant 0 : i32
    return %arg0, %arg1 : i32, i32
  }
}

module attributes {stable_mosaic.version = 11 : i64} {
  func.func @_conv3x3_kernel(%arg0: i32, %arg1: memref<2x18x18x128xbf16, #tpu.memory_space<vmem>>, %arg2: memref<9x128x128xbf16, #tpu.memory_space<vmem>>, %arg3: memref<1x128xf32, #tpu.memory_space<vmem>>, %arg4: memref<512x128xbf16, #tpu.memory_space<vmem>>, %arg5: memref<512x128xf32, #tpu.memory_space<vmem>>) attributes {dimension_semantics = [#tpu.dimension_semantics<parallel>], iteration_bounds = array<i64: 1>, scalar_prefetch = 0 : i64, scratch_operands = 1 : i64, tpu.core_type = #tpu.core_type<tc>, window_params = [{pipeline_mode = #tpu.pipeline_mode<synchronous>, transform_indices = @transform_0, window_bounds = array<i64: 2, 18, 18, 128>}, {transform_indices = @transform_1, window_bounds = array<i64: 9, 128, 128>}, {transform_indices = @transform_2, window_bounds = array<i64: 1, 128>}, {transform_indices = @transform_3, window_bounds = array<i64: 512, 128>}]} {
    %cst = arith.constant 0.000000e+00 : f32
    %0 = vector.broadcast %cst : f32 to vector<512x128xf32>
    %c0 = arith.constant 0 : index
    %c0_0 = arith.constant 0 : index
    %1 = vector.load %arg5[%c0, %c0_0] : memref<512x128xf32, #tpu.memory_space<vmem>>, vector<512x128xf32>
    tpu.vector_store %arg5[%c0, %c0_0], %0 {strides = array<i32>} : memref<512x128xf32, #tpu.memory_space<vmem>>, vector<512x128xf32>,
    %c0_1 = arith.constant 0 : index
    %c0_2 = arith.constant 0 : index
    %c0_3 = arith.constant 0 : index
    %c0_4 = arith.constant 0 : index
    %2 = vector.load %arg1[%c0_1, %c0_2, %c0_3, %c0_4] : memref<2x18x18x128xbf16, #tpu.memory_space<vmem>>, vector<2x16x16x128xbf16>
    %3 = vector.shape_cast %2 : vector<2x16x16x128xbf16> to vector<512x128xbf16>
    %c0_5 = arith.constant 0 : index
    %c0_6 = arith.constant 0 : index
    %4 = vector.load %arg5[%c0_5, %c0_6] : memref<512x128xf32, #tpu.memory_space<vmem>>, vector<512x128xf32>
    %c0_7 = arith.constant 0 : index
    %c0_8 = arith.constant 0 : index
    %c0_9 = arith.constant 0 : index
    %5 = vector.load %arg2[%c0_7, %c0_8, %c0_9] : memref<9x128x128xbf16, #tpu.memory_space<vmem>>, vector<1x128x128xbf16>
    %6 = vector.shape_cast %5 : vector<1x128x128xbf16> to vector<128x128xbf16>
    %cst_10 = arith.constant dense<0.000000e+00> : vector<512x128xf32>
    %7 = tpu.matmul %3, %6, %cst_10 {dimension_numbers = #tpu.dot_dimension_numbers<[1], [0], [0], [1], [0, 0, 1, 1], [], []>} : vector<512x128xbf16>, vector<128x128xbf16>, vector<512x128xf32> -> vector<512x128xf32>
    %8 = arith.addf %4, %7 : vector<512x128xf32>
    %c0_11 = arith.constant 0 : index
    %c0_12 = arith.constant 0 : index
    %9 = vector.load %arg5[%c0_11, %c0_12] : memref<512x128xf32, #tpu.memory_space<vmem>>, vector<512x128xf32>
    tpu.vector_store %arg5[%c0_11, %c0_12], %8 {strides = array<i32>} : memref<512x128xf32, #tpu.memory_space<vmem>>, vector<512x128xf32>,
    %c0_13 = arith.constant 0 : index
    %c0_14 = arith.constant 0 : index
    %c1 = arith.constant 1 : index
    %c0_15 = arith.constant 0 : index
    %10 = vector.load %arg1[%c0_13, %c0_14, %c1, %c0_15] : memref<2x18x18x128xbf16, #tpu.memory_space<vmem>>, vector<2x16x16x128xbf16>
    %11 = vector.shape_cast %10 : vector<2x16x16x128xbf16> to vector<512x128xbf16>
    %c0_16 = arith.constant 0 : index
    %c0_17 = arith.constant 0 : index
    %12 = vector.load %arg5[%c0_16, %c0_17] : memref<512x128xf32, #tpu.memory_space<vmem>>, vector<512x128xf32>
    %c1_18 = arith.constant 1 : index
    %c0_19 = arith.constant 0 : index
    %c0_20 = arith.constant 0 : index
    %13 = vector.load %arg2[%c1_18, %c0_19, %c0_20] : memref<9x128x128xbf16, #tpu.memory_space<vmem>>, vector<1x128x128xbf16>
    %14 = vector.shape_cast %13 : vector<1x128x128xbf16> to vector<128x128xbf16>
    %cst_21 = arith.constant dense<0.000000e+00> : vector<512x128xf32>
    %15 = tpu.matmul %11, %14, %cst_21 {dimension_numbers = #tpu.dot_dimension_numbers<[1], [0], [0], [1], [0, 0, 1, 1], [], []>} : vector<512x128xbf16>, vector<128x128xbf16>, vector<512x128xf32> -> vector<512x128xf32>
    %16 = arith.addf %12, %15 : vector<512x128xf32>
    %c0_22 = arith.constant 0 : index
    %c0_23 = arith.constant 0 : index
    %17 = vector.load %arg5[%c0_22, %c0_23] : memref<512x128xf32, #tpu.memory_space<vmem>>, vector<512x128xf32>
    tpu.vector_store %arg5[%c0_22, %c0_23], %16 {strides = array<i32>} : memref<512x128xf32, #tpu.memory_space<vmem>>, vector<512x128xf32>,
    %c0_24 = arith.constant 0 : index
    %c0_25 = arith.constant 0 : index
    %c2 = arith.constant 2 : index
    %c0_26 = arith.constant 0 : index
    %18 = vector.load %arg1[%c0_24, %c0_25, %c2, %c0_26] : memref<2x18x18x128xbf16, #tpu.memory_space<vmem>>, vector<2x16x16x128xbf16>
    %19 = vector.shape_cast %18 : vector<2x16x16x128xbf16> to vector<512x128xbf16>
    %c0_27 = arith.constant 0 : index
    %c0_28 = arith.constant 0 : index
    %20 = vector.load %arg5[%c0_27, %c0_28] : memref<512x128xf32, #tpu.memory_space<vmem>>, vector<512x128xf32>
    %c2_29 = arith.constant 2 : index
    %c0_30 = arith.constant 0 : index
    %c0_31 = arith.constant 0 : index
    %21 = vector.load %arg2[%c2_29, %c0_30, %c0_31] : memref<9x128x128xbf16, #tpu.memory_space<vmem>>, vector<1x128x128xbf16>
    %22 = vector.shape_cast %21 : vector<1x128x128xbf16> to vector<128x128xbf16>
    %cst_32 = arith.constant dense<0.000000e+00> : vector<512x128xf32>
    %23 = tpu.matmul %19, %22, %cst_32 {dimension_numbers = #tpu.dot_dimension_numbers<[1], [0], [0], [1], [0, 0, 1, 1], [], []>} : vector<512x128xbf16>, vector<128x128xbf16>, vector<512x128xf32> -> vector<512x128xf32>
    %24 = arith.addf %20, %23 : vector<512x128xf32>
    %c0_33 = arith.constant 0 : index
    %c0_34 = arith.constant 0 : index
    %25 = vector.load %arg5[%c0_33, %c0_34] : memref<512x128xf32, #tpu.memory_space<vmem>>, vector<512x128xf32>
    tpu.vector_store %arg5[%c0_33, %c0_34], %24 {strides = array<i32>} : memref<512x128xf32, #tpu.memory_space<vmem>>, vector<512x128xf32>,
    %c0_35 = arith.constant 0 : index
    %c1_36 = arith.constant 1 : index
    %c0_37 = arith.constant 0 : index
    %c0_38 = arith.constant 0 : index
    %26 = vector.load %arg1[%c0_35, %c1_36, %c0_37, %c0_38] : memref<2x18x18x128xbf16, #tpu.memory_space<vmem>>, vector<2x16x16x128xbf16>
    %27 = vector.shape_cast %26 : vector<2x16x16x128xbf16> to vector<512x128xbf16>
    %c0_39 = arith.constant 0 : index
    %c0_40 = arith.constant 0 : index
    %28 = vector.load %arg5[%c0_39, %c0_40] : memref<512x128xf32, #tpu.memory_space<vmem>>, vector<512x128xf32>
    %c3 = arith.constant 3 : index
    %c0_41 = arith.constant 0 : index
    %c0_42 = arith.constant 0 : index
    %29 = vector.load %arg2[%c3, %c0_41, %c0_42] : memref<9x128x128xbf16, #tpu.memory_space<vmem>>, vector<1x128x128xbf16>
    %30 = vector.shape_cast %29 : vector<1x128x128xbf16> to vector<128x128xbf16>
    %cst_43 = arith.constant dense<0.000000e+00> : vector<512x128xf32>
    %31 = tpu.matmul %27, %30, %cst_43 {dimension_numbers = #tpu.dot_dimension_numbers<[1], [0], [0], [1], [0, 0, 1, 1], [], []>} : vector<512x128xbf16>, vector<128x128xbf16>, vector<512x128xf32> -> vector<512x128xf32>
    %32 = arith.addf %28, %31 : vector<512x128xf32>
    %c0_44 = arith.constant 0 : index
    %c0_45 = arith.constant 0 : index
    %33 = vector.load %arg5[%c0_44, %c0_45] : memref<512x128xf32, #tpu.memory_space<vmem>>, vector<512x128xf32>
    tpu.vector_store %arg5[%c0_44, %c0_45], %32 {strides = array<i32>} : memref<512x128xf32, #tpu.memory_space<vmem>>, vector<512x128xf32>,
    %c0_46 = arith.constant 0 : index
    %c1_47 = arith.constant 1 : index
    %c1_48 = arith.constant 1 : index
    %c0_49 = arith.constant 0 : index
    %34 = vector.load %arg1[%c0_46, %c1_47, %c1_48, %c0_49] : memref<2x18x18x128xbf16, #tpu.memory_space<vmem>>, vector<2x16x16x128xbf16>
    %35 = vector.shape_cast %34 : vector<2x16x16x128xbf16> to vector<512x128xbf16>
    %c0_50 = arith.constant 0 : index
    %c0_51 = arith.constant 0 : index
    %36 = vector.load %arg5[%c0_50, %c0_51] : memref<512x128xf32, #tpu.memory_space<vmem>>, vector<512x128xf32>
    %c4 = arith.constant 4 : index
    %c0_52 = arith.constant 0 : index
    %c0_53 = arith.constant 0 : index
    %37 = vector.load %arg2[%c4, %c0_52, %c0_53] : memref<9x128x128xbf16, #tpu.memory_space<vmem>>, vector<1x128x128xbf16>
    %38 = vector.shape_cast %37 : vector<1x128x128xbf16> to vector<128x128xbf16>
    %cst_54 = arith.constant dense<0.000000e+00> : vector<512x128xf32>
    %39 = tpu.matmul %35, %38, %cst_54 {dimension_numbers = #tpu.dot_dimension_numbers<[1], [0], [0], [1], [0, 0, 1, 1], [], []>} : vector<512x128xbf16>, vector<128x128xbf16>, vector<512x128xf32> -> vector<512x128xf32>
    %40 = arith.addf %36, %39 : vector<512x128xf32>
    %c0_55 = arith.constant 0 : index
    %c0_56 = arith.constant 0 : index
    %41 = vector.load %arg5[%c0_55, %c0_56] : memref<512x128xf32, #tpu.memory_space<vmem>>, vector<512x128xf32>
    tpu.vector_store %arg5[%c0_55, %c0_56], %40 {strides = array<i32>} : memref<512x128xf32, #tpu.memory_space<vmem>>, vector<512x128xf32>,
    %c0_57 = arith.constant 0 : index
    %c1_58 = arith.constant 1 : index
    %c2_59 = arith.constant 2 : index
    %c0_60 = arith.constant 0 : index
    %42 = vector.load %arg1[%c0_57, %c1_58, %c2_59, %c0_60] : memref<2x18x18x128xbf16, #tpu.memory_space<vmem>>, vector<2x16x16x128xbf16>
    %43 = vector.shape_cast %42 : vector<2x16x16x128xbf16> to vector<512x128xbf16>
    %c0_61 = arith.constant 0 : index
    %c0_62 = arith.constant 0 : index
    %44 = vector.load %arg5[%c0_61, %c0_62] : memref<512x128xf32, #tpu.memory_space<vmem>>, vector<512x128xf32>
    %c5 = arith.constant 5 : index
    %c0_63 = arith.constant 0 : index
    %c0_64 = arith.constant 0 : index
    %45 = vector.load %arg2[%c5, %c0_63, %c0_64] : memref<9x128x128xbf16, #tpu.memory_space<vmem>>, vector<1x128x128xbf16>
    %46 = vector.shape_cast %45 : vector<1x128x128xbf16> to vector<128x128xbf16>
    %cst_65 = arith.constant dense<0.000000e+00> : vector<512x128xf32>
    %47 = tpu.matmul %43, %46, %cst_65 {dimension_numbers = #tpu.dot_dimension_numbers<[1], [0], [0], [1], [0, 0, 1, 1], [], []>} : vector<512x128xbf16>, vector<128x128xbf16>, vector<512x128xf32> -> vector<512x128xf32>
    %48 = arith.addf %44, %47 : vector<512x128xf32>
    %c0_66 = arith.constant 0 : index
    %c0_67 = arith.constant 0 : index
    %49 = vector.load %arg5[%c0_66, %c0_67] : memref<512x128xf32, #tpu.memory_space<vmem>>, vector<512x128xf32>
    tpu.vector_store %arg5[%c0_66, %c0_67], %48 {strides = array<i32>} : memref<512x128xf32, #tpu.memory_space<vmem>>, vector<512x128xf32>,
    %c0_68 = arith.constant 0 : index
    %c2_69 = arith.constant 2 : index
    %c0_70 = arith.constant 0 : index
    %c0_71 = arith.constant 0 : index
    %50 = vector.load %arg1[%c0_68, %c2_69, %c0_70, %c0_71] : memref<2x18x18x128xbf16, #tpu.memory_space<vmem>>, vector<2x16x16x128xbf16>
    %51 = vector.shape_cast %50 : vector<2x16x16x128xbf16> to vector<512x128xbf16>
    %c0_72 = arith.constant 0 : index
    %c0_73 = arith.constant 0 : index
    %52 = vector.load %arg5[%c0_72, %c0_73] : memref<512x128xf32, #tpu.memory_space<vmem>>, vector<512x128xf32>
    %c6 = arith.constant 6 : index
    %c0_74 = arith.constant 0 : index
    %c0_75 = arith.constant 0 : index
    %53 = vector.load %arg2[%c6, %c0_74, %c0_75] : memref<9x128x128xbf16, #tpu.memory_space<vmem>>, vector<1x128x128xbf16>
    %54 = vector.shape_cast %53 : vector<1x128x128xbf16> to vector<128x128xbf16>
    %cst_76 = arith.constant dense<0.000000e+00> : vector<512x128xf32>
    %55 = tpu.matmul %51, %54, %cst_76 {dimension_numbers = #tpu.dot_dimension_numbers<[1], [0], [0], [1], [0, 0, 1, 1], [], []>} : vector<512x128xbf16>, vector<128x128xbf16>, vector<512x128xf32> -> vector<512x128xf32>
    %56 = arith.addf %52, %55 : vector<512x128xf32>
    %c0_77 = arith.constant 0 : index
    %c0_78 = arith.constant 0 : index
    %57 = vector.load %arg5[%c0_77, %c0_78] : memref<512x128xf32, #tpu.memory_space<vmem>>, vector<512x128xf32>
    tpu.vector_store %arg5[%c0_77, %c0_78], %56 {strides = array<i32>} : memref<512x128xf32, #tpu.memory_space<vmem>>, vector<512x128xf32>,
    %c0_79 = arith.constant 0 : index
    %c2_80 = arith.constant 2 : index
    %c1_81 = arith.constant 1 : index
    %c0_82 = arith.constant 0 : index
    %58 = vector.load %arg1[%c0_79, %c2_80, %c1_81, %c0_82] : memref<2x18x18x128xbf16, #tpu.memory_space<vmem>>, vector<2x16x16x128xbf16>
    %59 = vector.shape_cast %58 : vector<2x16x16x128xbf16> to vector<512x128xbf16>
    %c0_83 = arith.constant 0 : index
    %c0_84 = arith.constant 0 : index
    %60 = vector.load %arg5[%c0_83, %c0_84] : memref<512x128xf32, #tpu.memory_space<vmem>>, vector<512x128xf32>
    %c7 = arith.constant 7 : index
    %c0_85 = arith.constant 0 : index
    %c0_86 = arith.constant 0 : index
    %61 = vector.load %arg2[%c7, %c0_85, %c0_86] : memref<9x128x128xbf16, #tpu.memory_space<vmem>>, vector<1x128x128xbf16>
    %62 = vector.shape_cast %61 : vector<1x128x128xbf16> to vector<128x128xbf16>
    %cst_87 = arith.constant dense<0.000000e+00> : vector<512x128xf32>
    %63 = tpu.matmul %59, %62, %cst_87 {dimension_numbers = #tpu.dot_dimension_numbers<[1], [0], [0], [1], [0, 0, 1, 1], [], []>} : vector<512x128xbf16>, vector<128x128xbf16>, vector<512x128xf32> -> vector<512x128xf32>
    %64 = arith.addf %60, %63 : vector<512x128xf32>
    %c0_88 = arith.constant 0 : index
    %c0_89 = arith.constant 0 : index
    %65 = vector.load %arg5[%c0_88, %c0_89] : memref<512x128xf32, #tpu.memory_space<vmem>>, vector<512x128xf32>
    tpu.vector_store %arg5[%c0_88, %c0_89], %64 {strides = array<i32>} : memref<512x128xf32, #tpu.memory_space<vmem>>, vector<512x128xf32>,
    %c0_90 = arith.constant 0 : index
    %c2_91 = arith.constant 2 : index
    %c2_92 = arith.constant 2 : index
    %c0_93 = arith.constant 0 : index
    %66 = vector.load %arg1[%c0_90, %c2_91, %c2_92, %c0_93] : memref<2x18x18x128xbf16, #tpu.memory_space<vmem>>, vector<2x16x16x128xbf16>
    %67 = vector.shape_cast %66 : vector<2x16x16x128xbf16> to vector<512x128xbf16>
    %c0_94 = arith.constant 0 : index
    %c0_95 = arith.constant 0 : index
    %68 = vector.load %arg5[%c0_94, %c0_95] : memref<512x128xf32, #tpu.memory_space<vmem>>, vector<512x128xf32>
    %c8 = arith.constant 8 : index
    %c0_96 = arith.constant 0 : index
    %c0_97 = arith.constant 0 : index
    %69 = vector.load %arg2[%c8, %c0_96, %c0_97] : memref<9x128x128xbf16, #tpu.memory_space<vmem>>, vector<1x128x128xbf16>
    %70 = vector.shape_cast %69 : vector<1x128x128xbf16> to vector<128x128xbf16>
    %cst_98 = arith.constant dense<0.000000e+00> : vector<512x128xf32>
    %71 = tpu.matmul %67, %70, %cst_98 {dimension_numbers = #tpu.dot_dimension_numbers<[1], [0], [0], [1], [0, 0, 1, 1], [], []>} : vector<512x128xbf16>, vector<128x128xbf16>, vector<512x128xf32> -> vector<512x128xf32>
    %72 = arith.addf %68, %71 : vector<512x128xf32>
    %c0_99 = arith.constant 0 : index
    %c0_100 = arith.constant 0 : index
    %73 = vector.load %arg5[%c0_99, %c0_100] : memref<512x128xf32, #tpu.memory_space<vmem>>, vector<512x128xf32>
    tpu.vector_store %arg5[%c0_99, %c0_100], %72 {strides = array<i32>} : memref<512x128xf32, #tpu.memory_space<vmem>>, vector<512x128xf32>,
    %c0_101 = arith.constant 0 : index
    %c0_102 = arith.constant 0 : index
    %74 = vector.load %arg5[%c0_101, %c0_102] : memref<512x128xf32, #tpu.memory_space<vmem>>, vector<512x128xf32>
    %c0_103 = arith.constant 0 : index
    %c0_104 = arith.constant 0 : index
    %75 = vector.load %arg3[%c0_103, %c0_104] : memref<1x128xf32, #tpu.memory_space<vmem>>, vector<1x128xf32>
    %76 = vector.broadcast %75 : vector<1x128xf32> to vector<512x128xf32>
    %77 = arith.addf %74, %76 : vector<512x128xf32>
    %cst_105 = arith.constant 0.000000e+00 : f32
    %78 = vector.broadcast %cst_105 : f32 to vector<512x128xf32>
    %79 = arith.maximumf %77, %78 : vector<512x128xf32>
    %80 = arith.truncf %79 : vector<512x128xf32> to vector<512x128xbf16>
    %c0_106 = arith.constant 0 : index
    %c0_107 = arith.constant 0 : index
    %81 = vector.load %arg4[%c0_106, %c0_107] : memref<512x128xbf16, #tpu.memory_space<vmem>>, vector<512x128xbf16>
    tpu.vector_store %arg4[%c0_106, %c0_107], %80 {strides = array<i32>} : memref<512x128xbf16, #tpu.memory_space<vmem>>, vector<512x128xbf16>,
    return
  }
  func.func @transform_0(%arg0: i32) -> (i32, i32, i32, i32) {
    %c0_i32 = arith.constant 0 : i32
    %c0_i32_0 = arith.constant 0 : i32
    %c0_i32_1 = arith.constant 0 : i32
    %c0_i32_2 = arith.constant 0 : i32
    %c0_i32_3 = arith.constant 0 : i32
    return %c0_i32, %c0_i32_0, %c0_i32_1, %c0_i32_2 : i32, i32, i32, i32
  }
  func.func @transform_1(%arg0: i32) -> (i32, i32, i32) {
    %c0_i32 = arith.constant 0 : i32
    %c0_i32_0 = arith.constant 0 : i32
    %c0_i32_1 = arith.constant 0 : i32
    return %c0_i32, %c0_i32_0, %arg0 : i32, i32, i32
  }
  func.func @transform_2(%arg0: i32) -> (i32, i32) {
    %c0_i32 = arith.constant 0 : i32
    %c0_i32_0 = arith.constant 0 : i32
    return %c0_i32, %arg0 : i32, i32
  }
  func.func @transform_3(%arg0: i32) -> (i32, i32) {
    %c0_i32 = arith.constant 0 : i32
    %c0_i32_0 = arith.constant 0 : i32
    return %c0_i32, %arg0 : i32, i32
  }
}

module attributes {stable_mosaic.version = 11 : i64} {
  func.func @_mm_res_kernel(%arg0: i32, %arg1: i32, %arg2: i32, %arg3: memref<128x128xbf16, #tpu.memory_space<vmem>>, %arg4: memref<128x128xbf16, #tpu.memory_space<vmem>>, %arg5: memref<1x128xf32, #tpu.memory_space<vmem>>, %arg6: memref<128x128xbf16, #tpu.memory_space<vmem>>, %arg7: memref<128x128xf32, #tpu.memory_space<vmem>>, %arg8: memref<128x128xf32, #tpu.memory_space<vmem>>) attributes {dimension_semantics = [#tpu.dimension_semantics<parallel>, #tpu.dimension_semantics<parallel>, #tpu.dimension_semantics<arbitrary>], iteration_bounds = array<i64: 4, 1, 1>, scalar_prefetch = 0 : i64, scratch_operands = 1 : i64, tpu.core_type = #tpu.core_type<tc>, window_params = [{transform_indices = @transform_0, window_bounds = array<i64: 128, 128>}, {transform_indices = @transform_1, window_bounds = array<i64: 128, 128>}, {transform_indices = @transform_2, window_bounds = array<i64: 1, 128>}, {transform_indices = @transform_3, window_bounds = array<i64: 128, 128>}, {transform_indices = @transform_4, window_bounds = array<i64: 128, 128>}]} {
    %c0_i32 = arith.constant 0 : i32
    %0 = arith.cmpi eq, %arg2, %c0_i32 : i32
    %1 = arith.extui %0 : i1 to i32
    %c0_i32_0 = arith.constant 0 : i32
    %2 = arith.cmpi ne, %1, %c0_i32_0 : i32
    scf.if %2 {
      %cst_10 = arith.constant 0.000000e+00 : f32
      %12 = vector.broadcast %cst_10 : f32 to vector<128x128xf32>
      %c0_11 = arith.constant 0 : index
      %c0_12 = arith.constant 0 : index
      %13 = vector.load %arg8[%c0_11, %c0_12] : memref<128x128xf32, #tpu.memory_space<vmem>>, vector<128x128xf32>
      tpu.vector_store %arg8[%c0_11, %c0_12], %12 {strides = array<i32>} : memref<128x128xf32, #tpu.memory_space<vmem>>, vector<128x128xf32>,
    } else {
    }
    %c0 = arith.constant 0 : index
    %c0_1 = arith.constant 0 : index
    %3 = vector.load %arg8[%c0, %c0_1] : memref<128x128xf32, #tpu.memory_space<vmem>>, vector<128x128xf32>
    %c0_2 = arith.constant 0 : index
    %c0_3 = arith.constant 0 : index
    %4 = vector.load %arg3[%c0_2, %c0_3] : memref<128x128xbf16, #tpu.memory_space<vmem>>, vector<128x128xbf16>
    %c0_4 = arith.constant 0 : index
    %c0_5 = arith.constant 0 : index
    %5 = vector.load %arg4[%c0_4, %c0_5] : memref<128x128xbf16, #tpu.memory_space<vmem>>, vector<128x128xbf16>
    %cst = arith.constant dense<0.000000e+00> : vector<128x128xf32>
    %6 = tpu.matmul %4, %5, %cst {dimension_numbers = #tpu.dot_dimension_numbers<[1], [0], [0], [1], [0, 0, 1, 1], [], []>} : vector<128x128xbf16>, vector<128x128xbf16>, vector<128x128xf32> -> vector<128x128xf32>
    %7 = arith.addf %3, %6 : vector<128x128xf32>
    %c0_6 = arith.constant 0 : index
    %c0_7 = arith.constant 0 : index
    %8 = vector.load %arg8[%c0_6, %c0_7] : memref<128x128xf32, #tpu.memory_space<vmem>>, vector<128x128xf32>
    tpu.vector_store %arg8[%c0_6, %c0_7], %7 {strides = array<i32>} : memref<128x128xf32, #tpu.memory_space<vmem>>, vector<128x128xf32>,
    %c0_i32_8 = arith.constant 0 : i32
    %9 = arith.cmpi eq, %arg2, %c0_i32_8 : i32
    %10 = arith.extui %9 : i1 to i32
    %c0_i32_9 = arith.constant 0 : i32
    %11 = arith.cmpi ne, %10, %c0_i32_9 : i32
    scf.if %11 {
      %c0_10 = arith.constant 0 : index
      %c0_11 = arith.constant 0 : index
      %12 = vector.load %arg8[%c0_10, %c0_11] : memref<128x128xf32, #tpu.memory_space<vmem>>, vector<128x128xf32>
      %c0_12 = arith.constant 0 : index
      %c0_13 = arith.constant 0 : index
      %13 = vector.load %arg5[%c0_12, %c0_13] : memref<1x128xf32, #tpu.memory_space<vmem>>, vector<1x128xf32>
      %14 = vector.broadcast %13 : vector<1x128xf32> to vector<128x128xf32>
      %15 = arith.addf %12, %14 : vector<128x128xf32>
      %c0_14 = arith.constant 0 : index
      %c0_15 = arith.constant 0 : index
      %16 = vector.load %arg6[%c0_14, %c0_15] : memref<128x128xbf16, #tpu.memory_space<vmem>>, vector<128x128xbf16>
      %17 = arith.extf %16 : vector<128x128xbf16> to vector<128x128xf32>
      %18 = arith.addf %15, %17 : vector<128x128xf32>
      %cst_16 = arith.constant 0.000000e+00 : f32
      %19 = vector.broadcast %cst_16 : f32 to vector<128x128xf32>
      %20 = arith.maximumf %18, %19 : vector<128x128xf32>
      %c0_17 = arith.constant 0 : index
      %c0_18 = arith.constant 0 : index
      %21 = vector.load %arg7[%c0_17, %c0_18] : memref<128x128xf32, #tpu.memory_space<vmem>>, vector<128x128xf32>
      tpu.vector_store %arg7[%c0_17, %c0_18], %20 {strides = array<i32>} : memref<128x128xf32, #tpu.memory_space<vmem>>, vector<128x128xf32>,
    } else {
    }
    return
  }
  func.func @transform_0(%arg0: i32, %arg1: i32, %arg2: i32) -> (i32, i32) {
    %c0_i32 = arith.constant 0 : i32
    return %arg0, %arg2 : i32, i32
  }
  func.func @transform_1(%arg0: i32, %arg1: i32, %arg2: i32) -> (i32, i32) {
    %c0_i32 = arith.constant 0 : i32
    return %arg2, %arg1 : i32, i32
  }
  func.func @transform_2(%arg0: i32, %arg1: i32, %arg2: i32) -> (i32, i32) {
    %c0_i32 = arith.constant 0 : i32
    %c0_i32_0 = arith.constant 0 : i32
    return %c0_i32, %arg1 : i32, i32
  }
  func.func @transform_3(%arg0: i32, %arg1: i32, %arg2: i32) -> (i32, i32) {
    %c0_i32 = arith.constant 0 : i32
    return %arg0, %arg1 : i32, i32
  }
  func.func @transform_4(%arg0: i32, %arg1: i32, %arg2: i32) -> (i32, i32) {
    %c0_i32 = arith.constant 0 : i32
    return %arg0, %arg1 : i32, i32
  }
}

</mosaic_0001>

<llo_original>
// kernel: residual_block_forward.3
$region0: #{residual_block_forward.3}
  #allocation0 [shape = 'u32[]', space=smem, size = 0x4, offset = 0x4, fixed_abs, tag = 'smem constant byte address 0x4 - core index']
  #allocation1 [shape = 'u32[144,128]{1,0:T(1,128)}', space=vmem, size = 0x12000, scoped, tag = 'internal scratch']
  #allocation2 [shape = 'f32[128,128]{1,0:T(8,128)}', space=vmem, size = 0x10000, scoped, tag = 'scratch operand']
  %s0 = inlined_call_operand.vmem [shape: bf16[512,128], index: 0, kind: input, shape index: {}]
  %s1 = inlined_call_operand.vmem [shape: bf16[128,128], index: 1, kind: input, shape index: {}]
  %s2 = inlined_call_operand.vmem [shape: f32[1,128], index: 2, kind: input, shape index: {}]
  %s3 = inlined_call_operand.vmem [shape: bf16[512,128], index: 3, kind: output, shape index: {}]
  %s4 = sld [smem:[#allocation0]]
  $region53: #{residual_block_forward.3} parent=0
    _
  %s6 = ssub.s32 1, %s4
  %s7 = scalar_select 0, %s6, %s4
  loop: start=0, step=1, limit=6
  $region2: #{residual_block_forward.3} parent=0 // loop_pre_header
    _
  $region3: #{residual_block_forward.3} parent=0 // loop_header
    %s9 = sphi 0, %s13
    %p10 = scmp.ge.s32.totalorder %s9, 6
    %s16 = sphi 0, %s35
    %s17 = sphi 0, %s31
    %s18 = sphi 0, %s27
    %s19 = sphi 0, %s16
    %s20 = sphi 0, %s17
    %s21 = sphi 0, %s18
    %s22 = sphi 0, %s19
    %s23 = sphi 0, %s20
    %s24 = sphi 0, %s21
    %s40 = sphi 0, %s42
    %s43 = sphi 0, %s40
    %s44 = sphi 0, %s43
    %s60 = sphi 0, %s44
    %s68 = sphi 0, %s70
    %s71 = sphi 0, %s68
    %s72 = sphi 0, %s71
    %s88 = sphi 0, %s72
    %s94 = sphi 0, %s96
    %s97 = sphi 0, %s94
    %s98 = sphi 0, %s97
    %s114 = sphi 0, %s98
    %s122 = sphi 0, %s124
    %s125 = sphi 0, %s122
    %s126 = sphi 0, %s125
    %s142 = sphi 0, %s126
  $region4: #{residual_block_forward.3} parent=0 // loop_header_branch
    %12 = sbr.rel (%p10) target = $region8
  $region5: #{residual_block_forward.3} parent=0 // loop_body
    %s14 = ssub.s32 %s9, 1
    %s15 = ssub.s32 %s9, 2
    %s25 = sadd.s32 1, %s18
    %p26 = scmp.ge.s32.totalorder %s25, 1
    %s27 = scalar_select %p26, 0, %s25
    %s28 = sadd.s32 1, %s17
    %s29 = scalar_select %p26, %s28, %s17
    %p30 = scmp.ge.s32.totalorder %s29, 1
    %s31 = scalar_select %p30, 0, %s29
    %s32 = sadd.s32 1, %s16
    %s33 = scalar_select %p30, %s32, %s16
    %p34 = scmp.ge.s32.totalorder %s33, 4
    %s35 = scalar_select %p34, 0, %s33
    %s36 = ssub.s32 %s16, %s35
    %s37 = ssub.s32 %s18, %s27
    %s38 = sor.u32 %s36, %s37
    %p39 = scmp.eq.s32.totalorder %s38, 0
    %s41 = sadd.s32 %s40, 1
    %s42 = scalar_select %p39, %s40, %s41
    %p45 = pneg %p39
    %p46 = scmp.eq.s32.totalorder %s9, 3
    %p47 = por %p45, %p46
    %p48 = scmp.ne.s32.totalorder %s40, %s43
    %p49 = scmp.eq.s32.totalorder %s9, 0
    %p50 = por %p48, %p49
    %p51 = scmp.ne.s32.totalorder %s40, %s43
    %p52 = scmp.eq.s32.totalorder %s14, 3
    %p53 = por %p51, %p52
    %p54 = scmp.ne.s32.totalorder %s43, %s44
    %p55 = scmp.eq.s32.totalorder %s14, 0
    %p56 = por %p54, %p55
    %p57 = scmp.ne.s32.totalorder %s43, %s44
    %p58 = scmp.eq.s32.totalorder %s15, 3
    %p59 = por %p57, %p58
    %p61 = scmp.ne.s32.totalorder %s44, %s60
    %p62 = scmp.eq.s32.totalorder %s15, 0
    %p63 = por %p61, %p62
    %s64 = ssub.s32 %s18, %s27
    %s65 = ssub.s32 %s17, %s31
    %s66 = sor.u32 %s64, %s65
    %p67 = scmp.eq.s32.totalorder %s66, 0
    %s69 = sadd.s32 %s68, 1
    %s70 = scalar_select %p67, %s68, %s69
    %p73 = pneg %p67
    %p74 = scmp.eq.s32.totalorder %s9, 3
    %p75 = por %p73, %p74
    %p76 = scmp.ne.s32.totalorder %s68, %s71
    %p77 = scmp.eq.s32.totalorder %s9, 0
    %p78 = por %p76, %p77
    %p79 = scmp.ne.s32.totalorder %s68, %s71
    %p80 = scmp.eq.s32.totalorder %s14, 3
    %p81 = por %p79, %p80
    %p82 = scmp.ne.s32.totalorder %s71, %s72
    %p83 = scmp.eq.s32.totalorder %s14, 0
    %p84 = por %p82, %p83
    %p85 = scmp.ne.s32.totalorder %s71, %s72
    %p86 = scmp.eq.s32.totalorder %s15, 3
    %p87 = por %p85, %p86
    %p89 = scmp.ne.s32.totalorder %s72, %s88
    %p90 = scmp.eq.s32.totalorder %s15, 0
    %p91 = por %p89, %p90
    %s92 = ssub.s32 %s17, %s31
    %p93 = scmp.eq.s32.totalorder %s92, 0
    %s95 = sadd.s32 %s94, 1
    %s96 = scalar_select %p93, %s94, %s95
    %p99 = pneg %p93
    %p100 = scmp.eq.s32.totalorder %s9, 3
    %p101 = por %p99, %p100
    %p102 = scmp.ne.s32.totalorder %s94, %s97
    %p103 = scmp.eq.s32.totalorder %s9, 0
    %p104 = por %p102, %p103
    %p105 = scmp.ne.s32.totalorder %s94, %s97
    %p106 = scmp.eq.s32.totalorder %s14, 3
    %p107 = por %p105, %p106
    %p108 = scmp.ne.s32.totalorder %s97, %s98
    %p109 = scmp.eq.s32.totalorder %s14, 0
    %p110 = por %p108, %p109
    %p111 = scmp.ne.s32.totalorder %s97, %s98
    %p112 = scmp.eq.s32.totalorder %s15, 3
    %p113 = por %p111, %p112
    %p115 = scmp.ne.s32.totalorder %s98, %s114
    %p116 = scmp.eq.s32.totalorder %s15, 0
    %p117 = por %p115, %p116
    %s118 = ssub.s32 %s16, %s35
    %s119 = ssub.s32 %s17, %s31
    %s120 = sor.u32 %s118, %s119
    %p121 = scmp.eq.s32.totalorder %s120, 0
    %s123 = sadd.s32 %s122, 1
    %s124 = scalar_select %p121, %s122, %s123
    %p127 = pneg %p121
    %p128 = scmp.eq.s32.totalorder %s9, 3
    %p129 = por %p127, %p128
    %p130 = scmp.ne.s32.totalorder %s122, %s125
    %p131 = scmp.eq.s32.totalorder %s9, 0
    %p132 = por %p130, %p131
    %p133 = scmp.ne.s32.totalorder %s122, %s125
    %p134 = scmp.eq.s32.totalorder %s14, 3
    %p135 = por %p133, %p134
    %p136 = scmp.ne.s32.totalorder %s125, %s126
    %p137 = scmp.eq.s32.totalorder %s14, 0
    %p138 = por %p136, %p137
    %p139 = scmp.ne.s32.totalorder %s125, %s126
    %p140 = scmp.eq.s32.totalorder %s15, 3
    %p141 = por %p139, %p140
    %p143 = scmp.ne.s32.totalorder %s126, %s142
    %p144 = scmp.eq.s32.totalorder %s15, 0
    %p145 = por %p143, %p144
    %p146 = scmp.le.s32.totalorder 1, %s9
    %p147 = scmp.lt.s32.totalorder %s9, 5
    %p148 = pnand %p146, %p147
    %p149 = pneg %p148
    // Predicated region
    $region9: #{residual_block_forward.3} parent=5 // pred_check
      _
    $region10: #{residual_block_forward.3} parent=5 // pred_check_branch
      %151 = sbr.rel (%p148) target = $region12
    $region11: #{residual_block_forward.3} parent=5 // pred_region
      %s152 = ssub.s32 %s9, 1
      // Predicated region
      $region13: #{residual_block_forward.3} parent=11 // pred_check
        %p153 = pneg %p84
      $region14: #{residual_block_forward.3} parent=11 // pred_check_branch
        %155 = sbr.rel (%p153) target = $region16
      $region15: #{residual_block_forward.3} parent=11 // pred_region
        %s156 = smul.u32 16, %s21
        %p157 = scmp.lt.s32.totalorder %s156, 15
        %s158 = scalar_select %p157, %s156, 15
        %p159 = scmp.lt.s32.totalorder %s20, 0
        %s160 = scalar_select %p159, %s20, 0
        %s161 = sadd.s32 %s160, %s158
        %s162 = smul.addr %s161, 4
        %s163 = scalar_lea.vmem %s1, %s162
        %s164 = smul.u32 16, %s21
      $region16: #{residual_block_forward.3} parent=11 // pred_fallthru
        _
      // Predicated region
      $region17: #{residual_block_forward.3} parent=11 // pred_check
        %p165 = pneg %p110
      $region18: #{residual_block_forward.3} parent=11 // pred_check_branch
        %167 = sbr.rel (%p165) target = $region20
      $region19: #{residual_block_forward.3} parent=11 // pred_region
        %p168 = scmp.lt.s32.totalorder %s20, 0
        %s169 = scalar_select %p168, %s20, 0
        %s170 = scalar_lea.vmem %s2, %s169
      $region20: #{residual_block_forward.3} parent=11 // pred_fallthru
        _
    $region12: #{residual_block_forward.3} parent=5 // pred_fallthru
      _
    %p171 = scmp.lt.s32.totalorder %s9, 4
    // Predicated region
    $region21: #{residual_block_forward.3} parent=5 // pred_check
      %p172 = pneg %p171
    $region22: #{residual_block_forward.3} parent=5 // pred_check_branch
      %174 = sbr.rel (%p172) target = $region24
    $region23: #{residual_block_forward.3} parent=5 // pred_region
      // Predicated region
      $region25: #{residual_block_forward.3} parent=23 // pred_check
        %p175 = pneg %p50
      $region26: #{residual_block_forward.3} parent=23 // pred_check_branch
        %177 = sbr.rel (%p175) target = $region28
      $region27: #{residual_block_forward.3} parent=23 // pred_region
        %s178 = smul.u32 16, %s16
        %p179 = scmp.lt.s32.totalorder %s178, 63
        %s180 = scalar_select %p179, %s178, 63
        %p181 = scmp.lt.s32.totalorder %s18, 0
        %s182 = scalar_select %p181, %s18, 0
        %s183 = sadd.s32 %s182, %s180
        %s184 = smul.addr %s183, 4
        %s185 = scalar_lea.vmem %s0, %s184
        %s186 = smul.u32 16, %s16
      $region28: #{residual_block_forward.3} parent=23 // pred_fallthru
        _
    $region24: #{residual_block_forward.3} parent=5 // pred_fallthru
      _
    %p187 = scmp.le.s32.totalorder 1, %s9
    %p188 = scmp.lt.s32.totalorder %s9, 5
    %p189 = pnand %p187, %p188
    %p190 = pneg %p189
    // Predicated region
    $region29: #{residual_block_forward.3} parent=5 // pred_check
      _
    $region30: #{residual_block_forward.3} parent=5 // pred_check_branch
      %192 = sbr.rel (%p189) target = $region32
    $region31: #{residual_block_forward.3} parent=5 // pred_region
      %s193 = ssub.s32 %s9, 1
      %s194 = smul.u32 16, %s19
      %p195 = scmp.lt.s32.totalorder %s194, 63
      %s196 = scalar_select %p195, %s194, 63
      %p197 = scmp.lt.s32.totalorder %s21, 0
      %s198 = scalar_select %p197, %s21, 0
      %s199 = sadd.s32 %s198, %s196
      %s200 = smul.addr %s199, 4
      %s201 = scalar_lea.vmem %s0, %s200
      %p202 = pneg %p56
      %p203 = pneg %p53
      %s204 = smul.u32 16, %s21
      %p205 = scmp.lt.s32.totalorder %s204, 15
      %s206 = scalar_select %p205, %s204, 15
      %p207 = scmp.lt.s32.totalorder %s20, 0
      %s208 = scalar_select %p207, %s20, 0
      %s209 = sadd.s32 %s208, %s206
      %s210 = smul.addr %s209, 4
      %s211 = scalar_lea.vmem %s1, %s210
      %p212 = pneg %p84
      %p213 = pneg %p81
      %p214 = scmp.lt.s32.totalorder %s20, 0
      %s215 = scalar_select %p214, %s20, 0
      %s216 = scalar_lea.vmem %s2, %s215
      %p217 = pneg %p110
      %p218 = pneg %p107
      %p219 = pneg %p138
      %p220 = pneg %p135
      %s221 = smul.u32 16, %s19
      %p222 = scmp.lt.s32.totalorder %s221, 63
      %s223 = scalar_select %p222, %s221, 63
      %p224 = scmp.lt.s32.totalorder %s20, 0
      %s225 = scalar_select %p224, %s20, 0
      %s226 = sadd.s32 %s225, %s223
      %s227 = smul.addr %s226, 4
      %s228 = scalar_lea.vmem %s3, %s227
      %s229 = smul.u32 16, %s19
      %p230 = scmp.lt.s32.totalorder %s229, 63
      %s231 = scalar_select %p230, %s229, 63
      %p232 = scmp.lt.s32.totalorder %s21, 0
      %s233 = scalar_select %p232, %s21, 0
      %s234 = sadd.s32 %s233, %s231
      %s235 = smul.addr %s234, 4
      %s236 = scalar_lea.vmem %s0, %s235
      %s237 = smul.u32 16, %s19
      %s238 = smul.u32 16, %s21
      %p239 = scmp.lt.s32.totalorder %s238, 15
      %s240 = scalar_select %p239, %s238, 15
      %p241 = scmp.lt.s32.totalorder %s20, 0
      %s242 = scalar_select %p241, %s20, 0
      %s243 = sadd.s32 %s242, %s240
      %s244 = smul.addr %s243, 4
      %s245 = scalar_lea.vmem %s1, %s244
      %s246 = smul.u32 16, %s21
      %p247 = scmp.lt.s32.totalorder %s20, 0
      %s248 = scalar_select %p247, %s20, 0
      %s249 = scalar_lea.vmem %s2, %s248
      %s250 = smul.u32 16, %s19
      %p251 = scmp.lt.s32.totalorder %s250, 63
      %s252 = scalar_select %p251, %s250, 63
      %p253 = scmp.lt.s32.totalorder %s20, 0
      %s254 = scalar_select %p253, %s20, 0
      %s255 = sadd.s32 %s254, %s252
      %s256 = smul.addr %s255, 4
      %s257 = scalar_lea.vmem %s3, %s256
      %s258 = smul.u32 16, %s19
      %p260 = scmp.eq.s32.totalorder %s21, 0
      // Predicated region
      $region33: #{residual_block_forward.3} parent=31 // pred_check
        %p261 = pneg %p260
      $region34: #{residual_block_forward.3} parent=31 // pred_check_branch
        %263 = sbr.rel (%p261) target = $region36
      $region35: #{residual_block_forward.3} parent=31 // pred_region
        %264 = vst [vmem:[#allocation2] sm:$0xff] 0.0
        %265 = vst [vmem:[#allocation2 + $0x8] sm:$0xff] 0.0
        %266 = vst [vmem:[#allocation2 + $0x10] sm:$0xff] 0.0
        %267 = vst [vmem:[#allocation2 + $0x18] sm:$0xff] 0.0
        %268 = vst [vmem:[#allocation2 + $0x20] sm:$0xff] 0.0
        %269 = vst [vmem:[#allocation2 + $0x28] sm:$0xff] 0.0
        %270 = vst [vmem:[#allocation2 + $0x30] sm:$0xff] 0.0
        %271 = vst [vmem:[#allocation2 + $0x38] sm:$0xff] 0.0
        %272 = vst [vmem:[#allocation2 + $0x40] sm:$0xff] 0.0
        %273 = vst [vmem:[#allocation2 + $0x48] sm:$0xff] 0.0
        %274 = vst [vmem:[#allocation2 + $0x50] sm:$0xff] 0.0
        %275 = vst [vmem:[#allocation2 + $0x58] sm:$0xff] 0.0
        %276 = vst [vmem:[#allocation2 + $0x60] sm:$0xff] 0.0
        %277 = vst [vmem:[#allocation2 + $0x68] sm:$0xff] 0.0
        %278 = vst [vmem:[#allocation2 + $0x70] sm:$0xff] 0.0
        %279 = vst [vmem:[#allocation2 + $0x78] sm:$0xff] 0.0
      $region36: #{residual_block_forward.3} parent=31 // pred_fallthru
        _
      %v280 = vld [vmem:[#allocation2] sm:$0xff]
      %v281 = vld [vmem:[#allocation2 + $0x8] sm:$0xff]
      %v282 = vld [vmem:[#allocation2 + $0x10] sm:$0xff]
      %v283 = vld [vmem:[#allocation2 + $0x18] sm:$0xff]
      %v284 = vld [vmem:[#allocation2 + $0x20] sm:$0xff]
      %v285 = vld [vmem:[#allocation2 + $0x28] sm:$0xff]
      %v286 = vld [vmem:[#allocation2 + $0x30] sm:$0xff]
      %v287 = vld [vmem:[#allocation2 + $0x38] sm:$0xff]
      %v288 = vld [vmem:[#allocation2 + $0x40] sm:$0xff]
      %v289 = vld [vmem:[#allocation2 + $0x48] sm:$0xff]
      %v290 = vld [vmem:[#allocation2 + $0x50] sm:$0xff]
      %v291 = vld [vmem:[#allocation2 + $0x58] sm:$0xff]
      %v292 = vld [vmem:[#allocation2 + $0x60] sm:$0xff]
      %v293 = vld [vmem:[#allocation2 + $0x68] sm:$0xff]
      %v294 = vld [vmem:[#allocation2 + $0x70] sm:$0xff]
      %v295 = vld [vmem:[#allocation2 + $0x78] sm:$0xff]
      %v296 = vld [vmem:[%s236] sm:$0xf]
      %v297 = vld [vmem:[%s236 + $0x4] sm:$0xf]
      %v298 = vld [vmem:[%s236 + $0x8] sm:$0xf]
      %v299 = vld [vmem:[%s236 + $0xc] sm:$0xf]
      %v300 = vld [vmem:[%s236 + $0x10] sm:$0xf]
      %v301 = vld [vmem:[%s236 + $0x14] sm:$0xf]
      %v302 = vld [vmem:[%s236 + $0x18] sm:$0xf]
      %v303 = vld [vmem:[%s236 + $0x1c] sm:$0xf]
      %v304 = vld [vmem:[%s236 + $0x20] sm:$0xf]
      %v305 = vld [vmem:[%s236 + $0x24] sm:$0xf]
      %v306 = vld [vmem:[%s236 + $0x28] sm:$0xf]
      %v307 = vld [vmem:[%s236 + $0x2c] sm:$0xf]
      %v308 = vld [vmem:[%s236 + $0x30] sm:$0xf]
      %v309 = vld [vmem:[%s236 + $0x34] sm:$0xf]
      %v310 = vld [vmem:[%s236 + $0x38] sm:$0xf]
      %v311 = vld [vmem:[%s236 + $0x3c] sm:$0xf]
      %v312 = vld [vmem:[%s245] sm:$0xf]
      %v313 = vld [vmem:[%s245 + $0x4] sm:$0xf]
      %v314 = vld [vmem:[%s245 + $0x8] sm:$0xf]
      %v315 = vld [vmem:[%s245 + $0xc] sm:$0xf]
      %v316 = vld [vmem:[%s245 + $0x10] sm:$0xf]
      %v317 = vld [vmem:[%s245 + $0x14] sm:$0xf]
      %v318 = vld [vmem:[%s245 + $0x18] sm:$0xf]
      %v319 = vld [vmem:[%s245 + $0x1c] sm:$0xf]
      %v320 = vld [vmem:[%s245 + $0x20] sm:$0xf]
      %v321 = vld [vmem:[%s245 + $0x24] sm:$0xf]
      %v322 = vld [vmem:[%s245 + $0x28] sm:$0xf]
      %v323 = vld [vmem:[%s245 + $0x2c] sm:$0xf]
      %v324 = vld [vmem:[%s245 + $0x30] sm:$0xf]
      %v325 = vld [vmem:[%s245 + $0x34] sm:$0xf]
      %v326 = vld [vmem:[%s245 + $0x38] sm:$0xf]
      %v327 = vld [vmem:[%s245 + $0x3c] sm:$0xf]
      %v344 = vunpack.c.l.b16 %v296
      %v345 = vunpack.c.l.b16 %v297
      %v346 = vunpack.c.l.b16 %v298
      %v347 = vunpack.c.l.b16 %v299
      %v348 = vunpack.c.l.b16 %v300
      %v349 = vunpack.c.l.b16 %v301
      %v350 = vunpack.c.l.b16 %v302
      %v351 = vunpack.c.l.b16 %v303
      %v352 = vunpack.c.l.b16 %v304
      %v353 = vunpack.c.l.b16 %v305
      %v354 = vunpack.c.l.b16 %v306
      %v355 = vunpack.c.l.b16 %v307
      %v356 = vunpack.c.l.b16 %v308
      %v357 = vunpack.c.l.b16 %v309
      %v358 = vunpack.c.l.b16 %v310
      %v359 = vunpack.c.l.b16 %v311
      %v360 = vpack.c.b16 %v345, %v344
      %v361 = vpack.c.b16 %v347, %v346
      %v362 = vpack.c.b16 %v349, %v348
      %v363 = vpack.c.b16 %v351, %v350
      %v364 = vpack.c.b16 %v353, %v352
      %v365 = vpack.c.b16 %v355, %v354
      %v366 = vpack.c.b16 %v357, %v356
      %v367 = vpack.c.b16 %v359, %v358
      %v392 = vunpack.c.l.b16 %v312
      %v393 = vunpack.c.l.b16 %v313
      %v394 = vunpack.c.l.b16 %v314
      %v395 = vunpack.c.l.b16 %v315
      %v396 = vunpack.c.l.b16 %v316
      %v397 = vunpack.c.l.b16 %v317
      %v398 = vunpack.c.l.b16 %v318
      %v399 = vunpack.c.l.b16 %v319
      %v400 = vunpack.c.l.b16 %v320
      %v401 = vunpack.c.l.b16 %v321
      %v402 = vunpack.c.l.b16 %v322
      %v403 = vunpack.c.l.b16 %v323
      %v404 = vunpack.c.l.b16 %v324
      %v405 = vunpack.c.l.b16 %v325
      %v406 = vunpack.c.l.b16 %v326
      %v407 = vunpack.c.l.b16 %v327
      %v408 = vpack.c.b16 %v393, %v392
      %v409 = vpack.c.b16 %v395, %v394
      %v410 = vpack.c.b16 %v397, %v396
      %v411 = vpack.c.b16 %v399, %v398
      %v412 = vpack.c.b16 %v401, %v400
      %v413 = vpack.c.b16 %v403, %v402
      %v414 = vpack.c.b16 %v405, %v404
      %v415 = vpack.c.b16 %v407, %v406
      %424 = vmatprep.subr.bf16.mxu0 0
      %425 = vmatpush1.bf16.msra.mxu0 %v415
      %426 = vmatprep.subr.bf16.mxu0 0
      %427 = vmatpush1.bf16.msra.mxu0 %v414
      %428 = vmatprep.subr.bf16.mxu0 0
      %429 = vmatpush1.bf16.msra.mxu0 %v413
      %430 = vmatprep.subr.bf16.mxu0 0
      %431 = vmatpush1.bf16.msra.mxu0 %v412
      %432 = vmatprep.subr.bf16.mxu0 0
      %433 = vmatpush1.bf16.msra.mxu0 %v411
      %434 = vmatprep.subr.bf16.mxu0 0
      %435 = vmatpush1.bf16.msra.mxu0 %v410
      %436 = vmatprep.subr.bf16.mxu0 0
      %437 = vmatpush1.bf16.msra.mxu0 %v409
      %438 = vmatprep.subr.bf16.mxu0 0
      %439 = vmatpush1.bf16.msra.mxu0 %v408
      %440 = vmatprep.subr.bf16.mxu0 0
      %441 = vmatpush2.bf16.msra.mxu0 0
      %442 = vmatprep.subr.bf16.mxu0 0
      %443 = vmatpush2.bf16.msra.mxu0 0
      %444 = vmatprep.subr.bf16.mxu0 0
      %445 = vmatpush2.bf16.msra.mxu0 0
      %446 = vmatprep.subr.bf16.mxu0 0
      %447 = vmatpush2.bf16.msra.mxu0 0
      %448 = vmatprep.subr.bf16.mxu0 0
      %449 = vmatpush2.bf16.msra.mxu0 0
      %450 = vmatprep.subr.bf16.mxu0 0
      %451 = vmatpush2.bf16.msra.mxu0 0
      %452 = vmatprep.subr.bf16.mxu0 0
      %453 = vmatpush2.bf16.msra.mxu0 0
      %454 = vmatprep.subr.bf16.mxu0 0
      %455 = vmatpush2.bf16.msra.mxu0 0
      %456 = vmatprep.mubr.bf16.mxu0 0
      %457 = vmatmul.mubr.bf16.gmra.mxu0 %v360
      %v458 = vpop.f32.mrf.mxu0
      %v459 = vadd.f32 0.0, %v458
      %v460 = vpop.f32.mrf.mxu0
      %v461 = vpop.f32.mrf.mxu0
      %v462 = vadd.f32 0.0, %v461
      %v463 = vpop.f32.mrf.mxu0
      %464 = vmatprep.mubr.bf16.mxu0 0
      %465 = vmatmul.mubr.bf16.gmra.mxu0 %v361
      %v466 = vpop.f32.mrf.mxu0
      %v467 = vadd.f32 0.0, %v466
      %v468 = vpop.f32.mrf.mxu0
      %v469 = vpop.f32.mrf.mxu0
      %v470 = vadd.f32 0.0, %v469
      %v471 = vpop.f32.mrf.mxu0
      %472 = vmatprep.mubr.bf16.mxu0 0
      %473 = vmatmul.mubr.bf16.gmra.mxu0 %v362
      %v474 = vpop.f32.mrf.mxu0
      %v475 = vadd.f32 0.0, %v474
      %v476 = vpop.f32.mrf.mxu0
      %v477 = vpop.f32.mrf.mxu0
      %v478 = vadd.f32 0.0, %v477
      %v479 = vpop.f32.mrf.mxu0
      %480 = vmatprep.mubr.bf16.mxu0 0
      %481 = vmatmul.mubr.bf16.gmra.mxu0 %v363
      %v482 = vpop.f32.mrf.mxu0
      %v483 = vadd.f32 0.0, %v482
      %v484 = vpop.f32.mrf.mxu0
      %v485 = vpop.f32.mrf.mxu0
      %v486 = vadd.f32 0.0, %v485
      %v487 = vpop.f32.mrf.mxu0
      %488 = vmatprep.mubr.bf16.mxu0 0
      %489 = vmatmul.mubr.bf16.gmra.mxu0 %v364
      %v490 = vpop.f32.mrf.mxu0
      %v491 = vadd.f32 0.0, %v490
      %v492 = vpop.f32.mrf.mxu0
      %v493 = vpop.f32.mrf.mxu0
      %v494 = vadd.f32 0.0, %v493
      %v495 = vpop.f32.mrf.mxu0
      %496 = vmatprep.mubr.bf16.mxu0 0
      %497 = vmatmul.mubr.bf16.gmra.mxu0 %v365
      %v498 = vpop.f32.mrf.mxu0
      %v499 = vadd.f32 0.0, %v498
      %v500 = vpop.f32.mrf.mxu0
      %v501 = vpop.f32.mrf.mxu0
      %v502 = vadd.f32 0.0, %v501
      %v503 = vpop.f32.mrf.mxu0
      %504 = vmatprep.mubr.bf16.mxu0 0
      %505 = vmatmul.mubr.bf16.gmra.mxu0 %v366
      %v506 = vpop.f32.mrf.mxu0
      %v507 = vadd.f32 0.0, %v506
      %v508 = vpop.f32.mrf.mxu0
      %v509 = vpop.f32.mrf.mxu0
      %v510 = vadd.f32 0.0, %v509
      %v511 = vpop.f32.mrf.mxu0
      %512 = vmatprep.mubr.bf16.mxu0 0
      %513 = vmatmul.mubr.bf16.gmra.mxu0 %v367
      %v514 = vpop.f32.mrf.mxu0
      %v515 = vadd.f32 0.0, %v514
      %v516 = vpop.f32.mrf.mxu0
      %v517 = vpop.f32.mrf.mxu0
      %v518 = vadd.f32 0.0, %v517
      %v519 = vpop.f32.mrf.mxu0
      %520 = vdwg.mxu0
      %v521 = vadd.f32 %v280, %v459
      %v522 = vadd.f32 %v281, %v462
      %v523 = vadd.f32 %v282, %v467
      %v524 = vadd.f32 %v283, %v470
      %v525 = vadd.f32 %v284, %v475
      %v526 = vadd.f32 %v285, %v478
      %v527 = vadd.f32 %v286, %v483
      %v528 = vadd.f32 %v287, %v486
      %v529 = vadd.f32 %v288, %v491
      %v530 = vadd.f32 %v289, %v494
      %v531 = vadd.f32 %v290, %v499
      %v532 = vadd.f32 %v291, %v502
      %v533 = vadd.f32 %v292, %v507
      %v534 = vadd.f32 %v293, %v510
      %v535 = vadd.f32 %v294, %v515
      %v536 = vadd.f32 %v295, %v518
      %537 = vst [vmem:[#allocation2] sm:$0xff] %v521
      %538 = vst [vmem:[#allocation2 + $0x8] sm:$0xff] %v522
      %539 = vst [vmem:[#allocation2 + $0x10] sm:$0xff] %v523
      %540 = vst [vmem:[#allocation2 + $0x18] sm:$0xff] %v524
      %541 = vst [vmem:[#allocation2 + $0x20] sm:$0xff] %v525
      %542 = vst [vmem:[#allocation2 + $0x28] sm:$0xff] %v526
      %543 = vst [vmem:[#allocation2 + $0x30] sm:$0xff] %v527
      %544 = vst [vmem:[#allocation2 + $0x38] sm:$0xff] %v528
      %545 = vst [vmem:[#allocation2 + $0x40] sm:$0xff] %v529
      %546 = vst [vmem:[#allocation2 + $0x48] sm:$0xff] %v530
      %547 = vst [vmem:[#allocation2 + $0x50] sm:$0xff] %v531
      %548 = vst [vmem:[#allocation2 + $0x58] sm:$0xff] %v532
      %549 = vst [vmem:[#allocation2 + $0x60] sm:$0xff] %v533
      %550 = vst [vmem:[#allocation2 + $0x68] sm:$0xff] %v534
      %551 = vst [vmem:[#allocation2 + $0x70] sm:$0xff] %v535
      %552 = vst [vmem:[#allocation2 + $0x78] sm:$0xff] %v536
      // Predicated region
      $region37: #{residual_block_forward.3} parent=31 // pred_check
        %p553 = pneg %p260
      $region38: #{residual_block_forward.3} parent=31 // pred_check_branch
        %555 = sbr.rel (%p553) target = $region40
      $region39: #{residual_block_forward.3} parent=31 // pred_region
        %v556 = vld [vmem:[#allocation2] sm:$0xff]
        %v557 = vld [vmem:[#allocation2 + $0x8] sm:$0xff]
        %v558 = vld [vmem:[#allocation2 + $0x10] sm:$0xff]
        %v559 = vld [vmem:[#allocation2 + $0x18] sm:$0xff]
        %v560 = vld [vmem:[#allocation2 + $0x20] sm:$0xff]
        %v561 = vld [vmem:[#allocation2 + $0x28] sm:$0xff]
        %v562 = vld [vmem:[#allocation2 + $0x30] sm:$0xff]
        %v563 = vld [vmem:[#allocation2 + $0x38] sm:$0xff]
        %v564 = vld [vmem:[#allocation2 + $0x40] sm:$0xff]
        %v565 = vld [vmem:[#allocation2 + $0x48] sm:$0xff]
        %v566 = vld [vmem:[#allocation2 + $0x50] sm:$0xff]
        %v567 = vld [vmem:[#allocation2 + $0x58] sm:$0xff]
        %v568 = vld [vmem:[#allocation2 + $0x60] sm:$0xff]
        %v569 = vld [vmem:[#allocation2 + $0x68] sm:$0xff]
        %v570 = vld [vmem:[#allocation2 + $0x70] sm:$0xff]
        %v571 = vld [vmem:[#allocation2 + $0x78] sm:$0xff]
        %v572 = vld [vmem:[%s249] sm:$0x1]
        %v574 = vlaneseq
        %v575 = vshrl.u32 %v574, 7
        %v576 = vsub.s32 0, %v575
        %v577 = vrot.slane %v572, %v576
        %v579 = vadd.f32 %v556, %v577
        %v580 = vadd.f32 %v557, %v577
        %v581 = vadd.f32 %v558, %v577
        %v582 = vadd.f32 %v559, %v577
        %v583 = vadd.f32 %v560, %v577
        %v584 = vadd.f32 %v561, %v577
        %v585 = vadd.f32 %v562, %v577
        %v586 = vadd.f32 %v563, %v577
        %v587 = vadd.f32 %v564, %v577
        %v588 = vadd.f32 %v565, %v577
        %v589 = vadd.f32 %v566, %v577
        %v590 = vadd.f32 %v567, %v577
        %v591 = vadd.f32 %v568, %v577
        %v592 = vadd.f32 %v569, %v577
        %v593 = vadd.f32 %v570, %v577
        %v594 = vadd.f32 %v571, %v577
        %v595 = vmax.f32 %v579, 0.0
        %v596 = vmax.f32 %v580, 0.0
        %v597 = vmax.f32 %v581, 0.0
        %v598 = vmax.f32 %v582, 0.0
        %v599 = vmax.f32 %v583, 0.0
        %v600 = vmax.f32 %v584, 0.0
        %v601 = vmax.f32 %v585, 0.0
        %v602 = vmax.f32 %v586, 0.0
        %v603 = vmax.f32 %v587, 0.0
        %v604 = vmax.f32 %v588, 0.0
        %v605 = vmax.f32 %v589, 0.0
        %v606 = vmax.f32 %v590, 0.0
        %v607 = vmax.f32 %v591, 0.0
        %v608 = vmax.f32 %v592, 0.0
        %v609 = vmax.f32 %v593, 0.0
        %v610 = vmax.f32 %v594, 0.0
        %v611 = vpack.c.bf16 %v596, %v595
        %v612 = vpack.c.bf16 %v598, %v597
        %v613 = vpack.c.bf16 %v600, %v599
        %v614 = vpack.c.bf16 %v602, %v601
        %v615 = vpack.c.bf16 %v604, %v603
        %v616 = vpack.c.bf16 %v606, %v605
        %v617 = vpack.c.bf16 %v608, %v607
        %v618 = vpack.c.bf16 %v610, %v609
        %v627 = vunpack.c.l.b16 %v611
        %v628 = vunpack.c.h.b16 %v611
        %v629 = vunpack.c.l.b16 %v612
        %v630 = vunpack.c.h.b16 %v612
        %v631 = vunpack.c.l.b16 %v613
        %v632 = vunpack.c.h.b16 %v613
        %v633 = vunpack.c.l.b16 %v614
        %v634 = vunpack.c.h.b16 %v614
        %v635 = vunpack.c.l.b16 %v615
        %v636 = vunpack.c.h.b16 %v615
        %v637 = vunpack.c.l.b16 %v616
        %v638 = vunpack.c.h.b16 %v616
        %v639 = vunpack.c.l.b16 %v617
        %v640 = vunpack.c.h.b16 %v617
        %v641 = vunpack.c.l.b16 %v618
        %v642 = vunpack.c.h.b16 %v618
        %v643 = vpack.c.b16 %v627, %v627
        %v644 = vpack.c.b16 %v628, %v628
        %v645 = vpack.c.b16 %v629, %v629
        %v646 = vpack.c.b16 %v630, %v630
        %v647 = vpack.c.b16 %v631, %v631
        %v648 = vpack.c.b16 %v632, %v632
        %v649 = vpack.c.b16 %v633, %v633
        %v650 = vpack.c.b16 %v634, %v634
        %v651 = vpack.c.b16 %v635, %v635
        %v652 = vpack.c.b16 %v636, %v636
        %v653 = vpack.c.b16 %v637, %v637
        %v654 = vpack.c.b16 %v638, %v638
        %v655 = vpack.c.b16 %v639, %v639
        %v656 = vpack.c.b16 %v640, %v640
        %v657 = vpack.c.b16 %v641, %v641
        %v658 = vpack.c.b16 %v642, %v642
        %675 = vst [vmem:[%s257] sm:$0xf] %v643
        %676 = vst [vmem:[%s257 + $0x4] sm:$0xf] %v644
        %677 = vst [vmem:[%s257 + $0x8] sm:$0xf] %v645
        %678 = vst [vmem:[%s257 + $0xc] sm:$0xf] %v646
        %679 = vst [vmem:[%s257 + $0x10] sm:$0xf] %v647
        %680 = vst [vmem:[%s257 + $0x14] sm:$0xf] %v648
        %681 = vst [vmem:[%s257 + $0x18] sm:$0xf] %v649
        %682 = vst [vmem:[%s257 + $0x1c] sm:$0xf] %v650
        %683 = vst [vmem:[%s257 + $0x20] sm:$0xf] %v651
        %684 = vst [vmem:[%s257 + $0x24] sm:$0xf] %v652
        %685 = vst [vmem:[%s257 + $0x28] sm:$0xf] %v653
        %686 = vst [vmem:[%s257 + $0x2c] sm:$0xf] %v654
        %687 = vst [vmem:[%s257 + $0x30] sm:$0xf] %v655
        %688 = vst [vmem:[%s257 + $0x34] sm:$0xf] %v656
        %689 = vst [vmem:[%s257 + $0x38] sm:$0xf] %v657
        %690 = vst [vmem:[%s257 + $0x3c] sm:$0xf] %v658
      $region40: #{residual_block_forward.3} parent=31 // pred_fallthru
        _
      %s691 = smul.u32 16, %s19
      %p692 = scmp.lt.s32.totalorder %s691, 63
      %s693 = scalar_select %p692, %s691, 63
      %p694 = scmp.lt.s32.totalorder %s20, 0
      %s695 = scalar_select %p694, %s20, 0
      %s696 = sadd.s32 %s695, %s693
      %s697 = smul.addr %s696, 4
      %s698 = scalar_lea.vmem %s3, %s697
      // Predicated region
      $region41: #{residual_block_forward.3} parent=31 // pred_check
        %p699 = pneg %p135
      $region42: #{residual_block_forward.3} parent=31 // pred_check_branch
        %701 = sbr.rel (%p699) target = $region44
      $region43: #{residual_block_forward.3} parent=31 // pred_region
        %s702 = smul.u32 16, %s19
      $region44: #{residual_block_forward.3} parent=31 // pred_fallthru
        _
    $region32: #{residual_block_forward.3} parent=5 // pred_fallthru
      _
    %p703 = scmp.le.s32.totalorder 2, %s9
    // Predicated region
    $region45: #{residual_block_forward.3} parent=5 // pred_check
      %p704 = pneg %p703
    $region46: #{residual_block_forward.3} parent=5 // pred_check_branch
      %706 = sbr.rel (%p704) target = $region48
    $region47: #{residual_block_forward.3} parent=5 // pred_region
      %s707 = ssub.s32 %s9, 2
      // Predicated region
      $region49: #{residual_block_forward.3} parent=47 // pred_check
        %p708 = pneg %p141
      $region50: #{residual_block_forward.3} parent=47 // pred_check_branch
        %710 = sbr.rel (%p708) target = $region52
      $region51: #{residual_block_forward.3} parent=47 // pred_region
        %s711 = smul.u32 16, %s22
        %p712 = scmp.lt.s32.totalorder %s711, 63
        %s713 = scalar_select %p712, %s711, 63
        %p714 = scmp.lt.s32.totalorder %s23, 0
        %s715 = scalar_select %p714, %s23, 0
        %s716 = sadd.s32 %s715, %s713
        %s717 = smul.addr %s716, 4
        %s718 = scalar_lea.vmem %s3, %s717
      $region52: #{residual_block_forward.3} parent=47 // pred_fallthru
        _
    $region48: #{residual_block_forward.3} parent=5 // pred_fallthru
      _
  $region6: #{residual_block_forward.3} parent=0 // loop_footer
    %s13 = sadd.s32 1, %s9
  $region7: #{residual_block_forward.3} parent=0 // loop_footer_branch
    %8 = sbr.rel target = $region3
  $region8: #{residual_block_forward.3} parent=0 // loop_exit
    _

// kernel: residual_block_forward.5
$region0: #{residual_block_forward.5}
  #allocation0 [shape = 'u32[]', space=smem, size = 0x4, offset = 0x4, fixed_abs, tag = 'smem constant byte address 0x4 - core index']
  #allocation1 [shape = 'u32[144,128]{1,0:T(1,128)}', space=vmem, size = 0x12000, scoped, tag = 'internal scratch']
  #allocation2 [shape = 'f32[128,128]{1,0:T(8,128)}', space=vmem, size = 0x10000, scoped, tag = 'scratch operand']
  %s0 = inlined_call_operand.vmem [shape: bf16[512,128], index: 0, kind: input, shape index: {}]
  %s1 = inlined_call_operand.vmem [shape: bf16[128,128], index: 1, kind: input, shape index: {}]
  %s2 = inlined_call_operand.vmem [shape: f32[1,128], index: 2, kind: input, shape index: {}]
  %s3 = inlined_call_operand.vmem [shape: bf16[512,128], index: 3, kind: input, shape index: {}]
  %s4 = inlined_call_operand.hbm [shape: f32[512,128], index: 4, kind: output, shape index: {}]
  %s5 = sld [smem:[#allocation0]]
  $region57: #{residual_block_forward.5} parent=0
    _
  %s7 = ssub.s32 1, %s5
  %s8 = scalar_select 0, %s7, %s5
  $region1: #{residual_block_forward.5} parent=0
    #allocation3 [shape = 'u8[131072]{0}', space=vmem, size = 0x20000, scoped, tag = 'output window, operand 0']
    #allocation4 [shape = 's32[2]{0}', space=sflag, size = 0x8, scoped, tag = 'scoped memory for residual_block_forward.5']
    %9 = vsyncpa [#allocation4], 0
    %s10 = scalar_lea.sflag [#allocation4], 1
    %11 = vsyncpa %s10, 0
    loop: start=0, step=1, limit=6
    $region2: #{residual_block_forward.5} parent=1 // loop_pre_header
      _
    $region3: #{residual_block_forward.5} parent=1 // loop_header
      %s13 = sphi 0, %s17
      %p14 = scmp.ge.s32.totalorder %s13, 6
      %s20 = sphi 0, %s39
      %s21 = sphi 0, %s35
      %s22 = sphi 0, %s31
      %s23 = sphi 0, %s20
      %s24 = sphi 0, %s21
      %s25 = sphi 0, %s22
      %s26 = sphi 0, %s23
      %s27 = sphi 0, %s24
      %s28 = sphi 0, %s25
      %s44 = sphi 0, %s46
      %s47 = sphi 0, %s44
      %s48 = sphi 0, %s47
      %s64 = sphi 0, %s48
      %s72 = sphi 0, %s74
      %s75 = sphi 0, %s72
      %s76 = sphi 0, %s75
      %s92 = sphi 0, %s76
      %s98 = sphi 0, %s100
      %s101 = sphi 0, %s98
      %s102 = sphi 0, %s101
      %s118 = sphi 0, %s102
      %s126 = sphi 0, %s128
      %s129 = sphi 0, %s126
      %s130 = sphi 0, %s129
      %s146 = sphi 0, %s130
      %s154 = sphi 0, %s156
      %s157 = sphi 0, %s154
      %s158 = sphi 0, %s157
      %s174 = sphi 0, %s158
    $region4: #{residual_block_forward.5} parent=1 // loop_header_branch
      %16 = sbr.rel (%p14) target = $region8
    $region5: #{residual_block_forward.5} parent=1 // loop_body
      %s18 = ssub.s32 %s13, 1
      %s19 = ssub.s32 %s13, 2
      %s29 = sadd.s32 1, %s22
      %p30 = scmp.ge.s32.totalorder %s29, 1
      %s31 = scalar_select %p30, 0, %s29
      %s32 = sadd.s32 1, %s21
      %s33 = scalar_select %p30, %s32, %s21
      %p34 = scmp.ge.s32.totalorder %s33, 1
      %s35 = scalar_select %p34, 0, %s33
      %s36 = sadd.s32 1, %s20
      %s37 = scalar_select %p34, %s36, %s20
      %p38 = scmp.ge.s32.totalorder %s37, 4
      %s39 = scalar_select %p38, 0, %s37
      %s40 = ssub.s32 %s20, %s39
      %s41 = ssub.s32 %s22, %s31
      %s42 = sor.u32 %s40, %s41
      %p43 = scmp.eq.s32.totalorder %s42, 0
      %s45 = sadd.s32 %s44, 1
      %s46 = scalar_select %p43, %s44, %s45
      %p49 = pneg %p43
      %p50 = scmp.eq.s32.totalorder %s13, 3
      %p51 = por %p49, %p50
      %p52 = scmp.ne.s32.totalorder %s44, %s47
      %p53 = scmp.eq.s32.totalorder %s13, 0
      %p54 = por %p52, %p53
      %p55 = scmp.ne.s32.totalorder %s44, %s47
      %p56 = scmp.eq.s32.totalorder %s18, 3
      %p57 = por %p55, %p56
      %p58 = scmp.ne.s32.totalorder %s47, %s48
      %p59 = scmp.eq.s32.totalorder %s18, 0
      %p60 = por %p58, %p59
      %p61 = scmp.ne.s32.totalorder %s47, %s48
      %p62 = scmp.eq.s32.totalorder %s19, 3
      %p63 = por %p61, %p62
      %p65 = scmp.ne.s32.totalorder %s48, %s64
      %p66 = scmp.eq.s32.totalorder %s19, 0
      %p67 = por %p65, %p66
      %s68 = ssub.s32 %s22, %s31
      %s69 = ssub.s32 %s21, %s35
      %s70 = sor.u32 %s68, %s69
      %p71 = scmp.eq.s32.totalorder %s70, 0
      %s73 = sadd.s32 %s72, 1
      %s74 = scalar_select %p71, %s72, %s73
      %p77 = pneg %p71
      %p78 = scmp.eq.s32.totalorder %s13, 3
      %p79 = por %p77, %p78
      %p80 = scmp.ne.s32.totalorder %s72, %s75
      %p81 = scmp.eq.s32.totalorder %s13, 0
      %p82 = por %p80, %p81
      %p83 = scmp.ne.s32.totalorder %s72, %s75
      %p84 = scmp.eq.s32.totalorder %s18, 3
      %p85 = por %p83, %p84
      %p86 = scmp.ne.s32.totalorder %s75, %s76
      %p87 = scmp.eq.s32.totalorder %s18, 0
      %p88 = por %p86, %p87
      %p89 = scmp.ne.s32.totalorder %s75, %s76
      %p90 = scmp.eq.s32.totalorder %s19, 3
      %p91 = por %p89, %p90
      %p93 = scmp.ne.s32.totalorder %s76, %s92
      %p94 = scmp.eq.s32.totalorder %s19, 0
      %p95 = por %p93, %p94
      %s96 = ssub.s32 %s21, %s35
      %p97 = scmp.eq.s32.totalorder %s96, 0
      %s99 = sadd.s32 %s98, 1
      %s100 = scalar_select %p97, %s98, %s99
      %p103 = pneg %p97
      %p104 = scmp.eq.s32.totalorder %s13, 3
      %p105 = por %p103, %p104
      %p106 = scmp.ne.s32.totalorder %s98, %s101
      %p107 = scmp.eq.s32.totalorder %s13, 0
      %p108 = por %p106, %p107
      %p109 = scmp.ne.s32.totalorder %s98, %s101
      %p110 = scmp.eq.s32.totalorder %s18, 3
      %p111 = por %p109, %p110
      %p112 = scmp.ne.s32.totalorder %s101, %s102
      %p113 = scmp.eq.s32.totalorder %s18, 0
      %p114 = por %p112, %p113
      %p115 = scmp.ne.s32.totalorder %s101, %s102
      %p116 = scmp.eq.s32.totalorder %s19, 3
      %p117 = por %p115, %p116
      %p119 = scmp.ne.s32.totalorder %s102, %s118
      %p120 = scmp.eq.s32.totalorder %s19, 0
      %p121 = por %p119, %p120
      %s122 = ssub.s32 %s20, %s39
      %s123 = ssub.s32 %s21, %s35
      %s124 = sor.u32 %s122, %s123
      %p125 = scmp.eq.s32.totalorder %s124, 0
      %s127 = sadd.s32 %s126, 1
      %s128 = scalar_select %p125, %s126, %s127
      %p131 = pneg %p125
      %p132 = scmp.eq.s32.totalorder %s13, 3
      %p133 = por %p131, %p132
      %p134 = scmp.ne.s32.totalorder %s126, %s129
      %p135 = scmp.eq.s32.totalorder %s13, 0
      %p136 = por %p134, %p135
      %p137 = scmp.ne.s32.totalorder %s126, %s129
      %p138 = scmp.eq.s32.totalorder %s18, 3
      %p139 = por %p137, %p138
      %p140 = scmp.ne.s32.totalorder %s129, %s130
      %p141 = scmp.eq.s32.totalorder %s18, 0
      %p142 = por %p140, %p141
      %p143 = scmp.ne.s32.totalorder %s129, %s130
      %p144 = scmp.eq.s32.totalorder %s19, 3
      %p145 = por %p143, %p144
      %p147 = scmp.ne.s32.totalorder %s130, %s146
      %p148 = scmp.eq.s32.totalorder %s19, 0
      %p149 = por %p147, %p148
      %s150 = ssub.s32 %s20, %s39
      %s151 = ssub.s32 %s21, %s35
      %s152 = sor.u32 %s150, %s151
      %p153 = scmp.eq.s32.totalorder %s152, 0
      %s155 = sadd.s32 %s154, 1
      %s156 = scalar_select %p153, %s154, %s155
      %p159 = pneg %p153
      %p160 = scmp.eq.s32.totalorder %s13, 3
      %p161 = por %p159, %p160
      %p162 = scmp.ne.s32.totalorder %s154, %s157
      %p163 = scmp.eq.s32.totalorder %s13, 0
      %p164 = por %p162, %p163
      %p165 = scmp.ne.s32.totalorder %s154, %s157
      %p166 = scmp.eq.s32.totalorder %s18, 3
      %p167 = por %p165, %p166
      %p168 = scmp.ne.s32.totalorder %s157, %s158
      %p169 = scmp.eq.s32.totalorder %s18, 0
      %p170 = por %p168, %p169
      %p171 = scmp.ne.s32.totalorder %s157, %s158
      %p172 = scmp.eq.s32.totalorder %s19, 3
      %p173 = por %p171, %p172
      %p175 = scmp.ne.s32.totalorder %s158, %s174
      %p176 = scmp.eq.s32.totalorder %s19, 0
      %p177 = por %p175, %p176
      %p178 = scmp.le.s32.totalorder 1, %s13
      %p179 = scmp.lt.s32.totalorder %s13, 5
      %p180 = pnand %p178, %p179
      %p181 = pneg %p180
      // Predicated region
      $region9: #{residual_block_forward.5} parent=5 // pred_check
        _
      $region10: #{residual_block_forward.5} parent=5 // pred_check_branch
        %183 = sbr.rel (%p180) target = $region12
      $region11: #{residual_block_forward.5} parent=5 // pred_region
        %s184 = ssub.s32 %s13, 1
        // Predicated region
        $region13: #{residual_block_forward.5} parent=11 // pred_check
          %p185 = pneg %p88
        $region14: #{residual_block_forward.5} parent=11 // pred_check_branch
          %187 = sbr.rel (%p185) target = $region16
        $region15: #{residual_block_forward.5} parent=11 // pred_region
          %s188 = smul.u32 16, %s25
          %p189 = scmp.lt.s32.totalorder %s188, 15
          %s190 = scalar_select %p189, %s188, 15
          %p191 = scmp.lt.s32.totalorder %s24, 0
          %s192 = scalar_select %p191, %s24, 0
          %s193 = sadd.s32 %s192, %s190
          %s194 = smul.addr %s193, 4
          %s195 = scalar_lea.vmem %s1, %s194
          %s196 = smul.u32 16, %s25
        $region16: #{residual_block_forward.5} parent=11 // pred_fallthru
          _
        // Predicated region
        $region17: #{residual_block_forward.5} parent=11 // pred_check
          %p197 = pneg %p114
        $region18: #{residual_block_forward.5} parent=11 // pred_check_branch
          %199 = sbr.rel (%p197) target = $region20
        $region19: #{residual_block_forward.5} parent=11 // pred_region
          %p200 = scmp.lt.s32.totalorder %s24, 0
          %s201 = scalar_select %p200, %s24, 0
          %s202 = scalar_lea.vmem %s2, %s201
        $region20: #{residual_block_forward.5} parent=11 // pred_fallthru
          _
      $region12: #{residual_block_forward.5} parent=5 // pred_fallthru
        _
      %p203 = scmp.lt.s32.totalorder %s13, 4
      // Predicated region
      $region21: #{residual_block_forward.5} parent=5 // pred_check
        %p204 = pneg %p203
      $region22: #{residual_block_forward.5} parent=5 // pred_check_branch
        %206 = sbr.rel (%p204) target = $region24
      $region23: #{residual_block_forward.5} parent=5 // pred_region
        // Predicated region
        $region25: #{residual_block_forward.5} parent=23 // pred_check
          %p207 = pneg %p54
        $region26: #{residual_block_forward.5} parent=23 // pred_check_branch
          %209 = sbr.rel (%p207) target = $region28
        $region27: #{residual_block_forward.5} parent=23 // pred_region
          %s210 = smul.u32 16, %s20
          %p211 = scmp.lt.s32.totalorder %s210, 63
          %s212 = scalar_select %p211, %s210, 63
          %p213 = scmp.lt.s32.totalorder %s22, 0
          %s214 = scalar_select %p213, %s22, 0
          %s215 = sadd.s32 %s214, %s212
          %s216 = smul.addr %s215, 4
          %s217 = scalar_lea.vmem %s0, %s216
          %s218 = smul.u32 16, %s20
        $region28: #{residual_block_forward.5} parent=23 // pred_fallthru
          _
        // Predicated region
        $region29: #{residual_block_forward.5} parent=23 // pred_check
          %p219 = pneg %p136
        $region30: #{residual_block_forward.5} parent=23 // pred_check_branch
          %221 = sbr.rel (%p219) target = $region32
        $region31: #{residual_block_forward.5} parent=23 // pred_region
          %s222 = smul.u32 16, %s20
          %p223 = scmp.lt.s32.totalorder %s222, 63
          %s224 = scalar_select %p223, %s222, 63
          %p225 = scmp.lt.s32.totalorder %s21, 0
          %s226 = scalar_select %p225, %s21, 0
          %s227 = sadd.s32 %s226, %s224
          %s228 = smul.addr %s227, 4
          %s229 = scalar_lea.vmem %s3, %s228
          %s230 = smul.u32 16, %s20
        $region32: #{residual_block_forward.5} parent=23 // pred_fallthru
          _
      $region24: #{residual_block_forward.5} parent=5 // pred_fallthru
        _
      %p231 = scmp.le.s32.totalorder 1, %s13
      %p232 = scmp.lt.s32.totalorder %s13, 5
      %p233 = pnand %p231, %p232
      %p234 = pneg %p233
      // Predicated region
      $region33: #{residual_block_forward.5} parent=5 // pred_check
        _
      $region34: #{residual_block_forward.5} parent=5 // pred_check_branch
        %236 = sbr.rel (%p233) target = $region36
      $region35: #{residual_block_forward.5} parent=5 // pred_region
        %s237 = ssub.s32 %s13, 1
        %s238 = smul.u32 16, %s23
        %p239 = scmp.lt.s32.totalorder %s238, 63
        %s240 = scalar_select %p239, %s238, 63
        %p241 = scmp.lt.s32.totalorder %s25, 0
        %s242 = scalar_select %p241, %s25, 0
        %s243 = sadd.s32 %s242, %s240
        %s244 = smul.addr %s243, 4
        %s245 = scalar_lea.vmem %s0, %s244
        %p246 = pneg %p60
        %p247 = pneg %p57
        %s248 = smul.u32 16, %s25
        %p249 = scmp.lt.s32.totalorder %s248, 15
        %s250 = scalar_select %p249, %s248, 15
        %p251 = scmp.lt.s32.totalorder %s24, 0
        %s252 = scalar_select %p251, %s24, 0
        %s253 = sadd.s32 %s252, %s250
        %s254 = smul.addr %s253, 4
        %s255 = scalar_lea.vmem %s1, %s254
        %p256 = pneg %p88
        %p257 = pneg %p85
        %p258 = scmp.lt.s32.totalorder %s24, 0
        %s259 = scalar_select %p258, %s24, 0
        %s260 = scalar_lea.vmem %s2, %s259
        %p261 = pneg %p114
        %p262 = pneg %p111
        %s263 = smul.u32 16, %s23
        %p264 = scmp.lt.s32.totalorder %s263, 63
        %s265 = scalar_select %p264, %s263, 63
        %p266 = scmp.lt.s32.totalorder %s24, 0
        %s267 = scalar_select %p266, %s24, 0
        %s268 = sadd.s32 %s267, %s265
        %s269 = smul.addr %s268, 4
        %s270 = scalar_lea.vmem %s3, %s269
        %p271 = pneg %p142
        %p272 = pneg %p139
        %p273 = pneg %p170
        %p274 = pneg %p167
        %s275 = sand.u32 %s157, 1
        %s276 = scalar_lea.sflag [#allocation4], %s275
        %s277 = sand.u32 %s157, 1
        %s278 = smul.addr %s277, 128
        %s279 = scalar_lea.vmem [#allocation3], %s278
        %s280 = smul.u32 16, %s23
        %p281 = scmp.lt.s32.totalorder %s280, 63
        %s282 = scalar_select %p281, %s280, 63
        %p283 = scmp.lt.s32.totalorder %s25, 0
        %s284 = scalar_select %p283, %s25, 0
        %s285 = sadd.s32 %s284, %s282
        %s286 = smul.addr %s285, 4
        %s287 = scalar_lea.vmem %s0, %s286
        %s288 = smul.u32 16, %s23
        %s289 = smul.u32 16, %s25
        %p290 = scmp.lt.s32.totalorder %s289, 15
        %s291 = scalar_select %p290, %s289, 15
        %p292 = scmp.lt.s32.totalorder %s24, 0
        %s293 = scalar_select %p292, %s24, 0
        %s294 = sadd.s32 %s293, %s291
        %s295 = smul.addr %s294, 4
        %s296 = scalar_lea.vmem %s1, %s295
        %s297 = smul.u32 16, %s25
        %p298 = scmp.lt.s32.totalorder %s24, 0
        %s299 = scalar_select %p298, %s24, 0
        %s300 = scalar_lea.vmem %s2, %s299
        %s301 = smul.u32 16, %s23
        %p302 = scmp.lt.s32.totalorder %s301, 63
        %s303 = scalar_select %p302, %s301, 63
        %p304 = scmp.lt.s32.totalorder %s24, 0
        %s305 = scalar_select %p304, %s24, 0
        %s306 = sadd.s32 %s305, %s303
        %s307 = smul.addr %s306, 4
        %s308 = scalar_lea.vmem %s3, %s307
        %s309 = smul.u32 16, %s23
        %s310 = smul.u32 16, %s23
        %p312 = scmp.eq.s32.totalorder %s25, 0
        // Predicated region
        $region37: #{residual_block_forward.5} parent=35 // pred_check
          %p313 = pneg %p312
        $region38: #{residual_block_forward.5} parent=35 // pred_check_branch
          %315 = sbr.rel (%p313) target = $region40
        $region39: #{residual_block_forward.5} parent=35 // pred_region
          %316 = vst [vmem:[#allocation2] sm:$0xff] 0.0
          %317 = vst [vmem:[#allocation2 + $0x8] sm:$0xff] 0.0
          %318 = vst [vmem:[#allocation2 + $0x10] sm:$0xff] 0.0
          %319 = vst [vmem:[#allocation2 + $0x18] sm:$0xff] 0.0
          %320 = vst [vmem:[#allocation2 + $0x20] sm:$0xff] 0.0
          %321 = vst [vmem:[#allocation2 + $0x28] sm:$0xff] 0.0
          %322 = vst [vmem:[#allocation2 + $0x30] sm:$0xff] 0.0
          %323 = vst [vmem:[#allocation2 + $0x38] sm:$0xff] 0.0
          %324 = vst [vmem:[#allocation2 + $0x40] sm:$0xff] 0.0
          %325 = vst [vmem:[#allocation2 + $0x48] sm:$0xff] 0.0
          %326 = vst [vmem:[#allocation2 + $0x50] sm:$0xff] 0.0
          %327 = vst [vmem:[#allocation2 + $0x58] sm:$0xff] 0.0
          %328 = vst [vmem:[#allocation2 + $0x60] sm:$0xff] 0.0
          %329 = vst [vmem:[#allocation2 + $0x68] sm:$0xff] 0.0
          %330 = vst [vmem:[#allocation2 + $0x70] sm:$0xff] 0.0
          %331 = vst [vmem:[#allocation2 + $0x78] sm:$0xff] 0.0
        $region40: #{residual_block_forward.5} parent=35 // pred_fallthru
          _
        %v332 = vld [vmem:[#allocation2] sm:$0xff]
        %v333 = vld [vmem:[#allocation2 + $0x8] sm:$0xff]
        %v334 = vld [vmem:[#allocation2 + $0x10] sm:$0xff]
        %v335 = vld [vmem:[#allocation2 + $0x18] sm:$0xff]
        %v336 = vld [vmem:[#allocation2 + $0x20] sm:$0xff]
        %v337 = vld [vmem:[#allocation2 + $0x28] sm:$0xff]
        %v338 = vld [vmem:[#allocation2 + $0x30] sm:$0xff]
        %v339 = vld [vmem:[#allocation2 + $0x38] sm:$0xff]
        %v340 = vld [vmem:[#allocation2 + $0x40] sm:$0xff]
        %v341 = vld [vmem:[#allocation2 + $0x48] sm:$0xff]
        %v342 = vld [vmem:[#allocation2 + $0x50] sm:$0xff]
        %v343 = vld [vmem:[#allocation2 + $0x58] sm:$0xff]
        %v344 = vld [vmem:[#allocation2 + $0x60] sm:$0xff]
        %v345 = vld [vmem:[#allocation2 + $0x68] sm:$0xff]
        %v346 = vld [vmem:[#allocation2 + $0x70] sm:$0xff]
        %v347 = vld [vmem:[#allocation2 + $0x78] sm:$0xff]
        %v348 = vld [vmem:[%s287] sm:$0xf]
        %v349 = vld [vmem:[%s287 + $0x4] sm:$0xf]
        %v350 = vld [vmem:[%s287 + $0x8] sm:$0xf]
        %v351 = vld [vmem:[%s287 + $0xc] sm:$0xf]
        %v352 = vld [vmem:[%s287 + $0x10] sm:$0xf]
        %v353 = vld [vmem:[%s287 + $0x14] sm:$0xf]
        %v354 = vld [vmem:[%s287 + $0x18] sm:$0xf]
        %v355 = vld [vmem:[%s287 + $0x1c] sm:$0xf]
        %v356 = vld [vmem:[%s287 + $0x20] sm:$0xf]
        %v357 = vld [vmem:[%s287 + $0x24] sm:$0xf]
        %v358 = vld [vmem:[%s287 + $0x28] sm:$0xf]
        %v359 = vld [vmem:[%s287 + $0x2c] sm:$0xf]
        %v360 = vld [vmem:[%s287 + $0x30] sm:$0xf]
        %v361 = vld [vmem:[%s287 + $0x34] sm:$0xf]
        %v362 = vld [vmem:[%s287 + $0x38] sm:$0xf]
        %v363 = vld [vmem:[%s287 + $0x3c] sm:$0xf]
        %v364 = vld [vmem:[%s296] sm:$0xf]
        %v365 = vld [vmem:[%s296 + $0x4] sm:$0xf]
        %v366 = vld [vmem:[%s296 + $0x8] sm:$0xf]
        %v367 = vld [vmem:[%s296 + $0xc] sm:$0xf]
        %v368 = vld [vmem:[%s296 + $0x10] sm:$0xf]
        %v369 = vld [vmem:[%s296 + $0x14] sm:$0xf]
        %v370 = vld [vmem:[%s296 + $0x18] sm:$0xf]
        %v371 = vld [vmem:[%s296 + $0x1c] sm:$0xf]
        %v372 = vld [vmem:[%s296 + $0x20] sm:$0xf]
        %v373 = vld [vmem:[%s296 + $0x24] sm:$0xf]
        %v374 = vld [vmem:[%s296 + $0x28] sm:$0xf]
        %v375 = vld [vmem:[%s296 + $0x2c] sm:$0xf]
        %v376 = vld [vmem:[%s296 + $0x30] sm:$0xf]
        %v377 = vld [vmem:[%s296 + $0x34] sm:$0xf]
        %v378 = vld [vmem:[%s296 + $0x38] sm:$0xf]
        %v379 = vld [vmem:[%s296 + $0x3c] sm:$0xf]
        %v396 = vunpack.c.l.b16 %v348
        %v397 = vunpack.c.l.b16 %v349
        %v398 = vunpack.c.l.b16 %v350
        %v399 = vunpack.c.l.b16 %v351
        %v400 = vunpack.c.l.b16 %v352
        %v401 = vunpack.c.l.b16 %v353
        %v402 = vunpack.c.l.b16 %v354
        %v403 = vunpack.c.l.b16 %v355
        %v404 = vunpack.c.l.b16 %v356
        %v405 = vunpack.c.l.b16 %v357
        %v406 = vunpack.c.l.b16 %v358
        %v407 = vunpack.c.l.b16 %v359
        %v408 = vunpack.c.l.b16 %v360
        %v409 = vunpack.c.l.b16 %v361
        %v410 = vunpack.c.l.b16 %v362
        %v411 = vunpack.c.l.b16 %v363
        %v412 = vpack.c.b16 %v397, %v396
        %v413 = vpack.c.b16 %v399, %v398
        %v414 = vpack.c.b16 %v401, %v400
        %v415 = vpack.c.b16 %v403, %v402
        %v416 = vpack.c.b16 %v405, %v404
        %v417 = vpack.c.b16 %v407, %v406
        %v418 = vpack.c.b16 %v409, %v408
        %v419 = vpack.c.b16 %v411, %v410
        %v444 = vunpack.c.l.b16 %v364
        %v445 = vunpack.c.l.b16 %v365
        %v446 = vunpack.c.l.b16 %v366
        %v447 = vunpack.c.l.b16 %v367
        %v448 = vunpack.c.l.b16 %v368
        %v449 = vunpack.c.l.b16 %v369
        %v450 = vunpack.c.l.b16 %v370
        %v451 = vunpack.c.l.b16 %v371
        %v452 = vunpack.c.l.b16 %v372
        %v453 = vunpack.c.l.b16 %v373
        %v454 = vunpack.c.l.b16 %v374
        %v455 = vunpack.c.l.b16 %v375
        %v456 = vunpack.c.l.b16 %v376
        %v457 = vunpack.c.l.b16 %v377
        %v458 = vunpack.c.l.b16 %v378
        %v459 = vunpack.c.l.b16 %v379
        %v460 = vpack.c.b16 %v445, %v444
        %v461 = vpack.c.b16 %v447, %v446
        %v462 = vpack.c.b16 %v449, %v448
        %v463 = vpack.c.b16 %v451, %v450
        %v464 = vpack.c.b16 %v453, %v452
        %v465 = vpack.c.b16 %v455, %v454
        %v466 = vpack.c.b16 %v457, %v456
        %v467 = vpack.c.b16 %v459, %v458
        %476 = vmatprep.subr.bf16.mxu0 0
        %477 = vmatpush1.bf16.msra.mxu0 %v467
        %478 = vmatprep.subr.bf16.mxu0 0
        %479 = vmatpush1.bf16.msra.mxu0 %v466
        %480 = vmatprep.subr.bf16.mxu0 0
        %481 = vmatpush1.bf16.msra.mxu0 %v465
        %482 = vmatprep.subr.bf16.mxu0 0
        %483 = vmatpush1.bf16.msra.mxu0 %v464
        %484 = vmatprep.subr.bf16.mxu0 0
        %485 = vmatpush1.bf16.msra.mxu0 %v463
        %486 = vmatprep.subr.bf16.mxu0 0
        %487 = vmatpush1.bf16.msra.mxu0 %v462
        %488 = vmatprep.subr.bf16.mxu0 0
        %489 = vmatpush1.bf16.msra.mxu0 %v461
        %490 = vmatprep.subr.bf16.mxu0 0
        %491 = vmatpush1.bf16.msra.mxu0 %v460
        %492 = vmatprep.subr.bf16.mxu0 0
        %493 = vmatpush2.bf16.msra.mxu0 0
        %494 = vmatprep.subr.bf16.mxu0 0
        %495 = vmatpush2.bf16.msra.mxu0 0
        %496 = vmatprep.subr.bf16.mxu0 0
        %497 = vmatpush2.bf16.msra.mxu0 0
        %498 = vmatprep.subr.bf16.mxu0 0
        %499 = vmatpush2.bf16.msra.mxu0 0
        %500 = vmatprep.subr.bf16.mxu0 0
        %501 = vmatpush2.bf16.msra.mxu0 0
        %502 = vmatprep.subr.bf16.mxu0 0
        %503 = vmatpush2.bf16.msra.mxu0 0
        %504 = vmatprep.subr.bf16.mxu0 0
        %505 = vmatpush2.bf16.msra.mxu0 0
        %506 = vmatprep.subr.bf16.mxu0 0
        %507 = vmatpush2.bf16.msra.mxu0 0
        %508 = vmatprep.mubr.bf16.mxu0 0
        %509 = vmatmul.mubr.bf16.gmra.mxu0 %v412
        %v510 = vpop.f32.mrf.mxu0
        %v511 = vadd.f32 0.0, %v510
        %v512 = vpop.f32.mrf.mxu0
        %v513 = vpop.f32.mrf.mxu0
        %v514 = vadd.f32 0.0, %v513
        %v515 = vpop.f32.mrf.mxu0
        %516 = vmatprep.mubr.bf16.mxu0 0
        %517 = vmatmul.mubr.bf16.gmra.mxu0 %v413
        %v518 = vpop.f32.mrf.mxu0
        %v519 = vadd.f32 0.0, %v518
        %v520 = vpop.f32.mrf.mxu0
        %v521 = vpop.f32.mrf.mxu0
        %v522 = vadd.f32 0.0, %v521
        %v523 = vpop.f32.mrf.mxu0
        %524 = vmatprep.mubr.bf16.mxu0 0
        %525 = vmatmul.mubr.bf16.gmra.mxu0 %v414
        %v526 = vpop.f32.mrf.mxu0
        %v527 = vadd.f32 0.0, %v526
        %v528 = vpop.f32.mrf.mxu0
        %v529 = vpop.f32.mrf.mxu0
        %v530 = vadd.f32 0.0, %v529
        %v531 = vpop.f32.mrf.mxu0
        %532 = vmatprep.mubr.bf16.mxu0 0
        %533 = vmatmul.mubr.bf16.gmra.mxu0 %v415
        %v534 = vpop.f32.mrf.mxu0
        %v535 = vadd.f32 0.0, %v534
        %v536 = vpop.f32.mrf.mxu0
        %v537 = vpop.f32.mrf.mxu0
        %v538 = vadd.f32 0.0, %v537
        %v539 = vpop.f32.mrf.mxu0
        %540 = vmatprep.mubr.bf16.mxu0 0
        %541 = vmatmul.mubr.bf16.gmra.mxu0 %v416
        %v542 = vpop.f32.mrf.mxu0
        %v543 = vadd.f32 0.0, %v542
        %v544 = vpop.f32.mrf.mxu0
        %v545 = vpop.f32.mrf.mxu0
        %v546 = vadd.f32 0.0, %v545
        %v547 = vpop.f32.mrf.mxu0
        %548 = vmatprep.mubr.bf16.mxu0 0
        %549 = vmatmul.mubr.bf16.gmra.mxu0 %v417
        %v550 = vpop.f32.mrf.mxu0
        %v551 = vadd.f32 0.0, %v550
        %v552 = vpop.f32.mrf.mxu0
        %v553 = vpop.f32.mrf.mxu0
        %v554 = vadd.f32 0.0, %v553
        %v555 = vpop.f32.mrf.mxu0
        %556 = vmatprep.mubr.bf16.mxu0 0
        %557 = vmatmul.mubr.bf16.gmra.mxu0 %v418
        %v558 = vpop.f32.mrf.mxu0
        %v559 = vadd.f32 0.0, %v558
        %v560 = vpop.f32.mrf.mxu0
        %v561 = vpop.f32.mrf.mxu0
        %v562 = vadd.f32 0.0, %v561
        %v563 = vpop.f32.mrf.mxu0
        %564 = vmatprep.mubr.bf16.mxu0 0
        %565 = vmatmul.mubr.bf16.gmra.mxu0 %v419
        %v566 = vpop.f32.mrf.mxu0
        %v567 = vadd.f32 0.0, %v566
        %v568 = vpop.f32.mrf.mxu0
        %v569 = vpop.f32.mrf.mxu0
        %v570 = vadd.f32 0.0, %v569
        %v571 = vpop.f32.mrf.mxu0
        %572 = vdwg.mxu0
        %v573 = vadd.f32 %v332, %v511
        %v574 = vadd.f32 %v333, %v514
        %v575 = vadd.f32 %v334, %v519
        %v576 = vadd.f32 %v335, %v522
        %v577 = vadd.f32 %v336, %v527
        %v578 = vadd.f32 %v337, %v530
        %v579 = vadd.f32 %v338, %v535
        %v580 = vadd.f32 %v339, %v538
        %v581 = vadd.f32 %v340, %v543
        %v582 = vadd.f32 %v341, %v546
        %v583 = vadd.f32 %v342, %v551
        %v584 = vadd.f32 %v343, %v554
        %v585 = vadd.f32 %v344, %v559
        %v586 = vadd.f32 %v345, %v562
        %v587 = vadd.f32 %v346, %v567
        %v588 = vadd.f32 %v347, %v570
        %589 = vst [vmem:[#allocation2] sm:$0xff] %v573
        %590 = vst [vmem:[#allocation2 + $0x8] sm:$0xff] %v574
        %591 = vst [vmem:[#allocation2 + $0x10] sm:$0xff] %v575
        %592 = vst [vmem:[#allocation2 + $0x18] sm:$0xff] %v576
        %593 = vst [vmem:[#allocation2 + $0x20] sm:$0xff] %v577
        %594 = vst [vmem:[#allocation2 + $0x28] sm:$0xff] %v578
        %595 = vst [vmem:[#allocation2 + $0x30] sm:$0xff] %v579
        %596 = vst [vmem:[#allocation2 + $0x38] sm:$0xff] %v580
        %597 = vst [vmem:[#allocation2 + $0x40] sm:$0xff] %v581
        %598 = vst [vmem:[#allocation2 + $0x48] sm:$0xff] %v582
        %599 = vst [vmem:[#allocation2 + $0x50] sm:$0xff] %v583
        %600 = vst [vmem:[#allocation2 + $0x58] sm:$0xff] %v584
        %601 = vst [vmem:[#allocation2 + $0x60] sm:$0xff] %v585
        %602 = vst [vmem:[#allocation2 + $0x68] sm:$0xff] %v586
        %603 = vst [vmem:[#allocation2 + $0x70] sm:$0xff] %v587
        %604 = vst [vmem:[#allocation2 + $0x78] sm:$0xff] %v588
        // Predicated region
        $region41: #{residual_block_forward.5} parent=35 // pred_check
          %p605 = pneg %p312
        $region42: #{residual_block_forward.5} parent=35 // pred_check_branch
          %607 = sbr.rel (%p605) target = $region44
        $region43: #{residual_block_forward.5} parent=35 // pred_region
          %v608 = vld [vmem:[#allocation2] sm:$0xff]
          %v609 = vld [vmem:[#allocation2 + $0x8] sm:$0xff]
          %v610 = vld [vmem:[#allocation2 + $0x10] sm:$0xff]
          %v611 = vld [vmem:[#allocation2 + $0x18] sm:$0xff]
          %v612 = vld [vmem:[#allocation2 + $0x20] sm:$0xff]
          %v613 = vld [vmem:[#allocation2 + $0x28] sm:$0xff]
          %v614 = vld [vmem:[#allocation2 + $0x30] sm:$0xff]
          %v615 = vld [vmem:[#allocation2 + $0x38] sm:$0xff]
          %v616 = vld [vmem:[#allocation2 + $0x40] sm:$0xff]
          %v617 = vld [vmem:[#allocation2 + $0x48] sm:$0xff]
          %v618 = vld [vmem:[#allocation2 + $0x50] sm:$0xff]
          %v619 = vld [vmem:[#allocation2 + $0x58] sm:$0xff]
          %v620 = vld [vmem:[#allocation2 + $0x60] sm:$0xff]
          %v621 = vld [vmem:[#allocation2 + $0x68] sm:$0xff]
          %v622 = vld [vmem:[#allocation2 + $0x70] sm:$0xff]
          %v623 = vld [vmem:[#allocation2 + $0x78] sm:$0xff]
          %v624 = vld [vmem:[%s300] sm:$0x1]
          %v626 = vlaneseq
          %v627 = vshrl.u32 %v626, 7
          %v628 = vsub.s32 0, %v627
          %v629 = vrot.slane %v624, %v628
          %v631 = vadd.f32 %v608, %v629
          %v632 = vadd.f32 %v609, %v629
          %v633 = vadd.f32 %v610, %v629
          %v634 = vadd.f32 %v611, %v629
          %v635 = vadd.f32 %v612, %v629
          %v636 = vadd.f32 %v613, %v629
          %v637 = vadd.f32 %v614, %v629
          %v638 = vadd.f32 %v615, %v629
          %v639 = vadd.f32 %v616, %v629
          %v640 = vadd.f32 %v617, %v629
          %v641 = vadd.f32 %v618, %v629
          %v642 = vadd.f32 %v619, %v629
          %v643 = vadd.f32 %v620, %v629
          %v644 = vadd.f32 %v621, %v629
          %v645 = vadd.f32 %v622, %v629
          %v646 = vadd.f32 %v623, %v629
          %v647 = vld [vmem:[%s308] sm:$0xf]
          %v648 = vld [vmem:[%s308 + $0x4] sm:$0xf]
          %v649 = vld [vmem:[%s308 + $0x8] sm:$0xf]
          %v650 = vld [vmem:[%s308 + $0xc] sm:$0xf]
          %v651 = vld [vmem:[%s308 + $0x10] sm:$0xf]
          %v652 = vld [vmem:[%s308 + $0x14] sm:$0xf]
          %v653 = vld [vmem:[%s308 + $0x18] sm:$0xf]
          %v654 = vld [vmem:[%s308 + $0x1c] sm:$0xf]
          %v655 = vld [vmem:[%s308 + $0x20] sm:$0xf]
          %v656 = vld [vmem:[%s308 + $0x24] sm:$0xf]
          %v657 = vld [vmem:[%s308 + $0x28] sm:$0xf]
          %v658 = vld [vmem:[%s308 + $0x2c] sm:$0xf]
          %v659 = vld [vmem:[%s308 + $0x30] sm:$0xf]
          %v660 = vld [vmem:[%s308 + $0x34] sm:$0xf]
          %v661 = vld [vmem:[%s308 + $0x38] sm:$0xf]
          %v662 = vld [vmem:[%s308 + $0x3c] sm:$0xf]
          %v663 = vunpack.c.l.bf16 %v647
          %v664 = vunpack.c.l.bf16 %v648
          %v665 = vunpack.c.l.bf16 %v649
          %v666 = vunpack.c.l.bf16 %v650
          %v667 = vunpack.c.l.bf16 %v651
          %v668 = vunpack.c.l.bf16 %v652
          %v669 = vunpack.c.l.bf16 %v653
          %v670 = vunpack.c.l.bf16 %v654
          %v671 = vunpack.c.l.bf16 %v655
          %v672 = vunpack.c.l.bf16 %v656
          %v673 = vunpack.c.l.bf16 %v657
          %v674 = vunpack.c.l.bf16 %v658
          %v675 = vunpack.c.l.bf16 %v659
          %v676 = vunpack.c.l.bf16 %v660
          %v677 = vunpack.c.l.bf16 %v661
          %v678 = vunpack.c.l.bf16 %v662
          %v679 = vadd.f32 %v631, %v663
          %v680 = vadd.f32 %v632, %v664
          %v681 = vadd.f32 %v633, %v665
          %v682 = vadd.f32 %v634, %v666
          %v683 = vadd.f32 %v635, %v667
          %v684 = vadd.f32 %v636, %v668
          %v685 = vadd.f32 %v637, %v669
          %v686 = vadd.f32 %v638, %v670
          %v687 = vadd.f32 %v639, %v671
          %v688 = vadd.f32 %v640, %v672
          %v689 = vadd.f32 %v641, %v673
          %v690 = vadd.f32 %v642, %v674
          %v691 = vadd.f32 %v643, %v675
          %v692 = vadd.f32 %v644, %v676
          %v693 = vadd.f32 %v645, %v677
          %v694 = vadd.f32 %v646, %v678
          %v695 = vmax.f32 %v679, 0.0
          %v696 = vmax.f32 %v680, 0.0
          %v697 = vmax.f32 %v681, 0.0
          %v698 = vmax.f32 %v682, 0.0
          %v699 = vmax.f32 %v683, 0.0
          %v700 = vmax.f32 %v684, 0.0
          %v701 = vmax.f32 %v685, 0.0
          %v702 = vmax.f32 %v686, 0.0
          %v703 = vmax.f32 %v687, 0.0
          %v704 = vmax.f32 %v688, 0.0
          %v705 = vmax.f32 %v689, 0.0
          %v706 = vmax.f32 %v690, 0.0
          %v707 = vmax.f32 %v691, 0.0
          %v708 = vmax.f32 %v692, 0.0
          %v709 = vmax.f32 %v693, 0.0
          %v710 = vmax.f32 %v694, 0.0
          %711 = vst [vmem:[%s279] sm:$0xff] %v695
          %712 = vst [vmem:[%s279 + $0x8] sm:$0xff] %v696
          %713 = vst [vmem:[%s279 + $0x10] sm:$0xff] %v697
          %714 = vst [vmem:[%s279 + $0x18] sm:$0xff] %v698
          %715 = vst [vmem:[%s279 + $0x20] sm:$0xff] %v699
          %716 = vst [vmem:[%s279 + $0x28] sm:$0xff] %v700
          %717 = vst [vmem:[%s279 + $0x30] sm:$0xff] %v701
          %718 = vst [vmem:[%s279 + $0x38] sm:$0xff] %v702
          %719 = vst [vmem:[%s279 + $0x40] sm:$0xff] %v703
          %720 = vst [vmem:[%s279 + $0x48] sm:$0xff] %v704
          %721 = vst [vmem:[%s279 + $0x50] sm:$0xff] %v705
          %722 = vst [vmem:[%s279 + $0x58] sm:$0xff] %v706
          %723 = vst [vmem:[%s279 + $0x60] sm:$0xff] %v707
          %724 = vst [vmem:[%s279 + $0x68] sm:$0xff] %v708
          %725 = vst [vmem:[%s279 + $0x70] sm:$0xff] %v709
          %726 = vst [vmem:[%s279 + $0x78] sm:$0xff] %v710
        $region44: #{residual_block_forward.5} parent=35 // pred_fallthru
          _
        %s727 = sand.u32 %s157, 1
        %s728 = scalar_lea.sflag [#allocation4], %s727
        %s729 = sand.u32 %s157, 1
        %s730 = smul.addr %s729, 128
        %s731 = scalar_lea.vmem [#allocation3], %s730
        // Predicated region
        $region45: #{residual_block_forward.5} parent=35 // pred_check
          %p732 = pneg %p167
        $region46: #{residual_block_forward.5} parent=35 // pred_check_branch
          %734 = sbr.rel (%p732) target = $region48
        $region47: #{residual_block_forward.5} parent=35 // pred_region
          %s735 = smul.u32 16, %s23
          %s737 = ssub.s32 2048, 2048
          %738 = vsyncadd %s728, %s737
          %s739 = sadd.s32 %s24, %s735
          %s740 = smul.addr %s739, 128
          %s741 = scalar_lea.hbm %s4, %s740
          %s742 = sshll.u32 %s731, 4
          %s743 = int_to_ptr.vmem [resolvable:$true] %s742
          %748 = dma.vmem_to_hbm [thread:$0]  %s743, 2048, %s741, %s728, 128, 128, 8
        $region48: #{residual_block_forward.5} parent=35 // pred_fallthru
          _
      $region36: #{residual_block_forward.5} parent=5 // pred_fallthru
        _
      %p749 = scmp.le.s32.totalorder 2, %s13
      // Predicated region
      $region49: #{residual_block_forward.5} parent=5 // pred_check
        %p750 = pneg %p749
      $region50: #{residual_block_forward.5} parent=5 // pred_check_branch
        %752 = sbr.rel (%p750) target = $region52
      $region51: #{residual_block_forward.5} parent=5 // pred_region
        %s753 = ssub.s32 %s13, 2
        // Predicated region
        $region53: #{residual_block_forward.5} parent=51 // pred_check
          %p754 = pneg %p173
        $region54: #{residual_block_forward.5} parent=51 // pred_check_branch
          %756 = sbr.rel (%p754) target = $region56
        $region55: #{residual_block_forward.5} parent=51 // pred_region
          %s757 = sand.u32 %s158, 1
          %s758 = scalar_lea.sflag [#allocation4], %s757
          %s759 = sand.u32 %s158, 1
          %s760 = smul.addr %s759, 128
          %s761 = scalar_lea.vmem [#allocation3], %s760
          %762 = dma.done %s758, 2048
        $region56: #{residual_block_forward.5} parent=51 // pred_fallthru
          _
      $region52: #{residual_block_forward.5} parent=5 // pred_fallthru
        _
    $region6: #{residual_block_forward.5} parent=1 // loop_footer
      %s17 = sadd.s32 1, %s13
    $region7: #{residual_block_forward.5} parent=1 // loop_footer_branch
      %12 = sbr.rel target = $region3
    $region8: #{residual_block_forward.5} parent=1 // loop_exit
      _
    %763 = vsyncpa [#allocation4], 1
    %s764 = scalar_lea.sflag [#allocation4], 1
    %765 = vsyncpa %s764, 1

// kernel: residual_block_forward.4
$region0: #{residual_block_forward.4}
  #allocation0 [shape = 'u32[]', space=smem, size = 0x4, offset = 0x4, fixed_abs, tag = 'smem constant byte address 0x4 - core index']
  #allocation1 [shape = 'u32[144,128]{1,0:T(1,128)}', space=vmem, size = 0x12000, scoped, tag = 'internal scratch']
  #allocation2 [shape = 'f32[512,128]{1,0:T(8,128)}', space=vmem, size = 0x40000, scoped, tag = 'scratch operand']
  %s0 = inlined_call_operand.vmem [shape: bf16[2,18,18,128], index: 0, kind: input, shape index: {}]
  %s1 = inlined_call_operand.vmem [shape: bf16[9,128,128], index: 1, kind: input, shape index: {}]
  %s2 = inlined_call_operand.vmem [shape: f32[1,128], index: 2, kind: input, shape index: {}]
  %s3 = inlined_call_operand.vmem [shape: bf16[512,128], index: 3, kind: output, shape index: {}]
  %s4 = sld [smem:[#allocation0]]
  $region22: #{residual_block_forward.4} parent=0
    _
  %s6 = ssub.s32 1, %s4
  %s7 = scalar_select 0, %s6, %s4
  // Predicated region
  $region2: #{residual_block_forward.4} parent=0 // pred_check
    _
  $region3: #{residual_block_forward.4} parent=0 // pred_check_branch
    %9 = sbr.rel (0) target = $region5
  $region4: #{residual_block_forward.4} parent=0 // pred_region
    _
  $region5: #{residual_block_forward.4} parent=0 // pred_fallthru
    _
  // Predicated region
  $region6: #{residual_block_forward.4} parent=0 // pred_check
    _
  $region7: #{residual_block_forward.4} parent=0 // pred_check_branch
    %11 = sbr.rel (0) target = $region9
  $region8: #{residual_block_forward.4} parent=0 // pred_region
    _
  $region9: #{residual_block_forward.4} parent=0 // pred_fallthru
    _
  // Predicated region
  $region10: #{residual_block_forward.4} parent=0 // pred_check
    _
  $region11: #{residual_block_forward.4} parent=0 // pred_check_branch
    %13 = sbr.rel (0) target = $region13
  $region12: #{residual_block_forward.4} parent=0 // pred_region
    _
  $region13: #{residual_block_forward.4} parent=0 // pred_fallthru
    _
  %15 = vst [vmem:[#allocation2] sm:$0xff] 0.0
  %16 = vst [vmem:[#allocation2 + $0x8] sm:$0xff] 0.0
  %17 = vst [vmem:[#allocation2 + $0x10] sm:$0xff] 0.0
  %18 = vst [vmem:[#allocation2 + $0x18] sm:$0xff] 0.0
  %19 = vst [vmem:[#allocation2 + $0x20] sm:$0xff] 0.0
  %20 = vst [vmem:[#allocation2 + $0x28] sm:$0xff] 0.0
  %21 = vst [vmem:[#allocation2 + $0x30] sm:$0xff] 0.0
  %22 = vst [vmem:[#allocation2 + $0x38] sm:$0xff] 0.0
  %23 = vst [vmem:[#allocation2 + $0x40] sm:$0xff] 0.0
  %24 = vst [vmem:[#allocation2 + $0x48] sm:$0xff] 0.0
  %25 = vst [vmem:[#allocation2 + $0x50] sm:$0xff] 0.0
  %26 = vst [vmem:[#allocation2 + $0x58] sm:$0xff] 0.0
  %27 = vst [vmem:[#allocation2 + $0x60] sm:$0xff] 0.0
  %28 = vst [vmem:[#allocation2 + $0x68] sm:$0xff] 0.0
  %29 = vst [vmem:[#allocation2 + $0x70] sm:$0xff] 0.0
  %30 = vst [vmem:[#allocation2 + $0x78] sm:$0xff] 0.0
  %31 = vst [vmem:[#allocation2 + $0x80] sm:$0xff] 0.0
  %32 = vst [vmem:[#allocation2 + $0x88] sm:$0xff] 0.0
  %33 = vst [vmem:[#allocation2 + $0x90] sm:$0xff] 0.0
  %34 = vst [vmem:[#allocation2 + $0x98] sm:$0xff] 0.0
  %35 = vst [vmem:[#allocation2 + $0xa0] sm:$0xff] 0.0
  %36 = vst [vmem:[#allocation2 + $0xa8] sm:$0xff] 0.0
  %37 = vst [vmem:[#allocation2 + $0xb0] sm:$0xff] 0.0
  %38 = vst [vmem:[#allocation2 + $0xb8] sm:$0xff] 0.0
  %39 = vst [vmem:[#allocation2 + $0xc0] sm:$0xff] 0.0
  %40 = vst [vmem:[#allocation2 + $0xc8] sm:$0xff] 0.0
  %41 = vst [vmem:[#allocation2 + $0xd0] sm:$0xff] 0.0
  %42 = vst [vmem:[#allocation2 + $0xd8] sm:$0xff] 0.0
  %43 = vst [vmem:[#allocation2 + $0xe0] sm:$0xff] 0.0
  %44 = vst [vmem:[#allocation2 + $0xe8] sm:$0xff] 0.0
  %45 = vst [vmem:[#allocation2 + $0xf0] sm:$0xff] 0.0
  %46 = vst [vmem:[#allocation2 + $0xf8] sm:$0xff] 0.0
  %47 = vst [vmem:[#allocation2 + $0x100] sm:$0xff] 0.0
  %48 = vst [vmem:[#allocation2 + $0x108] sm:$0xff] 0.0
  %49 = vst [vmem:[#allocation2 + $0x110] sm:$0xff] 0.0
  %50 = vst [vmem:[#allocation2 + $0x118] sm:$0xff] 0.0
  %51 = vst [vmem:[#allocation2 + $0x120] sm:$0xff] 0.0
  %52 = vst [vmem:[#allocation2 + $0x128] sm:$0xff] 0.0
  %53 = vst [vmem:[#allocation2 + $0x130] sm:$0xff] 0.0
  %54 = vst [vmem:[#allocation2 + $0x138] sm:$0xff] 0.0
  %55 = vst [vmem:[#allocation2 + $0x140] sm:$0xff] 0.0
  %56 = vst [vmem:[#allocation2 + $0x148] sm:$0xff] 0.0
  %57 = vst [vmem:[#allocation2 + $0x150] sm:$0xff] 0.0
  %58 = vst [vmem:[#allocation2 + $0x158] sm:$0xff] 0.0
  %59 = vst [vmem:[#allocation2 + $0x160] sm:$0xff] 0.0
  %60 = vst [vmem:[#allocation2 + $0x168] sm:$0xff] 0.0
  %61 = vst [vmem:[#allocation2 + $0x170] sm:$0xff] 0.0
  %62 = vst [vmem:[#allocation2 + $0x178] sm:$0xff] 0.0
  %63 = vst [vmem:[#allocation2 + $0x180] sm:$0xff] 0.0
  %64 = vst [vmem:[#allocation2 + $0x188] sm:$0xff] 0.0
  %65 = vst [vmem:[#allocation2 + $0x190] sm:$0xff] 0.0
  %66 = vst [vmem:[#allocation2 + $0x198] sm:$0xff] 0.0
  %67 = vst [vmem:[#allocation2 + $0x1a0] sm:$0xff] 0.0
  %68 = vst [vmem:[#allocation2 + $0x1a8] sm:$0xff] 0.0
  %69 = vst [vmem:[#allocation2 + $0x1b0] sm:$0xff] 0.0
  %70 = vst [vmem:[#allocation2 + $0x1b8] sm:$0xff] 0.0
  %71 = vst [vmem:[#allocation2 + $0x1c0] sm:$0xff] 0.0
  %72 = vst [vmem:[#allocation2 + $0x1c8] sm:$0xff] 0.0
  %73 = vst [vmem:[#allocation2 + $0x1d0] sm:$0xff] 0.0
  %74 = vst [vmem:[#allocation2 + $0x1d8] sm:$0xff] 0.0
  %75 = vst [vmem:[#allocation2 + $0x1e0] sm:$0xff] 0.0
  %76 = vst [vmem:[#allocation2 + $0x1e8] sm:$0xff] 0.0
  %77 = vst [vmem:[#allocation2 + $0x1f0] sm:$0xff] 0.0
  %78 = vst [vmem:[#allocation2 + $0x1f8] sm:$0xff] 0.0
  %v79 = vld [vmem:[%s0] sm:$0xf]
  %v80 = vld [vmem:[%s0 + $0x4] sm:$0xf]
  %v81 = vld [vmem:[%s0 + $0xc] sm:$0xf]
  %v82 = vld [vmem:[%s0 + $0x10] sm:$0xf]
  %v83 = vld [vmem:[%s0 + $0x18] sm:$0xf]
  %v84 = vld [vmem:[%s0 + $0x1c] sm:$0xf]
  %v85 = vld [vmem:[%s0 + $0x24] sm:$0xf]
  %v86 = vld [vmem:[%s0 + $0x28] sm:$0xf]
  %v87 = vld [vmem:[%s0 + $0x30] sm:$0xf]
  %v88 = vld [vmem:[%s0 + $0x34] sm:$0xf]
  %v89 = vld [vmem:[%s0 + $0x3c] sm:$0xf]
  %v90 = vld [vmem:[%s0 + $0x40] sm:$0xf]
  %v91 = vld [vmem:[%s0 + $0x48] sm:$0xf]
  %v92 = vld [vmem:[%s0 + $0x4c] sm:$0xf]
  %v93 = vld [vmem:[%s0 + $0x54] sm:$0xf]
  %v94 = vld [vmem:[%s0 + $0x58] sm:$0xf]
  %v95 = vld [vmem:[%s0 + $0x60] sm:$0xf]
  %v96 = vld [vmem:[%s0 + $0x64] sm:$0xf]
  %v97 = vld [vmem:[%s0 + $0x6c] sm:$0xf]
  %v98 = vld [vmem:[%s0 + $0x70] sm:$0xf]
  %v99 = vld [vmem:[%s0 + $0x78] sm:$0xf]
  %v100 = vld [vmem:[%s0 + $0x7c] sm:$0xf]
  %v101 = vld [vmem:[%s0 + $0x84] sm:$0xf]
  %v102 = vld [vmem:[%s0 + $0x88] sm:$0xf]
  %v103 = vld [vmem:[%s0 + $0x90] sm:$0xf]
  %v104 = vld [vmem:[%s0 + $0x94] sm:$0xf]
  %v105 = vld [vmem:[%s0 + $0x9c] sm:$0xf]
  %v106 = vld [vmem:[%s0 + $0xa0] sm:$0xf]
  %v107 = vld [vmem:[%s0 + $0xa8] sm:$0xf]
  %v108 = vld [vmem:[%s0 + $0xac] sm:$0xf]
  %v109 = vld [vmem:[%s0 + $0xb4] sm:$0xf]
  %v110 = vld [vmem:[%s0 + $0xb8] sm:$0xf]
  %v111 = vld [vmem:[%s0 + $0xd8] sm:$0xf]
  %v112 = vld [vmem:[%s0 + $0xdc] sm:$0xf]
  %v113 = vld [vmem:[%s0 + $0xe4] sm:$0xf]
  %v114 = vld [vmem:[%s0 + $0xe8] sm:$0xf]
  %v115 = vld [vmem:[%s0 + $0xf0] sm:$0xf]
  %v116 = vld [vmem:[%s0 + $0xf4] sm:$0xf]
  %v117 = vld [vmem:[%s0 + $0xfc] sm:$0xf]
  %v118 = vld [vmem:[%s0 + $0x100] sm:$0xf]
  %v119 = vld [vmem:[%s0 + $0x108] sm:$0xf]
  %v120 = vld [vmem:[%s0 + $0x10c] sm:$0xf]
  %v121 = vld [vmem:[%s0 + $0x114] sm:$0xf]
  %v122 = vld [vmem:[%s0 + $0x118] sm:$0xf]
  %v123 = vld [vmem:[%s0 + $0x120] sm:$0xf]
  %v124 = vld [vmem:[%s0 + $0x124] sm:$0xf]
  %v125 = vld [vmem:[%s0 + $0x12c] sm:$0xf]
  %v126 = vld [vmem:[%s0 + $0x130] sm:$0xf]
  %v127 = vld [vmem:[%s0 + $0x138] sm:$0xf]
  %v128 = vld [vmem:[%s0 + $0x13c] sm:$0xf]
  %v129 = vld [vmem:[%s0 + $0x144] sm:$0xf]
  %v130 = vld [vmem:[%s0 + $0x148] sm:$0xf]
  %v131 = vld [vmem:[%s0 + $0x150] sm:$0xf]
  %v132 = vld [vmem:[%s0 + $0x154] sm:$0xf]
  %v133 = vld [vmem:[%s0 + $0x15c] sm:$0xf]
  %v134 = vld [vmem:[%s0 + $0x160] sm:$0xf]
  %v135 = vld [vmem:[%s0 + $0x168] sm:$0xf]
  %v136 = vld [vmem:[%s0 + $0x16c] sm:$0xf]
  %v137 = vld [vmem:[%s0 + $0x174] sm:$0xf]
  %v138 = vld [vmem:[%s0 + $0x178] sm:$0xf]
  %v139 = vld [vmem:[%s0 + $0x180] sm:$0xf]
  %v140 = vld [vmem:[%s0 + $0x184] sm:$0xf]
  %v141 = vld [vmem:[%s0 + $0x18c] sm:$0xf]
  %v142 = vld [vmem:[%s0 + $0x190] sm:$0xf]
  %v143 = vld [vmem:[#allocation2] sm:$0xff]
  %v144 = vld [vmem:[#allocation2 + $0x8] sm:$0xff]
  %v145 = vld [vmem:[#allocation2 + $0x10] sm:$0xff]
  %v146 = vld [vmem:[#allocation2 + $0x18] sm:$0xff]
  %v147 = vld [vmem:[#allocation2 + $0x20] sm:$0xff]
  %v148 = vld [vmem:[#allocation2 + $0x28] sm:$0xff]
  %v149 = vld [vmem:[#allocation2 + $0x30] sm:$0xff]
  %v150 = vld [vmem:[#allocation2 + $0x38] sm:$0xff]
  %v151 = vld [vmem:[#allocation2 + $0x40] sm:$0xff]
  %v152 = vld [vmem:[#allocation2 + $0x48] sm:$0xff]
  %v153 = vld [vmem:[#allocation2 + $0x50] sm:$0xff]
  %v154 = vld [vmem:[#allocation2 + $0x58] sm:$0xff]
  %v155 = vld [vmem:[#allocation2 + $0x60] sm:$0xff]
  %v156 = vld [vmem:[#allocation2 + $0x68] sm:$0xff]
  %v157 = vld [vmem:[#allocation2 + $0x70] sm:$0xff]
  %v158 = vld [vmem:[#allocation2 + $0x78] sm:$0xff]
  %v159 = vld [vmem:[#allocation2 + $0x80] sm:$0xff]
  %v160 = vld [vmem:[#allocation2 + $0x88] sm:$0xff]
  %v161 = vld [vmem:[#allocation2 + $0x90] sm:$0xff]
  %v162 = vld [vmem:[#allocation2 + $0x98] sm:$0xff]
  %v163 = vld [vmem:[#allocation2 + $0xa0] sm:$0xff]
  %v164 = vld [vmem:[#allocation2 + $0xa8] sm:$0xff]
  %v165 = vld [vmem:[#allocation2 + $0xb0] sm:$0xff]
  %v166 = vld [vmem:[#allocation2 + $0xb8] sm:$0xff]
  %v167 = vld [vmem:[#allocation2 + $0xc0] sm:$0xff]
  %v168 = vld [vmem:[#allocation2 + $0xc8] sm:$0xff]
  %v169 = vld [vmem:[#allocation2 + $0xd0] sm:$0xff]
  %v170 = vld [vmem:[#allocation2 + $0xd8] sm:$0xff]
  %v171 = vld [vmem:[#allocation2 + $0xe0] sm:$0xff]
  %v172 = vld [vmem:[#allocation2 + $0xe8] sm:$0xff]
  %v173 = vld [vmem:[#allocation2 + $0xf0] sm:$0xff]
  %v174 = vld [vmem:[#allocation2 + $0xf8] sm:$0xff]
  %v175 = vld [vmem:[#allocation2 + $0x100] sm:$0xff]
  %v176 = vld [vmem:[#allocation2 + $0x108] sm:$0xff]
  %v177 = vld [vmem:[#allocation2 + $0x110] sm:$0xff]
  %v178 = vld [vmem:[#allocation2 + $0x118] sm:$0xff]
  %v179 = vld [vmem:[#allocation2 + $0x120] sm:$0xff]
  %v180 = vld [vmem:[#allocation2 + $0x128] sm:$0xff]
  %v181 = vld [vmem:[#allocation2 + $0x130] sm:$0xff]
  %v182 = vld [vmem:[#allocation2 + $0x138] sm:$0xff]
  %v183 = vld [vmem:[#allocation2 + $0x140] sm:$0xff]
  %v184 = vld [vmem:[#allocation2 + $0x148] sm:$0xff]
  %v185 = vld [vmem:[#allocation2 + $0x150] sm:$0xff]
  %v186 = vld [vmem:[#allocation2 + $0x158] sm:$0xff]
  %v187 = vld [vmem:[#allocation2 + $0x160] sm:$0xff]
  %v188 = vld [vmem:[#allocation2 + $0x168] sm:$0xff]
  %v189 = vld [vmem:[#allocation2 + $0x170] sm:$0xff]
  %v190 = vld [vmem:[#allocation2 + $0x178] sm:$0xff]
  %v191 = vld [vmem:[#allocation2 + $0x180] sm:$0xff]
  %v192 = vld [vmem:[#allocation2 + $0x188] sm:$0xff]
  %v193 = vld [vmem:[#allocation2 + $0x190] sm:$0xff]
  %v194 = vld [vmem:[#allocation2 + $0x198] sm:$0xff]
  %v195 = vld [vmem:[#allocation2 + $0x1a0] sm:$0xff]
  %v196 = vld [vmem:[#allocation2 + $0x1a8] sm:$0xff]
  %v197 = vld [vmem:[#allocation2 + $0x1b0] sm:$0xff]
  %v198 = vld [vmem:[#allocation2 + $0x1b8] sm:$0xff]
  %v199 = vld [vmem:[#allocation2 + $0x1c0] sm:$0xff]
  %v200 = vld [vmem:[#allocation2 + $0x1c8] sm:$0xff]
  %v201 = vld [vmem:[#allocation2 + $0x1d0] sm:$0xff]
  %v202 = vld [vmem:[#allocation2 + $0x1d8] sm:$0xff]
  %v203 = vld [vmem:[#allocation2 + $0x1e0] sm:$0xff]
  %v204 = vld [vmem:[#allocation2 + $0x1e8] sm:$0xff]
  %v205 = vld [vmem:[#allocation2 + $0x1f0] sm:$0xff]
  %v206 = vld [vmem:[#allocation2 + $0x1f8] sm:$0xff]
  %v207 = vld [vmem:[%s1] sm:$0xf]
  %v208 = vld [vmem:[%s1 + $0x4] sm:$0xf]
  %v209 = vld [vmem:[%s1 + $0x8] sm:$0xf]
  %v210 = vld [vmem:[%s1 + $0xc] sm:$0xf]
  %v211 = vld [vmem:[%s1 + $0x10] sm:$0xf]
  %v212 = vld [vmem:[%s1 + $0x14] sm:$0xf]
  %v213 = vld [vmem:[%s1 + $0x18] sm:$0xf]
  %v214 = vld [vmem:[%s1 + $0x1c] sm:$0xf]
  %v215 = vld [vmem:[%s1 + $0x20] sm:$0xf]
  %v216 = vld [vmem:[%s1 + $0x24] sm:$0xf]
  %v217 = vld [vmem:[%s1 + $0x28] sm:$0xf]
  %v218 = vld [vmem:[%s1 + $0x2c] sm:$0xf]
  %v219 = vld [vmem:[%s1 + $0x30] sm:$0xf]
  %v220 = vld [vmem:[%s1 + $0x34] sm:$0xf]
  %v221 = vld [vmem:[%s1 + $0x38] sm:$0xf]
  %v222 = vld [vmem:[%s1 + $0x3c] sm:$0xf]
  %v287 = vunpack.c.l.b16 %v79
  %v288 = vunpack.c.l.b16 %v80
  %v289 = vunpack.c.l.b16 %v81
  %v290 = vunpack.c.l.b16 %v82
  %v291 = vunpack.c.l.b16 %v83
  %v292 = vunpack.c.l.b16 %v84
  %v293 = vunpack.c.l.b16 %v85
  %v294 = vunpack.c.l.b16 %v86
  %v295 = vunpack.c.l.b16 %v87
  %v296 = vunpack.c.l.b16 %v88
  %v297 = vunpack.c.l.b16 %v89
  %v298 = vunpack.c.l.b16 %v90
  %v299 = vunpack.c.l.b16 %v91
  %v300 = vunpack.c.l.b16 %v92
  %v301 = vunpack.c.l.b16 %v93
  %v302 = vunpack.c.l.b16 %v94
  %v303 = vunpack.c.l.b16 %v95
  %v304 = vunpack.c.l.b16 %v96
  %v305 = vunpack.c.l.b16 %v97
  %v306 = vunpack.c.l.b16 %v98
  %v307 = vunpack.c.l.b16 %v99
  %v308 = vunpack.c.l.b16 %v100
  %v309 = vunpack.c.l.b16 %v101
  %v310 = vunpack.c.l.b16 %v102
  %v311 = vunpack.c.l.b16 %v103
  %v312 = vunpack.c.l.b16 %v104
  %v313 = vunpack.c.l.b16 %v105
  %v314 = vunpack.c.l.b16 %v106
  %v315 = vunpack.c.l.b16 %v107
  %v316 = vunpack.c.l.b16 %v108
  %v317 = vunpack.c.l.b16 %v109
  %v318 = vunpack.c.l.b16 %v110
  %v319 = vunpack.c.l.b16 %v111
  %v320 = vunpack.c.l.b16 %v112
  %v321 = vunpack.c.l.b16 %v113
  %v322 = vunpack.c.l.b16 %v114
  %v323 = vunpack.c.l.b16 %v115
  %v324 = vunpack.c.l.b16 %v116
  %v325 = vunpack.c.l.b16 %v117
  %v326 = vunpack.c.l.b16 %v118
  %v327 = vunpack.c.l.b16 %v119
  %v328 = vunpack.c.l.b16 %v120
  %v329 = vunpack.c.l.b16 %v121
  %v330 = vunpack.c.l.b16 %v122
  %v331 = vunpack.c.l.b16 %v123
  %v332 = vunpack.c.l.b16 %v124
  %v333 = vunpack.c.l.b16 %v125
  %v334 = vunpack.c.l.b16 %v126
  %v335 = vunpack.c.l.b16 %v127
  %v336 = vunpack.c.l.b16 %v128
  %v337 = vunpack.c.l.b16 %v129
  %v338 = vunpack.c.l.b16 %v130
  %v339 = vunpack.c.l.b16 %v131
  %v340 = vunpack.c.l.b16 %v132
  %v341 = vunpack.c.l.b16 %v133
  %v342 = vunpack.c.l.b16 %v134
  %v343 = vunpack.c.l.b16 %v135
  %v344 = vunpack.c.l.b16 %v136
  %v345 = vunpack.c.l.b16 %v137
  %v346 = vunpack.c.l.b16 %v138
  %v347 = vunpack.c.l.b16 %v139
  %v348 = vunpack.c.l.b16 %v140
  %v349 = vunpack.c.l.b16 %v141
  %v350 = vunpack.c.l.b16 %v142
  %v351 = vpack.c.b16 %v288, %v287
  %v352 = vpack.c.b16 %v290, %v289
  %v353 = vpack.c.b16 %v292, %v291
  %v354 = vpack.c.b16 %v294, %v293
  %v355 = vpack.c.b16 %v296, %v295
  %v356 = vpack.c.b16 %v298, %v297
  %v357 = vpack.c.b16 %v300, %v299
  %v358 = vpack.c.b16 %v302, %v301
  %v359 = vpack.c.b16 %v304, %v303
  %v360 = vpack.c.b16 %v306, %v305
  %v361 = vpack.c.b16 %v308, %v307
  %v362 = vpack.c.b16 %v310, %v309
  %v363 = vpack.c.b16 %v312, %v311
  %v364 = vpack.c.b16 %v314, %v313
  %v365 = vpack.c.b16 %v316, %v315
  %v366 = vpack.c.b16 %v318, %v317
  %v367 = vpack.c.b16 %v320, %v319
  %v368 = vpack.c.b16 %v322, %v321
  %v369 = vpack.c.b16 %v324, %v323
  %v370 = vpack.c.b16 %v326, %v325
  %v371 = vpack.c.b16 %v328, %v327
  %v372 = vpack.c.b16 %v330, %v329
  %v373 = vpack.c.b16 %v332, %v331
  %v374 = vpack.c.b16 %v334, %v333
  %v375 = vpack.c.b16 %v336, %v335
  %v376 = vpack.c.b16 %v338, %v337
  %v377 = vpack.c.b16 %v340, %v339
  %v378 = vpack.c.b16 %v342, %v341
  %v379 = vpack.c.b16 %v344, %v343
  %v380 = vpack.c.b16 %v346, %v345
  %v381 = vpack.c.b16 %v348, %v347
  %v382 = vpack.c.b16 %v350, %v349
  %v431 = vunpack.c.l.b16 %v207
  %v432 = vunpack.c.l.b16 %v208
  %v433 = vunpack.c.l.b16 %v209
  %v434 = vunpack.c.l.b16 %v210
  %v435 = vunpack.c.l.b16 %v211
  %v436 = vunpack.c.l.b16 %v212
  %v437 = vunpack.c.l.b16 %v213
  %v438 = vunpack.c.l.b16 %v214
  %v439 = vunpack.c.l.b16 %v215
  %v440 = vunpack.c.l.b16 %v216
  %v441 = vunpack.c.l.b16 %v217
  %v442 = vunpack.c.l.b16 %v218
  %v443 = vunpack.c.l.b16 %v219
  %v444 = vunpack.c.l.b16 %v220
  %v445 = vunpack.c.l.b16 %v221
  %v446 = vunpack.c.l.b16 %v222
  %v447 = vpack.c.b16 %v432, %v431
  %v448 = vpack.c.b16 %v434, %v433
  %v449 = vpack.c.b16 %v436, %v435
  %v450 = vpack.c.b16 %v438, %v437
  %v451 = vpack.c.b16 %v440, %v439
  %v452 = vpack.c.b16 %v442, %v441
  %v453 = vpack.c.b16 %v444, %v443
  %v454 = vpack.c.b16 %v446, %v445
  %463 = vmatprep.subr.bf16.mxu0 0
  %464 = vmatpush1.bf16.msra.mxu0 %v454
  %465 = vmatprep.subr.bf16.mxu0 0
  %466 = vmatpush1.bf16.msra.mxu0 %v453
  %467 = vmatprep.subr.bf16.mxu0 0
  %468 = vmatpush1.bf16.msra.mxu0 %v452
  %469 = vmatprep.subr.bf16.mxu0 0
  %470 = vmatpush1.bf16.msra.mxu0 %v451
  %471 = vmatprep.subr.bf16.mxu0 0
  %472 = vmatpush1.bf16.msra.mxu0 %v450
  %473 = vmatprep.subr.bf16.mxu0 0
  %474 = vmatpush1.bf16.msra.mxu0 %v449
  %475 = vmatprep.subr.bf16.mxu0 0
  %476 = vmatpush1.bf16.msra.mxu0 %v448
  %477 = vmatprep.subr.bf16.mxu0 0
  %478 = vmatpush1.bf16.msra.mxu0 %v447
  %479 = vmatprep.subr.bf16.mxu0 0
  %480 = vmatpush2.bf16.msra.mxu0 0
  %481 = vmatprep.subr.bf16.mxu0 0
  %482 = vmatpush2.bf16.msra.mxu0 0
  %483 = vmatprep.subr.bf16.mxu0 0
  %484 = vmatpush2.bf16.msra.mxu0 0
  %485 = vmatprep.subr.bf16.mxu0 0
  %486 = vmatpush2.bf16.msra.mxu0 0
  %487 = vmatprep.subr.bf16.mxu0 0
  %488 = vmatpush2.bf16.msra.mxu0 0
  %489 = vmatprep.subr.bf16.mxu0 0
  %490 = vmatpush2.bf16.msra.mxu0 0
  %491 = vmatprep.subr.bf16.mxu0 0
  %492 = vmatpush2.bf16.msra.mxu0 0
  %493 = vmatprep.subr.bf16.mxu0 0
  %494 = vmatpush2.bf16.msra.mxu0 0
  %495 = vmatprep.mubr.bf16.mxu0 0
  %496 = vmatmul.mubr.bf16.gmra.mxu0 %v351
  %v497 = vpop.f32.mrf.mxu0
  %v498 = vadd.f32 0.0, %v497
  %v499 = vpop.f32.mrf.mxu0
  %v500 = vpop.f32.mrf.mxu0
  %v501 = vadd.f32 0.0, %v500
  %v502 = vpop.f32.mrf.mxu0
  %503 = vmatprep.mubr.bf16.mxu0 0
  %504 = vmatmul.mubr.bf16.gmra.mxu0 %v352
  %v505 = vpop.f32.mrf.mxu0
  %v506 = vadd.f32 0.0, %v505
  %v507 = vpop.f32.mrf.mxu0
  %v508 = vpop.f32.mrf.mxu0
  %v509 = vadd.f32 0.0, %v508
  %v510 = vpop.f32.mrf.mxu0
  %511 = vmatprep.mubr.bf16.mxu0 0
  %512 = vmatmul.mubr.bf16.gmra.mxu0 %v353
  %v513 = vpop.f32.mrf.mxu0
  %v514 = vadd.f32 0.0, %v513
  %v515 = vpop.f32.mrf.mxu0
  %v516 = vpop.f32.mrf.mxu0
  %v517 = vadd.f32 0.0, %v516
  %v518 = vpop.f32.mrf.mxu0
  %519 = vmatprep.mubr.bf16.mxu0 0
  %520 = vmatmul.mubr.bf16.gmra.mxu0 %v354
  %v521 = vpop.f32.mrf.mxu0
  %v522 = vadd.f32 0.0, %v521
  %v523 = vpop.f32.mrf.mxu0
  %v524 = vpop.f32.mrf.mxu0
  %v525 = vadd.f32 0.0, %v524
  %v526 = vpop.f32.mrf.mxu0
  %527 = vmatprep.mubr.bf16.mxu0 0
  %528 = vmatmul.mubr.bf16.gmra.mxu0 %v355
  %v529 = vpop.f32.mrf.mxu0
  %v530 = vadd.f32 0.0, %v529
  %v531 = vpop.f32.mrf.mxu0
  %v532 = vpop.f32.mrf.mxu0
  %v533 = vadd.f32 0.0, %v532
  %v534 = vpop.f32.mrf.mxu0
  %535 = vmatprep.mubr.bf16.mxu0 0
  %536 = vmatmul.mubr.bf16.gmra.mxu0 %v356
  %v537 = vpop.f32.mrf.mxu0
  %v538 = vadd.f32 0.0, %v537
  %v539 = vpop.f32.mrf.mxu0
  %v540 = vpop.f32.mrf.mxu0
  %v541 = vadd.f32 0.0, %v540
  %v542 = vpop.f32.mrf.mxu0
  %543 = vmatprep.mubr.bf16.mxu0 0
  %544 = vmatmul.mubr.bf16.gmra.mxu0 %v357
  %v545 = vpop.f32.mrf.mxu0
  %v546 = vadd.f32 0.0, %v545
  %v547 = vpop.f32.mrf.mxu0
  %v548 = vpop.f32.mrf.mxu0
  %v549 = vadd.f32 0.0, %v548
  %v550 = vpop.f32.mrf.mxu0
  %551 = vmatprep.mubr.bf16.mxu0 0
  %552 = vmatmul.mubr.bf16.gmra.mxu0 %v358
  %v553 = vpop.f32.mrf.mxu0
  %v554 = vadd.f32 0.0, %v553
  %v555 = vpop.f32.mrf.mxu0
  %v556 = vpop.f32.mrf.mxu0
  %v557 = vadd.f32 0.0, %v556
  %v558 = vpop.f32.mrf.mxu0
  %559 = vmatprep.mubr.bf16.mxu0 0
  %560 = vmatmul.mubr.bf16.gmra.mxu0 %v359
  %v561 = vpop.f32.mrf.mxu0
  %v562 = vadd.f32 0.0, %v561
  %v563 = vpop.f32.mrf.mxu0
  %v564 = vpop.f32.mrf.mxu0
  %v565 = vadd.f32 0.0, %v564
  %v566 = vpop.f32.mrf.mxu0
  %567 = vmatprep.mubr.bf16.mxu0 0
  %568 = vmatmul.mubr.bf16.gmra.mxu0 %v360
  %v569 = vpop.f32.mrf.mxu0
  %v570 = vadd.f32 0.0, %v569
  %v571 = vpop.f32.mrf.mxu0
  %v572 = vpop.f32.mrf.mxu0
  %v573 = vadd.f32 0.0, %v572
  %v574 = vpop.f32.mrf.mxu0
  %575 = vmatprep.mubr.bf16.mxu0 0
  %576 = vmatmul.mubr.bf16.gmra.mxu0 %v361
  %v577 = vpop.f32.mrf.mxu0
  %v578 = vadd.f32 0.0, %v577
  %v579 = vpop.f32.mrf.mxu0
  %v580 = vpop.f32.mrf.mxu0
  %v581 = vadd.f32 0.0, %v580
  %v582 = vpop.f32.mrf.mxu0
  %583 = vmatprep.mubr.bf16.mxu0 0
  %584 = vmatmul.mubr.bf16.gmra.mxu0 %v362
  %v585 = vpop.f32.mrf.mxu0
  %v586 = vadd.f32 0.0, %v585
  %v587 = vpop.f32.mrf.mxu0
  %v588 = vpop.f32.mrf.mxu0
  %v589 = vadd.f32 0.0, %v588
  %v590 = vpop.f32.mrf.mxu0
  %591 = vmatprep.mubr.bf16.mxu0 0
  %592 = vmatmul.mubr.bf16.gmra.mxu0 %v363
  %v593 = vpop.f32.mrf.mxu0
  %v594 = vadd.f32 0.0, %v593
  %v595 = vpop.f32.mrf.mxu0
  %v596 = vpop.f32.mrf.mxu0
  %v597 = vadd.f32 0.0, %v596
  %v598 = vpop.f32.mrf.mxu0
  %599 = vmatprep.mubr.bf16.mxu0 0
  %600 = vmatmul.mubr.bf16.gmra.mxu0 %v364
  %v601 = vpop.f32.mrf.mxu0
  %v602 = vadd.f32 0.0, %v601
  %v603 = vpop.f32.mrf.mxu0
  %v604 = vpop.f32.mrf.mxu0
  %v605 = vadd.f32 0.0, %v604
  %v606 = vpop.f32.mrf.mxu0
  %607 = vmatprep.mubr.bf16.mxu0 0
  %608 = vmatmul.mubr.bf16.gmra.mxu0 %v365
  %v609 = vpop.f32.mrf.mxu0
  %v610 = vadd.f32 0.0, %v609
  %v611 = vpop.f32.mrf.mxu0
  %v612 = vpop.f32.mrf.mxu0
  %v613 = vadd.f32 0.0, %v612
  %v614 = vpop.f32.mrf.mxu0
  %615 = vmatprep.mubr.bf16.mxu0 0
  %616 = vmatmul.mubr.bf16.gmra.mxu0 %v366
  %v617 = vpop.f32.mrf.mxu0
  %v618 = vadd.f32 0.0, %v617
  %v619 = vpop.f32.mrf.mxu0
  %v620 = vpop.f32.mrf.mxu0
  %v621 = vadd.f32 0.0, %v620
  %v622 = vpop.f32.mrf.mxu0
  %623 = vmatprep.mubr.bf16.mxu0 0
  %624 = vmatmul.mubr.bf16.gmra.mxu0 %v367
  %v625 = vpop.f32.mrf.mxu0
  %v626 = vadd.f32 0.0, %v625
  %v627 = vpop.f32.mrf.mxu0
  %v628 = vpop.f32.mrf.mxu0
  %v629 = vadd.f32 0.0, %v628
  %v630 = vpop.f32.mrf.mxu0
  %631 = vmatprep.mubr.bf16.mxu0 0
  %632 = vmatmul.mubr.bf16.gmra.mxu0 %v368
  %v633 = vpop.f32.mrf.mxu0
  %v634 = vadd.f32 0.0, %v633
  %v635 = vpop.f32.mrf.mxu0
  %v636 = vpop.f32.mrf.mxu0
  %v637 = vadd.f32 0.0, %v636
  %v638 = vpop.f32.mrf.mxu0
  %639 = vmatprep.mubr.bf16.mxu0 0
  %640 = vmatmul.mubr.bf16.gmra.mxu0 %v369
  %v641 = vpop.f32.mrf.mxu0
  %v642 = vadd.f32 0.0, %v641
  %v643 = vpop.f32.mrf.mxu0
  %v644 = vpop.f32.mrf.mxu0
  %v645 = vadd.f32 0.0, %v644
  %v646 = vpop.f32.mrf.mxu0
  %647 = vmatprep.mubr.bf16.mxu0 0
  %648 = vmatmul.mubr.bf16.gmra.mxu0 %v370
  %v649 = vpop.f32.mrf.mxu0
  %v650 = vadd.f32 0.0, %v649
  %v651 = vpop.f32.mrf.mxu0
  %v652 = vpop.f32.mrf.mxu0
  %v653 = vadd.f32 0.0, %v652
  %v654 = vpop.f32.mrf.mxu0
  %655 = vmatprep.mubr.bf16.mxu0 0
  %656 = vmatmul.mubr.bf16.gmra.mxu0 %v371
  %v657 = vpop.f32.mrf.mxu0
  %v658 = vadd.f32 0.0, %v657
  %v659 = vpop.f32.mrf.mxu0
  %v660 = vpop.f32.mrf.mxu0
  %v661 = vadd.f32 0.0, %v660
  %v662 = vpop.f32.mrf.mxu0
  %663 = vmatprep.mubr.bf16.mxu0 0
  %664 = vmatmul.mubr.bf16.gmra.mxu0 %v372
  %v665 = vpop.f32.mrf.mxu0
  %v666 = vadd.f32 0.0, %v665
  %v667 = vpop.f32.mrf.mxu0
  %v668 = vpop.f32.mrf.mxu0
  %v669 = vadd.f32 0.0, %v668
  %v670 = vpop.f32.mrf.mxu0
  %671 = vmatprep.mubr.bf16.mxu0 0
  %672 = vmatmul.mubr.bf16.gmra.mxu0 %v373
  %v673 = vpop.f32.mrf.mxu0
  %v674 = vadd.f32 0.0, %v673
  %v675 = vpop.f32.mrf.mxu0
  %v676 = vpop.f32.mrf.mxu0
  %v677 = vadd.f32 0.0, %v676
  %v678 = vpop.f32.mrf.mxu0
  %679 = vmatprep.mubr.bf16.mxu0 0
  %680 = vmatmul.mubr.bf16.gmra.mxu0 %v374
  %v681 = vpop.f32.mrf.mxu0
  %v682 = vadd.f32 0.0, %v681
  %v683 = vpop.f32.mrf.mxu0
  %v684 = vpop.f32.mrf.mxu0
  %v685 = vadd.f32 0.0, %v684
  %v686 = vpop.f32.mrf.mxu0
  %687 = vmatprep.mubr.bf16.mxu0 0
  %688 = vmatmul.mubr.bf16.gmra.mxu0 %v375
  %v689 = vpop.f32.mrf.mxu0
  %v690 = vadd.f32 0.0, %v689
  %v691 = vpop.f32.mrf.mxu0
  %v692 = vpop.f32.mrf.mxu0
  %v693 = vadd.f32 0.0, %v692
  %v694 = vpop.f32.mrf.mxu0
  %695 = vmatprep.mubr.bf16.mxu0 0
  %696 = vmatmul.mubr.bf16.gmra.mxu0 %v376
  %v697 = vpop.f32.mrf.mxu0
  %v698 = vadd.f32 0.0, %v697
  %v699 = vpop.f32.mrf.mxu0
  %v700 = vpop.f32.mrf.mxu0
  %v701 = vadd.f32 0.0, %v700
  %v702 = vpop.f32.mrf.mxu0
  %703 = vmatprep.mubr.bf16.mxu0 0
  %704 = vmatmul.mubr.bf16.gmra.mxu0 %v377
  %v705 = vpop.f32.mrf.mxu0
  %v706 = vadd.f32 0.0, %v705
  %v707 = vpop.f32.mrf.mxu0
  %v708 = vpop.f32.mrf.mxu0
  %v709 = vadd.f32 0.0, %v708
  %v710 = vpop.f32.mrf.mxu0
  %711 = vmatprep.mubr.bf16.mxu0 0
  %712 = vmatmul.mubr.bf16.gmra.mxu0 %v378
  %v713 = vpop.f32.mrf.mxu0
  %v714 = vadd.f32 0.0, %v713
  %v715 = vpop.f32.mrf.mxu0
  %v716 = vpop.f32.mrf.mxu0
  %v717 = vadd.f32 0.0, %v716
  %v718 = vpop.f32.mrf.mxu0
  %719 = vmatprep.mubr.bf16.mxu0 0
  %720 = vmatmul.mubr.bf16.gmra.mxu0 %v379
  %v721 = vpop.f32.mrf.mxu0
  %v722 = vadd.f32 0.0, %v721
  %v723 = vpop.f32.mrf.mxu0
  %v724 = vpop.f32.mrf.mxu0
  %v725 = vadd.f32 0.0, %v724
  %v726 = vpop.f32.mrf.mxu0
  %727 = vmatprep.mubr.bf16.mxu0 0
  %728 = vmatmul.mubr.bf16.gmra.mxu0 %v380
  %v729 = vpop.f32.mrf.mxu0
  %v730 = vadd.f32 0.0, %v729
  %v731 = vpop.f32.mrf.mxu0
  %v732 = vpop.f32.mrf.mxu0
  %v733 = vadd.f32 0.0, %v732
  %v734 = vpop.f32.mrf.mxu0
  %735 = vmatprep.mubr.bf16.mxu0 0
  %736 = vmatmul.mubr.bf16.gmra.mxu0 %v381
  %v737 = vpop.f32.mrf.mxu0
  %v738 = vadd.f32 0.0, %v737
  %v739 = vpop.f32.mrf.mxu0
  %v740 = vpop.f32.mrf.mxu0
  %v741 = vadd.f32 0.0, %v740
  %v742 = vpop.f32.mrf.mxu0
  %743 = vmatprep.mubr.bf16.mxu0 0
  %744 = vmatmul.mubr.bf16.gmra.mxu0 %v382
  %v745 = vpop.f32.mrf.mxu0
  %v746 = vadd.f32 0.0, %v745
  %v747 = vpop.f32.mrf.mxu0
  %v748 = vpop.f32.mrf.mxu0
  %v749 = vadd.f32 0.0, %v748
  %v750 = vpop.f32.mrf.mxu0
  %751 = vdwg.mxu0
  %v752 = vadd.f32 %v143, %v498
  %v753 = vadd.f32 %v144, %v501
  %v754 = vadd.f32 %v145, %v506
  %v755 = vadd.f32 %v146, %v509
  %v756 = vadd.f32 %v147, %v514
  %v757 = vadd.f32 %v148, %v517
  %v758 = vadd.f32 %v149, %v522
  %v759 = vadd.f32 %v150, %v525
  %v760 = vadd.f32 %v151, %v530
  %v761 = vadd.f32 %v152, %v533
  %v762 = vadd.f32 %v153, %v538
  %v763 = vadd.f32 %v154, %v541
  %v764 = vadd.f32 %v155, %v546
  %v765 = vadd.f32 %v156, %v549
  %v766 = vadd.f32 %v157, %v554
  %v767 = vadd.f32 %v158, %v557
  %v768 = vadd.f32 %v159, %v562
  %v769 = vadd.f32 %v160, %v565
  %v770 = vadd.f32 %v161, %v570
  %v771 = vadd.f32 %v162, %v573
  %v772 = vadd.f32 %v163, %v578
  %v773 = vadd.f32 %v164, %v581
  %v774 = vadd.f32 %v165, %v586
  %v775 = vadd.f32 %v166, %v589
  %v776 = vadd.f32 %v167, %v594
  %v777 = vadd.f32 %v168, %v597
  %v778 = vadd.f32 %v169, %v602
  %v779 = vadd.f32 %v170, %v605
  %v780 = vadd.f32 %v171, %v610
  %v781 = vadd.f32 %v172, %v613
  %v782 = vadd.f32 %v173, %v618
  %v783 = vadd.f32 %v174, %v621
  %v784 = vadd.f32 %v175, %v626
  %v785 = vadd.f32 %v176, %v629
  %v786 = vadd.f32 %v177, %v634
  %v787 = vadd.f32 %v178, %v637
  %v788 = vadd.f32 %v179, %v642
  %v789 = vadd.f32 %v180, %v645
  %v790 = vadd.f32 %v181, %v650
  %v791 = vadd.f32 %v182, %v653
  %v792 = vadd.f32 %v183, %v658
  %v793 = vadd.f32 %v184, %v661
  %v794 = vadd.f32 %v185, %v666
  %v795 = vadd.f32 %v186, %v669
  %v796 = vadd.f32 %v187, %v674
  %v797 = vadd.f32 %v188, %v677
  %v798 = vadd.f32 %v189, %v682
  %v799 = vadd.f32 %v190, %v685
  %v800 = vadd.f32 %v191, %v690
  %v801 = vadd.f32 %v192, %v693
  %v802 = vadd.f32 %v193, %v698
  %v803 = vadd.f32 %v194, %v701
  %v804 = vadd.f32 %v195, %v706
  %v805 = vadd.f32 %v196, %v709
  %v806 = vadd.f32 %v197, %v714
  %v807 = vadd.f32 %v198, %v717
  %v808 = vadd.f32 %v199, %v722
  %v809 = vadd.f32 %v200, %v725
  %v810 = vadd.f32 %v201, %v730
  %v811 = vadd.f32 %v202, %v733
  %v812 = vadd.f32 %v203, %v738
  %v813 = vadd.f32 %v204, %v741
  %v814 = vadd.f32 %v205, %v746
  %v815 = vadd.f32 %v206, %v749
  %816 = vst [vmem:[#allocation2] sm:$0xff] %v752
  %817 = vst [vmem:[#allocation2 + $0x8] sm:$0xff] %v753
  %818 = vst [vmem:[#allocation2 + $0x10] sm:$0xff] %v754
  %819 = vst [vmem:[#allocation2 + $0x18] sm:$0xff] %v755
  %820 = vst [vmem:[#allocation2 + $0x20] sm:$0xff] %v756
  %821 = vst [vmem:[#allocation2 + $0x28] sm:$0xff] %v757
  %822 = vst [vmem:[#allocation2 + $0x30] sm:$0xff] %v758
  %823 = vst [vmem:[#allocation2 + $0x38] sm:$0xff] %v759
  %824 = vst [vmem:[#allocation2 + $0x40] sm:$0xff] %v760
  %825 = vst [vmem:[#allocation2 + $0x48] sm:$0xff] %v761
  %826 = vst [vmem:[#allocation2 + $0x50] sm:$0xff] %v762
  %827 = vst [vmem:[#allocation2 + $0x58] sm:$0xff] %v763
  %828 = vst [vmem:[#allocation2 + $0x60] sm:$0xff] %v764
  %829 = vst [vmem:[#allocation2 + $0x68] sm:$0xff] %v765
  %830 = vst [vmem:[#allocation2 + $0x70] sm:$0xff] %v766
  %831 = vst [vmem:[#allocation2 + $0x78] sm:$0xff] %v767
  %832 = vst [vmem:[#allocation2 + $0x80] sm:$0xff] %v768
  %833 = vst [vmem:[#allocation2 + $0x88] sm:$0xff] %v769
  %834 = vst [vmem:[#allocation2 + $0x90] sm:$0xff] %v770
  %835 = vst [vmem:[#allocation2 + $0x98] sm:$0xff] %v771
  %836 = vst [vmem:[#allocation2 + $0xa0] sm:$0xff] %v772
  %837 = vst [vmem:[#allocation2 + $0xa8] sm:$0xff] %v773
  %838 = vst [vmem:[#allocation2 + $0xb0] sm:$0xff] %v774
  %839 = vst [vmem:[#allocation2 + $0xb8] sm:$0xff] %v775
  %840 = vst [vmem:[#allocation2 + $0xc0] sm:$0xff] %v776
  %841 = vst [vmem:[#allocation2 + $0xc8] sm:$0xff] %v777
  %842 = vst [vmem:[#allocation2 + $0xd0] sm:$0xff] %v778
  %843 = vst [vmem:[#allocation2 + $0xd8] sm:$0xff] %v779
  %844 = vst [vmem:[#allocation2 + $0xe0] sm:$0xff] %v780
  %845 = vst [vmem:[#allocation2 + $0xe8] sm:$0xff] %v781
  %846 = vst [vmem:[#allocation2 + $0xf0] sm:$0xff] %v782
  %847 = vst [vmem:[#allocation2 + $0xf8] sm:$0xff] %v783
  %848 = vst [vmem:[#allocation2 + $0x100] sm:$0xff] %v784
  %849 = vst [vmem:[#allocation2 + $0x108] sm:$0xff] %v785
  %850 = vst [vmem:[#allocation2 + $0x110] sm:$0xff] %v786
  %851 = vst [vmem:[#allocation2 + $0x118] sm:$0xff] %v787
  %852 = vst [vmem:[#allocation2 + $0x120] sm:$0xff] %v788
  %853 = vst [vmem:[#allocation2 + $0x128] sm:$0xff] %v789
  %854 = vst [vmem:[#allocation2 + $0x130] sm:$0xff] %v790
  %855 = vst [vmem:[#allocation2 + $0x138] sm:$0xff] %v791
  %856 = vst [vmem:[#allocation2 + $0x140] sm:$0xff] %v792
  %857 = vst [vmem:[#allocation2 + $0x148] sm:$0xff] %v793
  %858 = vst [vmem:[#allocation2 + $0x150] sm:$0xff] %v794
  %859 = vst [vmem:[#allocation2 + $0x158] sm:$0xff] %v795
  %860 = vst [vmem:[#allocation2 + $0x160] sm:$0xff] %v796
  %861 = vst [vmem:[#allocation2 + $0x168] sm:$0xff] %v797
  %862 = vst [vmem:[#allocation2 + $0x170] sm:$0xff] %v798
  %863 = vst [vmem:[#allocation2 + $0x178] sm:$0xff] %v799
  %864 = vst [vmem:[#allocation2 + $0x180] sm:$0xff] %v800
  %865 = vst [vmem:[#allocation2 + $0x188] sm:$0xff] %v801
  %866 = vst [vmem:[#allocation2 + $0x190] sm:$0xff] %v802
  %867 = vst [vmem:[#allocation2 + $0x198] sm:$0xff] %v803
  %868 = vst [vmem:[#allocation2 + $0x1a0] sm:$0xff] %v804
  %869 = vst [vmem:[#allocation2 + $0x1a8] sm:$0xff] %v805
  %870 = vst [vmem:[#allocation2 + $0x1b0] sm:$0xff] %v806
  %871 = vst [vmem:[#allocation2 + $0x1b8] sm:$0xff] %v807
  %872 = vst [vmem:[#allocation2 + $0x1c0] sm:$0xff] %v808
  %873 = vst [vmem:[#allocation2 + $0x1c8] sm:$0xff] %v809
  %874 = vst [vmem:[#allocation2 + $0x1d0] sm:$0xff] %v810
  %875 = vst [vmem:[#allocation2 + $0x1d8] sm:$0xff] %v811
  %876 = vst [vmem:[#allocation2 + $0x1e0] sm:$0xff] %v812
  %877 = vst [vmem:[#allocation2 + $0x1e8] sm:$0xff] %v813
  %878 = vst [vmem:[#allocation2 + $0x1f0] sm:$0xff] %v814
  %879 = vst [vmem:[#allocation2 + $0x1f8] sm:$0xff] %v815
  %v880 = vld [vmem:[%s0] sm:$0xf]
  %v881 = vld [vmem:[%s0 + $0x4] sm:$0xf]
  %v882 = vld [vmem:[%s0 + $0x8] sm:$0x1]
  %v883 = vld [vmem:[%s0 + $0xc] sm:$0xf]
  %v884 = vld [vmem:[%s0 + $0x10] sm:$0xf]
  %v885 = vld [vmem:[%s0 + $0x14] sm:$0x1]
  %v886 = vld [vmem:[%s0 + $0x18] sm:$0xf]
  %v887 = vld [vmem:[%s0 + $0x1c] sm:$0xf]
  %v888 = vld [vmem:[%s0 + $0x20] sm:$0x1]
  %v889 = vld [vmem:[%s0 + $0x24] sm:$0xf]
  %v890 = vld [vmem:[%s0 + $0x28] sm:$0xf]
  %v891 = vld [vmem:[%s0 + $0x2c] sm:$0x1]
  %v892 = vld [vmem:[%s0 + $0x30] sm:$0xf]
  %v893 = vld [vmem:[%s0 + $0x34] sm:$0xf]
  %v894 = vld [vmem:[%s0 + $0x38] sm:$0x1]
  %v895 = vld [vmem:[%s0 + $0x3c] sm:$0xf]
  %v896 = vld [vmem:[%s0 + $0x40] sm:$0xf]
  %v897 = vld [vmem:[%s0 + $0x44] sm:$0x1]
  %v898 = vld [vmem:[%s0 + $0x48] sm:$0xf]
  %v899 = vld [vmem:[%s0 + $0x4c] sm:$0xf]
  %v900 = vld [vmem:[%s0 + $0x50] sm:$0x1]
  %v901 = vld [vmem:[%s0 + $0x54] sm:$0xf]
  %v902 = vld [vmem:[%s0 + $0x58] sm:$0xf]
  %v903 = vld [vmem:[%s0 + $0x5c] sm:$0x1]
  %v904 = vld [vmem:[%s0 + $0x60] sm:$0xf]
  %v905 = vld [vmem:[%s0 + $0x64] sm:$0xf]
  %v906 = vld [vmem:[%s0 + $0x68] sm:$0x1]
  %v907 = vld [vmem:[%s0 + $0x6c] sm:$0xf]
  %v908 = vld [vmem:[%s0 + $0x70] sm:$0xf]
  %v909 = vld [vmem:[%s0 + $0x74] sm:$0x1]
  %v910 = vld [vmem:[%s0 + $0x78] sm:$0xf]
  %v911 = vld [vmem:[%s0 + $0x7c] sm:$0xf]
  %v912 = vld [vmem:[%s0 + $0x80] sm:$0x1]
  %v913 = vld [vmem:[%s0 + $0x84] sm:$0xf]
  %v914 = vld [vmem:[%s0 + $0x88] sm:$0xf]
  %v915 = vld [vmem:[%s0 + $0x8c] sm:$0x1]
  %v916 = vld [vmem:[%s0 + $0x90] sm:$0xf]
  %v917 = vld [vmem:[%s0 + $0x94] sm:$0xf]
  %v918 = vld [vmem:[%s0 + $0x98] sm:$0x1]
  %v919 = vld [vmem:[%s0 + $0x9c] sm:$0xf]
  %v920 = vld [vmem:[%s0 + $0xa0] sm:$0xf]
  %v921 = vld [vmem:[%s0 + $0xa4] sm:$0x1]
  %v922 = vld [vmem:[%s0 + $0xa8] sm:$0xf]
  %v923 = vld [vmem:[%s0 + $0xac] sm:$0xf]
  %v924 = vld [vmem:[%s0 + $0xb0] sm:$0x1]
  %v925 = vld [vmem:[%s0 + $0xb4] sm:$0xf]
  %v926 = vld [vmem:[%s0 + $0xb8] sm:$0xf]
  %v927 = vld [vmem:[%s0 + $0xbc] sm:$0x1]
  %v928 = vld [vmem:[%s0 + $0xd8] sm:$0xf]
  %v929 = vld [vmem:[%s0 + $0xdc] sm:$0xf]
  %v930 = vld [vmem:[%s0 + $0xe0] sm:$0x1]
  %v931 = vld [vmem:[%s0 + $0xe4] sm:$0xf]
  %v932 = vld [vmem:[%s0 + $0xe8] sm:$0xf]
  %v933 = vld [vmem:[%s0 + $0xec] sm:$0x1]
  %v934 = vld [vmem:[%s0 + $0xf0] sm:$0xf]
  %v935 = vld [vmem:[%s0 + $0xf4] sm:$0xf]
  %v936 = vld [vmem:[%s0 + $0xf8] sm:$0x1]
  %v937 = vld [vmem:[%s0 + $0xfc] sm:$0xf]
  %v938 = vld [vmem:[%s0 + $0x100] sm:$0xf]
  %v939 = vld [vmem:[%s0 + $0x104] sm:$0x1]
  %v940 = vld [vmem:[%s0 + $0x108] sm:$0xf]
  %v941 = vld [vmem:[%s0 + $0x10c] sm:$0xf]
  %v942 = vld [vmem:[%s0 + $0x110] sm:$0x1]
  %v943 = vld [vmem:[%s0 + $0x114] sm:$0xf]
  %v944 = vld [vmem:[%s0 + $0x118] sm:$0xf]
  %v945 = vld [vmem:[%s0 + $0x11c] sm:$0x1]
  %v946 = vld [vmem:[%s0 + $0x120] sm:$0xf]
  %v947 = vld [vmem:[%s0 + $0x124] sm:$0xf]
  %v948 = vld [vmem:[%s0 + $0x128] sm:$0x1]
  %v949 = vld [vmem:[%s0 + $0x12c] sm:$0xf]
  %v950 = vld [vmem:[%s0 + $0x130] sm:$0xf]
  %v951 = vld [vmem:[%s0 + $0x134] sm:$0x1]
  %v952 = vld [vmem:[%s0 + $0x138] sm:$0xf]
  %v953 = vld [vmem:[%s0 + $0x13c] sm:$0xf]
  %v954 = vld [vmem:[%s0 + $0x140] sm:$0x1]
  %v955 = vld [vmem:[%s0 + $0x144] sm:$0xf]
  %v956 = vld [vmem:[%s0 + $0x148] sm:$0xf]
  %v957 = vld [vmem:[%s0 + $0x14c] sm:$0x1]
  %v958 = vld [vmem:[%s0 + $0x150] sm:$0xf]
  %v959 = vld [vmem:[%s0 + $0x154] sm:$0xf]
  %v960 = vld [vmem:[%s0 + $0x158] sm:$0x1]
  %v961 = vld [vmem:[%s0 + $0x15c] sm:$0xf]
  %v962 = vld [vmem:[%s0 + $0x160] sm:$0xf]
  %v963 = vld [vmem:[%s0 + $0x164] sm:$0x1]
  %v964 = vld [vmem:[%s0 + $0x168] sm:$0xf]
  %v965 = vld [vmem:[%s0 + $0x16c] sm:$0xf]
  %v966 = vld [vmem:[%s0 + $0x170] sm:$0x1]
  %v967 = vld [vmem:[%s0 + $0x174] sm:$0xf]
  %v968 = vld [vmem:[%s0 + $0x178] sm:$0xf]
  %v969 = vld [vmem:[%s0 + $0x17c] sm:$0x1]
  %v970 = vld [vmem:[%s0 + $0x180] sm:$0xf]
  %v971 = vld [vmem:[%s0 + $0x184] sm:$0xf]
  %v972 = vld [vmem:[%s0 + $0x188] sm:$0x1]
  %v973 = vld [vmem:[%s0 + $0x18c] sm:$0xf]
  %v974 = vld [vmem:[%s0 + $0x190] sm:$0xf]
  %v975 = vld [vmem:[%s0 + $0x194] sm:$0x1]
  %vm976 = vsmask.f32 3328
  %vm977 = vsmask.f32 7440
  %vm978 = vmor %vm976, %vm977
  %v980 = vshrl.u32 %v880, 16
  %v982 = vrot.slane %v980, 4
  %v983 = vshll.u32 %v880, 16
  %v985 = vrot.slane %v983, 5
  %v986 = vor.u32 %v982, %v985
  %v987 = vrot.slane %v986, 4
  %v989 = vshll.u32 %v881, 16
  %v991 = vrot.slane %v989, 5
  %v992 = vsel %vm978, %v987, %v991
  %v993 = vshrl.u32 %v881, 16
  %v995 = vrot.slane %v993, 4
  %v996 = vor.u32 %v995, %v991
  %v997 = vrot.slane %v996, 4
  %v999 = vshll.u32 %v882, 16
  %v1001 = vrot.slane %v999, 5
  %v1002 = vsel %vm978, %v997, %v1001
  %v1004 = vshrl.u32 %v883, 16
  %v1006 = vrot.slane %v1004, 4
  %v1007 = vshll.u32 %v883, 16
  %v1009 = vrot.slane %v1007, 5
  %v1010 = vor.u32 %v1006, %v1009
  %v1011 = vrot.slane %v1010, 4
  %v1013 = vshll.u32 %v884, 16
  %v1015 = vrot.slane %v1013, 5
  %v1016 = vsel %vm978, %v1011, %v1015
  %v1017 = vshrl.u32 %v884, 16
  %v1019 = vrot.slane %v1017, 4
  %v1020 = vor.u32 %v1019, %v1015
  %v1021 = vrot.slane %v1020, 4
  %v1023 = vshll.u32 %v885, 16
  %v1025 = vrot.slane %v1023, 5
  %v1026 = vsel %vm978, %v1021, %v1025
  %v1028 = vshrl.u32 %v886, 16
  %v1030 = vrot.slane %v1028, 4
  %v1031 = vshll.u32 %v886, 16
  %v1033 = vrot.slane %v1031, 5
  %v1034 = vor.u32 %v1030, %v1033
  %v1035 = vrot.slane %v1034, 4
  %v1037 = vshll.u32 %v887, 16
  %v1039 = vrot.slane %v1037, 5
  %v1040 = vsel %vm978, %v1035, %v1039
  %v1041 = vshrl.u32 %v887, 16
  %v1043 = vrot.slane %v1041, 4
  %v1044 = vor.u32 %v1043, %v1039
  %v1045 = vrot.slane %v1044, 4
  %v1047 = vshll.u32 %v888, 16
  %v1049 = vrot.slane %v1047, 5
  %v1050 = vsel %vm978, %v1045, %v1049
  %v1052 = vshrl.u32 %v889, 16
  %v1054 = vrot.slane %v1052, 4
  %v1055 = vshll.u32 %v889, 16
  %v1057 = vrot.slane %v1055, 5
  %v1058 = vor.u32 %v1054, %v1057
  %v1059 = vrot.slane %v1058, 4
  %v1061 = vshll.u32 %v890, 16
  %v1063 = vrot.slane %v1061, 5
  %v1064 = vsel %vm978, %v1059, %v1063
  %v1065 = vshrl.u32 %v890, 16
  %v1067 = vrot.slane %v1065, 4
  %v1068 = vor.u32 %v1067, %v1063
  %v1069 = vrot.slane %v1068, 4
  %v1071 = vshll.u32 %v891, 16
  %v1073 = vrot.slane %v1071, 5
  %v1074 = vsel %vm978, %v1069, %v1073
  %v1076 = vshrl.u32 %v892, 16
  %v1078 = vrot.slane %v1076, 4
  %v1079 = vshll.u32 %v892, 16
  %v1081 = vrot.slane %v1079, 5
  %v1082 = vor.u32 %v1078, %v1081
  %v1083 = vrot.slane %v1082, 4
  %v1085 = vshll.u32 %v893, 16
  %v1087 = vrot.slane %v1085, 5
  %v1088 = vsel %vm978, %v1083, %v1087
  %v1089 = vshrl.u32 %v893, 16
  %v1091 = vrot.slane %v1089, 4
  %v1092 = vor.u32 %v1091, %v1087
  %v1093 = vrot.slane %v1092, 4
  %v1095 = vshll.u32 %v894, 16
  %v1097 = vrot.slane %v1095, 5
  %v1098 = vsel %vm978, %v1093, %v1097
  %v1100 = vshrl.u32 %v895, 16
  %v1102 = vrot.slane %v1100, 4
  %v1103 = vshll.u32 %v895, 16
  %v1105 = vrot.slane %v1103, 5
  %v1106 = vor.u32 %v1102, %v1105
  %v1107 = vrot.slane %v1106, 4
  %v1109 = vshll.u32 %v896, 16
  %v1111 = vrot.slane %v1109, 5
  %v1112 = vsel %vm978, %v1107, %v1111
  %v1113 = vshrl.u32 %v896, 16
  %v1115 = vrot.slane %v1113, 4
  %v1116 = vor.u32 %v1115, %v1111
  %v1117 = vrot.slane %v1116, 4
  %v1119 = vshll.u32 %v897, 16
  %v1121 = vrot.slane %v1119, 5
  %v1122 = vsel %vm978, %v1117, %v1121
  %v1124 = vshrl.u32 %v898, 16
  %v1126 = vrot.slane %v1124, 4
  %v1127 = vshll.u32 %v898, 16
  %v1129 = vrot.slane %v1127, 5
  %v1130 = vor.u32 %v1126, %v1129
  %v1131 = vrot.slane %v1130, 4
  %v1133 = vshll.u32 %v899, 16
  %v1135 = vrot.slane %v1133, 5
  %v1136 = vsel %vm978, %v1131, %v1135
  %v1137 = vshrl.u32 %v899, 16
  %v1139 = vrot.slane %v1137, 4
  %v1140 = vor.u32 %v1139, %v1135
  %v1141 = vrot.slane %v1140, 4
  %v1143 = vshll.u32 %v900, 16
  %v1145 = vrot.slane %v1143, 5
  %v1146 = vsel %vm978, %v1141, %v1145
  %v1148 = vshrl.u32 %v901, 16
  %v1150 = vrot.slane %v1148, 4
  %v1151 = vshll.u32 %v901, 16
  %v1153 = vrot.slane %v1151, 5
  %v1154 = vor.u32 %v1150, %v1153
  %v1155 = vrot.slane %v1154, 4
  %v1157 = vshll.u32 %v902, 16
  %v1159 = vrot.slane %v1157, 5
  %v1160 = vsel %vm978, %v1155, %v1159
  %v1161 = vshrl.u32 %v902, 16
  %v1163 = vrot.slane %v1161, 4
  %v1164 = vor.u32 %v1163, %v1159
  %v1165 = vrot.slane %v1164, 4
  %v1167 = vshll.u32 %v903, 16
  %v1169 = vrot.slane %v1167, 5
  %v1170 = vsel %vm978, %v1165, %v1169
  %v1172 = vshrl.u32 %v904, 16
  %v1174 = vrot.slane %v1172, 4
  %v1175 = vshll.u32 %v904, 16
  %v1177 = vrot.slane %v1175, 5
  %v1178 = vor.u32 %v1174, %v1177
  %v1179 = vrot.slane %v1178, 4
  %v1181 = vshll.u32 %v905, 16
  %v1183 = vrot.slane %v1181, 5
  %v1184 = vsel %vm978, %v1179, %v1183
  %v1185 = vshrl.u32 %v905, 16
  %v1187 = vrot.slane %v1185, 4
  %v1188 = vor.u32 %v1187, %v1183
  %v1189 = vrot.slane %v1188, 4
  %v1191 = vshll.u32 %v906, 16
  %v1193 = vrot.slane %v1191, 5
  %v1194 = vsel %vm978, %v1189, %v1193
  %v1196 = vshrl.u32 %v907, 16
  %v1198 = vrot.slane %v1196, 4
  %v1199 = vshll.u32 %v907, 16
  %v1201 = vrot.slane %v1199, 5
  %v1202 = vor.u32 %v1198, %v1201
  %v1203 = vrot.slane %v1202, 4
  %v1205 = vshll.u32 %v908, 16
  %v1207 = vrot.slane %v1205, 5
  %v1208 = vsel %vm978, %v1203, %v1207
  %v1209 = vshrl.u32 %v908, 16
  %v1211 = vrot.slane %v1209, 4
  %v1212 = vor.u32 %v1211, %v1207
  %v1213 = vrot.slane %v1212, 4
  %v1215 = vshll.u32 %v909, 16
  %v1217 = vrot.slane %v1215, 5
  %v1218 = vsel %vm978, %v1213, %v1217
  %v1220 = vshrl.u32 %v910, 16
  %v1222 = vrot.slane %v1220, 4
  %v1223 = vshll.u32 %v910, 16
  %v1225 = vrot.slane %v1223, 5
  %v1226 = vor.u32 %v1222, %v1225
  %v1227 = vrot.slane %v1226, 4
  %v1229 = vshll.u32 %v911, 16
  %v1231 = vrot.slane %v1229, 5
  %v1232 = vsel %vm978, %v1227, %v1231
  %v1233 = vshrl.u32 %v911, 16
  %v1235 = vrot.slane %v1233, 4
  %v1236 = vor.u32 %v1235, %v1231
  %v1237 = vrot.slane %v1236, 4
  %v1239 = vshll.u32 %v912, 16
  %v1241 = vrot.slane %v1239, 5
  %v1242 = vsel %vm978, %v1237, %v1241
  %v1244 = vshrl.u32 %v913, 16
  %v1246 = vrot.slane %v1244, 4
  %v1247 = vshll.u32 %v913, 16
  %v1249 = vrot.slane %v1247, 5
  %v1250 = vor.u32 %v1246, %v1249
  %v1251 = vrot.slane %v1250, 4
  %v1253 = vshll.u32 %v914, 16
  %v1255 = vrot.slane %v1253, 5
  %v1256 = vsel %vm978, %v1251, %v1255
  %v1257 = vshrl.u32 %v914, 16
  %v1259 = vrot.slane %v1257, 4
  %v1260 = vor.u32 %v1259, %v1255
  %v1261 = vrot.slane %v1260, 4
  %v1263 = vshll.u32 %v915, 16
  %v1265 = vrot.slane %v1263, 5
  %v1266 = vsel %vm978, %v1261, %v1265
  %v1268 = vshrl.u32 %v916, 16
  %v1270 = vrot.slane %v1268, 4
  %v1271 = vshll.u32 %v916, 16
  %v1273 = vrot.slane %v1271, 5
  %v1274 = vor.u32 %v1270, %v1273
  %v1275 = vrot.slane %v1274, 4
  %v1277 = vshll.u32 %v917, 16
  %v1279 = vrot.slane %v1277, 5
  %v1280 = vsel %vm978, %v1275, %v1279
  %v1281 = vshrl.u32 %v917, 16
  %v1283 = vrot.slane %v1281, 4
  %v1284 = vor.u32 %v1283, %v1279
  %v1285 = vrot.slane %v1284, 4
  %v1287 = vshll.u32 %v918, 16
  %v1289 = vrot.slane %v1287, 5
  %v1290 = vsel %vm978, %v1285, %v1289
  %v1292 = vshrl.u32 %v919, 16
  %v1294 = vrot.slane %v1292, 4
  %v1295 = vshll.u32 %v919, 16
  %v1297 = vrot.slane %v1295, 5
  %v1298 = vor.u32 %v1294, %v1297
  %v1299 = vrot.slane %v1298, 4
  %v1301 = vshll.u32 %v920, 16
  %v1303 = vrot.slane %v1301, 5
  %v1304 = vsel %vm978, %v1299, %v1303
  %v1305 = vshrl.u32 %v920, 16
  %v1307 = vrot.slane %v1305, 4
  %v1308 = vor.u32 %v1307, %v1303
  %v1309 = vrot.slane %v1308, 4
  %v1311 = vshll.u32 %v921, 16
  %v1313 = vrot.slane %v1311, 5
  %v1314 = vsel %vm978, %v1309, %v1313
  %v1316 = vshrl.u32 %v922, 16
  %v1318 = vrot.slane %v1316, 4
  %v1319 = vshll.u32 %v922, 16
  %v1321 = vrot.slane %v1319, 5
  %v1322 = vor.u32 %v1318, %v1321
  %v1323 = vrot.slane %v1322, 4
  %v1325 = vshll.u32 %v923, 16
  %v1327 = vrot.slane %v1325, 5
  %v1328 = vsel %vm978, %v1323, %v1327
  %v1329 = vshrl.u32 %v923, 16
  %v1331 = vrot.slane %v1329, 4
  %v1332 = vor.u32 %v1331, %v1327
  %v1333 = vrot.slane %v1332, 4
  %v1335 = vshll.u32 %v924, 16
  %v1337 = vrot.slane %v1335, 5
  %v1338 = vsel %vm978, %v1333, %v1337
  %v1340 = vshrl.u32 %v925, 16
  %v1342 = vrot.slane %v1340, 4
  %v1343 = vshll.u32 %v925, 16
  %v1345 = vrot.slane %v1343, 5
  %v1346 = vor.u32 %v1342, %v1345
  %v1347 = vrot.slane %v1346, 4
  %v1349 = vshll.u32 %v926, 16
  %v1351 = vrot.slane %v1349, 5
  %v1352 = vsel %vm978, %v1347, %v1351
  %v1353 = vshrl.u32 %v926, 16
  %v1355 = vrot.slane %v1353, 4
  %v1356 = vor.u32 %v1355, %v1351
  %v1357 = vrot.slane %v1356, 4
  %v1359 = vshll.u32 %v927, 16
  %v1361 = vrot.slane %v1359, 5
  %v1362 = vsel %vm978, %v1357, %v1361
  %v1364 = vshrl.u32 %v928, 16
  %v1366 = vrot.slane %v1364, 4
  %v1367 = vshll.u32 %v928, 16
  %v1369 = vrot.slane %v1367, 5
  %v1370 = vor.u32 %v1366, %v1369
  %v1371 = vrot.slane %v1370, 4
  %v1373 = vshll.u32 %v929, 16
  %v1375 = vrot.slane %v1373, 5
  %v1376 = vsel %vm978, %v1371, %v1375
  %v1377 = vshrl.u32 %v929, 16
  %v1379 = vrot.slane %v1377, 4
  %v1380 = vor.u32 %v1379, %v1375
  %v1381 = vrot.slane %v1380, 4
  %v1383 = vshll.u32 %v930, 16
  %v1385 = vrot.slane %v1383, 5
  %v1386 = vsel %vm978, %v1381, %v1385
  %v1388 = vshrl.u32 %v931, 16
  %v1390 = vrot.slane %v1388, 4
  %v1391 = vshll.u32 %v931, 16
  %v1393 = vrot.slane %v1391, 5
  %v1394 = vor.u32 %v1390, %v1393
  %v1395 = vrot.slane %v1394, 4
  %v1397 = vshll.u32 %v932, 16
  %v1399 = vrot.slane %v1397, 5
  %v1400 = vsel %vm978, %v1395, %v1399
  %v1401 = vshrl.u32 %v932, 16
  %v1403 = vrot.slane %v1401, 4
  %v1404 = vor.u32 %v1403, %v1399
  %v1405 = vrot.slane %v1404, 4
  %v1407 = vshll.u32 %v933, 16
  %v1409 = vrot.slane %v1407, 5
  %v1410 = vsel %vm978, %v1405, %v1409
  %v1412 = vshrl.u32 %v934, 16
  %v1414 = vrot.slane %v1412, 4
  %v1415 = vshll.u32 %v934, 16
  %v1417 = vrot.slane %v1415, 5
  %v1418 = vor.u32 %v1414, %v1417
  %v1419 = vrot.slane %v1418, 4
  %v1421 = vshll.u32 %v935, 16
  %v1423 = vrot.slane %v1421, 5
  %v1424 = vsel %vm978, %v1419, %v1423
  %v1425 = vshrl.u32 %v935, 16
  %v1427 = vrot.slane %v1425, 4
  %v1428 = vor.u32 %v1427, %v1423
  %v1429 = vrot.slane %v1428, 4
  %v1431 = vshll.u32 %v936, 16
  %v1433 = vrot.slane %v1431, 5
  %v1434 = vsel %vm978, %v1429, %v1433
  %v1436 = vshrl.u32 %v937, 16
  %v1438 = vrot.slane %v1436, 4
  %v1439 = vshll.u32 %v937, 16
  %v1441 = vrot.slane %v1439, 5
  %v1442 = vor.u32 %v1438, %v1441
  %v1443 = vrot.slane %v1442, 4
  %v1445 = vshll.u32 %v938, 16
  %v1447 = vrot.slane %v1445, 5
  %v1448 = vsel %vm978, %v1443, %v1447
  %v1449 = vshrl.u32 %v938, 16
  %v1451 = vrot.slane %v1449, 4
  %v1452 = vor.u32 %v1451, %v1447
  %v1453 = vrot.slane %v1452, 4
  %v1455 = vshll.u32 %v939, 16
  %v1457 = vrot.slane %v1455, 5
  %v1458 = vsel %vm978, %v1453, %v1457
  %v1460 = vshrl.u32 %v940, 16
  %v1462 = vrot.slane %v1460, 4
  %v1463 = vshll.u32 %v940, 16
  %v1465 = vrot.slane %v1463, 5
  %v1466 = vor.u32 %v1462, %v1465
  %v1467 = vrot.slane %v1466, 4
  %v1469 = vshll.u32 %v941, 16
  %v1471 = vrot.slane %v1469, 5
  %v1472 = vsel %vm978, %v1467, %v1471
  %v1473 = vshrl.u32 %v941, 16
  %v1475 = vrot.slane %v1473, 4
  %v1476 = vor.u32 %v1475, %v1471
  %v1477 = vrot.slane %v1476, 4
  %v1479 = vshll.u32 %v942, 16
  %v1481 = vrot.slane %v1479, 5
  %v1482 = vsel %vm978, %v1477, %v1481
  %v1484 = vshrl.u32 %v943, 16
  %v1486 = vrot.slane %v1484, 4
  %v1487 = vshll.u32 %v943, 16
  %v1489 = vrot.slane %v1487, 5
  %v1490 = vor.u32 %v1486, %v1489
  %v1491 = vrot.slane %v1490, 4
  %v1493 = vshll.u32 %v944, 16
  %v1495 = vrot.slane %v1493, 5
  %v1496 = vsel %vm978, %v1491, %v1495
  %v1497 = vshrl.u32 %v944, 16
  %v1499 = vrot.slane %v1497, 4
  %v1500 = vor.u32 %v1499, %v1495
  %v1501 = vrot.slane %v1500, 4
  %v1503 = vshll.u32 %v945, 16
  %v1505 = vrot.slane %v1503, 5
  %v1506 = vsel %vm978, %v1501, %v1505
  %v1508 = vshrl.u32 %v946, 16
  %v1510 = vrot.slane %v1508, 4
  %v1511 = vshll.u32 %v946, 16
  %v1513 = vrot.slane %v1511, 5
  %v1514 = vor.u32 %v1510, %v1513
  %v1515 = vrot.slane %v1514, 4
  %v1517 = vshll.u32 %v947, 16
  %v1519 = vrot.slane %v1517, 5
  %v1520 = vsel %vm978, %v1515, %v1519
  %v1521 = vshrl.u32 %v947, 16
  %v1523 = vrot.slane %v1521, 4
  %v1524 = vor.u32 %v1523, %v1519
  %v1525 = vrot.slane %v1524, 4
  %v1527 = vshll.u32 %v948, 16
  %v1529 = vrot.slane %v1527, 5
  %v1530 = vsel %vm978, %v1525, %v1529
  %v1532 = vshrl.u32 %v949, 16
  %v1534 = vrot.slane %v1532, 4
  %v1535 = vshll.u32 %v949, 16
  %v1537 = vrot.slane %v1535, 5
  %v1538 = vor.u32 %v1534, %v1537
  %v1539 = vrot.slane %v1538, 4
  %v1541 = vshll.u32 %v950, 16
  %v1543 = vrot.slane %v1541, 5
  %v1544 = vsel %vm978, %v1539, %v1543
  %v1545 = vshrl.u32 %v950, 16
  %v1547 = vrot.slane %v1545, 4
  %v1548 = vor.u32 %v1547, %v1543
  %v1549 = vrot.slane %v1548, 4
  %v1551 = vshll.u32 %v951, 16
  %v1553 = vrot.slane %v1551, 5
  %v1554 = vsel %vm978, %v1549, %v1553
  %v1556 = vshrl.u32 %v952, 16
  %v1558 = vrot.slane %v1556, 4
  %v1559 = vshll.u32 %v952, 16
  %v1561 = vrot.slane %v1559, 5
  %v1562 = vor.u32 %v1558, %v1561
  %v1563 = vrot.slane %v1562, 4
  %v1565 = vshll.u32 %v953, 16
  %v1567 = vrot.slane %v1565, 5
  %v1568 = vsel %vm978, %v1563, %v1567
  %v1569 = vshrl.u32 %v953, 16
  %v1571 = vrot.slane %v1569, 4
  %v1572 = vor.u32 %v1571, %v1567
  %v1573 = vrot.slane %v1572, 4
  %v1575 = vshll.u32 %v954, 16
  %v1577 = vrot.slane %v1575, 5
  %v1578 = vsel %vm978, %v1573, %v1577
  %v1580 = vshrl.u32 %v955, 16
  %v1582 = vrot.slane %v1580, 4
  %v1583 = vshll.u32 %v955, 16
  %v1585 = vrot.slane %v1583, 5
  %v1586 = vor.u32 %v1582, %v1585
  %v1587 = vrot.slane %v1586, 4
  %v1589 = vshll.u32 %v956, 16
  %v1591 = vrot.slane %v1589, 5
  %v1592 = vsel %vm978, %v1587, %v1591
  %v1593 = vshrl.u32 %v956, 16
  %v1595 = vrot.slane %v1593, 4
  %v1596 = vor.u32 %v1595, %v1591
  %v1597 = vrot.slane %v1596, 4
  %v1599 = vshll.u32 %v957, 16
  %v1601 = vrot.slane %v1599, 5
  %v1602 = vsel %vm978, %v1597, %v1601
  %v1604 = vshrl.u32 %v958, 16
  %v1606 = vrot.slane %v1604, 4
  %v1607 = vshll.u32 %v958, 16
  %v1609 = vrot.slane %v1607, 5
  %v1610 = vor.u32 %v1606, %v1609
  %v1611 = vrot.slane %v1610, 4
  %v1613 = vshll.u32 %v959, 16
  %v1615 = vrot.slane %v1613, 5
  %v1616 = vsel %vm978, %v1611, %v1615
  %v1617 = vshrl.u32 %v959, 16
  %v1619 = vrot.slane %v1617, 4
  %v1620 = vor.u32 %v1619, %v1615
  %v1621 = vrot.slane %v1620, 4
  %v1623 = vshll.u32 %v960, 16
  %v1625 = vrot.slane %v1623, 5
  %v1626 = vsel %vm978, %v1621, %v1625
  %v1628 = vshrl.u32 %v961, 16
  %v1630 = vrot.slane %v1628, 4
  %v1631 = vshll.u32 %v961, 16
  %v1633 = vrot.slane %v1631, 5
  %v1634 = vor.u32 %v1630, %v1633
  %v1635 = vrot.slane %v1634, 4
  %v1637 = vshll.u32 %v962, 16
  %v1639 = vrot.slane %v1637, 5
  %v1640 = vsel %vm978, %v1635, %v1639
  %v1641 = vshrl.u32 %v962, 16
  %v1643 = vrot.slane %v1641, 4
  %v1644 = vor.u32 %v1643, %v1639
  %v1645 = vrot.slane %v1644, 4
  %v1647 = vshll.u32 %v963, 16
  %v1649 = vrot.slane %v1647, 5
  %v1650 = vsel %vm978, %v1645, %v1649
  %v1652 = vshrl.u32 %v964, 16
  %v1654 = vrot.slane %v1652, 4
  %v1655 = vshll.u32 %v964, 16
  %v1657 = vrot.slane %v1655, 5
  %v1658 = vor.u32 %v1654, %v1657
  %v1659 = vrot.slane %v1658, 4
  %v1661 = vshll.u32 %v965, 16
  %v1663 = vrot.slane %v1661, 5
  %v1664 = vsel %vm978, %v1659, %v1663
  %v1665 = vshrl.u32 %v965, 16
  %v1667 = vrot.slane %v1665, 4
  %v1668 = vor.u32 %v1667, %v1663
  %v1669 = vrot.slane %v1668, 4
  %v1671 = vshll.u32 %v966, 16
  %v1673 = vrot.slane %v1671, 5
  %v1674 = vsel %vm978, %v1669, %v1673
  %v1676 = vshrl.u32 %v967, 16
  %v1678 = vrot.slane %v1676, 4
  %v1679 = vshll.u32 %v967, 16
  %v1681 = vrot.slane %v1679, 5
  %v1682 = vor.u32 %v1678, %v1681
  %v1683 = vrot.slane %v1682, 4
  %v1685 = vshll.u32 %v968, 16
  %v1687 = vrot.slane %v1685, 5
  %v1688 = vsel %vm978, %v1683, %v1687
  %v1689 = vshrl.u32 %v968, 16
  %v1691 = vrot.slane %v1689, 4
  %v1692 = vor.u32 %v1691, %v1687
  %v1693 = vrot.slane %v1692, 4
  %v1695 = vshll.u32 %v969, 16
  %v1697 = vrot.slane %v1695, 5
  %v1698 = vsel %vm978, %v1693, %v1697
  %v1700 = vshrl.u32 %v970, 16
  %v1702 = vrot.slane %v1700, 4
  %v1703 = vshll.u32 %v970, 16
  %v1705 = vrot.slane %v1703, 5
  %v1706 = vor.u32 %v1702, %v1705
  %v1707 = vrot.slane %v1706, 4
  %v1709 = vshll.u32 %v971, 16
  %v1711 = vrot.slane %v1709, 5
  %v1712 = vsel %vm978, %v1707, %v1711
  %v1713 = vshrl.u32 %v971, 16
  %v1715 = vrot.slane %v1713, 4
  %v1716 = vor.u32 %v1715, %v1711
  %v1717 = vrot.slane %v1716, 4
  %v1719 = vshll.u32 %v972, 16
  %v1721 = vrot.slane %v1719, 5
  %v1722 = vsel %vm978, %v1717, %v1721
  %v1724 = vshrl.u32 %v973, 16
  %v1726 = vrot.slane %v1724, 4
  %v1727 = vshll.u32 %v973, 16
  %v1729 = vrot.slane %v1727, 5
  %v1730 = vor.u32 %v1726, %v1729
  %v1731 = vrot.slane %v1730, 4
  %v1733 = vshll.u32 %v974, 16
  %v1735 = vrot.slane %v1733, 5
  %v1736 = vsel %vm978, %v1731, %v1735
  %v1737 = vshrl.u32 %v974, 16
  %v1739 = vrot.slane %v1737, 4
  %v1740 = vor.u32 %v1739, %v1735
  %v1741 = vrot.slane %v1740, 4
  %v1743 = vshll.u32 %v975, 16
  %v1745 = vrot.slane %v1743, 5
  %v1746 = vsel %vm978, %v1741, %v1745
  %v1747 = vld [vmem:[#allocation2] sm:$0xff]
  %v1748 = vld [vmem:[#allocation2 + $0x8] sm:$0xff]
  %v1749 = vld [vmem:[#allocation2 + $0x10] sm:$0xff]
  %v1750 = vld [vmem:[#allocation2 + $0x18] sm:$0xff]
  %v1751 = vld [vmem:[#allocation2 + $0x20] sm:$0xff]
  %v1752 = vld [vmem:[#allocation2 + $0x28] sm:$0xff]
  %v1753 = vld [vmem:[#allocation2 + $0x30] sm:$0xff]
  %v1754 = vld [vmem:[#allocation2 + $0x38] sm:$0xff]
  %v1755 = vld [vmem:[#allocation2 + $0x40] sm:$0xff]
  %v1756 = vld [vmem:[#allocation2 + $0x48] sm:$0xff]
  %v1757 = vld [vmem:[#allocation2 + $0x50] sm:$0xff]
  %v1758 = vld [vmem:[#allocation2 + $0x58] sm:$0xff]
  %v1759 = vld [vmem:[#allocation2 + $0x60] sm:$0xff]
  %v1760 = vld [vmem:[#allocation2 + $0x68] sm:$0xff]
  %v1761 = vld [vmem:[#allocation2 + $0x70] sm:$0xff]
  %v1762 = vld [vmem:[#allocation2 + $0x78] sm:$0xff]
  %v1763 = vld [vmem:[#allocation2 + $0x80] sm:$0xff]
  %v1764 = vld [vmem:[#allocation2 + $0x88] sm:$0xff]
  %v1765 = vld [vmem:[#allocation2 + $0x90] sm:$0xff]
  %v1766 = vld [vmem:[#allocation2 + $0x98] sm:$0xff]
  %v1767 = vld [vmem:[#allocation2 + $0xa0] sm:$0xff]
  %v1768 = vld [vmem:[#allocation2 + $0xa8] sm:$0xff]
  %v1769 = vld [vmem:[#allocation2 + $0xb0] sm:$0xff]
  %v1770 = vld [vmem:[#allocation2 + $0xb8] sm:$0xff]
  %v1771 = vld [vmem:[#allocation2 + $0xc0] sm:$0xff]
  %v1772 = vld [vmem:[#allocation2 + $0xc8] sm:$0xff]
  %v1773 = vld [vmem:[#allocation2 + $0xd0] sm:$0xff]
  %v1774 = vld [vmem:[#allocation2 + $0xd8] sm:$0xff]
  %v1775 = vld [vmem:[#allocation2 + $0xe0] sm:$0xff]
  %v1776 = vld [vmem:[#allocation2 + $0xe8] sm:$0xff]
  %v1777 = vld [vmem:[#allocation2 + $0xf0] sm:$0xff]
  %v1778 = vld [vmem:[#allocation2 + $0xf8] sm:$0xff]
  %v1779 = vld [vmem:[#allocation2 + $0x100] sm:$0xff]
  %v1780 = vld [vmem:[#allocation2 + $0x108] sm:$0xff]
  %v1781 = vld [vmem:[#allocation2 + $0x110] sm:$0xff]
  %v1782 = vld [vmem:[#allocation2 + $0x118] sm:$0xff]
  %v1783 = vld [vmem:[#allocation2 + $0x120] sm:$0xff]
  %v1784 = vld [vmem:[#allocation2 + $0x128] sm:$0xff]
  %v1785 = vld [vmem:[#allocation2 + $0x130] sm:$0xff]
  %v1786 = vld [vmem:[#allocation2 + $0x138] sm:$0xff]
  %v1787 = vld [vmem:[#allocation2 + $0x140] sm:$0xff]
  %v1788 = vld [vmem:[#allocation2 + $0x148] sm:$0xff]
  %v1789 = vld [vmem:[#allocation2 + $0x150] sm:$0xff]
  %v1790 = vld [vmem:[#allocation2 + $0x158] sm:$0xff]
  %v1791 = vld [vmem:[#allocation2 + $0x160] sm:$0xff]
  %v1792 = vld [vmem:[#allocation2 + $0x168] sm:$0xff]
  %v1793 = vld [vmem:[#allocation2 + $0x170] sm:$0xff]
  %v1794 = vld [vmem:[#allocation2 + $0x178] sm:$0xff]
  %v1795 = vld [vmem:[#allocation2 + $0x180] sm:$0xff]
  %v1796 = vld [vmem:[#allocation2 + $0x188] sm:$0xff]
  %v1797 = vld [vmem:[#allocation2 + $0x190] sm:$0xff]
  %v1798 = vld [vmem:[#allocation2 + $0x198] sm:$0xff]
  %v1799 = vld [vmem:[#allocation2 + $0x1a0] sm:$0xff]
  %v1800 = vld [vmem:[#allocation2 + $0x1a8] sm:$0xff]
  %v1801 = vld [vmem:[#allocation2 + $0x1b0] sm:$0xff]
  %v1802 = vld [vmem:[#allocation2 + $0x1b8] sm:$0xff]
  %v1803 = vld [vmem:[#allocation2 + $0x1c0] sm:$0xff]
  %v1804 = vld [vmem:[#allocation2 + $0x1c8] sm:$0xff]
  %v1805 = vld [vmem:[#allocation2 + $0x1d0] sm:$0xff]
  %v1806 = vld [vmem:[#allocation2 + $0x1d8] sm:$0xff]
  %v1807 = vld [vmem:[#allocation2 + $0x1e0] sm:$0xff]
  %v1808 = vld [vmem:[#allocation2 + $0x1e8] sm:$0xff]
  %v1809 = vld [vmem:[#allocation2 + $0x1f0] sm:$0xff]
  %v1810 = vld [vmem:[#allocation2 + $0x1f8] sm:$0xff]
  %s1811 = scalar_lea.vmem %s1, 64
  %v1812 = vld [vmem:[%s1811] sm:$0xf]
  %v1813 = vld [vmem:[%s1811 + $0x4] sm:$0xf]
  %v1814 = vld [vmem:[%s1811 + $0x8] sm:$0xf]
  %v1815 = vld [vmem:[%s1811 + $0xc] sm:$0xf]
  %v1816 = vld [vmem:[%s1811 + $0x10] sm:$0xf]
  %v1817 = vld [vmem:[%s1811 + $0x14] sm:$0xf]
  %v1818 = vld [vmem:[%s1811 + $0x18] sm:$0xf]
  %v1819 = vld [vmem:[%s1811 + $0x1c] sm:$0xf]
  %v1820 = vld [vmem:[%s1811 + $0x20] sm:$0xf]
  %v1821 = vld [vmem:[%s1811 + $0x24] sm:$0xf]
  %v1822 = vld [vmem:[%s1811 + $0x28] sm:$0xf]
  %v1823 = vld [vmem:[%s1811 + $0x2c] sm:$0xf]
  %v1824 = vld [vmem:[%s1811 + $0x30] sm:$0xf]
  %v1825 = vld [vmem:[%s1811 + $0x34] sm:$0xf]
  %v1826 = vld [vmem:[%s1811 + $0x38] sm:$0xf]
  %v1827 = vld [vmem:[%s1811 + $0x3c] sm:$0xf]
  %v1828 = vunpack.c.l.b16 %v992
  %v1829 = vunpack.c.l.b16 %v1002
  %v1830 = vunpack.c.l.b16 %v1016
  %v1831 = vunpack.c.l.b16 %v1026
  %v1832 = vunpack.c.l.b16 %v1040
  %v1833 = vunpack.c.l.b16 %v1050
  %v1834 = vunpack.c.l.b16 %v1064
  %v1835 = vunpack.c.l.b16 %v1074
  %v1836 = vunpack.c.l.b16 %v1088
  %v1837 = vunpack.c.l.b16 %v1098
  %v1838 = vunpack.c.l.b16 %v1112
  %v1839 = vunpack.c.l.b16 %v1122
  %v1840 = vunpack.c.l.b16 %v1136
  %v1841 = vunpack.c.l.b16 %v1146
  %v1842 = vunpack.c.l.b16 %v1160
  %v1843 = vunpack.c.l.b16 %v1170
  %v1844 = vunpack.c.l.b16 %v1184
  %v1845 = vunpack.c.l.b16 %v1194
  %v1846 = vunpack.c.l.b16 %v1208
  %v1847 = vunpack.c.l.b16 %v1218
  %v1848 = vunpack.c.l.b16 %v1232
  %v1849 = vunpack.c.l.b16 %v1242
  %v1850 = vunpack.c.l.b16 %v1256
  %v1851 = vunpack.c.l.b16 %v1266
  %v1852 = vunpack.c.l.b16 %v1280
  %v1853 = vunpack.c.l.b16 %v1290
  %v1854 = vunpack.c.l.b16 %v1304
  %v1855 = vunpack.c.l.b16 %v1314
  %v1856 = vunpack.c.l.b16 %v1328
  %v1857 = vunpack.c.l.b16 %v1338
  %v1858 = vunpack.c.l.b16 %v1352
  %v1859 = vunpack.c.l.b16 %v1362
  %v1860 = vunpack.c.l.b16 %v1376
  %v1861 = vunpack.c.l.b16 %v1386
  %v1862 = vunpack.c.l.b16 %v1400
  %v1863 = vunpack.c.l.b16 %v1410
  %v1864 = vunpack.c.l.b16 %v1424
  %v1865 = vunpack.c.l.b16 %v1434
  %v1866 = vunpack.c.l.b16 %v1448
  %v1867 = vunpack.c.l.b16 %v1458
  %v1868 = vunpack.c.l.b16 %v1472
  %v1869 = vunpack.c.l.b16 %v1482
  %v1870 = vunpack.c.l.b16 %v1496
  %v1871 = vunpack.c.l.b16 %v1506
  %v1872 = vunpack.c.l.b16 %v1520
  %v1873 = vunpack.c.l.b16 %v1530
  %v1874 = vunpack.c.l.b16 %v1544
  %v1875 = vunpack.c.l.b16 %v1554
  %v1876 = vunpack.c.l.b16 %v1568
  %v1877 = vunpack.c.l.b16 %v1578
  %v1878 = vunpack.c.l.b16 %v1592
  %v1879 = vunpack.c.l.b16 %v1602
  %v1880 = vunpack.c.l.b16 %v1616
  %v1881 = vunpack.c.l.b16 %v1626
  %v1882 = vunpack.c.l.b16 %v1640
  %v1883 = vunpack.c.l.b16 %v1650
  %v1884 = vunpack.c.l.b16 %v1664
  %v1885 = vunpack.c.l.b16 %v1674
  %v1886 = vunpack.c.l.b16 %v1688
  %v1887 = vunpack.c.l.b16 %v1698
  %v1888 = vunpack.c.l.b16 %v1712
  %v1889 = vunpack.c.l.b16 %v1722
  %v1890 = vunpack.c.l.b16 %v1736
  %v1891 = vunpack.c.l.b16 %v1746
  %v1892 = vpack.c.b16 %v1829, %v1828
  %v1893 = vpack.c.b16 %v1831, %v1830
  %v1894 = vpack.c.b16 %v1833, %v1832
  %v1895 = vpack.c.b16 %v1835, %v1834
  %v1896 = vpack.c.b16 %v1837, %v1836
  %v1897 = vpack.c.b16 %v1839, %v1838
  %v1898 = vpack.c.b16 %v1841, %v1840
  %v1899 = vpack.c.b16 %v1843, %v1842
  %v1900 = vpack.c.b16 %v1845, %v1844
  %v1901 = vpack.c.b16 %v1847, %v1846
  %v1902 = vpack.c.b16 %v1849, %v1848
  %v1903 = vpack.c.b16 %v1851, %v1850
  %v1904 = vpack.c.b16 %v1853, %v1852
  %v1905 = vpack.c.b16 %v1855, %v1854
  %v1906 = vpack.c.b16 %v1857, %v1856
  %v1907 = vpack.c.b16 %v1859, %v1858
  %v1908 = vpack.c.b16 %v1861, %v1860
  %v1909 = vpack.c.b16 %v1863, %v1862
  %v1910 = vpack.c.b16 %v1865, %v1864
  %v1911 = vpack.c.b16 %v1867, %v1866
  %v1912 = vpack.c.b16 %v1869, %v1868
  %v1913 = vpack.c.b16 %v1871, %v1870
  %v1914 = vpack.c.b16 %v1873, %v1872
  %v1915 = vpack.c.b16 %v1875, %v1874
  %v1916 = vpack.c.b16 %v1877, %v1876
  %v1917 = vpack.c.b16 %v1879, %v1878
  %v1918 = vpack.c.b16 %v1881, %v1880
  %v1919 = vpack.c.b16 %v1883, %v1882
  %v1920 = vpack.c.b16 %v1885, %v1884
  %v1921 = vpack.c.b16 %v1887, %v1886
  %v1922 = vpack.c.b16 %v1889, %v1888
  %v1923 = vpack.c.b16 %v1891, %v1890
  %v1972 = vunpack.c.l.b16 %v1812
  %v1973 = vunpack.c.l.b16 %v1813
  %v1974 = vunpack.c.l.b16 %v1814
  %v1975 = vunpack.c.l.b16 %v1815
  %v1976 = vunpack.c.l.b16 %v1816
  %v1977 = vunpack.c.l.b16 %v1817
  %v1978 = vunpack.c.l.b16 %v1818
  %v1979 = vunpack.c.l.b16 %v1819
  %v1980 = vunpack.c.l.b16 %v1820
  %v1981 = vunpack.c.l.b16 %v1821
  %v1982 = vunpack.c.l.b16 %v1822
  %v1983 = vunpack.c.l.b16 %v1823
  %v1984 = vunpack.c.l.b16 %v1824
  %v1985 = vunpack.c.l.b16 %v1825
  %v1986 = vunpack.c.l.b16 %v1826
  %v1987 = vunpack.c.l.b16 %v1827
  %v1988 = vpack.c.b16 %v1973, %v1972
  %v1989 = vpack.c.b16 %v1975, %v1974
  %v1990 = vpack.c.b16 %v1977, %v1976
  %v1991 = vpack.c.b16 %v1979, %v1978
  %v1992 = vpack.c.b16 %v1981, %v1980
  %v1993 = vpack.c.b16 %v1983, %v1982
  %v1994 = vpack.c.b16 %v1985, %v1984
  %v1995 = vpack.c.b16 %v1987, %v1986
  %2004 = vmatprep.subr.bf16.mxu0 0
  %2005 = vmatpush1.bf16.msra.mxu0 %v1995
  %2006 = vmatprep.subr.bf16.mxu0 0
  %2007 = vmatpush1.bf16.msra.mxu0 %v1994
  %2008 = vmatprep.subr.bf16.mxu0 0
  %2009 = vmatpush1.bf16.msra.mxu0 %v1993
  %2010 = vmatprep.subr.bf16.mxu0 0
  %2011 = vmatpush1.bf16.msra.mxu0 %v1992
  %2012 = vmatprep.subr.bf16.mxu0 0
  %2013 = vmatpush1.bf16.msra.mxu0 %v1991
  %2014 = vmatprep.subr.bf16.mxu0 0
  %2015 = vmatpush1.bf16.msra.mxu0 %v1990
  %2016 = vmatprep.subr.bf16.mxu0 0
  %2017 = vmatpush1.bf16.msra.mxu0 %v1989
  %2018 = vmatprep.subr.bf16.mxu0 0
  %2019 = vmatpush1.bf16.msra.mxu0 %v1988
  %2020 = vmatprep.subr.bf16.mxu0 0
  %2021 = vmatpush2.bf16.msra.mxu0 0
  %2022 = vmatprep.subr.bf16.mxu0 0
  %2023 = vmatpush2.bf16.msra.mxu0 0
  %2024 = vmatprep.subr.bf16.mxu0 0
  %2025 = vmatpush2.bf16.msra.mxu0 0
  %2026 = vmatprep.subr.bf16.mxu0 0
  %2027 = vmatpush2.bf16.msra.mxu0 0
  %2028 = vmatprep.subr.bf16.mxu0 0
  %2029 = vmatpush2.bf16.msra.mxu0 0
  %2030 = vmatprep.subr.bf16.mxu0 0
  %2031 = vmatpush2.bf16.msra.mxu0 0
  %2032 = vmatprep.subr.bf16.mxu0 0
  %2033 = vmatpush2.bf16.msra.mxu0 0
  %2034 = vmatprep.subr.bf16.mxu0 0
  %2035 = vmatpush2.bf16.msra.mxu0 0
  %2036 = vmatprep.mubr.bf16.mxu0 0
  %2037 = vmatmul.mubr.bf16.gmra.mxu0 %v1892
  %v2038 = vpop.f32.mrf.mxu0
  %v2039 = vadd.f32 0.0, %v2038
  %v2040 = vpop.f32.mrf.mxu0
  %v2041 = vpop.f32.mrf.mxu0
  %v2042 = vadd.f32 0.0, %v2041
  %v2043 = vpop.f32.mrf.mxu0
  %2044 = vmatprep.mubr.bf16.mxu0 0
  %2045 = vmatmul.mubr.bf16.gmra.mxu0 %v1893
  %v2046 = vpop.f32.mrf.mxu0
  %v2047 = vadd.f32 0.0, %v2046
  %v2048 = vpop.f32.mrf.mxu0
  %v2049 = vpop.f32.mrf.mxu0
  %v2050 = vadd.f32 0.0, %v2049
  %v2051 = vpop.f32.mrf.mxu0
  %2052 = vmatprep.mubr.bf16.mxu0 0
  %2053 = vmatmul.mubr.bf16.gmra.mxu0 %v1894
  %v2054 = vpop.f32.mrf.mxu0
  %v2055 = vadd.f32 0.0, %v2054
  %v2056 = vpop.f32.mrf.mxu0
  %v2057 = vpop.f32.mrf.mxu0
  %v2058 = vadd.f32 0.0, %v2057
  %v2059 = vpop.f32.mrf.mxu0
  %2060 = vmatprep.mubr.bf16.mxu0 0
  %2061 = vmatmul.mubr.bf16.gmra.mxu0 %v1895
  %v2062 = vpop.f32.mrf.mxu0
  %v2063 = vadd.f32 0.0, %v2062
  %v2064 = vpop.f32.mrf.mxu0
  %v2065 = vpop.f32.mrf.mxu0
  %v2066 = vadd.f32 0.0, %v2065
  %v2067 = vpop.f32.mrf.mxu0
  %2068 = vmatprep.mubr.bf16.mxu0 0
  %2069 = vmatmul.mubr.bf16.gmra.mxu0 %v1896
  %v2070 = vpop.f32.mrf.mxu0
  %v2071 = vadd.f32 0.0, %v2070
  %v2072 = vpop.f32.mrf.mxu0
  %v2073 = vpop.f32.mrf.mxu0
  %v2074 = vadd.f32 0.0, %v2073
  %v2075 = vpop.f32.mrf.mxu0
  %2076 = vmatprep.mubr.bf16.mxu0 0
  %2077 = vmatmul.mubr.bf16.gmra.mxu0 %v1897
  %v2078 = vpop.f32.mrf.mxu0
  %v2079 = vadd.f32 0.0, %v2078
  %v2080 = vpop.f32.mrf.mxu0
  %v2081 = vpop.f32.mrf.mxu0
  %v2082 = vadd.f32 0.0, %v2081
  %v2083 = vpop.f32.mrf.mxu0
  %2084 = vmatprep.mubr.bf16.mxu0 0
  %2085 = vmatmul.mubr.bf16.gmra.mxu0 %v1898
  %v2086 = vpop.f32.mrf.mxu0
  %v2087 = vadd.f32 0.0, %v2086
  %v2088 = vpop.f32.mrf.mxu0
  %v2089 = vpop.f32.mrf.mxu0
  %v2090 = vadd.f32 0.0, %v2089
  %v2091 = vpop.f32.mrf.mxu0
  %2092 = vmatprep.mubr.bf16.mxu0 0
  %2093 = vmatmul.mubr.bf16.gmra.mxu0 %v1899
  %v2094 = vpop.f32.mrf.mxu0
  %v2095 = vadd.f32 0.0, %v2094
  %v2096 = vpop.f32.mrf.mxu0
  %v2097 = vpop.f32.mrf.mxu0
  %v2098 = vadd.f32 0.0, %v2097
  %v2099 = vpop.f32.mrf.mxu0
  %2100 = vmatprep.mubr.bf16.mxu0 0
  %2101 = vmatmul.mubr.bf16.gmra.mxu0 %v1900
  %v2102 = vpop.f32.mrf.mxu0
  %v2103 = vadd.f32 0.0, %v2102
  %v2104 = vpop.f32.mrf.mxu0
  %v2105 = vpop.f32.mrf.mxu0
  %v2106 = vadd.f32 0.0, %v2105
  %v2107 = vpop.f32.mrf.mxu0
  %2108 = vmatprep.mubr.bf16.mxu0 0
  %2109 = vmatmul.mubr.bf16.gmra.mxu0 %v1901
  %v2110 = vpop.f32.mrf.mxu0
  %v2111 = vadd.f32 0.0, %v2110
  %v2112 = vpop.f32.mrf.mxu0
  %v2113 = vpop.f32.mrf.mxu0
  %v2114 = vadd.f32 0.0, %v2113
  %v2115 = vpop.f32.mrf.mxu0
  %2116 = vmatprep.mubr.bf16.mxu0 0
  %2117 = vmatmul.mubr.bf16.gmra.mxu0 %v1902
  %v2118 = vpop.f32.mrf.mxu0
  %v2119 = vadd.f32 0.0, %v2118
  %v2120 = vpop.f32.mrf.mxu0
  %v2121 = vpop.f32.mrf.mxu0
  %v2122 = vadd.f32 0.0, %v2121
  %v2123 = vpop.f32.mrf.mxu0
  %2124 = vmatprep.mubr.bf16.mxu0 0
  %2125 = vmatmul.mubr.bf16.gmra.mxu0 %v1903
  %v2126 = vpop.f32.mrf.mxu0
  %v2127 = vadd.f32 0.0, %v2126
  %v2128 = vpop.f32.mrf.mxu0
  %v2129 = vpop.f32.mrf.mxu0
  %v2130 = vadd.f32 0.0, %v2129
  %v2131 = vpop.f32.mrf.mxu0
  %2132 = vmatprep.mubr.bf16.mxu0 0
  %2133 = vmatmul.mubr.bf16.gmra.mxu0 %v1904
  %v2134 = vpop.f32.mrf.mxu0
  %v2135 = vadd.f32 0.0, %v2134
  %v2136 = vpop.f32.mrf.mxu0
  %v2137 = vpop.f32.mrf.mxu0
  %v2138 = vadd.f32 0.0, %v2137
  %v2139 = vpop.f32.mrf.mxu0
  %2140 = vmatprep.mubr.bf16.mxu0 0
  %2141 = vmatmul.mubr.bf16.gmra.mxu0 %v1905
  %v2142 = vpop.f32.mrf.mxu0
  %v2143 = vadd.f32 0.0, %v2142
  %v2144 = vpop.f32.mrf.mxu0
  %v2145 = vpop.f32.mrf.mxu0
  %v2146 = vadd.f32 0.0, %v2145
  %v2147 = vpop.f32.mrf.mxu0
  %2148 = vmatprep.mubr.bf16.mxu0 0
  %2149 = vmatmul.mubr.bf16.gmra.mxu0 %v1906
  %v2150 = vpop.f32.mrf.mxu0
  %v2151 = vadd.f32 0.0, %v2150
  %v2152 = vpop.f32.mrf.mxu0
  %v2153 = vpop.f32.mrf.mxu0
  %v2154 = vadd.f32 0.0, %v2153
  %v2155 = vpop.f32.mrf.mxu0
  %2156 = vmatprep.mubr.bf16.mxu0 0
  %2157 = vmatmul.mubr.bf16.gmra.mxu0 %v1907
  %v2158 = vpop.f32.mrf.mxu0
  %v2159 = vadd.f32 0.0, %v2158
  %v2160 = vpop.f32.mrf.mxu0
  %v2161 = vpop.f32.mrf.mxu0
  %v2162 = vadd.f32 0.0, %v2161
  %v2163 = vpop.f32.mrf.mxu0
  %2164 = vmatprep.mubr.bf16.mxu0 0
  %2165 = vmatmul.mubr.bf16.gmra.mxu0 %v1908
  %v2166 = vpop.f32.mrf.mxu0
  %v2167 = vadd.f32 0.0, %v2166
  %v2168 = vpop.f32.mrf.mxu0
  %v2169 = vpop.f32.mrf.mxu0
  %v2170 = vadd.f32 0.0, %v2169
  %v2171 = vpop.f32.mrf.mxu0
  %2172 = vmatprep.mubr.bf16.mxu0 0
  %2173 = vmatmul.mubr.bf16.gmra.mxu0 %v1909
  %v2174 = vpop.f32.mrf.mxu0
  %v2175 = vadd.f32 0.0, %v2174
  %v2176 = vpop.f32.mrf.mxu0
  %v2177 = vpop.f32.mrf.mxu0
  %v2178 = vadd.f32 0.0, %v2177
  %v2179 = vpop.f32.mrf.mxu0
  %2180 = vmatprep.mubr.bf16.mxu0 0
  %2181 = vmatmul.mubr.bf16.gmra.mxu0 %v1910
  %v2182 = vpop.f32.mrf.mxu0
  %v2183 = vadd.f32 0.0, %v2182
  %v2184 = vpop.f32.mrf.mxu0
  %v2185 = vpop.f32.mrf.mxu0
  %v2186 = vadd.f32 0.0, %v2185
  %v2187 = vpop.f32.mrf.mxu0
  %2188 = vmatprep.mubr.bf16.mxu0 0
  %2189 = vmatmul.mubr.bf16.gmra.mxu0 %v1911
  %v2190 = vpop.f32.mrf.mxu0
  %v2191 = vadd.f32 0.0, %v2190
  %v2192 = vpop.f32.mrf.mxu0
  %v2193 = vpop.f32.mrf.mxu0
  %v2194 = vadd.f32 0.0, %v2193
  %v2195 = vpop.f32.mrf.mxu0
  %2196 = vmatprep.mubr.bf16.mxu0 0
  %2197 = vmatmul.mubr.bf16.gmra.mxu0 %v1912
  %v2198 = vpop.f32.mrf.mxu0
  %v2199 = vadd.f32 0.0, %v2198
  %v2200 = vpop.f32.mrf.mxu0
  %v2201 = vpop.f32.mrf.mxu0
  %v2202 = vadd.f32 0.0, %v2201
  %v2203 = vpop.f32.mrf.mxu0
  %2204 = vmatprep.mubr.bf16.mxu0 0
  %2205 = vmatmul.mubr.bf16.gmra.mxu0 %v1913
  %v2206 = vpop.f32.mrf.mxu0
  %v2207 = vadd.f32 0.0, %v2206
  %v2208 = vpop.f32.mrf.mxu0
  %v2209 = vpop.f32.mrf.mxu0
  %v2210 = vadd.f32 0.0, %v2209
  %v2211 = vpop.f32.mrf.mxu0
  %2212 = vmatprep.mubr.bf16.mxu0 0
  %2213 = vmatmul.mubr.bf16.gmra.mxu0 %v1914
  %v2214 = vpop.f32.mrf.mxu0
  %v2215 = vadd.f32 0.0, %v2214
  %v2216 = vpop.f32.mrf.mxu0
  %v2217 = vpop.f32.mrf.mxu0
  %v2218 = vadd.f32 0.0, %v2217
  %v2219 = vpop.f32.mrf.mxu0
  %2220 = vmatprep.mubr.bf16.mxu0 0
  %2221 = vmatmul.mubr.bf16.gmra.mxu0 %v1915
  %v2222 = vpop.f32.mrf.mxu0
  %v2223 = vadd.f32 0.0, %v2222
  %v2224 = vpop.f32.mrf.mxu0
  %v2225 = vpop.f32.mrf.mxu0
  %v2226 = vadd.f32 0.0, %v2225
  %v2227 = vpop.f32.mrf.mxu0
  %2228 = vmatprep.mubr.bf16.mxu0 0
  %2229 = vmatmul.mubr.bf16.gmra.mxu0 %v1916
  %v2230 = vpop.f32.mrf.mxu0
  %v2231 = vadd.f32 0.0, %v2230
  %v2232 = vpop.f32.mrf.mxu0
  %v2233 = vpop.f32.mrf.mxu0
  %v2234 = vadd.f32 0.0, %v2233
  %v2235 = vpop.f32.mrf.mxu0
  %2236 = vmatprep.mubr.bf16.mxu0 0
  %2237 = vmatmul.mubr.bf16.gmra.mxu0 %v1917
  %v2238 = vpop.f32.mrf.mxu0
  %v2239 = vadd.f32 0.0, %v2238
  %v2240 = vpop.f32.mrf.mxu0
  %v2241 = vpop.f32.mrf.mxu0
  %v2242 = vadd.f32 0.0, %v2241
  %v2243 = vpop.f32.mrf.mxu0
  %2244 = vmatprep.mubr.bf16.mxu0 0
  %2245 = vmatmul.mubr.bf16.gmra.mxu0 %v1918
  %v2246 = vpop.f32.mrf.mxu0
  %v2247 = vadd.f32 0.0, %v2246
  %v2248 = vpop.f32.mrf.mxu0
  %v2249 = vpop.f32.mrf.mxu0
  %v2250 = vadd.f32 0.0, %v2249
  %v2251 = vpop.f32.mrf.mxu0
  %2252 = vmatprep.mubr.bf16.mxu0 0
  %2253 = vmatmul.mubr.bf16.gmra.mxu0 %v1919
  %v2254 = vpop.f32.mrf.mxu0
  %v2255 = vadd.f32 0.0, %v2254
  %v2256 = vpop.f32.mrf.mxu0
  %v2257 = vpop.f32.mrf.mxu0
  %v2258 = vadd.f32 0.0, %v2257
  %v2259 = vpop.f32.mrf.mxu0
  %2260 = vmatprep.mubr.bf16.mxu0 0
  %2261 = vmatmul.mubr.bf16.gmra.mxu0 %v1920
  %v2262 = vpop.f32.mrf.mxu0
  %v2263 = vadd.f32 0.0, %v2262
  %v2264 = vpop.f32.mrf.mxu0
  %v2265 = vpop.f32.mrf.mxu0
  %v2266 = vadd.f32 0.0, %v2265
  %v2267 = vpop.f32.mrf.mxu0
  %2268 = vmatprep.mubr.bf16.mxu0 0
  %2269 = vmatmul.mubr.bf16.gmra.mxu0 %v1921
  %v2270 = vpop.f32.mrf.mxu0
  %v2271 = vadd.f32 0.0, %v2270
  %v2272 = vpop.f32.mrf.mxu0
  %v2273 = vpop.f32.mrf.mxu0
  %v2274 = vadd.f32 0.0, %v2273
  %v2275 = vpop.f32.mrf.mxu0
  %2276 = vmatprep.mubr.bf16.mxu0 0
  %2277 = vmatmul.mubr.bf16.gmra.mxu0 %v1922
  %v2278 = vpop.f32.mrf.mxu0
  %v2279 = vadd.f32 0.0, %v2278
  %v2280 = vpop.f32.mrf.mxu0
  %v2281 = vpop.f32.mrf.mxu0
  %v2282 = vadd.f32 0.0, %v2281
  %v2283 = vpop.f32.mrf.mxu0
  %2284 = vmatprep.mubr.bf16.mxu0 0
  %2285 = vmatmul.mubr.bf16.gmra.mxu0 %v1923
  %v2286 = vpop.f32.mrf.mxu0
  %v2287 = vadd.f32 0.0, %v2286
  %v2288 = vpop.f32.mrf.mxu0
  %v2289 = vpop.f32.mrf.mxu0
  %v2290 = vadd.f32 0.0, %v2289
  %v2291 = vpop.f32.mrf.mxu0
  %2292 = vdwg.mxu0
  %v2293 = vadd.f32 %v1747, %v2039
  %v2294 = vadd.f32 %v1748, %v2042
  %v2295 = vadd.f32 %v1749, %v2047
  %v2296 = vadd.f32 %v1750, %v2050
  %v2297 = vadd.f32 %v1751, %v2055
  %v2298 = vadd.f32 %v1752, %v2058
  %v2299 = vadd.f32 %v1753, %v2063
  %v2300 = vadd.f32 %v1754, %v2066
  %v2301 = vadd.f32 %v1755, %v2071
  %v2302 = vadd.f32 %v1756, %v2074
  %v2303 = vadd.f32 %v1757, %v2079
  %v2304 = vadd.f32 %v1758, %v2082
  %v2305 = vadd.f32 %v1759, %v2087
  %v2306 = vadd.f32 %v1760, %v2090
  %v2307 = vadd.f32 %v1761, %v2095
  %v2308 = vadd.f32 %v1762, %v2098
  %v2309 = vadd.f32 %v1763, %v2103
  %v2310 = vadd.f32 %v1764, %v2106
  %v2311 = vadd.f32 %v1765, %v2111
  %v2312 = vadd.f32 %v1766, %v2114
  %v2313 = vadd.f32 %v1767, %v2119
  %v2314 = vadd.f32 %v1768, %v2122
  %v2315 = vadd.f32 %v1769, %v2127
  %v2316 = vadd.f32 %v1770, %v2130
  %v2317 = vadd.f32 %v1771, %v2135
  %v2318 = vadd.f32 %v1772, %v2138
  %v2319 = vadd.f32 %v1773, %v2143
  %v2320 = vadd.f32 %v1774, %v2146
  %v2321 = vadd.f32 %v1775, %v2151
  %v2322 = vadd.f32 %v1776, %v2154
  %v2323 = vadd.f32 %v1777, %v2159
  %v2324 = vadd.f32 %v1778, %v2162
  %v2325 = vadd.f32 %v1779, %v2167
  %v2326 = vadd.f32 %v1780, %v2170
  %v2327 = vadd.f32 %v1781, %v2175
  %v2328 = vadd.f32 %v1782, %v2178
  %v2329 = vadd.f32 %v1783, %v2183
  %v2330 = vadd.f32 %v1784, %v2186
  %v2331 = vadd.f32 %v1785, %v2191
  %v2332 = vadd.f32 %v1786, %v2194
  %v2333 = vadd.f32 %v1787, %v2199
  %v2334 = vadd.f32 %v1788, %v2202
  %v2335 = vadd.f32 %v1789, %v2207
  %v2336 = vadd.f32 %v1790, %v2210
  %v2337 = vadd.f32 %v1791, %v2215
  %v2338 = vadd.f32 %v1792, %v2218
  %v2339 = vadd.f32 %v1793, %v2223
  %v2340 = vadd.f32 %v1794, %v2226
  %v2341 = vadd.f32 %v1795, %v2231
  %v2342 = vadd.f32 %v1796, %v2234
  %v2343 = vadd.f32 %v1797, %v2239
  %v2344 = vadd.f32 %v1798, %v2242
  %v2345 = vadd.f32 %v1799, %v2247
  %v2346 = vadd.f32 %v1800, %v2250
  %v2347 = vadd.f32 %v1801, %v2255
  %v2348 = vadd.f32 %v1802, %v2258
  %v2349 = vadd.f32 %v1803, %v2263
  %v2350 = vadd.f32 %v1804, %v2266
  %v2351 = vadd.f32 %v1805, %v2271
  %v2352 = vadd.f32 %v1806, %v2274
  %v2353 = vadd.f32 %v1807, %v2279
  %v2354 = vadd.f32 %v1808, %v2282
  %v2355 = vadd.f32 %v1809, %v2287
  %v2356 = vadd.f32 %v1810, %v2290
  %2357 = vst [vmem:[#allocation2] sm:$0xff] %v2293
  %2358 = vst [vmem:[#allocation2 + $0x8] sm:$0xff] %v2294
  %2359 = vst [vmem:[#allocation2 + $0x10] sm:$0xff] %v2295
  %2360 = vst [vmem:[#allocation2 + $0x18] sm:$0xff] %v2296
  %2361 = vst [vmem:[#allocation2 + $0x20] sm:$0xff] %v2297
  %2362 = vst [vmem:[#allocation2 + $0x28] sm:$0xff] %v2298
  %2363 = vst [vmem:[#allocation2 + $0x30] sm:$0xff] %v2299
  %2364 = vst [vmem:[#allocation2 + $0x38] sm:$0xff] %v2300
  %2365 = vst [vmem:[#allocation2 + $0x40] sm:$0xff] %v2301
  %2366 = vst [vmem:[#allocation2 + $0x48] sm:$0xff] %v2302
  %2367 = vst [vmem:[#allocation2 + $0x50] sm:$0xff] %v2303
  %2368 = vst [vmem:[#allocation2 + $0x58] sm:$0xff] %v2304
  %2369 = vst [vmem:[#allocation2 + $0x60] sm:$0xff] %v2305
  %2370 = vst [vmem:[#allocation2 + $0x68] sm:$0xff] %v2306
  %2371 = vst [vmem:[#allocation2 + $0x70] sm:$0xff] %v2307
  %2372 = vst [vmem:[#allocation2 + $0x78] sm:$0xff] %v2308
  %2373 = vst [vmem:[#allocation2 + $0x80] sm:$0xff] %v2309
  %2374 = vst [vmem:[#allocation2 + $0x88] sm:$0xff] %v2310
  %2375 = vst [vmem:[#allocation2 + $0x90] sm:$0xff] %v2311
  %2376 = vst [vmem:[#allocation2 + $0x98] sm:$0xff] %v2312
  %2377 = vst [vmem:[#allocation2 + $0xa0] sm:$0xff] %v2313
  %2378 = vst [vmem:[#allocation2 + $0xa8] sm:$0xff] %v2314
  %2379 = vst [vmem:[#allocation2 + $0xb0] sm:$0xff] %v2315
  %2380 = vst [vmem:[#allocation2 + $0xb8] sm:$0xff] %v2316
  %2381 = vst [vmem:[#allocation2 + $0xc0] sm:$0xff] %v2317
  %2382 = vst [vmem:[#allocation2 + $0xc8] sm:$0xff] %v2318
  %2383 = vst [vmem:[#allocation2 + $0xd0] sm:$0xff] %v2319
  %2384 = vst [vmem:[#allocation2 + $0xd8] sm:$0xff] %v2320
  %2385 = vst [vmem:[#allocation2 + $0xe0] sm:$0xff] %v2321
  %2386 = vst [vmem:[#allocation2 + $0xe8] sm:$0xff] %v2322
  %2387 = vst [vmem:[#allocation2 + $0xf0] sm:$0xff] %v2323
  %2388 = vst [vmem:[#allocation2 + $0xf8] sm:$0xff] %v2324
  %2389 = vst [vmem:[#allocation2 + $0x100] sm:$0xff] %v2325
  %2390 = vst [vmem:[#allocation2 + $0x108] sm:$0xff] %v2326
  %2391 = vst [vmem:[#allocation2 + $0x110] sm:$0xff] %v2327
  %2392 = vst [vmem:[#allocation2 + $0x118] sm:$0xff] %v2328
  %2393 = vst [vmem:[#allocation2 + $0x120] sm:$0xff] %v2329
  %2394 = vst [vmem:[#allocation2 + $0x128] sm:$0xff] %v2330
  %2395 = vst [vmem:[#allocation2 + $0x130] sm:$0xff] %v2331
  %2396 = vst [vmem:[#allocation2 + $0x138] sm:$0xff] %v2332
  %2397 = vst [vmem:[#allocation2 + $0x140] sm:$0xff] %v2333
  %2398 = vst [vmem:[#allocation2 + $0x148] sm:$0xff] %v2334
  %2399 = vst [vmem:[#allocation2 + $0x150] sm:$0xff] %v2335
  %2400 = vst [vmem:[#allocation2 + $0x158] sm:$0xff] %v2336
  %2401 = vst [vmem:[#allocation2 + $0x160] sm:$0xff] %v2337
  %2402 = vst [vmem:[#allocation2 + $0x168] sm:$0xff] %v2338
  %2403 = vst [vmem:[#allocation2 + $0x170] sm:$0xff] %v2339
  %2404 = vst [vmem:[#allocation2 + $0x178] sm:$0xff] %v2340
  %2405 = vst [vmem:[#allocation2 + $0x180] sm:$0xff] %v2341
  %2406 = vst [vmem:[#allocation2 + $0x188] sm:$0xff] %v2342
  %2407 = vst [vmem:[#allocation2 + $0x190] sm:$0xff] %v2343
  %2408 = vst [vmem:[#allocation2 + $0x198] sm:$0xff] %v2344
  %2409 = vst [vmem:[#allocation2 + $0x1a0] sm:$0xff] %v2345
  %2410 = vst [vmem:[#allocation2 + $0x1a8] sm:$0xff] %v2346
  %2411 = vst [vmem:[#allocation2 + $0x1b0] sm:$0xff] %v2347
  %2412 = vst [vmem:[#allocation2 + $0x1b8] sm:$0xff] %v2348
  %2413 = vst [vmem:[#allocation2 + $0x1c0] sm:$0xff] %v2349
  %2414 = vst [vmem:[#allocation2 + $0x1c8] sm:$0xff] %v2350
  %2415 = vst [vmem:[#allocation2 + $0x1d0] sm:$0xff] %v2351
  %2416 = vst [vmem:[#allocation2 + $0x1d8] sm:$0xff] %v2352
  %2417 = vst [vmem:[#allocation2 + $0x1e0] sm:$0xff] %v2353
  %2418 = vst [vmem:[#allocation2 + $0x1e8] sm:$0xff] %v2354
  %2419 = vst [vmem:[#allocation2 + $0x1f0] sm:$0xff] %v2355
  %2420 = vst [vmem:[#allocation2 + $0x1f8] sm:$0xff] %v2356
  %v2421 = vld [vmem:[%s0] sm:$0xe]
  %v2422 = vld [vmem:[%s0 + $0x4] sm:$0xf]
  %v2423 = vld [vmem:[%s0 + $0x8] sm:$0x1]
  %v2424 = vld [vmem:[%s0 + $0xc] sm:$0xe]
  %v2425 = vld [vmem:[%s0 + $0x10] sm:$0xf]
  %v2426 = vld [vmem:[%s0 + $0x14] sm:$0x1]
  %v2427 = vld [vmem:[%s0 + $0x18] sm:$0xe]
  %v2428 = vld [vmem:[%s0 + $0x1c] sm:$0xf]
  %v2429 = vld [vmem:[%s0 + $0x20] sm:$0x1]
  %v2430 = vld [vmem:[%s0 + $0x24] sm:$0xe]
  %v2431 = vld [vmem:[%s0 + $0x28] sm:$0xf]
  %v2432 = vld [vmem:[%s0 + $0x2c] sm:$0x1]
  %v2433 = vld [vmem:[%s0 + $0x30] sm:$0xe]
  %v2434 = vld [vmem:[%s0 + $0x34] sm:$0xf]
  %v2435 = vld [vmem:[%s0 + $0x38] sm:$0x1]
  %v2436 = vld [vmem:[%s0 + $0x3c] sm:$0xe]
  %v2437 = vld [vmem:[%s0 + $0x40] sm:$0xf]
  %v2438 = vld [vmem:[%s0 + $0x44] sm:$0x1]
  %v2439 = vld [vmem:[%s0 + $0x48] sm:$0xe]
  %v2440 = vld [vmem:[%s0 + $0x4c] sm:$0xf]
  %v2441 = vld [vmem:[%s0 + $0x50] sm:$0x1]
  %v2442 = vld [vmem:[%s0 + $0x54] sm:$0xe]
  %v2443 = vld [vmem:[%s0 + $0x58] sm:$0xf]
  %v2444 = vld [vmem:[%s0 + $0x5c] sm:$0x1]
  %v2445 = vld [vmem:[%s0 + $0x60] sm:$0xe]
  %v2446 = vld [vmem:[%s0 + $0x64] sm:$0xf]
  %v2447 = vld [vmem:[%s0 + $0x68] sm:$0x1]
  %v2448 = vld [vmem:[%s0 + $0x6c] sm:$0xe]
  %v2449 = vld [vmem:[%s0 + $0x70] sm:$0xf]
  %v2450 = vld [vmem:[%s0 + $0x74] sm:$0x1]
  %v2451 = vld [vmem:[%s0 + $0x78] sm:$0xe]
  %v2452 = vld [vmem:[%s0 + $0x7c] sm:$0xf]
  %v2453 = vld [vmem:[%s0 + $0x80] sm:$0x1]
  %v2454 = vld [vmem:[%s0 + $0x84] sm:$0xe]
  %v2455 = vld [vmem:[%s0 + $0x88] sm:$0xf]
  %v2456 = vld [vmem:[%s0 + $0x8c] sm:$0x1]
  %v2457 = vld [vmem:[%s0 + $0x90] sm:$0xe]
  %v2458 = vld [vmem:[%s0 + $0x94] sm:$0xf]
  %v2459 = vld [vmem:[%s0 + $0x98] sm:$0x1]
  %v2460 = vld [vmem:[%s0 + $0x9c] sm:$0xe]
  %v2461 = vld [vmem:[%s0 + $0xa0] sm:$0xf]
  %v2462 = vld [vmem:[%s0 + $0xa4] sm:$0x1]
  %v2463 = vld [vmem:[%s0 + $0xa8] sm:$0xe]
  %v2464 = vld [vmem:[%s0 + $0xac] sm:$0xf]
  %v2465 = vld [vmem:[%s0 + $0xb0] sm:$0x1]
  %v2466 = vld [vmem:[%s0 + $0xb4] sm:$0xe]
  %v2467 = vld [vmem:[%s0 + $0xb8] sm:$0xf]
  %v2468 = vld [vmem:[%s0 + $0xbc] sm:$0x1]
  %v2469 = vld [vmem:[%s0 + $0xd8] sm:$0xe]
  %v2470 = vld [vmem:[%s0 + $0xdc] sm:$0xf]
  %v2471 = vld [vmem:[%s0 + $0xe0] sm:$0x1]
  %v2472 = vld [vmem:[%s0 + $0xe4] sm:$0xe]
  %v2473 = vld [vmem:[%s0 + $0xe8] sm:$0xf]
  %v2474 = vld [vmem:[%s0 + $0xec] sm:$0x1]
  %v2475 = vld [vmem:[%s0 + $0xf0] sm:$0xe]
  %v2476 = vld [vmem:[%s0 + $0xf4] sm:$0xf]
  %v2477 = vld [vmem:[%s0 + $0xf8] sm:$0x1]
  %v2478 = vld [vmem:[%s0 + $0xfc] sm:$0xe]
  %v2479 = vld [vmem:[%s0 + $0x100] sm:$0xf]
  %v2480 = vld [vmem:[%s0 + $0x104] sm:$0x1]
  %v2481 = vld [vmem:[%s0 + $0x108] sm:$0xe]
  %v2482 = vld [vmem:[%s0 + $0x10c] sm:$0xf]
  %v2483 = vld [vmem:[%s0 + $0x110] sm:$0x1]
  %v2484 = vld [vmem:[%s0 + $0x114] sm:$0xe]
  %v2485 = vld [vmem:[%s0 + $0x118] sm:$0xf]
  %v2486 = vld [vmem:[%s0 + $0x11c] sm:$0x1]
  %v2487 = vld [vmem:[%s0 + $0x120] sm:$0xe]
  %v2488 = vld [vmem:[%s0 + $0x124] sm:$0xf]
  %v2489 = vld [vmem:[%s0 + $0x128] sm:$0x1]
  %v2490 = vld [vmem:[%s0 + $0x12c] sm:$0xe]
  %v2491 = vld [vmem:[%s0 + $0x130] sm:$0xf]
  %v2492 = vld [vmem:[%s0 + $0x134] sm:$0x1]
  %v2493 = vld [vmem:[%s0 + $0x138] sm:$0xe]
  %v2494 = vld [vmem:[%s0 + $0x13c] sm:$0xf]
  %v2495 = vld [vmem:[%s0 + $0x140] sm:$0x1]
  %v2496 = vld [vmem:[%s0 + $0x144] sm:$0xe]
  %v2497 = vld [vmem:[%s0 + $0x148] sm:$0xf]
  %v2498 = vld [vmem:[%s0 + $0x14c] sm:$0x1]
  %v2499 = vld [vmem:[%s0 + $0x150] sm:$0xe]
  %v2500 = vld [vmem:[%s0 + $0x154] sm:$0xf]
  %v2501 = vld [vmem:[%s0 + $0x158] sm:$0x1]
  %v2502 = vld [vmem:[%s0 + $0x15c] sm:$0xe]
  %v2503 = vld [vmem:[%s0 + $0x160] sm:$0xf]
  %v2504 = vld [vmem:[%s0 + $0x164] sm:$0x1]
  %v2505 = vld [vmem:[%s0 + $0x168] sm:$0xe]
  %v2506 = vld [vmem:[%s0 + $0x16c] sm:$0xf]
  %v2507 = vld [vmem:[%s0 + $0x170] sm:$0x1]
  %v2508 = vld [vmem:[%s0 + $0x174] sm:$0xe]
  %v2509 = vld [vmem:[%s0 + $0x178] sm:$0xf]
  %v2510 = vld [vmem:[%s0 + $0x17c] sm:$0x1]
  %v2511 = vld [vmem:[%s0 + $0x180] sm:$0xe]
  %v2512 = vld [vmem:[%s0 + $0x184] sm:$0xf]
  %v2513 = vld [vmem:[%s0 + $0x188] sm:$0x1]
  %v2514 = vld [vmem:[%s0 + $0x18c] sm:$0xe]
  %v2515 = vld [vmem:[%s0 + $0x190] sm:$0xf]
  %v2516 = vld [vmem:[%s0 + $0x194] sm:$0x1]
  %vm2613 = vcmask 1042432
  %vm2614 = vcmask 1046532
  %vm2615 = vmor %vm2613, %vm2614
  %v2616 = vrot.slane %v2421, 5
  %v2617 = vrot.slane %v2616, 4
  %v2618 = vrot.slane %v2422, 5
  %v2619 = vsel %vm2615, %v2617, %v2618
  %v2620 = vrot.slane %v2618, 4
  %v2621 = vrot.slane %v2423, 5
  %v2622 = vsel %vm2615, %v2620, %v2621
  %v2623 = vrot.slane %v2424, 5
  %v2624 = vrot.slane %v2623, 4
  %v2625 = vrot.slane %v2425, 5
  %v2626 = vsel %vm2615, %v2624, %v2625
  %v2627 = vrot.slane %v2625, 4
  %v2628 = vrot.slane %v2426, 5
  %v2629 = vsel %vm2615, %v2627, %v2628
  %v2630 = vrot.slane %v2427, 5
  %v2631 = vrot.slane %v2630, 4
  %v2632 = vrot.slane %v2428, 5
  %v2633 = vsel %vm2615, %v2631, %v2632
  %v2634 = vrot.slane %v2632, 4
  %v2635 = vrot.slane %v2429, 5
  %v2636 = vsel %vm2615, %v2634, %v2635
  %v2637 = vrot.slane %v2430, 5
  %v2638 = vrot.slane %v2637, 4
  %v2639 = vrot.slane %v2431, 5
  %v2640 = vsel %vm2615, %v2638, %v2639
  %v2641 = vrot.slane %v2639, 4
  %v2642 = vrot.slane %v2432, 5
  %v2643 = vsel %vm2615, %v2641, %v2642
  %v2644 = vrot.slane %v2433, 5
  %v2645 = vrot.slane %v2644, 4
  %v2646 = vrot.slane %v2434, 5
  %v2647 = vsel %vm2615, %v2645, %v2646
  %v2648 = vrot.slane %v2646, 4
  %v2649 = vrot.slane %v2435, 5
  %v2650 = vsel %vm2615, %v2648, %v2649
  %v2651 = vrot.slane %v2436, 5
  %v2652 = vrot.slane %v2651, 4
  %v2653 = vrot.slane %v2437, 5
  %v2654 = vsel %vm2615, %v2652, %v2653
  %v2655 = vrot.slane %v2653, 4
  %v2656 = vrot.slane %v2438, 5
  %v2657 = vsel %vm2615, %v2655, %v2656
  %v2658 = vrot.slane %v2439, 5
  %v2659 = vrot.slane %v2658, 4
  %v2660 = vrot.slane %v2440, 5
  %v2661 = vsel %vm2615, %v2659, %v2660
  %v2662 = vrot.slane %v2660, 4
  %v2663 = vrot.slane %v2441, 5
  %v2664 = vsel %vm2615, %v2662, %v2663
  %v2665 = vrot.slane %v2442, 5
  %v2666 = vrot.slane %v2665, 4
  %v2667 = vrot.slane %v2443, 5
  %v2668 = vsel %vm2615, %v2666, %v2667
  %v2669 = vrot.slane %v2667, 4
  %v2670 = vrot.slane %v2444, 5
  %v2671 = vsel %vm2615, %v2669, %v2670
  %v2672 = vrot.slane %v2445, 5
  %v2673 = vrot.slane %v2672, 4
  %v2674 = vrot.slane %v2446, 5
  %v2675 = vsel %vm2615, %v2673, %v2674
  %v2676 = vrot.slane %v2674, 4
  %v2677 = vrot.slane %v2447, 5
  %v2678 = vsel %vm2615, %v2676, %v2677
  %v2679 = vrot.slane %v2448, 5
  %v2680 = vrot.slane %v2679, 4
  %v2681 = vrot.slane %v2449, 5
  %v2682 = vsel %vm2615, %v2680, %v2681
  %v2683 = vrot.slane %v2681, 4
  %v2684 = vrot.slane %v2450, 5
  %v2685 = vsel %vm2615, %v2683, %v2684
  %v2686 = vrot.slane %v2451, 5
  %v2687 = vrot.slane %v2686, 4
  %v2688 = vrot.slane %v2452, 5
  %v2689 = vsel %vm2615, %v2687, %v2688
  %v2690 = vrot.slane %v2688, 4
  %v2691 = vrot.slane %v2453, 5
  %v2692 = vsel %vm2615, %v2690, %v2691
  %v2693 = vrot.slane %v2454, 5
  %v2694 = vrot.slane %v2693, 4
  %v2695 = vrot.slane %v2455, 5
  %v2696 = vsel %vm2615, %v2694, %v2695
  %v2697 = vrot.slane %v2695, 4
  %v2698 = vrot.slane %v2456, 5
  %v2699 = vsel %vm2615, %v2697, %v2698
  %v2700 = vrot.slane %v2457, 5
  %v2701 = vrot.slane %v2700, 4
  %v2702 = vrot.slane %v2458, 5
  %v2703 = vsel %vm2615, %v2701, %v2702
  %v2704 = vrot.slane %v2702, 4
  %v2705 = vrot.slane %v2459, 5
  %v2706 = vsel %vm2615, %v2704, %v2705
  %v2707 = vrot.slane %v2460, 5
  %v2708 = vrot.slane %v2707, 4
  %v2709 = vrot.slane %v2461, 5
  %v2710 = vsel %vm2615, %v2708, %v2709
  %v2711 = vrot.slane %v2709, 4
  %v2712 = vrot.slane %v2462, 5
  %v2713 = vsel %vm2615, %v2711, %v2712
  %v2714 = vrot.slane %v2463, 5
  %v2715 = vrot.slane %v2714, 4
  %v2716 = vrot.slane %v2464, 5
  %v2717 = vsel %vm2615, %v2715, %v2716
  %v2718 = vrot.slane %v2716, 4
  %v2719 = vrot.slane %v2465, 5
  %v2720 = vsel %vm2615, %v2718, %v2719
  %v2721 = vrot.slane %v2466, 5
  %v2722 = vrot.slane %v2721, 4
  %v2723 = vrot.slane %v2467, 5
  %v2724 = vsel %vm2615, %v2722, %v2723
  %v2725 = vrot.slane %v2723, 4
  %v2726 = vrot.slane %v2468, 5
  %v2727 = vsel %vm2615, %v2725, %v2726
  %v2728 = vrot.slane %v2469, 5
  %v2729 = vrot.slane %v2728, 4
  %v2730 = vrot.slane %v2470, 5
  %v2731 = vsel %vm2615, %v2729, %v2730
  %v2732 = vrot.slane %v2730, 4
  %v2733 = vrot.slane %v2471, 5
  %v2734 = vsel %vm2615, %v2732, %v2733
  %v2735 = vrot.slane %v2472, 5
  %v2736 = vrot.slane %v2735, 4
  %v2737 = vrot.slane %v2473, 5
  %v2738 = vsel %vm2615, %v2736, %v2737
  %v2739 = vrot.slane %v2737, 4
  %v2740 = vrot.slane %v2474, 5
  %v2741 = vsel %vm2615, %v2739, %v2740
  %v2742 = vrot.slane %v2475, 5
  %v2743 = vrot.slane %v2742, 4
  %v2744 = vrot.slane %v2476, 5
  %v2745 = vsel %vm2615, %v2743, %v2744
  %v2746 = vrot.slane %v2744, 4
  %v2747 = vrot.slane %v2477, 5
  %v2748 = vsel %vm2615, %v2746, %v2747
  %v2749 = vrot.slane %v2478, 5
  %v2750 = vrot.slane %v2749, 4
  %v2751 = vrot.slane %v2479, 5
  %v2752 = vsel %vm2615, %v2750, %v2751
  %v2753 = vrot.slane %v2751, 4
  %v2754 = vrot.slane %v2480, 5
  %v2755 = vsel %vm2615, %v2753, %v2754
  %v2756 = vrot.slane %v2481, 5
  %v2757 = vrot.slane %v2756, 4
  %v2758 = vrot.slane %v2482, 5
  %v2759 = vsel %vm2615, %v2757, %v2758
  %v2760 = vrot.slane %v2758, 4
  %v2761 = vrot.slane %v2483, 5
  %v2762 = vsel %vm2615, %v2760, %v2761
  %v2763 = vrot.slane %v2484, 5
  %v2764 = vrot.slane %v2763, 4
  %v2765 = vrot.slane %v2485, 5
  %v2766 = vsel %vm2615, %v2764, %v2765
  %v2767 = vrot.slane %v2765, 4
  %v2768 = vrot.slane %v2486, 5
  %v2769 = vsel %vm2615, %v2767, %v2768
  %v2770 = vrot.slane %v2487, 5
  %v2771 = vrot.slane %v2770, 4
  %v2772 = vrot.slane %v2488, 5
  %v2773 = vsel %vm2615, %v2771, %v2772
  %v2774 = vrot.slane %v2772, 4
  %v2775 = vrot.slane %v2489, 5
  %v2776 = vsel %vm2615, %v2774, %v2775
  %v2777 = vrot.slane %v2490, 5
  %v2778 = vrot.slane %v2777, 4
  %v2779 = vrot.slane %v2491, 5
  %v2780 = vsel %vm2615, %v2778, %v2779
  %v2781 = vrot.slane %v2779, 4
  %v2782 = vrot.slane %v2492, 5
  %v2783 = vsel %vm2615, %v2781, %v2782
  %v2784 = vrot.slane %v2493, 5
  %v2785 = vrot.slane %v2784, 4
  %v2786 = vrot.slane %v2494, 5
  %v2787 = vsel %vm2615, %v2785, %v2786
  %v2788 = vrot.slane %v2786, 4
  %v2789 = vrot.slane %v2495, 5
  %v2790 = vsel %vm2615, %v2788, %v2789
  %v2791 = vrot.slane %v2496, 5
  %v2792 = vrot.slane %v2791, 4
  %v2793 = vrot.slane %v2497, 5
  %v2794 = vsel %vm2615, %v2792, %v2793
  %v2795 = vrot.slane %v2793, 4
  %v2796 = vrot.slane %v2498, 5
  %v2797 = vsel %vm2615, %v2795, %v2796
  %v2798 = vrot.slane %v2499, 5
  %v2799 = vrot.slane %v2798, 4
  %v2800 = vrot.slane %v2500, 5
  %v2801 = vsel %vm2615, %v2799, %v2800
  %v2802 = vrot.slane %v2800, 4
  %v2803 = vrot.slane %v2501, 5
  %v2804 = vsel %vm2615, %v2802, %v2803
  %v2805 = vrot.slane %v2502, 5
  %v2806 = vrot.slane %v2805, 4
  %v2807 = vrot.slane %v2503, 5
  %v2808 = vsel %vm2615, %v2806, %v2807
  %v2809 = vrot.slane %v2807, 4
  %v2810 = vrot.slane %v2504, 5
  %v2811 = vsel %vm2615, %v2809, %v2810
  %v2812 = vrot.slane %v2505, 5
  %v2813 = vrot.slane %v2812, 4
  %v2814 = vrot.slane %v2506, 5
  %v2815 = vsel %vm2615, %v2813, %v2814
  %v2816 = vrot.slane %v2814, 4
  %v2817 = vrot.slane %v2507, 5
  %v2818 = vsel %vm2615, %v2816, %v2817
  %v2819 = vrot.slane %v2508, 5
  %v2820 = vrot.slane %v2819, 4
  %v2821 = vrot.slane %v2509, 5
  %v2822 = vsel %vm2615, %v2820, %v2821
  %v2823 = vrot.slane %v2821, 4
  %v2824 = vrot.slane %v2510, 5
  %v2825 = vsel %vm2615, %v2823, %v2824
  %v2826 = vrot.slane %v2511, 5
  %v2827 = vrot.slane %v2826, 4
  %v2828 = vrot.slane %v2512, 5
  %v2829 = vsel %vm2615, %v2827, %v2828
  %v2830 = vrot.slane %v2828, 4
  %v2831 = vrot.slane %v2513, 5
  %v2832 = vsel %vm2615, %v2830, %v2831
  %v2833 = vrot.slane %v2514, 5
  %v2834 = vrot.slane %v2833, 4
  %v2835 = vrot.slane %v2515, 5
  %v2836 = vsel %vm2615, %v2834, %v2835
  %v2837 = vrot.slane %v2835, 4
  %v2838 = vrot.slane %v2516, 5
  %v2839 = vsel %vm2615, %v2837, %v2838
  %v2840 = vld [vmem:[#allocation2] sm:$0xff]
  %v2841 = vld [vmem:[#allocation2 + $0x8] sm:$0xff]
  %v2842 = vld [vmem:[#allocation2 + $0x10] sm:$0xff]
  %v2843 = vld [vmem:[#allocation2 + $0x18] sm:$0xff]
  %v2844 = vld [vmem:[#allocation2 + $0x20] sm:$0xff]
  %v2845 = vld [vmem:[#allocation2 + $0x28] sm:$0xff]
  %v2846 = vld [vmem:[#allocation2 + $0x30] sm:$0xff]
  %v2847 = vld [vmem:[#allocation2 + $0x38] sm:$0xff]
  %v2848 = vld [vmem:[#allocation2 + $0x40] sm:$0xff]
  %v2849 = vld [vmem:[#allocation2 + $0x48] sm:$0xff]
  %v2850 = vld [vmem:[#allocation2 + $0x50] sm:$0xff]
  %v2851 = vld [vmem:[#allocation2 + $0x58] sm:$0xff]
  %v2852 = vld [vmem:[#allocation2 + $0x60] sm:$0xff]
  %v2853 = vld [vmem:[#allocation2 + $0x68] sm:$0xff]
  %v2854 = vld [vmem:[#allocation2 + $0x70] sm:$0xff]
  %v2855 = vld [vmem:[#allocation2 + $0x78] sm:$0xff]
  %v2856 = vld [vmem:[#allocation2 + $0x80] sm:$0xff]
  %v2857 = vld [vmem:[#allocation2 + $0x88] sm:$0xff]
  %v2858 = vld [vmem:[#allocation2 + $0x90] sm:$0xff]
  %v2859 = vld [vmem:[#allocation2 + $0x98] sm:$0xff]
  %v2860 = vld [vmem:[#allocation2 + $0xa0] sm:$0xff]
  %v2861 = vld [vmem:[#allocation2 + $0xa8] sm:$0xff]
  %v2862 = vld [vmem:[#allocation2 + $0xb0] sm:$0xff]
  %v2863 = vld [vmem:[#allocation2 + $0xb8] sm:$0xff]
  %v2864 = vld [vmem:[#allocation2 + $0xc0] sm:$0xff]
  %v2865 = vld [vmem:[#allocation2 + $0xc8] sm:$0xff]
  %v2866 = vld [vmem:[#allocation2 + $0xd0] sm:$0xff]
  %v2867 = vld [vmem:[#allocation2 + $0xd8] sm:$0xff]
  %v2868 = vld [vmem:[#allocation2 + $0xe0] sm:$0xff]
  %v2869 = vld [vmem:[#allocation2 + $0xe8] sm:$0xff]
  %v2870 = vld [vmem:[#allocation2 + $0xf0] sm:$0xff]
  %v2871 = vld [vmem:[#allocation2 + $0xf8] sm:$0xff]
  %v2872 = vld [vmem:[#allocation2 + $0x100] sm:$0xff]
  %v2873 = vld [vmem:[#allocation2 + $0x108] sm:$0xff]
  %v2874 = vld [vmem:[#allocation2 + $0x110] sm:$0xff]
  %v2875 = vld [vmem:[#allocation2 + $0x118] sm:$0xff]
  %v2876 = vld [vmem:[#allocation2 + $0x120] sm:$0xff]
  %v2877 = vld [vmem:[#allocation2 + $0x128] sm:$0xff]
  %v2878 = vld [vmem:[#allocation2 + $0x130] sm:$0xff]
  %v2879 = vld [vmem:[#allocation2 + $0x138] sm:$0xff]
  %v2880 = vld [vmem:[#allocation2 + $0x140] sm:$0xff]
  %v2881 = vld [vmem:[#allocation2 + $0x148] sm:$0xff]
  %v2882 = vld [vmem:[#allocation2 + $0x150] sm:$0xff]
  %v2883 = vld [vmem:[#allocation2 + $0x158] sm:$0xff]
  %v2884 = vld [vmem:[#allocation2 + $0x160] sm:$0xff]
  %v2885 = vld [vmem:[#allocation2 + $0x168] sm:$0xff]
  %v2886 = vld [vmem:[#allocation2 + $0x170] sm:$0xff]
  %v2887 = vld [vmem:[#allocation2 + $0x178] sm:$0xff]
  %v2888 = vld [vmem:[#allocation2 + $0x180] sm:$0xff]
  %v2889 = vld [vmem:[#allocation2 + $0x188] sm:$0xff]
  %v2890 = vld [vmem:[#allocation2 + $0x190] sm:$0xff]
  %v2891 = vld [vmem:[#allocation2 + $0x198] sm:$0xff]
  %v2892 = vld [vmem:[#allocation2 + $0x1a0] sm:$0xff]
  %v2893 = vld [vmem:[#allocation2 + $0x1a8] sm:$0xff]
  %v2894 = vld [vmem:[#allocation2 + $0x1b0] sm:$0xff]
  %v2895 = vld [vmem:[#allocation2 + $0x1b8] sm:$0xff]
  %v2896 = vld [vmem:[#allocation2 + $0x1c0] sm:$0xff]
  %v2897 = vld [vmem:[#allocation2 + $0x1c8] sm:$0xff]
  %v2898 = vld [vmem:[#allocation2 + $0x1d0] sm:$0xff]
  %v2899 = vld [vmem:[#allocation2 + $0x1d8] sm:$0xff]
  %v2900 = vld [vmem:[#allocation2 + $0x1e0] sm:$0xff]
  %v2901 = vld [vmem:[#allocation2 + $0x1e8] sm:$0xff]
  %v2902 = vld [vmem:[#allocation2 + $0x1f0] sm:$0xff]
  %v2903 = vld [vmem:[#allocation2 + $0x1f8] sm:$0xff]
  %s2904 = scalar_lea.vmem %s1, 128
  %v2905 = vld [vmem:[%s2904] sm:$0xf]
  %v2906 = vld [vmem:[%s2904 + $0x4] sm:$0xf]
  %v2907 = vld [vmem:[%s2904 + $0x8] sm:$0xf]
  %v2908 = vld [vmem:[%s2904 + $0xc] sm:$0xf]
  %v2909 = vld [vmem:[%s2904 + $0x10] sm:$0xf]
  %v2910 = vld [vmem:[%s2904 + $0x14] sm:$0xf]
  %v2911 = vld [vmem:[%s2904 + $0x18] sm:$0xf]
  %v2912 = vld [vmem:[%s2904 + $0x1c] sm:$0xf]
  %v2913 = vld [vmem:[%s2904 + $0x20] sm:$0xf]
  %v2914 = vld [vmem:[%s2904 + $0x24] sm:$0xf]
  %v2915 = vld [vmem:[%s2904 + $0x28] sm:$0xf]
  %v2916 = vld [vmem:[%s2904 + $0x2c] sm:$0xf]
  %v2917 = vld [vmem:[%s2904 + $0x30] sm:$0xf]
  %v2918 = vld [vmem:[%s2904 + $0x34] sm:$0xf]
  %v2919 = vld [vmem:[%s2904 + $0x38] sm:$0xf]
  %v2920 = vld [vmem:[%s2904 + $0x3c] sm:$0xf]
  %v2921 = vunpack.c.l.b16 %v2619
  %v2922 = vunpack.c.l.b16 %v2622
  %v2923 = vunpack.c.l.b16 %v2626
  %v2924 = vunpack.c.l.b16 %v2629
  %v2925 = vunpack.c.l.b16 %v2633
  %v2926 = vunpack.c.l.b16 %v2636
  %v2927 = vunpack.c.l.b16 %v2640
  %v2928 = vunpack.c.l.b16 %v2643
  %v2929 = vunpack.c.l.b16 %v2647
  %v2930 = vunpack.c.l.b16 %v2650
  %v2931 = vunpack.c.l.b16 %v2654
  %v2932 = vunpack.c.l.b16 %v2657
  %v2933 = vunpack.c.l.b16 %v2661
  %v2934 = vunpack.c.l.b16 %v2664
  %v2935 = vunpack.c.l.b16 %v2668
  %v2936 = vunpack.c.l.b16 %v2671
  %v2937 = vunpack.c.l.b16 %v2675
  %v2938 = vunpack.c.l.b16 %v2678
  %v2939 = vunpack.c.l.b16 %v2682
  %v2940 = vunpack.c.l.b16 %v2685
  %v2941 = vunpack.c.l.b16 %v2689
  %v2942 = vunpack.c.l.b16 %v2692
  %v2943 = vunpack.c.l.b16 %v2696
  %v2944 = vunpack.c.l.b16 %v2699
  %v2945 = vunpack.c.l.b16 %v2703
  %v2946 = vunpack.c.l.b16 %v2706
  %v2947 = vunpack.c.l.b16 %v2710
  %v2948 = vunpack.c.l.b16 %v2713
  %v2949 = vunpack.c.l.b16 %v2717
  %v2950 = vunpack.c.l.b16 %v2720
  %v2951 = vunpack.c.l.b16 %v2724
  %v2952 = vunpack.c.l.b16 %v2727
  %v2953 = vunpack.c.l.b16 %v2731
  %v2954 = vunpack.c.l.b16 %v2734
  %v2955 = vunpack.c.l.b16 %v2738
  %v2956 = vunpack.c.l.b16 %v2741
  %v2957 = vunpack.c.l.b16 %v2745
  %v2958 = vunpack.c.l.b16 %v2748
  %v2959 = vunpack.c.l.b16 %v2752
  %v2960 = vunpack.c.l.b16 %v2755
  %v2961 = vunpack.c.l.b16 %v2759
  %v2962 = vunpack.c.l.b16 %v2762
  %v2963 = vunpack.c.l.b16 %v2766
  %v2964 = vunpack.c.l.b16 %v2769
  %v2965 = vunpack.c.l.b16 %v2773
  %v2966 = vunpack.c.l.b16 %v2776
  %v2967 = vunpack.c.l.b16 %v2780
  %v2968 = vunpack.c.l.b16 %v2783
  %v2969 = vunpack.c.l.b16 %v2787
  %v2970 = vunpack.c.l.b16 %v2790
  %v2971 = vunpack.c.l.b16 %v2794
  %v2972 = vunpack.c.l.b16 %v2797
  %v2973 = vunpack.c.l.b16 %v2801
  %v2974 = vunpack.c.l.b16 %v2804
  %v2975 = vunpack.c.l.b16 %v2808
  %v2976 = vunpack.c.l.b16 %v2811
  %v2977 = vunpack.c.l.b16 %v2815
  %v2978 = vunpack.c.l.b16 %v2818
  %v2979 = vunpack.c.l.b16 %v2822
  %v2980 = vunpack.c.l.b16 %v2825
  %v2981 = vunpack.c.l.b16 %v2829
  %v2982 = vunpack.c.l.b16 %v2832
  %v2983 = vunpack.c.l.b16 %v2836
  %v2984 = vunpack.c.l.b16 %v2839
  %v2985 = vpack.c.b16 %v2922, %v2921
  %v2986 = vpack.c.b16 %v2924, %v2923
  %v2987 = vpack.c.b16 %v2926, %v2925
  %v2988 = vpack.c.b16 %v2928, %v2927
  %v2989 = vpack.c.b16 %v2930, %v2929
  %v2990 = vpack.c.b16 %v2932, %v2931
  %v2991 = vpack.c.b16 %v2934, %v2933
  %v2992 = vpack.c.b16 %v2936, %v2935
  %v2993 = vpack.c.b16 %v2938, %v2937
  %v2994 = vpack.c.b16 %v2940, %v2939
  %v2995 = vpack.c.b16 %v2942, %v2941
  %v2996 = vpack.c.b16 %v2944, %v2943
  %v2997 = vpack.c.b16 %v2946, %v2945
  %v2998 = vpack.c.b16 %v2948, %v2947
  %v2999 = vpack.c.b16 %v2950, %v2949
  %v3000 = vpack.c.b16 %v2952, %v2951
  %v3001 = vpack.c.b16 %v2954, %v2953
  %v3002 = vpack.c.b16 %v2956, %v2955
  %v3003 = vpack.c.b16 %v2958, %v2957
  %v3004 = vpack.c.b16 %v2960, %v2959
  %v3005 = vpack.c.b16 %v2962, %v2961
  %v3006 = vpack.c.b16 %v2964, %v2963
  %v3007 = vpack.c.b16 %v2966, %v2965
  %v3008 = vpack.c.b16 %v2968, %v2967
  %v3009 = vpack.c.b16 %v2970, %v2969
  %v3010 = vpack.c.b16 %v2972, %v2971
  %v3011 = vpack.c.b16 %v2974, %v2973
  %v3012 = vpack.c.b16 %v2976, %v2975
  %v3013 = vpack.c.b16 %v2978, %v2977
  %v3014 = vpack.c.b16 %v2980, %v2979
  %v3015 = vpack.c.b16 %v2982, %v2981
  %v3016 = vpack.c.b16 %v2984, %v2983
  %v3065 = vunpack.c.l.b16 %v2905
  %v3066 = vunpack.c.l.b16 %v2906
  %v3067 = vunpack.c.l.b16 %v2907
  %v3068 = vunpack.c.l.b16 %v2908
  %v3069 = vunpack.c.l.b16 %v2909
  %v3070 = vunpack.c.l.b16 %v2910
  %v3071 = vunpack.c.l.b16 %v2911
  %v3072 = vunpack.c.l.b16 %v2912
  %v3073 = vunpack.c.l.b16 %v2913
  %v3074 = vunpack.c.l.b16 %v2914
  %v3075 = vunpack.c.l.b16 %v2915
  %v3076 = vunpack.c.l.b16 %v2916
  %v3077 = vunpack.c.l.b16 %v2917
  %v3078 = vunpack.c.l.b16 %v2918
  %v3079 = vunpack.c.l.b16 %v2919
  %v3080 = vunpack.c.l.b16 %v2920
  %v3081 = vpack.c.b16 %v3066, %v3065
  %v3082 = vpack.c.b16 %v3068, %v3067
  %v3083 = vpack.c.b16 %v3070, %v3069
  %v3084 = vpack.c.b16 %v3072, %v3071
  %v3085 = vpack.c.b16 %v3074, %v3073
  %v3086 = vpack.c.b16 %v3076, %v3075
  %v3087 = vpack.c.b16 %v3078, %v3077
  %v3088 = vpack.c.b16 %v3080, %v3079
  %3097 = vmatprep.subr.bf16.mxu0 0
  %3098 = vmatpush1.bf16.msra.mxu0 %v3088
  %3099 = vmatprep.subr.bf16.mxu0 0
  %3100 = vmatpush1.bf16.msra.mxu0 %v3087
  %3101 = vmatprep.subr.bf16.mxu0 0
  %3102 = vmatpush1.bf16.msra.mxu0 %v3086
  %3103 = vmatprep.subr.bf16.mxu0 0
  %3104 = vmatpush1.bf16.msra.mxu0 %v3085
  %3105 = vmatprep.subr.bf16.mxu0 0
  %3106 = vmatpush1.bf16.msra.mxu0 %v3084
  %3107 = vmatprep.subr.bf16.mxu0 0
  %3108 = vmatpush1.bf16.msra.mxu0 %v3083
  %3109 = vmatprep.subr.bf16.mxu0 0
  %3110 = vmatpush1.bf16.msra.mxu0 %v3082
  %3111 = vmatprep.subr.bf16.mxu0 0
  %3112 = vmatpush1.bf16.msra.mxu0 %v3081
  %3113 = vmatprep.subr.bf16.mxu0 0
  %3114 = vmatpush2.bf16.msra.mxu0 0
  %3115 = vmatprep.subr.bf16.mxu0 0
  %3116 = vmatpush2.bf16.msra.mxu0 0
  %3117 = vmatprep.subr.bf16.mxu0 0
  %3118 = vmatpush2.bf16.msra.mxu0 0
  %3119 = vmatprep.subr.bf16.mxu0 0
  %3120 = vmatpush2.bf16.msra.mxu0 0
  %3121 = vmatprep.subr.bf16.mxu0 0
  %3122 = vmatpush2.bf16.msra.mxu0 0
  %3123 = vmatprep.subr.bf16.mxu0 0
  %3124 = vmatpush2.bf16.msra.mxu0 0
  %3125 = vmatprep.subr.bf16.mxu0 0
  %3126 = vmatpush2.bf16.msra.mxu0 0
  %3127 = vmatprep.subr.bf16.mxu0 0
  %3128 = vmatpush2.bf16.msra.mxu0 0
  %3129 = vmatprep.mubr.bf16.mxu0 0
  %3130 = vmatmul.mubr.bf16.gmra.mxu0 %v2985
  %v3131 = vpop.f32.mrf.mxu0
  %v3132 = vadd.f32 0.0, %v3131
  %v3133 = vpop.f32.mrf.mxu0
  %v3134 = vpop.f32.mrf.mxu0
  %v3135 = vadd.f32 0.0, %v3134
  %v3136 = vpop.f32.mrf.mxu0
  %3137 = vmatprep.mubr.bf16.mxu0 0
  %3138 = vmatmul.mubr.bf16.gmra.mxu0 %v2986
  %v3139 = vpop.f32.mrf.mxu0
  %v3140 = vadd.f32 0.0, %v3139
  %v3141 = vpop.f32.mrf.mxu0
  %v3142 = vpop.f32.mrf.mxu0
  %v3143 = vadd.f32 0.0, %v3142
  %v3144 = vpop.f32.mrf.mxu0
  %3145 = vmatprep.mubr.bf16.mxu0 0
  %3146 = vmatmul.mubr.bf16.gmra.mxu0 %v2987
  %v3147 = vpop.f32.mrf.mxu0
  %v3148 = vadd.f32 0.0, %v3147
  %v3149 = vpop.f32.mrf.mxu0
  %v3150 = vpop.f32.mrf.mxu0
  %v3151 = vadd.f32 0.0, %v3150
  %v3152 = vpop.f32.mrf.mxu0
  %3153 = vmatprep.mubr.bf16.mxu0 0
  %3154 = vmatmul.mubr.bf16.gmra.mxu0 %v2988
  %v3155 = vpop.f32.mrf.mxu0
  %v3156 = vadd.f32 0.0, %v3155
  %v3157 = vpop.f32.mrf.mxu0
  %v3158 = vpop.f32.mrf.mxu0
  %v3159 = vadd.f32 0.0, %v3158
  %v3160 = vpop.f32.mrf.mxu0
  %3161 = vmatprep.mubr.bf16.mxu0 0
  %3162 = vmatmul.mubr.bf16.gmra.mxu0 %v2989
  %v3163 = vpop.f32.mrf.mxu0
  %v3164 = vadd.f32 0.0, %v3163
  %v3165 = vpop.f32.mrf.mxu0
  %v3166 = vpop.f32.mrf.mxu0
  %v3167 = vadd.f32 0.0, %v3166
  %v3168 = vpop.f32.mrf.mxu0
  %3169 = vmatprep.mubr.bf16.mxu0 0
  %3170 = vmatmul.mubr.bf16.gmra.mxu0 %v2990
  %v3171 = vpop.f32.mrf.mxu0
  %v3172 = vadd.f32 0.0, %v3171
  %v3173 = vpop.f32.mrf.mxu0
  %v3174 = vpop.f32.mrf.mxu0
  %v3175 = vadd.f32 0.0, %v3174
  %v3176 = vpop.f32.mrf.mxu0
  %3177 = vmatprep.mubr.bf16.mxu0 0
  %3178 = vmatmul.mubr.bf16.gmra.mxu0 %v2991
  %v3179 = vpop.f32.mrf.mxu0
  %v3180 = vadd.f32 0.0, %v3179
  %v3181 = vpop.f32.mrf.mxu0
  %v3182 = vpop.f32.mrf.mxu0
  %v3183 = vadd.f32 0.0, %v3182
  %v3184 = vpop.f32.mrf.mxu0
  %3185 = vmatprep.mubr.bf16.mxu0 0
  %3186 = vmatmul.mubr.bf16.gmra.mxu0 %v2992
  %v3187 = vpop.f32.mrf.mxu0
  %v3188 = vadd.f32 0.0, %v3187
  %v3189 = vpop.f32.mrf.mxu0
  %v3190 = vpop.f32.mrf.mxu0
  %v3191 = vadd.f32 0.0, %v3190
  %v3192 = vpop.f32.mrf.mxu0
  %3193 = vmatprep.mubr.bf16.mxu0 0
  %3194 = vmatmul.mubr.bf16.gmra.mxu0 %v2993
  %v3195 = vpop.f32.mrf.mxu0
  %v3196 = vadd.f32 0.0, %v3195
  %v3197 = vpop.f32.mrf.mxu0
  %v3198 = vpop.f32.mrf.mxu0
  %v3199 = vadd.f32 0.0, %v3198
  %v3200 = vpop.f32.mrf.mxu0
  %3201 = vmatprep.mubr.bf16.mxu0 0
  %3202 = vmatmul.mubr.bf16.gmra.mxu0 %v2994
  %v3203 = vpop.f32.mrf.mxu0
  %v3204 = vadd.f32 0.0, %v3203
  %v3205 = vpop.f32.mrf.mxu0
  %v3206 = vpop.f32.mrf.mxu0
  %v3207 = vadd.f32 0.0, %v3206
  %v3208 = vpop.f32.mrf.mxu0
  %3209 = vmatprep.mubr.bf16.mxu0 0
  %3210 = vmatmul.mubr.bf16.gmra.mxu0 %v2995
  %v3211 = vpop.f32.mrf.mxu0
  %v3212 = vadd.f32 0.0, %v3211
  %v3213 = vpop.f32.mrf.mxu0
  %v3214 = vpop.f32.mrf.mxu0
  %v3215 = vadd.f32 0.0, %v3214
  %v3216 = vpop.f32.mrf.mxu0
  %3217 = vmatprep.mubr.bf16.mxu0 0
  %3218 = vmatmul.mubr.bf16.gmra.mxu0 %v2996
  %v3219 = vpop.f32.mrf.mxu0
  %v3220 = vadd.f32 0.0, %v3219
  %v3221 = vpop.f32.mrf.mxu0
  %v3222 = vpop.f32.mrf.mxu0
  %v3223 = vadd.f32 0.0, %v3222
  %v3224 = vpop.f32.mrf.mxu0
  %3225 = vmatprep.mubr.bf16.mxu0 0
  %3226 = vmatmul.mubr.bf16.gmra.mxu0 %v2997
  %v3227 = vpop.f32.mrf.mxu0
  %v3228 = vadd.f32 0.0, %v3227
  %v3229 = vpop.f32.mrf.mxu0
  %v3230 = vpop.f32.mrf.mxu0
  %v3231 = vadd.f32 0.0, %v3230
  %v3232 = vpop.f32.mrf.mxu0
  %3233 = vmatprep.mubr.bf16.mxu0 0
  %3234 = vmatmul.mubr.bf16.gmra.mxu0 %v2998
  %v3235 = vpop.f32.mrf.mxu0
  %v3236 = vadd.f32 0.0, %v3235
  %v3237 = vpop.f32.mrf.mxu0
  %v3238 = vpop.f32.mrf.mxu0
  %v3239 = vadd.f32 0.0, %v3238
  %v3240 = vpop.f32.mrf.mxu0
  %3241 = vmatprep.mubr.bf16.mxu0 0
  %3242 = vmatmul.mubr.bf16.gmra.mxu0 %v2999
  %v3243 = vpop.f32.mrf.mxu0
  %v3244 = vadd.f32 0.0, %v3243
  %v3245 = vpop.f32.mrf.mxu0
  %v3246 = vpop.f32.mrf.mxu0
  %v3247 = vadd.f32 0.0, %v3246
  %v3248 = vpop.f32.mrf.mxu0
  %3249 = vmatprep.mubr.bf16.mxu0 0
  %3250 = vmatmul.mubr.bf16.gmra.mxu0 %v3000
  %v3251 = vpop.f32.mrf.mxu0
  %v3252 = vadd.f32 0.0, %v3251
  %v3253 = vpop.f32.mrf.mxu0
  %v3254 = vpop.f32.mrf.mxu0
  %v3255 = vadd.f32 0.0, %v3254
  %v3256 = vpop.f32.mrf.mxu0
  %3257 = vmatprep.mubr.bf16.mxu0 0
  %3258 = vmatmul.mubr.bf16.gmra.mxu0 %v3001
  %v3259 = vpop.f32.mrf.mxu0
  %v3260 = vadd.f32 0.0, %v3259
  %v3261 = vpop.f32.mrf.mxu0
  %v3262 = vpop.f32.mrf.mxu0
  %v3263 = vadd.f32 0.0, %v3262
  %v3264 = vpop.f32.mrf.mxu0
  %3265 = vmatprep.mubr.bf16.mxu0 0
  %3266 = vmatmul.mubr.bf16.gmra.mxu0 %v3002
  %v3267 = vpop.f32.mrf.mxu0
  %v3268 = vadd.f32 0.0, %v3267
  %v3269 = vpop.f32.mrf.mxu0
  %v3270 = vpop.f32.mrf.mxu0
  %v3271 = vadd.f32 0.0, %v3270
  %v3272 = vpop.f32.mrf.mxu0
  %3273 = vmatprep.mubr.bf16.mxu0 0
  %3274 = vmatmul.mubr.bf16.gmra.mxu0 %v3003
  %v3275 = vpop.f32.mrf.mxu0
  %v3276 = vadd.f32 0.0, %v3275
  %v3277 = vpop.f32.mrf.mxu0
  %v3278 = vpop.f32.mrf.mxu0
  %v3279 = vadd.f32 0.0, %v3278
  %v3280 = vpop.f32.mrf.mxu0
  %3281 = vmatprep.mubr.bf16.mxu0 0
  %3282 = vmatmul.mubr.bf16.gmra.mxu0 %v3004
  %v3283 = vpop.f32.mrf.mxu0
  %v3284 = vadd.f32 0.0, %v3283
  %v3285 = vpop.f32.mrf.mxu0
  %v3286 = vpop.f32.mrf.mxu0
  %v3287 = vadd.f32 0.0, %v3286
  %v3288 = vpop.f32.mrf.mxu0
  %3289 = vmatprep.mubr.bf16.mxu0 0
  %3290 = vmatmul.mubr.bf16.gmra.mxu0 %v3005
  %v3291 = vpop.f32.mrf.mxu0
  %v3292 = vadd.f32 0.0, %v3291
  %v3293 = vpop.f32.mrf.mxu0
  %v3294 = vpop.f32.mrf.mxu0
  %v3295 = vadd.f32 0.0, %v3294
  %v3296 = vpop.f32.mrf.mxu0
  %3297 = vmatprep.mubr.bf16.mxu0 0
  %3298 = vmatmul.mubr.bf16.gmra.mxu0 %v3006
  %v3299 = vpop.f32.mrf.mxu0
  %v3300 = vadd.f32 0.0, %v3299
  %v3301 = vpop.f32.mrf.mxu0
  %v3302 = vpop.f32.mrf.mxu0
  %v3303 = vadd.f32 0.0, %v3302
  %v3304 = vpop.f32.mrf.mxu0
  %3305 = vmatprep.mubr.bf16.mxu0 0
  %3306 = vmatmul.mubr.bf16.gmra.mxu0 %v3007
  %v3307 = vpop.f32.mrf.mxu0
  %v3308 = vadd.f32 0.0, %v3307
  %v3309 = vpop.f32.mrf.mxu0
  %v3310 = vpop.f32.mrf.mxu0
  %v3311 = vadd.f32 0.0, %v3310
  %v3312 = vpop.f32.mrf.mxu0
  %3313 = vmatprep.mubr.bf16.mxu0 0
  %3314 = vmatmul.mubr.bf16.gmra.mxu0 %v3008
  %v3315 = vpop.f32.mrf.mxu0
  %v3316 = vadd.f32 0.0, %v3315
  %v3317 = vpop.f32.mrf.mxu0
  %v3318 = vpop.f32.mrf.mxu0
  %v3319 = vadd.f32 0.0, %v3318
  %v3320 = vpop.f32.mrf.mxu0
  %3321 = vmatprep.mubr.bf16.mxu0 0
  %3322 = vmatmul.mubr.bf16.gmra.mxu0 %v3009
  %v3323 = vpop.f32.mrf.mxu0
  %v3324 = vadd.f32 0.0, %v3323
  %v3325 = vpop.f32.mrf.mxu0
  %v3326 = vpop.f32.mrf.mxu0
  %v3327 = vadd.f32 0.0, %v3326
  %v3328 = vpop.f32.mrf.mxu0
  %3329 = vmatprep.mubr.bf16.mxu0 0
  %3330 = vmatmul.mubr.bf16.gmra.mxu0 %v3010
  %v3331 = vpop.f32.mrf.mxu0
  %v3332 = vadd.f32 0.0, %v3331
  %v3333 = vpop.f32.mrf.mxu0
  %v3334 = vpop.f32.mrf.mxu0
  %v3335 = vadd.f32 0.0, %v3334
  %v3336 = vpop.f32.mrf.mxu0
  %3337 = vmatprep.mubr.bf16.mxu0 0
  %3338 = vmatmul.mubr.bf16.gmra.mxu0 %v3011
  %v3339 = vpop.f32.mrf.mxu0
  %v3340 = vadd.f32 0.0, %v3339
  %v3341 = vpop.f32.mrf.mxu0
  %v3342 = vpop.f32.mrf.mxu0
  %v3343 = vadd.f32 0.0, %v3342
  %v3344 = vpop.f32.mrf.mxu0
  %3345 = vmatprep.mubr.bf16.mxu0 0
  %3346 = vmatmul.mubr.bf16.gmra.mxu0 %v3012
  %v3347 = vpop.f32.mrf.mxu0
  %v3348 = vadd.f32 0.0, %v3347
  %v3349 = vpop.f32.mrf.mxu0
  %v3350 = vpop.f32.mrf.mxu0
  %v3351 = vadd.f32 0.0, %v3350
  %v3352 = vpop.f32.mrf.mxu0
  %3353 = vmatprep.mubr.bf16.mxu0 0
  %3354 = vmatmul.mubr.bf16.gmra.mxu0 %v3013
  %v3355 = vpop.f32.mrf.mxu0
  %v3356 = vadd.f32 0.0, %v3355
  %v3357 = vpop.f32.mrf.mxu0
  %v3358 = vpop.f32.mrf.mxu0
  %v3359 = vadd.f32 0.0, %v3358
  %v3360 = vpop.f32.mrf.mxu0
  %3361 = vmatprep.mubr.bf16.mxu0 0
  %3362 = vmatmul.mubr.bf16.gmra.mxu0 %v3014
  %v3363 = vpop.f32.mrf.mxu0
  %v3364 = vadd.f32 0.0, %v3363
  %v3365 = vpop.f32.mrf.mxu0
  %v3366 = vpop.f32.mrf.mxu0
  %v3367 = vadd.f32 0.0, %v3366
  %v3368 = vpop.f32.mrf.mxu0
  %3369 = vmatprep.mubr.bf16.mxu0 0
  %3370 = vmatmul.mubr.bf16.gmra.mxu0 %v3015
  %v3371 = vpop.f32.mrf.mxu0
  %v3372 = vadd.f32 0.0, %v3371
  %v3373 = vpop.f32.mrf.mxu0
  %v3374 = vpop.f32.mrf.mxu0
  %v3375 = vadd.f32 0.0, %v3374
  %v3376 = vpop.f32.mrf.mxu0
  %3377 = vmatprep.mubr.bf16.mxu0 0
  %3378 = vmatmul.mubr.bf16.gmra.mxu0 %v3016
  %v3379 = vpop.f32.mrf.mxu0
  %v3380 = vadd.f32 0.0, %v3379
  %v3381 = vpop.f32.mrf.mxu0
  %v3382 = vpop.f32.mrf.mxu0
  %v3383 = vadd.f32 0.0, %v3382
  %v3384 = vpop.f32.mrf.mxu0
  %3385 = vdwg.mxu0
  %v3386 = vadd.f32 %v2840, %v3132
  %v3387 = vadd.f32 %v2841, %v3135
  %v3388 = vadd.f32 %v2842, %v3140
  %v3389 = vadd.f32 %v2843, %v3143
  %v3390 = vadd.f32 %v2844, %v3148
  %v3391 = vadd.f32 %v2845, %v3151
  %v3392 = vadd.f32 %v2846, %v3156
  %v3393 = vadd.f32 %v2847, %v3159
  %v3394 = vadd.f32 %v2848, %v3164
  %v3395 = vadd.f32 %v2849, %v3167
  %v3396 = vadd.f32 %v2850, %v3172
  %v3397 = vadd.f32 %v2851, %v3175
  %v3398 = vadd.f32 %v2852, %v3180
  %v3399 = vadd.f32 %v2853, %v3183
  %v3400 = vadd.f32 %v2854, %v3188
  %v3401 = vadd.f32 %v2855, %v3191
  %v3402 = vadd.f32 %v2856, %v3196
  %v3403 = vadd.f32 %v2857, %v3199
  %v3404 = vadd.f32 %v2858, %v3204
  %v3405 = vadd.f32 %v2859, %v3207
  %v3406 = vadd.f32 %v2860, %v3212
  %v3407 = vadd.f32 %v2861, %v3215
  %v3408 = vadd.f32 %v2862, %v3220
  %v3409 = vadd.f32 %v2863, %v3223
  %v3410 = vadd.f32 %v2864, %v3228
  %v3411 = vadd.f32 %v2865, %v3231
  %v3412 = vadd.f32 %v2866, %v3236
  %v3413 = vadd.f32 %v2867, %v3239
  %v3414 = vadd.f32 %v2868, %v3244
  %v3415 = vadd.f32 %v2869, %v3247
  %v3416 = vadd.f32 %v2870, %v3252
  %v3417 = vadd.f32 %v2871, %v3255
  %v3418 = vadd.f32 %v2872, %v3260
  %v3419 = vadd.f32 %v2873, %v3263
  %v3420 = vadd.f32 %v2874, %v3268
  %v3421 = vadd.f32 %v2875, %v3271
  %v3422 = vadd.f32 %v2876, %v3276
  %v3423 = vadd.f32 %v2877, %v3279
  %v3424 = vadd.f32 %v2878, %v3284
  %v3425 = vadd.f32 %v2879, %v3287
  %v3426 = vadd.f32 %v2880, %v3292
  %v3427 = vadd.f32 %v2881, %v3295
  %v3428 = vadd.f32 %v2882, %v3300
  %v3429 = vadd.f32 %v2883, %v3303
  %v3430 = vadd.f32 %v2884, %v3308
  %v3431 = vadd.f32 %v2885, %v3311
  %v3432 = vadd.f32 %v2886, %v3316
  %v3433 = vadd.f32 %v2887, %v3319
  %v3434 = vadd.f32 %v2888, %v3324
  %v3435 = vadd.f32 %v2889, %v3327
  %v3436 = vadd.f32 %v2890, %v3332
  %v3437 = vadd.f32 %v2891, %v3335
  %v3438 = vadd.f32 %v2892, %v3340
  %v3439 = vadd.f32 %v2893, %v3343
  %v3440 = vadd.f32 %v2894, %v3348
  %v3441 = vadd.f32 %v2895, %v3351
  %v3442 = vadd.f32 %v2896, %v3356
  %v3443 = vadd.f32 %v2897, %v3359
  %v3444 = vadd.f32 %v2898, %v3364
  %v3445 = vadd.f32 %v2899, %v3367
  %v3446 = vadd.f32 %v2900, %v3372
  %v3447 = vadd.f32 %v2901, %v3375
  %v3448 = vadd.f32 %v2902, %v3380
  %v3449 = vadd.f32 %v2903, %v3383
  %3450 = vst [vmem:[#allocation2] sm:$0xff] %v3386
  %3451 = vst [vmem:[#allocation2 + $0x8] sm:$0xff] %v3387
  %3452 = vst [vmem:[#allocation2 + $0x10] sm:$0xff] %v3388
  %3453 = vst [vmem:[#allocation2 + $0x18] sm:$0xff] %v3389
  %3454 = vst [vmem:[#allocation2 + $0x20] sm:$0xff] %v3390
  %3455 = vst [vmem:[#allocation2 + $0x28] sm:$0xff] %v3391
  %3456 = vst [vmem:[#allocation2 + $0x30] sm:$0xff] %v3392
  %3457 = vst [vmem:[#allocation2 + $0x38] sm:$0xff] %v3393
  %3458 = vst [vmem:[#allocation2 + $0x40] sm:$0xff] %v3394
  %3459 = vst [vmem:[#allocation2 + $0x48] sm:$0xff] %v3395
  %3460 = vst [vmem:[#allocation2 + $0x50] sm:$0xff] %v3396
  %3461 = vst [vmem:[#allocation2 + $0x58] sm:$0xff] %v3397
  %3462 = vst [vmem:[#allocation2 + $0x60] sm:$0xff] %v3398
  %3463 = vst [vmem:[#allocation2 + $0x68] sm:$0xff] %v3399
  %3464 = vst [vmem:[#allocation2 + $0x70] sm:$0xff] %v3400
  %3465 = vst [vmem:[#allocation2 + $0x78] sm:$0xff] %v3401
  %3466 = vst [vmem:[#allocation2 + $0x80] sm:$0xff] %v3402
  %3467 = vst [vmem:[#allocation2 + $0x88] sm:$0xff] %v3403
  %3468 = vst [vmem:[#allocation2 + $0x90] sm:$0xff] %v3404
  %3469 = vst [vmem:[#allocation2 + $0x98] sm:$0xff] %v3405
  %3470 = vst [vmem:[#allocation2 + $0xa0] sm:$0xff] %v3406
  %3471 = vst [vmem:[#allocation2 + $0xa8] sm:$0xff] %v3407
  %3472 = vst [vmem:[#allocation2 + $0xb0] sm:$0xff] %v3408
  %3473 = vst [vmem:[#allocation2 + $0xb8] sm:$0xff] %v3409
  %3474 = vst [vmem:[#allocation2 + $0xc0] sm:$0xff] %v3410
  %3475 = vst [vmem:[#allocation2 + $0xc8] sm:$0xff] %v3411
  %3476 = vst [vmem:[#allocation2 + $0xd0] sm:$0xff] %v3412
  %3477 = vst [vmem:[#allocation2 + $0xd8] sm:$0xff] %v3413
  %3478 = vst [vmem:[#allocation2 + $0xe0] sm:$0xff] %v3414
  %3479 = vst [vmem:[#allocation2 + $0xe8] sm:$0xff] %v3415
  %3480 = vst [vmem:[#allocation2 + $0xf0] sm:$0xff] %v3416
  %3481 = vst [vmem:[#allocation2 + $0xf8] sm:$0xff] %v3417
  %3482 = vst [vmem:[#allocation2 + $0x100] sm:$0xff] %v3418
  %3483 = vst [vmem:[#allocation2 + $0x108] sm:$0xff] %v3419
  %3484 = vst [vmem:[#allocation2 + $0x110] sm:$0xff] %v3420
  %3485 = vst [vmem:[#allocation2 + $0x118] sm:$0xff] %v3421
  %3486 = vst [vmem:[#allocation2 + $0x120] sm:$0xff] %v3422
  %3487 = vst [vmem:[#allocation2 + $0x128] sm:$0xff] %v3423
  %3488 = vst [vmem:[#allocation2 + $0x130] sm:$0xff] %v3424
  %3489 = vst [vmem:[#allocation2 + $0x138] sm:$0xff] %v3425
  %3490 = vst [vmem:[#allocation2 + $0x140] sm:$0xff] %v3426
  %3491 = vst [vmem:[#allocation2 + $0x148] sm:$0xff] %v3427
  %3492 = vst [vmem:[#allocation2 + $0x150] sm:$0xff] %v3428
  %3493 = vst [vmem:[#allocation2 + $0x158] sm:$0xff] %v3429
  %3494 = vst [vmem:[#allocation2 + $0x160] sm:$0xff] %v3430
  %3495 = vst [vmem:[#allocation2 + $0x168] sm:$0xff] %v3431
  %3496 = vst [vmem:[#allocation2 + $0x170] sm:$0xff] %v3432
  %3497 = vst [vmem:[#allocation2 + $0x178] sm:$0xff] %v3433
  %3498 = vst [vmem:[#allocation2 + $0x180] sm:$0xff] %v3434
  %3499 = vst [vmem:[#allocation2 + $0x188] sm:$0xff] %v3435
  %3500 = vst [vmem:[#allocation2 + $0x190] sm:$0xff] %v3436
  %3501 = vst [vmem:[#allocation2 + $0x198] sm:$0xff] %v3437
  %3502 = vst [vmem:[#allocation2 + $0x1a0] sm:$0xff] %v3438
  %3503 = vst [vmem:[#allocation2 + $0x1a8] sm:$0xff] %v3439
  %3504 = vst [vmem:[#allocation2 + $0x1b0] sm:$0xff] %v3440
  %3505 = vst [vmem:[#allocation2 + $0x1b8] sm:$0xff] %v3441
  %3506 = vst [vmem:[#allocation2 + $0x1c0] sm:$0xff] %v3442
  %3507 = vst [vmem:[#allocation2 + $0x1c8] sm:$0xff] %v3443
  %3508 = vst [vmem:[#allocation2 + $0x1d0] sm:$0xff] %v3444
  %3509 = vst [vmem:[#allocation2 + $0x1d8] sm:$0xff] %v3445
  %3510 = vst [vmem:[#allocation2 + $0x1e0] sm:$0xff] %v3446
  %3511 = vst [vmem:[#allocation2 + $0x1e8] sm:$0xff] %v3447
  %3512 = vst [vmem:[#allocation2 + $0x1f0] sm:$0xff] %v3448
  %3513 = vst [vmem:[#allocation2 + $0x1f8] sm:$0xff] %v3449
  %s3514 = scalar_lea.vmem %s0, 12
  %v3515 = vld [vmem:[%s3514] sm:$0xf]
  %v3516 = vld [vmem:[%s3514 + $0x4] sm:$0xf]
  %v3517 = vld [vmem:[%s3514 + $0xc] sm:$0xf]
  %v3518 = vld [vmem:[%s3514 + $0x10] sm:$0xf]
  %v3519 = vld [vmem:[%s3514 + $0x18] sm:$0xf]
  %v3520 = vld [vmem:[%s3514 + $0x1c] sm:$0xf]
  %v3521 = vld [vmem:[%s3514 + $0x24] sm:$0xf]
  %v3522 = vld [vmem:[%s3514 + $0x28] sm:$0xf]
  %v3523 = vld [vmem:[%s3514 + $0x30] sm:$0xf]
  %v3524 = vld [vmem:[%s3514 + $0x34] sm:$0xf]
  %v3525 = vld [vmem:[%s3514 + $0x3c] sm:$0xf]
  %v3526 = vld [vmem:[%s3514 + $0x40] sm:$0xf]
  %v3527 = vld [vmem:[%s3514 + $0x48] sm:$0xf]
  %v3528 = vld [vmem:[%s3514 + $0x4c] sm:$0xf]
  %v3529 = vld [vmem:[%s3514 + $0x54] sm:$0xf]
  %v3530 = vld [vmem:[%s3514 + $0x58] sm:$0xf]
  %v3531 = vld [vmem:[%s3514 + $0x60] sm:$0xf]
  %v3532 = vld [vmem:[%s3514 + $0x64] sm:$0xf]
  %v3533 = vld [vmem:[%s3514 + $0x6c] sm:$0xf]
  %v3534 = vld [vmem:[%s3514 + $0x70] sm:$0xf]
  %v3535 = vld [vmem:[%s3514 + $0x78] sm:$0xf]
  %v3536 = vld [vmem:[%s3514 + $0x7c] sm:$0xf]
  %v3537 = vld [vmem:[%s3514 + $0x84] sm:$0xf]
  %v3538 = vld [vmem:[%s3514 + $0x88] sm:$0xf]
  %v3539 = vld [vmem:[%s3514 + $0x90] sm:$0xf]
  %v3540 = vld [vmem:[%s3514 + $0x94] sm:$0xf]
  %v3541 = vld [vmem:[%s3514 + $0x9c] sm:$0xf]
  %v3542 = vld [vmem:[%s3514 + $0xa0] sm:$0xf]
  %v3543 = vld [vmem:[%s3514 + $0xa8] sm:$0xf]
  %v3544 = vld [vmem:[%s3514 + $0xac] sm:$0xf]
  %v3545 = vld [vmem:[%s3514 + $0xb4] sm:$0xf]
  %v3546 = vld [vmem:[%s3514 + $0xb8] sm:$0xf]
  %v3547 = vld [vmem:[%s3514 + $0xd8] sm:$0xf]
  %v3548 = vld [vmem:[%s3514 + $0xdc] sm:$0xf]
  %v3549 = vld [vmem:[%s3514 + $0xe4] sm:$0xf]
  %v3550 = vld [vmem:[%s3514 + $0xe8] sm:$0xf]
  %v3551 = vld [vmem:[%s3514 + $0xf0] sm:$0xf]
  %v3552 = vld [vmem:[%s3514 + $0xf4] sm:$0xf]
  %v3553 = vld [vmem:[%s3514 + $0xfc] sm:$0xf]
  %v3554 = vld [vmem:[%s3514 + $0x100] sm:$0xf]
  %v3555 = vld [vmem:[%s3514 + $0x108] sm:$0xf]
  %v3556 = vld [vmem:[%s3514 + $0x10c] sm:$0xf]
  %v3557 = vld [vmem:[%s3514 + $0x114] sm:$0xf]
  %v3558 = vld [vmem:[%s3514 + $0x118] sm:$0xf]
  %v3559 = vld [vmem:[%s3514 + $0x120] sm:$0xf]
  %v3560 = vld [vmem:[%s3514 + $0x124] sm:$0xf]
  %v3561 = vld [vmem:[%s3514 + $0x12c] sm:$0xf]
  %v3562 = vld [vmem:[%s3514 + $0x130] sm:$0xf]
  %v3563 = vld [vmem:[%s3514 + $0x138] sm:$0xf]
  %v3564 = vld [vmem:[%s3514 + $0x13c] sm:$0xf]
  %v3565 = vld [vmem:[%s3514 + $0x144] sm:$0xf]
  %v3566 = vld [vmem:[%s3514 + $0x148] sm:$0xf]
  %v3567 = vld [vmem:[%s3514 + $0x150] sm:$0xf]
  %v3568 = vld [vmem:[%s3514 + $0x154] sm:$0xf]
  %v3569 = vld [vmem:[%s3514 + $0x15c] sm:$0xf]
  %v3570 = vld [vmem:[%s3514 + $0x160] sm:$0xf]
  %v3571 = vld [vmem:[%s3514 + $0x168] sm:$0xf]
  %v3572 = vld [vmem:[%s3514 + $0x16c] sm:$0xf]
  %v3573 = vld [vmem:[%s3514 + $0x174] sm:$0xf]
  %v3574 = vld [vmem:[%s3514 + $0x178] sm:$0xf]
  %v3575 = vld [vmem:[%s3514 + $0x180] sm:$0xf]
  %v3576 = vld [vmem:[%s3514 + $0x184] sm:$0xf]
  %v3577 = vld [vmem:[%s3514 + $0x18c] sm:$0xf]
  %v3578 = vld [vmem:[%s3514 + $0x190] sm:$0xf]
  %v3579 = vld [vmem:[#allocation2] sm:$0xff]
  %v3580 = vld [vmem:[#allocation2 + $0x8] sm:$0xff]
  %v3581 = vld [vmem:[#allocation2 + $0x10] sm:$0xff]
  %v3582 = vld [vmem:[#allocation2 + $0x18] sm:$0xff]
  %v3583 = vld [vmem:[#allocation2 + $0x20] sm:$0xff]
  %v3584 = vld [vmem:[#allocation2 + $0x28] sm:$0xff]
  %v3585 = vld [vmem:[#allocation2 + $0x30] sm:$0xff]
  %v3586 = vld [vmem:[#allocation2 + $0x38] sm:$0xff]
  %v3587 = vld [vmem:[#allocation2 + $0x40] sm:$0xff]
  %v3588 = vld [vmem:[#allocation2 + $0x48] sm:$0xff]
  %v3589 = vld [vmem:[#allocation2 + $0x50] sm:$0xff]
  %v3590 = vld [vmem:[#allocation2 + $0x58] sm:$0xff]
  %v3591 = vld [vmem:[#allocation2 + $0x60] sm:$0xff]
  %v3592 = vld [vmem:[#allocation2 + $0x68] sm:$0xff]
  %v3593 = vld [vmem:[#allocation2 + $0x70] sm:$0xff]
  %v3594 = vld [vmem:[#allocation2 + $0x78] sm:$0xff]
  %v3595 = vld [vmem:[#allocation2 + $0x80] sm:$0xff]
  %v3596 = vld [vmem:[#allocation2 + $0x88] sm:$0xff]
  %v3597 = vld [vmem:[#allocation2 + $0x90] sm:$0xff]
  %v3598 = vld [vmem:[#allocation2 + $0x98] sm:$0xff]
  %v3599 = vld [vmem:[#allocation2 + $0xa0] sm:$0xff]
  %v3600 = vld [vmem:[#allocation2 + $0xa8] sm:$0xff]
  %v3601 = vld [vmem:[#allocation2 + $0xb0] sm:$0xff]
  %v3602 = vld [vmem:[#allocation2 + $0xb8] sm:$0xff]
  %v3603 = vld [vmem:[#allocation2 + $0xc0] sm:$0xff]
  %v3604 = vld [vmem:[#allocation2 + $0xc8] sm:$0xff]
  %v3605 = vld [vmem:[#allocation2 + $0xd0] sm:$0xff]
  %v3606 = vld [vmem:[#allocation2 + $0xd8] sm:$0xff]
  %v3607 = vld [vmem:[#allocation2 + $0xe0] sm:$0xff]
  %v3608 = vld [vmem:[#allocation2 + $0xe8] sm:$0xff]
  %v3609 = vld [vmem:[#allocation2 + $0xf0] sm:$0xff]
  %v3610 = vld [vmem:[#allocation2 + $0xf8] sm:$0xff]
  %v3611 = vld [vmem:[#allocation2 + $0x100] sm:$0xff]
  %v3612 = vld [vmem:[#allocation2 + $0x108] sm:$0xff]
  %v3613 = vld [vmem:[#allocation2 + $0x110] sm:$0xff]
  %v3614 = vld [vmem:[#allocation2 + $0x118] sm:$0xff]
  %v3615 = vld [vmem:[#allocation2 + $0x120] sm:$0xff]
  %v3616 = vld [vmem:[#allocation2 + $0x128] sm:$0xff]
  %v3617 = vld [vmem:[#allocation2 + $0x130] sm:$0xff]
  %v3618 = vld [vmem:[#allocation2 + $0x138] sm:$0xff]
  %v3619 = vld [vmem:[#allocation2 + $0x140] sm:$0xff]
  %v3620 = vld [vmem:[#allocation2 + $0x148] sm:$0xff]
  %v3621 = vld [vmem:[#allocation2 + $0x150] sm:$0xff]
  %v3622 = vld [vmem:[#allocation2 + $0x158] sm:$0xff]
  %v3623 = vld [vmem:[#allocation2 + $0x160] sm:$0xff]
  %v3624 = vld [vmem:[#allocation2 + $0x168] sm:$0xff]
  %v3625 = vld [vmem:[#allocation2 + $0x170] sm:$0xff]
  %v3626 = vld [vmem:[#allocation2 + $0x178] sm:$0xff]
  %v3627 = vld [vmem:[#allocation2 + $0x180] sm:$0xff]
  %v3628 = vld [vmem:[#allocation2 + $0x188] sm:$0xff]
  %v3629 = vld [vmem:[#allocation2 + $0x190] sm:$0xff]
  %v3630 = vld [vmem:[#allocation2 + $0x198] sm:$0xff]
  %v3631 = vld [vmem:[#allocation2 + $0x1a0] sm:$0xff]
  %v3632 = vld [vmem:[#allocation2 + $0x1a8] sm:$0xff]
  %v3633 = vld [vmem:[#allocation2 + $0x1b0] sm:$0xff]
  %v3634 = vld [vmem:[#allocation2 + $0x1b8] sm:$0xff]
  %v3635 = vld [vmem:[#allocation2 + $0x1c0] sm:$0xff]
  %v3636 = vld [vmem:[#allocation2 + $0x1c8] sm:$0xff]
  %v3637 = vld [vmem:[#allocation2 + $0x1d0] sm:$0xff]
  %v3638 = vld [vmem:[#allocation2 + $0x1d8] sm:$0xff]
  %v3639 = vld [vmem:[#allocation2 + $0x1e0] sm:$0xff]
  %v3640 = vld [vmem:[#allocation2 + $0x1e8] sm:$0xff]
  %v3641 = vld [vmem:[#allocation2 + $0x1f0] sm:$0xff]
  %v3642 = vld [vmem:[#allocation2 + $0x1f8] sm:$0xff]
  %s3643 = scalar_lea.vmem %s1, 192
  %v3644 = vld [vmem:[%s3643] sm:$0xf]
  %v3645 = vld [vmem:[%s3643 + $0x4] sm:$0xf]
  %v3646 = vld [vmem:[%s3643 + $0x8] sm:$0xf]
  %v3647 = vld [vmem:[%s3643 + $0xc] sm:$0xf]
  %v3648 = vld [vmem:[%s3643 + $0x10] sm:$0xf]
  %v3649 = vld [vmem:[%s3643 + $0x14] sm:$0xf]
  %v3650 = vld [vmem:[%s3643 + $0x18] sm:$0xf]
  %v3651 = vld [vmem:[%s3643 + $0x1c] sm:$0xf]
  %v3652 = vld [vmem:[%s3643 + $0x20] sm:$0xf]
  %v3653 = vld [vmem:[%s3643 + $0x24] sm:$0xf]
  %v3654 = vld [vmem:[%s3643 + $0x28] sm:$0xf]
  %v3655 = vld [vmem:[%s3643 + $0x2c] sm:$0xf]
  %v3656 = vld [vmem:[%s3643 + $0x30] sm:$0xf]
  %v3657 = vld [vmem:[%s3643 + $0x34] sm:$0xf]
  %v3658 = vld [vmem:[%s3643 + $0x38] sm:$0xf]
  %v3659 = vld [vmem:[%s3643 + $0x3c] sm:$0xf]
  %v3724 = vunpack.c.l.b16 %v3515
  %v3725 = vunpack.c.l.b16 %v3516
  %v3726 = vunpack.c.l.b16 %v3517
  %v3727 = vunpack.c.l.b16 %v3518
  %v3728 = vunpack.c.l.b16 %v3519
  %v3729 = vunpack.c.l.b16 %v3520
  %v3730 = vunpack.c.l.b16 %v3521
  %v3731 = vunpack.c.l.b16 %v3522
  %v3732 = vunpack.c.l.b16 %v3523
  %v3733 = vunpack.c.l.b16 %v3524
  %v3734 = vunpack.c.l.b16 %v3525
  %v3735 = vunpack.c.l.b16 %v3526
  %v3736 = vunpack.c.l.b16 %v3527
  %v3737 = vunpack.c.l.b16 %v3528
  %v3738 = vunpack.c.l.b16 %v3529
  %v3739 = vunpack.c.l.b16 %v3530
  %v3740 = vunpack.c.l.b16 %v3531
  %v3741 = vunpack.c.l.b16 %v3532
  %v3742 = vunpack.c.l.b16 %v3533
  %v3743 = vunpack.c.l.b16 %v3534
  %v3744 = vunpack.c.l.b16 %v3535
  %v3745 = vunpack.c.l.b16 %v3536
  %v3746 = vunpack.c.l.b16 %v3537
  %v3747 = vunpack.c.l.b16 %v3538
  %v3748 = vunpack.c.l.b16 %v3539
  %v3749 = vunpack.c.l.b16 %v3540
  %v3750 = vunpack.c.l.b16 %v3541
  %v3751 = vunpack.c.l.b16 %v3542
  %v3752 = vunpack.c.l.b16 %v3543
  %v3753 = vunpack.c.l.b16 %v3544
  %v3754 = vunpack.c.l.b16 %v3545
  %v3755 = vunpack.c.l.b16 %v3546
  %v3756 = vunpack.c.l.b16 %v3547
  %v3757 = vunpack.c.l.b16 %v3548
  %v3758 = vunpack.c.l.b16 %v3549
  %v3759 = vunpack.c.l.b16 %v3550
  %v3760 = vunpack.c.l.b16 %v3551
  %v3761 = vunpack.c.l.b16 %v3552
  %v3762 = vunpack.c.l.b16 %v3553
  %v3763 = vunpack.c.l.b16 %v3554
  %v3764 = vunpack.c.l.b16 %v3555
  %v3765 = vunpack.c.l.b16 %v3556
  %v3766 = vunpack.c.l.b16 %v3557
  %v3767 = vunpack.c.l.b16 %v3558
  %v3768 = vunpack.c.l.b16 %v3559
  %v3769 = vunpack.c.l.b16 %v3560
  %v3770 = vunpack.c.l.b16 %v3561
  %v3771 = vunpack.c.l.b16 %v3562
  %v3772 = vunpack.c.l.b16 %v3563
  %v3773 = vunpack.c.l.b16 %v3564
  %v3774 = vunpack.c.l.b16 %v3565
  %v3775 = vunpack.c.l.b16 %v3566
  %v3776 = vunpack.c.l.b16 %v3567
  %v3777 = vunpack.c.l.b16 %v3568
  %v3778 = vunpack.c.l.b16 %v3569
  %v3779 = vunpack.c.l.b16 %v3570
  %v3780 = vunpack.c.l.b16 %v3571
  %v3781 = vunpack.c.l.b16 %v3572
  %v3782 = vunpack.c.l.b16 %v3573
  %v3783 = vunpack.c.l.b16 %v3574
  %v3784 = vunpack.c.l.b16 %v3575
  %v3785 = vunpack.c.l.b16 %v3576
  %v3786 = vunpack.c.l.b16 %v3577
  %v3787 = vunpack.c.l.b16 %v3578
  %v3788 = vpack.c.b16 %v3725, %v3724
  %v3789 = vpack.c.b16 %v3727, %v3726
  %v3790 = vpack.c.b16 %v3729, %v3728
  %v3791 = vpack.c.b16 %v3731, %v3730
  %v3792 = vpack.c.b16 %v3733, %v3732
  %v3793 = vpack.c.b16 %v3735, %v3734
  %v3794 = vpack.c.b16 %v3737, %v3736
  %v3795 = vpack.c.b16 %v3739, %v3738
  %v3796 = vpack.c.b16 %v3741, %v3740
  %v3797 = vpack.c.b16 %v3743, %v3742
  %v3798 = vpack.c.b16 %v3745, %v3744
  %v3799 = vpack.c.b16 %v3747, %v3746
  %v3800 = vpack.c.b16 %v3749, %v3748
  %v3801 = vpack.c.b16 %v3751, %v3750
  %v3802 = vpack.c.b16 %v3753, %v3752
  %v3803 = vpack.c.b16 %v3755, %v3754
  %v3804 = vpack.c.b16 %v3757, %v3756
  %v3805 = vpack.c.b16 %v3759, %v3758
  %v3806 = vpack.c.b16 %v3761, %v3760
  %v3807 = vpack.c.b16 %v3763, %v3762
  %v3808 = vpack.c.b16 %v3765, %v3764
  %v3809 = vpack.c.b16 %v3767, %v3766
  %v3810 = vpack.c.b16 %v3769, %v3768
  %v3811 = vpack.c.b16 %v3771, %v3770
  %v3812 = vpack.c.b16 %v3773, %v3772
  %v3813 = vpack.c.b16 %v3775, %v3774
  %v3814 = vpack.c.b16 %v3777, %v3776
  %v3815 = vpack.c.b16 %v3779, %v3778
  %v3816 = vpack.c.b16 %v3781, %v3780
  %v3817 = vpack.c.b16 %v3783, %v3782
  %v3818 = vpack.c.b16 %v3785, %v3784
  %v3819 = vpack.c.b16 %v3787, %v3786
  %v3868 = vunpack.c.l.b16 %v3644
  %v3869 = vunpack.c.l.b16 %v3645
  %v3870 = vunpack.c.l.b16 %v3646
  %v3871 = vunpack.c.l.b16 %v3647
  %v3872 = vunpack.c.l.b16 %v3648
  %v3873 = vunpack.c.l.b16 %v3649
  %v3874 = vunpack.c.l.b16 %v3650
  %v3875 = vunpack.c.l.b16 %v3651
  %v3876 = vunpack.c.l.b16 %v3652
  %v3877 = vunpack.c.l.b16 %v3653
  %v3878 = vunpack.c.l.b16 %v3654
  %v3879 = vunpack.c.l.b16 %v3655
  %v3880 = vunpack.c.l.b16 %v3656
  %v3881 = vunpack.c.l.b16 %v3657
  %v3882 = vunpack.c.l.b16 %v3658
  %v3883 = vunpack.c.l.b16 %v3659
  %v3884 = vpack.c.b16 %v3869, %v3868
  %v3885 = vpack.c.b16 %v3871, %v3870
  %v3886 = vpack.c.b16 %v3873, %v3872
  %v3887 = vpack.c.b16 %v3875, %v3874
  %v3888 = vpack.c.b16 %v3877, %v3876
  %v3889 = vpack.c.b16 %v3879, %v3878
  %v3890 = vpack.c.b16 %v3881, %v3880
  %v3891 = vpack.c.b16 %v3883, %v3882
  %3900 = vmatprep.subr.bf16.mxu0 0
  %3901 = vmatpush1.bf16.msra.mxu0 %v3891
  %3902 = vmatprep.subr.bf16.mxu0 0
  %3903 = vmatpush1.bf16.msra.mxu0 %v3890
  %3904 = vmatprep.subr.bf16.mxu0 0
  %3905 = vmatpush1.bf16.msra.mxu0 %v3889
  %3906 = vmatprep.subr.bf16.mxu0 0
  %3907 = vmatpush1.bf16.msra.mxu0 %v3888
  %3908 = vmatprep.subr.bf16.mxu0 0
  %3909 = vmatpush1.bf16.msra.mxu0 %v3887
  %3910 = vmatprep.subr.bf16.mxu0 0
  %3911 = vmatpush1.bf16.msra.mxu0 %v3886
  %3912 = vmatprep.subr.bf16.mxu0 0
  %3913 = vmatpush1.bf16.msra.mxu0 %v3885
  %3914 = vmatprep.subr.bf16.mxu0 0
  %3915 = vmatpush1.bf16.msra.mxu0 %v3884
  %3916 = vmatprep.subr.bf16.mxu0 0
  %3917 = vmatpush2.bf16.msra.mxu0 0
  %3918 = vmatprep.subr.bf16.mxu0 0
  %3919 = vmatpush2.bf16.msra.mxu0 0
  %3920 = vmatprep.subr.bf16.mxu0 0
  %3921 = vmatpush2.bf16.msra.mxu0 0
  %3922 = vmatprep.subr.bf16.mxu0 0
  %3923 = vmatpush2.bf16.msra.mxu0 0
  %3924 = vmatprep.subr.bf16.mxu0 0
  %3925 = vmatpush2.bf16.msra.mxu0 0
  %3926 = vmatprep.subr.bf16.mxu0 0
  %3927 = vmatpush2.bf16.msra.mxu0 0
  %3928 = vmatprep.subr.bf16.mxu0 0
  %3929 = vmatpush2.bf16.msra.mxu0 0
  %3930 = vmatprep.subr.bf16.mxu0 0
  %3931 = vmatpush2.bf16.msra.mxu0 0
  %3932 = vmatprep.mubr.bf16.mxu0 0
  %3933 = vmatmul.mubr.bf16.gmra.mxu0 %v3788
  %v3934 = vpop.f32.mrf.mxu0
  %v3935 = vadd.f32 0.0, %v3934
  %v3936 = vpop.f32.mrf.mxu0
  %v3937 = vpop.f32.mrf.mxu0
  %v3938 = vadd.f32 0.0, %v3937
  %v3939 = vpop.f32.mrf.mxu0
  %3940 = vmatprep.mubr.bf16.mxu0 0
  %3941 = vmatmul.mubr.bf16.gmra.mxu0 %v3789
  %v3942 = vpop.f32.mrf.mxu0
  %v3943 = vadd.f32 0.0, %v3942
  %v3944 = vpop.f32.mrf.mxu0
  %v3945 = vpop.f32.mrf.mxu0
  %v3946 = vadd.f32 0.0, %v3945
  %v3947 = vpop.f32.mrf.mxu0
  %3948 = vmatprep.mubr.bf16.mxu0 0
  %3949 = vmatmul.mubr.bf16.gmra.mxu0 %v3790
  %v3950 = vpop.f32.mrf.mxu0
  %v3951 = vadd.f32 0.0, %v3950
  %v3952 = vpop.f32.mrf.mxu0
  %v3953 = vpop.f32.mrf.mxu0
  %v3954 = vadd.f32 0.0, %v3953
  %v3955 = vpop.f32.mrf.mxu0
  %3956 = vmatprep.mubr.bf16.mxu0 0
  %3957 = vmatmul.mubr.bf16.gmra.mxu0 %v3791
  %v3958 = vpop.f32.mrf.mxu0
  %v3959 = vadd.f32 0.0, %v3958
  %v3960 = vpop.f32.mrf.mxu0
  %v3961 = vpop.f32.mrf.mxu0
  %v3962 = vadd.f32 0.0, %v3961
  %v3963 = vpop.f32.mrf.mxu0
  %3964 = vmatprep.mubr.bf16.mxu0 0
  %3965 = vmatmul.mubr.bf16.gmra.mxu0 %v3792
  %v3966 = vpop.f32.mrf.mxu0
  %v3967 = vadd.f32 0.0, %v3966
  %v3968 = vpop.f32.mrf.mxu0
  %v3969 = vpop.f32.mrf.mxu0
  %v3970 = vadd.f32 0.0, %v3969
  %v3971 = vpop.f32.mrf.mxu0
  %3972 = vmatprep.mubr.bf16.mxu0 0
  %3973 = vmatmul.mubr.bf16.gmra.mxu0 %v3793
  %v3974 = vpop.f32.mrf.mxu0
  %v3975 = vadd.f32 0.0, %v3974
  %v3976 = vpop.f32.mrf.mxu0
  %v3977 = vpop.f32.mrf.mxu0
  %v3978 = vadd.f32 0.0, %v3977
  %v3979 = vpop.f32.mrf.mxu0
  %3980 = vmatprep.mubr.bf16.mxu0 0
  %3981 = vmatmul.mubr.bf16.gmra.mxu0 %v3794
  %v3982 = vpop.f32.mrf.mxu0
  %v3983 = vadd.f32 0.0, %v3982
  %v3984 = vpop.f32.mrf.mxu0
  %v3985 = vpop.f32.mrf.mxu0
  %v3986 = vadd.f32 0.0, %v3985
  %v3987 = vpop.f32.mrf.mxu0
  %3988 = vmatprep.mubr.bf16.mxu0 0
  %3989 = vmatmul.mubr.bf16.gmra.mxu0 %v3795
  %v3990 = vpop.f32.mrf.mxu0
  %v3991 = vadd.f32 0.0, %v3990
  %v3992 = vpop.f32.mrf.mxu0
  %v3993 = vpop.f32.mrf.mxu0
  %v3994 = vadd.f32 0.0, %v3993
  %v3995 = vpop.f32.mrf.mxu0
  %3996 = vmatprep.mubr.bf16.mxu0 0
  %3997 = vmatmul.mubr.bf16.gmra.mxu0 %v3796
  %v3998 = vpop.f32.mrf.mxu0
  %v3999 = vadd.f32 0.0, %v3998
  %v4000 = vpop.f32.mrf.mxu0
  %v4001 = vpop.f32.mrf.mxu0
  %v4002 = vadd.f32 0.0, %v4001
  %v4003 = vpop.f32.mrf.mxu0
  %4004 = vmatprep.mubr.bf16.mxu0 0
  %4005 = vmatmul.mubr.bf16.gmra.mxu0 %v3797
  %v4006 = vpop.f32.mrf.mxu0
  %v4007 = vadd.f32 0.0, %v4006
  %v4008 = vpop.f32.mrf.mxu0
  %v4009 = vpop.f32.mrf.mxu0
  %v4010 = vadd.f32 0.0, %v4009
  %v4011 = vpop.f32.mrf.mxu0
  %4012 = vmatprep.mubr.bf16.mxu0 0
  %4013 = vmatmul.mubr.bf16.gmra.mxu0 %v3798
  %v4014 = vpop.f32.mrf.mxu0
  %v4015 = vadd.f32 0.0, %v4014
  %v4016 = vpop.f32.mrf.mxu0
  %v4017 = vpop.f32.mrf.mxu0
  %v4018 = vadd.f32 0.0, %v4017
  %v4019 = vpop.f32.mrf.mxu0
  %4020 = vmatprep.mubr.bf16.mxu0 0
  %4021 = vmatmul.mubr.bf16.gmra.mxu0 %v3799
  %v4022 = vpop.f32.mrf.mxu0
  %v4023 = vadd.f32 0.0, %v4022
  %v4024 = vpop.f32.mrf.mxu0
  %v4025 = vpop.f32.mrf.mxu0
  %v4026 = vadd.f32 0.0, %v4025
  %v4027 = vpop.f32.mrf.mxu0
  %4028 = vmatprep.mubr.bf16.mxu0 0
  %4029 = vmatmul.mubr.bf16.gmra.mxu0 %v3800
  %v4030 = vpop.f32.mrf.mxu0
  %v4031 = vadd.f32 0.0, %v4030
  %v4032 = vpop.f32.mrf.mxu0
  %v4033 = vpop.f32.mrf.mxu0
  %v4034 = vadd.f32 0.0, %v4033
  %v4035 = vpop.f32.mrf.mxu0
  %4036 = vmatprep.mubr.bf16.mxu0 0
  %4037 = vmatmul.mubr.bf16.gmra.mxu0 %v3801
  %v4038 = vpop.f32.mrf.mxu0
  %v4039 = vadd.f32 0.0, %v4038
  %v4040 = vpop.f32.mrf.mxu0
  %v4041 = vpop.f32.mrf.mxu0
  %v4042 = vadd.f32 0.0, %v4041
  %v4043 = vpop.f32.mrf.mxu0
  %4044 = vmatprep.mubr.bf16.mxu0 0
  %4045 = vmatmul.mubr.bf16.gmra.mxu0 %v3802
  %v4046 = vpop.f32.mrf.mxu0
  %v4047 = vadd.f32 0.0, %v4046
  %v4048 = vpop.f32.mrf.mxu0
  %v4049 = vpop.f32.mrf.mxu0
  %v4050 = vadd.f32 0.0, %v4049
  %v4051 = vpop.f32.mrf.mxu0
  %4052 = vmatprep.mubr.bf16.mxu0 0
  %4053 = vmatmul.mubr.bf16.gmra.mxu0 %v3803
  %v4054 = vpop.f32.mrf.mxu0
  %v4055 = vadd.f32 0.0, %v4054
  %v4056 = vpop.f32.mrf.mxu0
  %v4057 = vpop.f32.mrf.mxu0
  %v4058 = vadd.f32 0.0, %v4057
  %v4059 = vpop.f32.mrf.mxu0
  %4060 = vmatprep.mubr.bf16.mxu0 0
  %4061 = vmatmul.mubr.bf16.gmra.mxu0 %v3804
  %v4062 = vpop.f32.mrf.mxu0
  %v4063 = vadd.f32 0.0, %v4062
  %v4064 = vpop.f32.mrf.mxu0
  %v4065 = vpop.f32.mrf.mxu0
  %v4066 = vadd.f32 0.0, %v4065
  %v4067 = vpop.f32.mrf.mxu0
  %4068 = vmatprep.mubr.bf16.mxu0 0
  %4069 = vmatmul.mubr.bf16.gmra.mxu0 %v3805
  %v4070 = vpop.f32.mrf.mxu0
  %v4071 = vadd.f32 0.0, %v4070
  %v4072 = vpop.f32.mrf.mxu0
  %v4073 = vpop.f32.mrf.mxu0
  %v4074 = vadd.f32 0.0, %v4073
  %v4075 = vpop.f32.mrf.mxu0
  %4076 = vmatprep.mubr.bf16.mxu0 0
  %4077 = vmatmul.mubr.bf16.gmra.mxu0 %v3806
  %v4078 = vpop.f32.mrf.mxu0
  %v4079 = vadd.f32 0.0, %v4078
  %v4080 = vpop.f32.mrf.mxu0
  %v4081 = vpop.f32.mrf.mxu0
  %v4082 = vadd.f32 0.0, %v4081
  %v4083 = vpop.f32.mrf.mxu0
  %4084 = vmatprep.mubr.bf16.mxu0 0
  %4085 = vmatmul.mubr.bf16.gmra.mxu0 %v3807
  %v4086 = vpop.f32.mrf.mxu0
  %v4087 = vadd.f32 0.0, %v4086
  %v4088 = vpop.f32.mrf.mxu0
  %v4089 = vpop.f32.mrf.mxu0
  %v4090 = vadd.f32 0.0, %v4089
  %v4091 = vpop.f32.mrf.mxu0
  %4092 = vmatprep.mubr.bf16.mxu0 0
  %4093 = vmatmul.mubr.bf16.gmra.mxu0 %v3808
  %v4094 = vpop.f32.mrf.mxu0
  %v4095 = vadd.f32 0.0, %v4094
  %v4096 = vpop.f32.mrf.mxu0
  %v4097 = vpop.f32.mrf.mxu0
  %v4098 = vadd.f32 0.0, %v4097
  %v4099 = vpop.f32.mrf.mxu0
  %4100 = vmatprep.mubr.bf16.mxu0 0
  %4101 = vmatmul.mubr.bf16.gmra.mxu0 %v3809
  %v4102 = vpop.f32.mrf.mxu0
  %v4103 = vadd.f32 0.0, %v4102
  %v4104 = vpop.f32.mrf.mxu0
  %v4105 = vpop.f32.mrf.mxu0
  %v4106 = vadd.f32 0.0, %v4105
  %v4107 = vpop.f32.mrf.mxu0
  %4108 = vmatprep.mubr.bf16.mxu0 0
  %4109 = vmatmul.mubr.bf16.gmra.mxu0 %v3810
  %v4110 = vpop.f32.mrf.mxu0
  %v4111 = vadd.f32 0.0, %v4110
  %v4112 = vpop.f32.mrf.mxu0
  %v4113 = vpop.f32.mrf.mxu0
  %v4114 = vadd.f32 0.0, %v4113
  %v4115 = vpop.f32.mrf.mxu0
  %4116 = vmatprep.mubr.bf16.mxu0 0
  %4117 = vmatmul.mubr.bf16.gmra.mxu0 %v3811
  %v4118 = vpop.f32.mrf.mxu0
  %v4119 = vadd.f32 0.0, %v4118
  %v4120 = vpop.f32.mrf.mxu0
  %v4121 = vpop.f32.mrf.mxu0
  %v4122 = vadd.f32 0.0, %v4121
  %v4123 = vpop.f32.mrf.mxu0
  %4124 = vmatprep.mubr.bf16.mxu0 0
  %4125 = vmatmul.mubr.bf16.gmra.mxu0 %v3812
  %v4126 = vpop.f32.mrf.mxu0
  %v4127 = vadd.f32 0.0, %v4126
  %v4128 = vpop.f32.mrf.mxu0
  %v4129 = vpop.f32.mrf.mxu0
  %v4130 = vadd.f32 0.0, %v4129
  %v4131 = vpop.f32.mrf.mxu0
  %4132 = vmatprep.mubr.bf16.mxu0 0
  %4133 = vmatmul.mubr.bf16.gmra.mxu0 %v3813
  %v4134 = vpop.f32.mrf.mxu0
  %v4135 = vadd.f32 0.0, %v4134
  %v4136 = vpop.f32.mrf.mxu0
  %v4137 = vpop.f32.mrf.mxu0
  %v4138 = vadd.f32 0.0, %v4137
  %v4139 = vpop.f32.mrf.mxu0
  %4140 = vmatprep.mubr.bf16.mxu0 0
  %4141 = vmatmul.mubr.bf16.gmra.mxu0 %v3814
  %v4142 = vpop.f32.mrf.mxu0
  %v4143 = vadd.f32 0.0, %v4142
  %v4144 = vpop.f32.mrf.mxu0
  %v4145 = vpop.f32.mrf.mxu0
  %v4146 = vadd.f32 0.0, %v4145
  %v4147 = vpop.f32.mrf.mxu0
  %4148 = vmatprep.mubr.bf16.mxu0 0
  %4149 = vmatmul.mubr.bf16.gmra.mxu0 %v3815
  %v4150 = vpop.f32.mrf.mxu0
  %v4151 = vadd.f32 0.0, %v4150
  %v4152 = vpop.f32.mrf.mxu0
  %v4153 = vpop.f32.mrf.mxu0
  %v4154 = vadd.f32 0.0, %v4153
  %v4155 = vpop.f32.mrf.mxu0
  %4156 = vmatprep.mubr.bf16.mxu0 0
  %4157 = vmatmul.mubr.bf16.gmra.mxu0 %v3816
  %v4158 = vpop.f32.mrf.mxu0
  %v4159 = vadd.f32 0.0, %v4158
  %v4160 = vpop.f32.mrf.mxu0
  %v4161 = vpop.f32.mrf.mxu0
  %v4162 = vadd.f32 0.0, %v4161
  %v4163 = vpop.f32.mrf.mxu0
  %4164 = vmatprep.mubr.bf16.mxu0 0
  %4165 = vmatmul.mubr.bf16.gmra.mxu0 %v3817
  %v4166 = vpop.f32.mrf.mxu0
  %v4167 = vadd.f32 0.0, %v4166
  %v4168 = vpop.f32.mrf.mxu0
  %v4169 = vpop.f32.mrf.mxu0
  %v4170 = vadd.f32 0.0, %v4169
  %v4171 = vpop.f32.mrf.mxu0
  %4172 = vmatprep.mubr.bf16.mxu0 0
  %4173 = vmatmul.mubr.bf16.gmra.mxu0 %v3818
  %v4174 = vpop.f32.mrf.mxu0
  %v4175 = vadd.f32 0.0, %v4174
  %v4176 = vpop.f32.mrf.mxu0
  %v4177 = vpop.f32.mrf.mxu0
  %v4178 = vadd.f32 0.0, %v4177
  %v4179 = vpop.f32.mrf.mxu0
  %4180 = vmatprep.mubr.bf16.mxu0 0
  %4181 = vmatmul.mubr.bf16.gmra.mxu0 %v3819
  %v4182 = vpop.f32.mrf.mxu0
  %v4183 = vadd.f32 0.0, %v4182
  %v4184 = vpop.f32.mrf.mxu0
  %v4185 = vpop.f32.mrf.mxu0
  %v4186 = vadd.f32 0.0, %v4185
  %v4187 = vpop.f32.mrf.mxu0
  %4188 = vdwg.mxu0
  %v4189 = vadd.f32 %v3579, %v3935
  %v4190 = vadd.f32 %v3580, %v3938
  %v4191 = vadd.f32 %v3581, %v3943
  %v4192 = vadd.f32 %v3582, %v3946
  %v4193 = vadd.f32 %v3583, %v3951
  %v4194 = vadd.f32 %v3584, %v3954
  %v4195 = vadd.f32 %v3585, %v3959
  %v4196 = vadd.f32 %v3586, %v3962
  %v4197 = vadd.f32 %v3587, %v3967
  %v4198 = vadd.f32 %v3588, %v3970
  %v4199 = vadd.f32 %v3589, %v3975
  %v4200 = vadd.f32 %v3590, %v3978
  %v4201 = vadd.f32 %v3591, %v3983
  %v4202 = vadd.f32 %v3592, %v3986
  %v4203 = vadd.f32 %v3593, %v3991
  %v4204 = vadd.f32 %v3594, %v3994
  %v4205 = vadd.f32 %v3595, %v3999
  %v4206 = vadd.f32 %v3596, %v4002
  %v4207 = vadd.f32 %v3597, %v4007
  %v4208 = vadd.f32 %v3598, %v4010
  %v4209 = vadd.f32 %v3599, %v4015
  %v4210 = vadd.f32 %v3600, %v4018
  %v4211 = vadd.f32 %v3601, %v4023
  %v4212 = vadd.f32 %v3602, %v4026
  %v4213 = vadd.f32 %v3603, %v4031
  %v4214 = vadd.f32 %v3604, %v4034
  %v4215 = vadd.f32 %v3605, %v4039
  %v4216 = vadd.f32 %v3606, %v4042
  %v4217 = vadd.f32 %v3607, %v4047
  %v4218 = vadd.f32 %v3608, %v4050
  %v4219 = vadd.f32 %v3609, %v4055
  %v4220 = vadd.f32 %v3610, %v4058
  %v4221 = vadd.f32 %v3611, %v4063
  %v4222 = vadd.f32 %v3612, %v4066
  %v4223 = vadd.f32 %v3613, %v4071
  %v4224 = vadd.f32 %v3614, %v4074
  %v4225 = vadd.f32 %v3615, %v4079
  %v4226 = vadd.f32 %v3616, %v4082
  %v4227 = vadd.f32 %v3617, %v4087
  %v4228 = vadd.f32 %v3618, %v4090
  %v4229 = vadd.f32 %v3619, %v4095
  %v4230 = vadd.f32 %v3620, %v4098
  %v4231 = vadd.f32 %v3621, %v4103
  %v4232 = vadd.f32 %v3622, %v4106
  %v4233 = vadd.f32 %v3623, %v4111
  %v4234 = vadd.f32 %v3624, %v4114
  %v4235 = vadd.f32 %v3625, %v4119
  %v4236 = vadd.f32 %v3626, %v4122
  %v4237 = vadd.f32 %v3627, %v4127
  %v4238 = vadd.f32 %v3628, %v4130
  %v4239 = vadd.f32 %v3629, %v4135
  %v4240 = vadd.f32 %v3630, %v4138
  %v4241 = vadd.f32 %v3631, %v4143
  %v4242 = vadd.f32 %v3632, %v4146
  %v4243 = vadd.f32 %v3633, %v4151
  %v4244 = vadd.f32 %v3634, %v4154
  %v4245 = vadd.f32 %v3635, %v4159
  %v4246 = vadd.f32 %v3636, %v4162
  %v4247 = vadd.f32 %v3637, %v4167
  %v4248 = vadd.f32 %v3638, %v4170
  %v4249 = vadd.f32 %v3639, %v4175
  %v4250 = vadd.f32 %v3640, %v4178
  %v4251 = vadd.f32 %v3641, %v4183
  %v4252 = vadd.f32 %v3642, %v4186
  %4253 = vst [vmem:[#allocation2] sm:$0xff] %v4189
  %4254 = vst [vmem:[#allocation2 + $0x8] sm:$0xff] %v4190
  %4255 = vst [vmem:[#allocation2 + $0x10] sm:$0xff] %v4191
  %4256 = vst [vmem:[#allocation2 + $0x18] sm:$0xff] %v4192
  %4257 = vst [vmem:[#allocation2 + $0x20] sm:$0xff] %v4193
  %4258 = vst [vmem:[#allocation2 + $0x28] sm:$0xff] %v4194
  %4259 = vst [vmem:[#allocation2 + $0x30] sm:$0xff] %v4195
  %4260 = vst [vmem:[#allocation2 + $0x38] sm:$0xff] %v4196
  %4261 = vst [vmem:[#allocation2 + $0x40] sm:$0xff] %v4197
  %4262 = vst [vmem:[#allocation2 + $0x48] sm:$0xff] %v4198
  %4263 = vst [vmem:[#allocation2 + $0x50] sm:$0xff] %v4199
  %4264 = vst [vmem:[#allocation2 + $0x58] sm:$0xff] %v4200
  %4265 = vst [vmem:[#allocation2 + $0x60] sm:$0xff] %v4201
  %4266 = vst [vmem:[#allocation2 + $0x68] sm:$0xff] %v4202
  %4267 = vst [vmem:[#allocation2 + $0x70] sm:$0xff] %v4203
  %4268 = vst [vmem:[#allocation2 + $0x78] sm:$0xff] %v4204
  %4269 = vst [vmem:[#allocation2 + $0x80] sm:$0xff] %v4205
  %4270 = vst [vmem:[#allocation2 + $0x88] sm:$0xff] %v4206
  %4271 = vst [vmem:[#allocation2 + $0x90] sm:$0xff] %v4207
  %4272 = vst [vmem:[#allocation2 + $0x98] sm:$0xff] %v4208
  %4273 = vst [vmem:[#allocation2 + $0xa0] sm:$0xff] %v4209
  %4274 = vst [vmem:[#allocation2 + $0xa8] sm:$0xff] %v4210
  %4275 = vst [vmem:[#allocation2 + $0xb0] sm:$0xff] %v4211
  %4276 = vst [vmem:[#allocation2 + $0xb8] sm:$0xff] %v4212
  %4277 = vst [vmem:[#allocation2 + $0xc0] sm:$0xff] %v4213
  %4278 = vst [vmem:[#allocation2 + $0xc8] sm:$0xff] %v4214
  %4279 = vst [vmem:[#allocation2 + $0xd0] sm:$0xff] %v4215
  %4280 = vst [vmem:[#allocation2 + $0xd8] sm:$0xff] %v4216
  %4281 = vst [vmem:[#allocation2 + $0xe0] sm:$0xff] %v4217
  %4282 = vst [vmem:[#allocation2 + $0xe8] sm:$0xff] %v4218
  %4283 = vst [vmem:[#allocation2 + $0xf0] sm:$0xff] %v4219
  %4284 = vst [vmem:[#allocation2 + $0xf8] sm:$0xff] %v4220
  %4285 = vst [vmem:[#allocation2 + $0x100] sm:$0xff] %v4221
  %4286 = vst [vmem:[#allocation2 + $0x108] sm:$0xff] %v4222
  %4287 = vst [vmem:[#allocation2 + $0x110] sm:$0xff] %v4223
  %4288 = vst [vmem:[#allocation2 + $0x118] sm:$0xff] %v4224
  %4289 = vst [vmem:[#allocation2 + $0x120] sm:$0xff] %v4225
  %4290 = vst [vmem:[#allocation2 + $0x128] sm:$0xff] %v4226
  %4291 = vst [vmem:[#allocation2 + $0x130] sm:$0xff] %v4227
  %4292 = vst [vmem:[#allocation2 + $0x138] sm:$0xff] %v4228
  %4293 = vst [vmem:[#allocation2 + $0x140] sm:$0xff] %v4229
  %4294 = vst [vmem:[#allocation2 + $0x148] sm:$0xff] %v4230
  %4295 = vst [vmem:[#allocation2 + $0x150] sm:$0xff] %v4231
  %4296 = vst [vmem:[#allocation2 + $0x158] sm:$0xff] %v4232
  %4297 = vst [vmem:[#allocation2 + $0x160] sm:$0xff] %v4233
  %4298 = vst [vmem:[#allocation2 + $0x168] sm:$0xff] %v4234
  %4299 = vst [vmem:[#allocation2 + $0x170] sm:$0xff] %v4235
  %4300 = vst [vmem:[#allocation2 + $0x178] sm:$0xff] %v4236
  %4301 = vst [vmem:[#allocation2 + $0x180] sm:$0xff] %v4237
  %4302 = vst [vmem:[#allocation2 + $0x188] sm:$0xff] %v4238
  %4303 = vst [vmem:[#allocation2 + $0x190] sm:$0xff] %v4239
  %4304 = vst [vmem:[#allocation2 + $0x198] sm:$0xff] %v4240
  %4305 = vst [vmem:[#allocation2 + $0x1a0] sm:$0xff] %v4241
  %4306 = vst [vmem:[#allocation2 + $0x1a8] sm:$0xff] %v4242
  %4307 = vst [vmem:[#allocation2 + $0x1b0] sm:$0xff] %v4243
  %4308 = vst [vmem:[#allocation2 + $0x1b8] sm:$0xff] %v4244
  %4309 = vst [vmem:[#allocation2 + $0x1c0] sm:$0xff] %v4245
  %4310 = vst [vmem:[#allocation2 + $0x1c8] sm:$0xff] %v4246
  %4311 = vst [vmem:[#allocation2 + $0x1d0] sm:$0xff] %v4247
  %4312 = vst [vmem:[#allocation2 + $0x1d8] sm:$0xff] %v4248
  %4313 = vst [vmem:[#allocation2 + $0x1e0] sm:$0xff] %v4249
  %4314 = vst [vmem:[#allocation2 + $0x1e8] sm:$0xff] %v4250
  %4315 = vst [vmem:[#allocation2 + $0x1f0] sm:$0xff] %v4251
  %4316 = vst [vmem:[#allocation2 + $0x1f8] sm:$0xff] %v4252
  %v4317 = vld [vmem:[%s3514] sm:$0xf]
  %v4318 = vld [vmem:[%s3514 + $0x4] sm:$0xf]
  %v4319 = vld [vmem:[%s3514 + $0x8] sm:$0x1]
  %v4320 = vld [vmem:[%s3514 + $0xc] sm:$0xf]
  %v4321 = vld [vmem:[%s3514 + $0x10] sm:$0xf]
  %v4322 = vld [vmem:[%s3514 + $0x14] sm:$0x1]
  %v4323 = vld [vmem:[%s3514 + $0x18] sm:$0xf]
  %v4324 = vld [vmem:[%s3514 + $0x1c] sm:$0xf]
  %v4325 = vld [vmem:[%s3514 + $0x20] sm:$0x1]
  %v4326 = vld [vmem:[%s3514 + $0x24] sm:$0xf]
  %v4327 = vld [vmem:[%s3514 + $0x28] sm:$0xf]
  %v4328 = vld [vmem:[%s3514 + $0x2c] sm:$0x1]
  %v4329 = vld [vmem:[%s3514 + $0x30] sm:$0xf]
  %v4330 = vld [vmem:[%s3514 + $0x34] sm:$0xf]
  %v4331 = vld [vmem:[%s3514 + $0x38] sm:$0x1]
  %v4332 = vld [vmem:[%s3514 + $0x3c] sm:$0xf]
  %v4333 = vld [vmem:[%s3514 + $0x40] sm:$0xf]
  %v4334 = vld [vmem:[%s3514 + $0x44] sm:$0x1]
  %v4335 = vld [vmem:[%s3514 + $0x48] sm:$0xf]
  %v4336 = vld [vmem:[%s3514 + $0x4c] sm:$0xf]
  %v4337 = vld [vmem:[%s3514 + $0x50] sm:$0x1]
  %v4338 = vld [vmem:[%s3514 + $0x54] sm:$0xf]
  %v4339 = vld [vmem:[%s3514 + $0x58] sm:$0xf]
  %v4340 = vld [vmem:[%s3514 + $0x5c] sm:$0x1]
  %v4341 = vld [vmem:[%s3514 + $0x60] sm:$0xf]
  %v4342 = vld [vmem:[%s3514 + $0x64] sm:$0xf]
  %v4343 = vld [vmem:[%s3514 + $0x68] sm:$0x1]
  %v4344 = vld [vmem:[%s3514 + $0x6c] sm:$0xf]
  %v4345 = vld [vmem:[%s3514 + $0x70] sm:$0xf]
  %v4346 = vld [vmem:[%s3514 + $0x74] sm:$0x1]
  %v4347 = vld [vmem:[%s3514 + $0x78] sm:$0xf]
  %v4348 = vld [vmem:[%s3514 + $0x7c] sm:$0xf]
  %v4349 = vld [vmem:[%s3514 + $0x80] sm:$0x1]
  %v4350 = vld [vmem:[%s3514 + $0x84] sm:$0xf]
  %v4351 = vld [vmem:[%s3514 + $0x88] sm:$0xf]
  %v4352 = vld [vmem:[%s3514 + $0x8c] sm:$0x1]
  %v4353 = vld [vmem:[%s3514 + $0x90] sm:$0xf]
  %v4354 = vld [vmem:[%s3514 + $0x94] sm:$0xf]
  %v4355 = vld [vmem:[%s3514 + $0x98] sm:$0x1]
  %v4356 = vld [vmem:[%s3514 + $0x9c] sm:$0xf]
  %v4357 = vld [vmem:[%s3514 + $0xa0] sm:$0xf]
  %v4358 = vld [vmem:[%s3514 + $0xa4] sm:$0x1]
  %v4359 = vld [vmem:[%s3514 + $0xa8] sm:$0xf]
  %v4360 = vld [vmem:[%s3514 + $0xac] sm:$0xf]
  %v4361 = vld [vmem:[%s3514 + $0xb0] sm:$0x1]
  %v4362 = vld [vmem:[%s3514 + $0xb4] sm:$0xf]
  %v4363 = vld [vmem:[%s3514 + $0xb8] sm:$0xf]
  %v4364 = vld [vmem:[%s3514 + $0xbc] sm:$0x1]
  %v4365 = vld [vmem:[%s3514 + $0xd8] sm:$0xf]
  %v4366 = vld [vmem:[%s3514 + $0xdc] sm:$0xf]
  %v4367 = vld [vmem:[%s3514 + $0xe0] sm:$0x1]
  %v4368 = vld [vmem:[%s3514 + $0xe4] sm:$0xf]
  %v4369 = vld [vmem:[%s3514 + $0xe8] sm:$0xf]
  %v4370 = vld [vmem:[%s3514 + $0xec] sm:$0x1]
  %v4371 = vld [vmem:[%s3514 + $0xf0] sm:$0xf]
  %v4372 = vld [vmem:[%s3514 + $0xf4] sm:$0xf]
  %v4373 = vld [vmem:[%s3514 + $0xf8] sm:$0x1]
  %v4374 = vld [vmem:[%s3514 + $0xfc] sm:$0xf]
  %v4375 = vld [vmem:[%s3514 + $0x100] sm:$0xf]
  %v4376 = vld [vmem:[%s3514 + $0x104] sm:$0x1]
  %v4377 = vld [vmem:[%s3514 + $0x108] sm:$0xf]
  %v4378 = vld [vmem:[%s3514 + $0x10c] sm:$0xf]
  %v4379 = vld [vmem:[%s3514 + $0x110] sm:$0x1]
  %v4380 = vld [vmem:[%s3514 + $0x114] sm:$0xf]
  %v4381 = vld [vmem:[%s3514 + $0x118] sm:$0xf]
  %v4382 = vld [vmem:[%s3514 + $0x11c] sm:$0x1]
  %v4383 = vld [vmem:[%s3514 + $0x120] sm:$0xf]
  %v4384 = vld [vmem:[%s3514 + $0x124] sm:$0xf]
  %v4385 = vld [vmem:[%s3514 + $0x128] sm:$0x1]
  %v4386 = vld [vmem:[%s3514 + $0x12c] sm:$0xf]
  %v4387 = vld [vmem:[%s3514 + $0x130] sm:$0xf]
  %v4388 = vld [vmem:[%s3514 + $0x134] sm:$0x1]
  %v4389 = vld [vmem:[%s3514 + $0x138] sm:$0xf]
  %v4390 = vld [vmem:[%s3514 + $0x13c] sm:$0xf]
  %v4391 = vld [vmem:[%s3514 + $0x140] sm:$0x1]
  %v4392 = vld [vmem:[%s3514 + $0x144] sm:$0xf]
  %v4393 = vld [vmem:[%s3514 + $0x148] sm:$0xf]
  %v4394 = vld [vmem:[%s3514 + $0x14c] sm:$0x1]
  %v4395 = vld [vmem:[%s3514 + $0x150] sm:$0xf]
  %v4396 = vld [vmem:[%s3514 + $0x154] sm:$0xf]
  %v4397 = vld [vmem:[%s3514 + $0x158] sm:$0x1]
  %v4398 = vld [vmem:[%s3514 + $0x15c] sm:$0xf]
  %v4399 = vld [vmem:[%s3514 + $0x160] sm:$0xf]
  %v4400 = vld [vmem:[%s3514 + $0x164] sm:$0x1]
  %v4401 = vld [vmem:[%s3514 + $0x168] sm:$0xf]
  %v4402 = vld [vmem:[%s3514 + $0x16c] sm:$0xf]
  %v4403 = vld [vmem:[%s3514 + $0x170] sm:$0x1]
  %v4404 = vld [vmem:[%s3514 + $0x174] sm:$0xf]
  %v4405 = vld [vmem:[%s3514 + $0x178] sm:$0xf]
  %v4406 = vld [vmem:[%s3514 + $0x17c] sm:$0x1]
  %v4407 = vld [vmem:[%s3514 + $0x180] sm:$0xf]
  %v4408 = vld [vmem:[%s3514 + $0x184] sm:$0xf]
  %v4409 = vld [vmem:[%s3514 + $0x188] sm:$0x1]
  %v4410 = vld [vmem:[%s3514 + $0x18c] sm:$0xf]
  %v4411 = vld [vmem:[%s3514 + $0x190] sm:$0xf]
  %v4412 = vld [vmem:[%s3514 + $0x194] sm:$0x1]
  %v4414 = vshrl.u32 %v4317, 16
  %v4416 = vrot.slane %v4414, 4
  %v4417 = vshll.u32 %v4317, 16
  %v4419 = vrot.slane %v4417, 5
  %v4420 = vor.u32 %v4416, %v4419
  %v4421 = vrot.slane %v4420, 4
  %v4423 = vshll.u32 %v4318, 16
  %v4425 = vrot.slane %v4423, 5
  %v4426 = vsel %vm978, %v4421, %v4425
  %v4427 = vshrl.u32 %v4318, 16
  %v4429 = vrot.slane %v4427, 4
  %v4430 = vor.u32 %v4429, %v4425
  %v4431 = vrot.slane %v4430, 4
  %v4433 = vshll.u32 %v4319, 16
  %v4435 = vrot.slane %v4433, 5
  %v4436 = vsel %vm978, %v4431, %v4435
  %v4438 = vshrl.u32 %v4320, 16
  %v4440 = vrot.slane %v4438, 4
  %v4441 = vshll.u32 %v4320, 16
  %v4443 = vrot.slane %v4441, 5
  %v4444 = vor.u32 %v4440, %v4443
  %v4445 = vrot.slane %v4444, 4
  %v4447 = vshll.u32 %v4321, 16
  %v4449 = vrot.slane %v4447, 5
  %v4450 = vsel %vm978, %v4445, %v4449
  %v4451 = vshrl.u32 %v4321, 16
  %v4453 = vrot.slane %v4451, 4
  %v4454 = vor.u32 %v4453, %v4449
  %v4455 = vrot.slane %v4454, 4
  %v4457 = vshll.u32 %v4322, 16
  %v4459 = vrot.slane %v4457, 5
  %v4460 = vsel %vm978, %v4455, %v4459
  %v4462 = vshrl.u32 %v4323, 16
  %v4464 = vrot.slane %v4462, 4
  %v4465 = vshll.u32 %v4323, 16
  %v4467 = vrot.slane %v4465, 5
  %v4468 = vor.u32 %v4464, %v4467
  %v4469 = vrot.slane %v4468, 4
  %v4471 = vshll.u32 %v4324, 16
  %v4473 = vrot.slane %v4471, 5
  %v4474 = vsel %vm978, %v4469, %v4473
  %v4475 = vshrl.u32 %v4324, 16
  %v4477 = vrot.slane %v4475, 4
  %v4478 = vor.u32 %v4477, %v4473
  %v4479 = vrot.slane %v4478, 4
  %v4481 = vshll.u32 %v4325, 16
  %v4483 = vrot.slane %v4481, 5
  %v4484 = vsel %vm978, %v4479, %v4483
  %v4486 = vshrl.u32 %v4326, 16
  %v4488 = vrot.slane %v4486, 4
  %v4489 = vshll.u32 %v4326, 16
  %v4491 = vrot.slane %v4489, 5
  %v4492 = vor.u32 %v4488, %v4491
  %v4493 = vrot.slane %v4492, 4
  %v4495 = vshll.u32 %v4327, 16
  %v4497 = vrot.slane %v4495, 5
  %v4498 = vsel %vm978, %v4493, %v4497
  %v4499 = vshrl.u32 %v4327, 16
  %v4501 = vrot.slane %v4499, 4
  %v4502 = vor.u32 %v4501, %v4497
  %v4503 = vrot.slane %v4502, 4
  %v4505 = vshll.u32 %v4328, 16
  %v4507 = vrot.slane %v4505, 5
  %v4508 = vsel %vm978, %v4503, %v4507
  %v4510 = vshrl.u32 %v4329, 16
  %v4512 = vrot.slane %v4510, 4
  %v4513 = vshll.u32 %v4329, 16
  %v4515 = vrot.slane %v4513, 5
  %v4516 = vor.u32 %v4512, %v4515
  %v4517 = vrot.slane %v4516, 4
  %v4519 = vshll.u32 %v4330, 16
  %v4521 = vrot.slane %v4519, 5
  %v4522 = vsel %vm978, %v4517, %v4521
  %v4523 = vshrl.u32 %v4330, 16
  %v4525 = vrot.slane %v4523, 4
  %v4526 = vor.u32 %v4525, %v4521
  %v4527 = vrot.slane %v4526, 4
  %v4529 = vshll.u32 %v4331, 16
  %v4531 = vrot.slane %v4529, 5
  %v4532 = vsel %vm978, %v4527, %v4531
  %v4534 = vshrl.u32 %v4332, 16
  %v4536 = vrot.slane %v4534, 4
  %v4537 = vshll.u32 %v4332, 16
  %v4539 = vrot.slane %v4537, 5
  %v4540 = vor.u32 %v4536, %v4539
  %v4541 = vrot.slane %v4540, 4
  %v4543 = vshll.u32 %v4333, 16
  %v4545 = vrot.slane %v4543, 5
  %v4546 = vsel %vm978, %v4541, %v4545
  %v4547 = vshrl.u32 %v4333, 16
  %v4549 = vrot.slane %v4547, 4
  %v4550 = vor.u32 %v4549, %v4545
  %v4551 = vrot.slane %v4550, 4
  %v4553 = vshll.u32 %v4334, 16
  %v4555 = vrot.slane %v4553, 5
  %v4556 = vsel %vm978, %v4551, %v4555
  %v4558 = vshrl.u32 %v4335, 16
  %v4560 = vrot.slane %v4558, 4
  %v4561 = vshll.u32 %v4335, 16
  %v4563 = vrot.slane %v4561, 5
  %v4564 = vor.u32 %v4560, %v4563
  %v4565 = vrot.slane %v4564, 4
  %v4567 = vshll.u32 %v4336, 16
  %v4569 = vrot.slane %v4567, 5
  %v4570 = vsel %vm978, %v4565, %v4569
  %v4571 = vshrl.u32 %v4336, 16
  %v4573 = vrot.slane %v4571, 4
  %v4574 = vor.u32 %v4573, %v4569
  %v4575 = vrot.slane %v4574, 4
  %v4577 = vshll.u32 %v4337, 16
  %v4579 = vrot.slane %v4577, 5
  %v4580 = vsel %vm978, %v4575, %v4579
  %v4582 = vshrl.u32 %v4338, 16
  %v4584 = vrot.slane %v4582, 4
  %v4585 = vshll.u32 %v4338, 16
  %v4587 = vrot.slane %v4585, 5
  %v4588 = vor.u32 %v4584, %v4587
  %v4589 = vrot.slane %v4588, 4
  %v4591 = vshll.u32 %v4339, 16
  %v4593 = vrot.slane %v4591, 5
  %v4594 = vsel %vm978, %v4589, %v4593
  %v4595 = vshrl.u32 %v4339, 16
  %v4597 = vrot.slane %v4595, 4
  %v4598 = vor.u32 %v4597, %v4593
  %v4599 = vrot.slane %v4598, 4
  %v4601 = vshll.u32 %v4340, 16
  %v4603 = vrot.slane %v4601, 5
  %v4604 = vsel %vm978, %v4599, %v4603
  %v4606 = vshrl.u32 %v4341, 16
  %v4608 = vrot.slane %v4606, 4
  %v4609 = vshll.u32 %v4341, 16
  %v4611 = vrot.slane %v4609, 5
  %v4612 = vor.u32 %v4608, %v4611
  %v4613 = vrot.slane %v4612, 4
  %v4615 = vshll.u32 %v4342, 16
  %v4617 = vrot.slane %v4615, 5
  %v4618 = vsel %vm978, %v4613, %v4617
  %v4619 = vshrl.u32 %v4342, 16
  %v4621 = vrot.slane %v4619, 4
  %v4622 = vor.u32 %v4621, %v4617
  %v4623 = vrot.slane %v4622, 4
  %v4625 = vshll.u32 %v4343, 16
  %v4627 = vrot.slane %v4625, 5
  %v4628 = vsel %vm978, %v4623, %v4627
  %v4630 = vshrl.u32 %v4344, 16
  %v4632 = vrot.slane %v4630, 4
  %v4633 = vshll.u32 %v4344, 16
  %v4635 = vrot.slane %v4633, 5
  %v4636 = vor.u32 %v4632, %v4635
  %v4637 = vrot.slane %v4636, 4
  %v4639 = vshll.u32 %v4345, 16
  %v4641 = vrot.slane %v4639, 5
  %v4642 = vsel %vm978, %v4637, %v4641
  %v4643 = vshrl.u32 %v4345, 16
  %v4645 = vrot.slane %v4643, 4
  %v4646 = vor.u32 %v4645, %v4641
  %v4647 = vrot.slane %v4646, 4
  %v4649 = vshll.u32 %v4346, 16
  %v4651 = vrot.slane %v4649, 5
  %v4652 = vsel %vm978, %v4647, %v4651
  %v4654 = vshrl.u32 %v4347, 16
  %v4656 = vrot.slane %v4654, 4
  %v4657 = vshll.u32 %v4347, 16
  %v4659 = vrot.slane %v4657, 5
  %v4660 = vor.u32 %v4656, %v4659
  %v4661 = vrot.slane %v4660, 4
  %v4663 = vshll.u32 %v4348, 16
  %v4665 = vrot.slane %v4663, 5
  %v4666 = vsel %vm978, %v4661, %v4665
  %v4667 = vshrl.u32 %v4348, 16
  %v4669 = vrot.slane %v4667, 4
  %v4670 = vor.u32 %v4669, %v4665
  %v4671 = vrot.slane %v4670, 4
  %v4673 = vshll.u32 %v4349, 16
  %v4675 = vrot.slane %v4673, 5
  %v4676 = vsel %vm978, %v4671, %v4675
  %v4678 = vshrl.u32 %v4350, 16
  %v4680 = vrot.slane %v4678, 4
  %v4681 = vshll.u32 %v4350, 16
  %v4683 = vrot.slane %v4681, 5
  %v4684 = vor.u32 %v4680, %v4683
  %v4685 = vrot.slane %v4684, 4
  %v4687 = vshll.u32 %v4351, 16
  %v4689 = vrot.slane %v4687, 5
  %v4690 = vsel %vm978, %v4685, %v4689
  %v4691 = vshrl.u32 %v4351, 16
  %v4693 = vrot.slane %v4691, 4
  %v4694 = vor.u32 %v4693, %v4689
  %v4695 = vrot.slane %v4694, 4
  %v4697 = vshll.u32 %v4352, 16
  %v4699 = vrot.slane %v4697, 5
  %v4700 = vsel %vm978, %v4695, %v4699
  %v4702 = vshrl.u32 %v4353, 16
  %v4704 = vrot.slane %v4702, 4
  %v4705 = vshll.u32 %v4353, 16
  %v4707 = vrot.slane %v4705, 5
  %v4708 = vor.u32 %v4704, %v4707
  %v4709 = vrot.slane %v4708, 4
  %v4711 = vshll.u32 %v4354, 16
  %v4713 = vrot.slane %v4711, 5
  %v4714 = vsel %vm978, %v4709, %v4713
  %v4715 = vshrl.u32 %v4354, 16
  %v4717 = vrot.slane %v4715, 4
  %v4718 = vor.u32 %v4717, %v4713
  %v4719 = vrot.slane %v4718, 4
  %v4721 = vshll.u32 %v4355, 16
  %v4723 = vrot.slane %v4721, 5
  %v4724 = vsel %vm978, %v4719, %v4723
  %v4726 = vshrl.u32 %v4356, 16
  %v4728 = vrot.slane %v4726, 4
  %v4729 = vshll.u32 %v4356, 16
  %v4731 = vrot.slane %v4729, 5
  %v4732 = vor.u32 %v4728, %v4731
  %v4733 = vrot.slane %v4732, 4
  %v4735 = vshll.u32 %v4357, 16
  %v4737 = vrot.slane %v4735, 5
  %v4738 = vsel %vm978, %v4733, %v4737
  %v4739 = vshrl.u32 %v4357, 16
  %v4741 = vrot.slane %v4739, 4
  %v4742 = vor.u32 %v4741, %v4737
  %v4743 = vrot.slane %v4742, 4
  %v4745 = vshll.u32 %v4358, 16
  %v4747 = vrot.slane %v4745, 5
  %v4748 = vsel %vm978, %v4743, %v4747
  %v4750 = vshrl.u32 %v4359, 16
  %v4752 = vrot.slane %v4750, 4
  %v4753 = vshll.u32 %v4359, 16
  %v4755 = vrot.slane %v4753, 5
  %v4756 = vor.u32 %v4752, %v4755
  %v4757 = vrot.slane %v4756, 4
  %v4759 = vshll.u32 %v4360, 16
  %v4761 = vrot.slane %v4759, 5
  %v4762 = vsel %vm978, %v4757, %v4761
  %v4763 = vshrl.u32 %v4360, 16
  %v4765 = vrot.slane %v4763, 4
  %v4766 = vor.u32 %v4765, %v4761
  %v4767 = vrot.slane %v4766, 4
  %v4769 = vshll.u32 %v4361, 16
  %v4771 = vrot.slane %v4769, 5
  %v4772 = vsel %vm978, %v4767, %v4771
  %v4774 = vshrl.u32 %v4362, 16
  %v4776 = vrot.slane %v4774, 4
  %v4777 = vshll.u32 %v4362, 16
  %v4779 = vrot.slane %v4777, 5
  %v4780 = vor.u32 %v4776, %v4779
  %v4781 = vrot.slane %v4780, 4
  %v4783 = vshll.u32 %v4363, 16
  %v4785 = vrot.slane %v4783, 5
  %v4786 = vsel %vm978, %v4781, %v4785
  %v4787 = vshrl.u32 %v4363, 16
  %v4789 = vrot.slane %v4787, 4
  %v4790 = vor.u32 %v4789, %v4785
  %v4791 = vrot.slane %v4790, 4
  %v4793 = vshll.u32 %v4364, 16
  %v4795 = vrot.slane %v4793, 5
  %v4796 = vsel %vm978, %v4791, %v4795
  %v4798 = vshrl.u32 %v4365, 16
  %v4800 = vrot.slane %v4798, 4
  %v4801 = vshll.u32 %v4365, 16
  %v4803 = vrot.slane %v4801, 5
  %v4804 = vor.u32 %v4800, %v4803
  %v4805 = vrot.slane %v4804, 4
  %v4807 = vshll.u32 %v4366, 16
  %v4809 = vrot.slane %v4807, 5
  %v4810 = vsel %vm978, %v4805, %v4809
  %v4811 = vshrl.u32 %v4366, 16
  %v4813 = vrot.slane %v4811, 4
  %v4814 = vor.u32 %v4813, %v4809
  %v4815 = vrot.slane %v4814, 4
  %v4817 = vshll.u32 %v4367, 16
  %v4819 = vrot.slane %v4817, 5
  %v4820 = vsel %vm978, %v4815, %v4819
  %v4822 = vshrl.u32 %v4368, 16
  %v4824 = vrot.slane %v4822, 4
  %v4825 = vshll.u32 %v4368, 16
  %v4827 = vrot.slane %v4825, 5
  %v4828 = vor.u32 %v4824, %v4827
  %v4829 = vrot.slane %v4828, 4
  %v4831 = vshll.u32 %v4369, 16
  %v4833 = vrot.slane %v4831, 5
  %v4834 = vsel %vm978, %v4829, %v4833
  %v4835 = vshrl.u32 %v4369, 16
  %v4837 = vrot.slane %v4835, 4
  %v4838 = vor.u32 %v4837, %v4833
  %v4839 = vrot.slane %v4838, 4
  %v4841 = vshll.u32 %v4370, 16
  %v4843 = vrot.slane %v4841, 5
  %v4844 = vsel %vm978, %v4839, %v4843
  %v4846 = vshrl.u32 %v4371, 16
  %v4848 = vrot.slane %v4846, 4
  %v4849 = vshll.u32 %v4371, 16
  %v4851 = vrot.slane %v4849, 5
  %v4852 = vor.u32 %v4848, %v4851
  %v4853 = vrot.slane %v4852, 4
  %v4855 = vshll.u32 %v4372, 16
  %v4857 = vrot.slane %v4855, 5
  %v4858 = vsel %vm978, %v4853, %v4857
  %v4859 = vshrl.u32 %v4372, 16
  %v4861 = vrot.slane %v4859, 4
  %v4862 = vor.u32 %v4861, %v4857
  %v4863 = vrot.slane %v4862, 4
  %v4865 = vshll.u32 %v4373, 16
  %v4867 = vrot.slane %v4865, 5
  %v4868 = vsel %vm978, %v4863, %v4867
  %v4870 = vshrl.u32 %v4374, 16
  %v4872 = vrot.slane %v4870, 4
  %v4873 = vshll.u32 %v4374, 16
  %v4875 = vrot.slane %v4873, 5
  %v4876 = vor.u32 %v4872, %v4875
  %v4877 = vrot.slane %v4876, 4
  %v4879 = vshll.u32 %v4375, 16
  %v4881 = vrot.slane %v4879, 5
  %v4882 = vsel %vm978, %v4877, %v4881
  %v4883 = vshrl.u32 %v4375, 16
  %v4885 = vrot.slane %v4883, 4
  %v4886 = vor.u32 %v4885, %v4881
  %v4887 = vrot.slane %v4886, 4
  %v4889 = vshll.u32 %v4376, 16
  %v4891 = vrot.slane %v4889, 5
  %v4892 = vsel %vm978, %v4887, %v4891
  %v4894 = vshrl.u32 %v4377, 16
  %v4896 = vrot.slane %v4894, 4
  %v4897 = vshll.u32 %v4377, 16
  %v4899 = vrot.slane %v4897, 5
  %v4900 = vor.u32 %v4896, %v4899
  %v4901 = vrot.slane %v4900, 4
  %v4903 = vshll.u32 %v4378, 16
  %v4905 = vrot.slane %v4903, 5
  %v4906 = vsel %vm978, %v4901, %v4905
  %v4907 = vshrl.u32 %v4378, 16
  %v4909 = vrot.slane %v4907, 4
  %v4910 = vor.u32 %v4909, %v4905
  %v4911 = vrot.slane %v4910, 4
  %v4913 = vshll.u32 %v4379, 16
  %v4915 = vrot.slane %v4913, 5
  %v4916 = vsel %vm978, %v4911, %v4915
  %v4918 = vshrl.u32 %v4380, 16
  %v4920 = vrot.slane %v4918, 4
  %v4921 = vshll.u32 %v4380, 16
  %v4923 = vrot.slane %v4921, 5
  %v4924 = vor.u32 %v4920, %v4923
  %v4925 = vrot.slane %v4924, 4
  %v4927 = vshll.u32 %v4381, 16
  %v4929 = vrot.slane %v4927, 5
  %v4930 = vsel %vm978, %v4925, %v4929
  %v4931 = vshrl.u32 %v4381, 16
  %v4933 = vrot.slane %v4931, 4
  %v4934 = vor.u32 %v4933, %v4929
  %v4935 = vrot.slane %v4934, 4
  %v4937 = vshll.u32 %v4382, 16
  %v4939 = vrot.slane %v4937, 5
  %v4940 = vsel %vm978, %v4935, %v4939
  %v4942 = vshrl.u32 %v4383, 16
  %v4944 = vrot.slane %v4942, 4
  %v4945 = vshll.u32 %v4383, 16
  %v4947 = vrot.slane %v4945, 5
  %v4948 = vor.u32 %v4944, %v4947
  %v4949 = vrot.slane %v4948, 4
  %v4951 = vshll.u32 %v4384, 16
  %v4953 = vrot.slane %v4951, 5
  %v4954 = vsel %vm978, %v4949, %v4953
  %v4955 = vshrl.u32 %v4384, 16
  %v4957 = vrot.slane %v4955, 4
  %v4958 = vor.u32 %v4957, %v4953
  %v4959 = vrot.slane %v4958, 4
  %v4961 = vshll.u32 %v4385, 16
  %v4963 = vrot.slane %v4961, 5
  %v4964 = vsel %vm978, %v4959, %v4963
  %v4966 = vshrl.u32 %v4386, 16
  %v4968 = vrot.slane %v4966, 4
  %v4969 = vshll.u32 %v4386, 16
  %v4971 = vrot.slane %v4969, 5
  %v4972 = vor.u32 %v4968, %v4971
  %v4973 = vrot.slane %v4972, 4
  %v4975 = vshll.u32 %v4387, 16
  %v4977 = vrot.slane %v4975, 5
  %v4978 = vsel %vm978, %v4973, %v4977
  %v4979 = vshrl.u32 %v4387, 16
  %v4981 = vrot.slane %v4979, 4
  %v4982 = vor.u32 %v4981, %v4977
  %v4983 = vrot.slane %v4982, 4
  %v4985 = vshll.u32 %v4388, 16
  %v4987 = vrot.slane %v4985, 5
  %v4988 = vsel %vm978, %v4983, %v4987
  %v4990 = vshrl.u32 %v4389, 16
  %v4992 = vrot.slane %v4990, 4
  %v4993 = vshll.u32 %v4389, 16
  %v4995 = vrot.slane %v4993, 5
  %v4996 = vor.u32 %v4992, %v4995
  %v4997 = vrot.slane %v4996, 4
  %v4999 = vshll.u32 %v4390, 16
  %v5001 = vrot.slane %v4999, 5
  %v5002 = vsel %vm978, %v4997, %v5001
  %v5003 = vshrl.u32 %v4390, 16
  %v5005 = vrot.slane %v5003, 4
  %v5006 = vor.u32 %v5005, %v5001
  %v5007 = vrot.slane %v5006, 4
  %v5009 = vshll.u32 %v4391, 16
  %v5011 = vrot.slane %v5009, 5
  %v5012 = vsel %vm978, %v5007, %v5011
  %v5014 = vshrl.u32 %v4392, 16
  %v5016 = vrot.slane %v5014, 4
  %v5017 = vshll.u32 %v4392, 16
  %v5019 = vrot.slane %v5017, 5
  %v5020 = vor.u32 %v5016, %v5019
  %v5021 = vrot.slane %v5020, 4
  %v5023 = vshll.u32 %v4393, 16
  %v5025 = vrot.slane %v5023, 5
  %v5026 = vsel %vm978, %v5021, %v5025
  %v5027 = vshrl.u32 %v4393, 16
  %v5029 = vrot.slane %v5027, 4
  %v5030 = vor.u32 %v5029, %v5025
  %v5031 = vrot.slane %v5030, 4
  %v5033 = vshll.u32 %v4394, 16
  %v5035 = vrot.slane %v5033, 5
  %v5036 = vsel %vm978, %v5031, %v5035
  %v5038 = vshrl.u32 %v4395, 16
  %v5040 = vrot.slane %v5038, 4
  %v5041 = vshll.u32 %v4395, 16
  %v5043 = vrot.slane %v5041, 5
  %v5044 = vor.u32 %v5040, %v5043
  %v5045 = vrot.slane %v5044, 4
  %v5047 = vshll.u32 %v4396, 16
  %v5049 = vrot.slane %v5047, 5
  %v5050 = vsel %vm978, %v5045, %v5049
  %v5051 = vshrl.u32 %v4396, 16
  %v5053 = vrot.slane %v5051, 4
  %v5054 = vor.u32 %v5053, %v5049
  %v5055 = vrot.slane %v5054, 4
  %v5057 = vshll.u32 %v4397, 16
  %v5059 = vrot.slane %v5057, 5
  %v5060 = vsel %vm978, %v5055, %v5059
  %v5062 = vshrl.u32 %v4398, 16
  %v5064 = vrot.slane %v5062, 4
  %v5065 = vshll.u32 %v4398, 16
  %v5067 = vrot.slane %v5065, 5
  %v5068 = vor.u32 %v5064, %v5067
  %v5069 = vrot.slane %v5068, 4
  %v5071 = vshll.u32 %v4399, 16
  %v5073 = vrot.slane %v5071, 5
  %v5074 = vsel %vm978, %v5069, %v5073
  %v5075 = vshrl.u32 %v4399, 16
  %v5077 = vrot.slane %v5075, 4
  %v5078 = vor.u32 %v5077, %v5073
  %v5079 = vrot.slane %v5078, 4
  %v5081 = vshll.u32 %v4400, 16
  %v5083 = vrot.slane %v5081, 5
  %v5084 = vsel %vm978, %v5079, %v5083
  %v5086 = vshrl.u32 %v4401, 16
  %v5088 = vrot.slane %v5086, 4
  %v5089 = vshll.u32 %v4401, 16
  %v5091 = vrot.slane %v5089, 5
  %v5092 = vor.u32 %v5088, %v5091
  %v5093 = vrot.slane %v5092, 4
  %v5095 = vshll.u32 %v4402, 16
  %v5097 = vrot.slane %v5095, 5
  %v5098 = vsel %vm978, %v5093, %v5097
  %v5099 = vshrl.u32 %v4402, 16
  %v5101 = vrot.slane %v5099, 4
  %v5102 = vor.u32 %v5101, %v5097
  %v5103 = vrot.slane %v5102, 4
  %v5105 = vshll.u32 %v4403, 16
  %v5107 = vrot.slane %v5105, 5
  %v5108 = vsel %vm978, %v5103, %v5107
  %v5110 = vshrl.u32 %v4404, 16
  %v5112 = vrot.slane %v5110, 4
  %v5113 = vshll.u32 %v4404, 16
  %v5115 = vrot.slane %v5113, 5
  %v5116 = vor.u32 %v5112, %v5115
  %v5117 = vrot.slane %v5116, 4
  %v5119 = vshll.u32 %v4405, 16
  %v5121 = vrot.slane %v5119, 5
  %v5122 = vsel %vm978, %v5117, %v5121
  %v5123 = vshrl.u32 %v4405, 16
  %v5125 = vrot.slane %v5123, 4
  %v5126 = vor.u32 %v5125, %v5121
  %v5127 = vrot.slane %v5126, 4
  %v5129 = vshll.u32 %v4406, 16
  %v5131 = vrot.slane %v5129, 5
  %v5132 = vsel %vm978, %v5127, %v5131
  %v5134 = vshrl.u32 %v4407, 16
  %v5136 = vrot.slane %v5134, 4
  %v5137 = vshll.u32 %v4407, 16
  %v5139 = vrot.slane %v5137, 5
  %v5140 = vor.u32 %v5136, %v5139
  %v5141 = vrot.slane %v5140, 4
  %v5143 = vshll.u32 %v4408, 16
  %v5145 = vrot.slane %v5143, 5
  %v5146 = vsel %vm978, %v5141, %v5145
  %v5147 = vshrl.u32 %v4408, 16
  %v5149 = vrot.slane %v5147, 4
  %v5150 = vor.u32 %v5149, %v5145
  %v5151 = vrot.slane %v5150, 4
  %v5153 = vshll.u32 %v4409, 16
  %v5155 = vrot.slane %v5153, 5
  %v5156 = vsel %vm978, %v5151, %v5155
  %v5158 = vshrl.u32 %v4410, 16
  %v5160 = vrot.slane %v5158, 4
  %v5161 = vshll.u32 %v4410, 16
  %v5163 = vrot.slane %v5161, 5
  %v5164 = vor.u32 %v5160, %v5163
  %v5165 = vrot.slane %v5164, 4
  %v5167 = vshll.u32 %v4411, 16
  %v5169 = vrot.slane %v5167, 5
  %v5170 = vsel %vm978, %v5165, %v5169
  %v5171 = vshrl.u32 %v4411, 16
  %v5173 = vrot.slane %v5171, 4
  %v5174 = vor.u32 %v5173, %v5169
  %v5175 = vrot.slane %v5174, 4
  %v5177 = vshll.u32 %v4412, 16
  %v5179 = vrot.slane %v5177, 5
  %v5180 = vsel %vm978, %v5175, %v5179
  %v5181 = vld [vmem:[#allocation2] sm:$0xff]
  %v5182 = vld [vmem:[#allocation2 + $0x8] sm:$0xff]
  %v5183 = vld [vmem:[#allocation2 + $0x10] sm:$0xff]
  %v5184 = vld [vmem:[#allocation2 + $0x18] sm:$0xff]
  %v5185 = vld [vmem:[#allocation2 + $0x20] sm:$0xff]
  %v5186 = vld [vmem:[#allocation2 + $0x28] sm:$0xff]
  %v5187 = vld [vmem:[#allocation2 + $0x30] sm:$0xff]
  %v5188 = vld [vmem:[#allocation2 + $0x38] sm:$0xff]
  %v5189 = vld [vmem:[#allocation2 + $0x40] sm:$0xff]
  %v5190 = vld [vmem:[#allocation2 + $0x48] sm:$0xff]
  %v5191 = vld [vmem:[#allocation2 + $0x50] sm:$0xff]
  %v5192 = vld [vmem:[#allocation2 + $0x58] sm:$0xff]
  %v5193 = vld [vmem:[#allocation2 + $0x60] sm:$0xff]
  %v5194 = vld [vmem:[#allocation2 + $0x68] sm:$0xff]
  %v5195 = vld [vmem:[#allocation2 + $0x70] sm:$0xff]
  %v5196 = vld [vmem:[#allocation2 + $0x78] sm:$0xff]
  %v5197 = vld [vmem:[#allocation2 + $0x80] sm:$0xff]
  %v5198 = vld [vmem:[#allocation2 + $0x88] sm:$0xff]
  %v5199 = vld [vmem:[#allocation2 + $0x90] sm:$0xff]
  %v5200 = vld [vmem:[#allocation2 + $0x98] sm:$0xff]
  %v5201 = vld [vmem:[#allocation2 + $0xa0] sm:$0xff]
  %v5202 = vld [vmem:[#allocation2 + $0xa8] sm:$0xff]
  %v5203 = vld [vmem:[#allocation2 + $0xb0] sm:$0xff]
  %v5204 = vld [vmem:[#allocation2 + $0xb8] sm:$0xff]
  %v5205 = vld [vmem:[#allocation2 + $0xc0] sm:$0xff]
  %v5206 = vld [vmem:[#allocation2 + $0xc8] sm:$0xff]
  %v5207 = vld [vmem:[#allocation2 + $0xd0] sm:$0xff]
  %v5208 = vld [vmem:[#allocation2 + $0xd8] sm:$0xff]
  %v5209 = vld [vmem:[#allocation2 + $0xe0] sm:$0xff]
  %v5210 = vld [vmem:[#allocation2 + $0xe8] sm:$0xff]
  %v5211 = vld [vmem:[#allocation2 + $0xf0] sm:$0xff]
  %v5212 = vld [vmem:[#allocation2 + $0xf8] sm:$0xff]
  %v5213 = vld [vmem:[#allocation2 + $0x100] sm:$0xff]
  %v5214 = vld [vmem:[#allocation2 + $0x108] sm:$0xff]
  %v5215 = vld [vmem:[#allocation2 + $0x110] sm:$0xff]
  %v5216 = vld [vmem:[#allocation2 + $0x118] sm:$0xff]
  %v5217 = vld [vmem:[#allocation2 + $0x120] sm:$0xff]
  %v5218 = vld [vmem:[#allocation2 + $0x128] sm:$0xff]
  %v5219 = vld [vmem:[#allocation2 + $0x130] sm:$0xff]
  %v5220 = vld [vmem:[#allocation2 + $0x138] sm:$0xff]
  %v5221 = vld [vmem:[#allocation2 + $0x140] sm:$0xff]
  %v5222 = vld [vmem:[#allocation2 + $0x148] sm:$0xff]
  %v5223 = vld [vmem:[#allocation2 + $0x150] sm:$0xff]
  %v5224 = vld [vmem:[#allocation2 + $0x158] sm:$0xff]
  %v5225 = vld [vmem:[#allocation2 + $0x160] sm:$0xff]
  %v5226 = vld [vmem:[#allocation2 + $0x168] sm:$0xff]
  %v5227 = vld [vmem:[#allocation2 + $0x170] sm:$0xff]
  %v5228 = vld [vmem:[#allocation2 + $0x178] sm:$0xff]
  %v5229 = vld [vmem:[#allocation2 + $0x180] sm:$0xff]
  %v5230 = vld [vmem:[#allocation2 + $0x188] sm:$0xff]
  %v5231 = vld [vmem:[#allocation2 + $0x190] sm:$0xff]
  %v5232 = vld [vmem:[#allocation2 + $0x198] sm:$0xff]
  %v5233 = vld [vmem:[#allocation2 + $0x1a0] sm:$0xff]
  %v5234 = vld [vmem:[#allocation2 + $0x1a8] sm:$0xff]
  %v5235 = vld [vmem:[#allocation2 + $0x1b0] sm:$0xff]
  %v5236 = vld [vmem:[#allocation2 + $0x1b8] sm:$0xff]
  %v5237 = vld [vmem:[#allocation2 + $0x1c0] sm:$0xff]
  %v5238 = vld [vmem:[#allocation2 + $0x1c8] sm:$0xff]
  %v5239 = vld [vmem:[#allocation2 + $0x1d0] sm:$0xff]
  %v5240 = vld [vmem:[#allocation2 + $0x1d8] sm:$0xff]
  %v5241 = vld [vmem:[#allocation2 + $0x1e0] sm:$0xff]
  %v5242 = vld [vmem:[#allocation2 + $0x1e8] sm:$0xff]
  %v5243 = vld [vmem:[#allocation2 + $0x1f0] sm:$0xff]
  %v5244 = vld [vmem:[#allocation2 + $0x1f8] sm:$0xff]
  %s5245 = scalar_lea.vmem %s1, 256
  %v5246 = vld [vmem:[%s5245] sm:$0xf]
  %v5247 = vld [vmem:[%s5245 + $0x4] sm:$0xf]
  %v5248 = vld [vmem:[%s5245 + $0x8] sm:$0xf]
  %v5249 = vld [vmem:[%s5245 + $0xc] sm:$0xf]
  %v5250 = vld [vmem:[%s5245 + $0x10] sm:$0xf]
  %v5251 = vld [vmem:[%s5245 + $0x14] sm:$0xf]
  %v5252 = vld [vmem:[%s5245 + $0x18] sm:$0xf]
  %v5253 = vld [vmem:[%s5245 + $0x1c] sm:$0xf]
  %v5254 = vld [vmem:[%s5245 + $0x20] sm:$0xf]
  %v5255 = vld [vmem:[%s5245 + $0x24] sm:$0xf]
  %v5256 = vld [vmem:[%s5245 + $0x28] sm:$0xf]
  %v5257 = vld [vmem:[%s5245 + $0x2c] sm:$0xf]
  %v5258 = vld [vmem:[%s5245 + $0x30] sm:$0xf]
  %v5259 = vld [vmem:[%s5245 + $0x34] sm:$0xf]
  %v5260 = vld [vmem:[%s5245 + $0x38] sm:$0xf]
  %v5261 = vld [vmem:[%s5245 + $0x3c] sm:$0xf]
  %v5262 = vunpack.c.l.b16 %v4426
  %v5263 = vunpack.c.l.b16 %v4436
  %v5264 = vunpack.c.l.b16 %v4450
  %v5265 = vunpack.c.l.b16 %v4460
  %v5266 = vunpack.c.l.b16 %v4474
  %v5267 = vunpack.c.l.b16 %v4484
  %v5268 = vunpack.c.l.b16 %v4498
  %v5269 = vunpack.c.l.b16 %v4508
  %v5270 = vunpack.c.l.b16 %v4522
  %v5271 = vunpack.c.l.b16 %v4532
  %v5272 = vunpack.c.l.b16 %v4546
  %v5273 = vunpack.c.l.b16 %v4556
  %v5274 = vunpack.c.l.b16 %v4570
  %v5275 = vunpack.c.l.b16 %v4580
  %v5276 = vunpack.c.l.b16 %v4594
  %v5277 = vunpack.c.l.b16 %v4604
  %v5278 = vunpack.c.l.b16 %v4618
  %v5279 = vunpack.c.l.b16 %v4628
  %v5280 = vunpack.c.l.b16 %v4642
  %v5281 = vunpack.c.l.b16 %v4652
  %v5282 = vunpack.c.l.b16 %v4666
  %v5283 = vunpack.c.l.b16 %v4676
  %v5284 = vunpack.c.l.b16 %v4690
  %v5285 = vunpack.c.l.b16 %v4700
  %v5286 = vunpack.c.l.b16 %v4714
  %v5287 = vunpack.c.l.b16 %v4724
  %v5288 = vunpack.c.l.b16 %v4738
  %v5289 = vunpack.c.l.b16 %v4748
  %v5290 = vunpack.c.l.b16 %v4762
  %v5291 = vunpack.c.l.b16 %v4772
  %v5292 = vunpack.c.l.b16 %v4786
  %v5293 = vunpack.c.l.b16 %v4796
  %v5294 = vunpack.c.l.b16 %v4810
  %v5295 = vunpack.c.l.b16 %v4820
  %v5296 = vunpack.c.l.b16 %v4834
  %v5297 = vunpack.c.l.b16 %v4844
  %v5298 = vunpack.c.l.b16 %v4858
  %v5299 = vunpack.c.l.b16 %v4868
  %v5300 = vunpack.c.l.b16 %v4882
  %v5301 = vunpack.c.l.b16 %v4892
  %v5302 = vunpack.c.l.b16 %v4906
  %v5303 = vunpack.c.l.b16 %v4916
  %v5304 = vunpack.c.l.b16 %v4930
  %v5305 = vunpack.c.l.b16 %v4940
  %v5306 = vunpack.c.l.b16 %v4954
  %v5307 = vunpack.c.l.b16 %v4964
  %v5308 = vunpack.c.l.b16 %v4978
  %v5309 = vunpack.c.l.b16 %v4988
  %v5310 = vunpack.c.l.b16 %v5002
  %v5311 = vunpack.c.l.b16 %v5012
  %v5312 = vunpack.c.l.b16 %v5026
  %v5313 = vunpack.c.l.b16 %v5036
  %v5314 = vunpack.c.l.b16 %v5050
  %v5315 = vunpack.c.l.b16 %v5060
  %v5316 = vunpack.c.l.b16 %v5074
  %v5317 = vunpack.c.l.b16 %v5084
  %v5318 = vunpack.c.l.b16 %v5098
  %v5319 = vunpack.c.l.b16 %v5108
  %v5320 = vunpack.c.l.b16 %v5122
  %v5321 = vunpack.c.l.b16 %v5132
  %v5322 = vunpack.c.l.b16 %v5146
  %v5323 = vunpack.c.l.b16 %v5156
  %v5324 = vunpack.c.l.b16 %v5170
  %v5325 = vunpack.c.l.b16 %v5180
  %v5326 = vpack.c.b16 %v5263, %v5262
  %v5327 = vpack.c.b16 %v5265, %v5264
  %v5328 = vpack.c.b16 %v5267, %v5266
  %v5329 = vpack.c.b16 %v5269, %v5268
  %v5330 = vpack.c.b16 %v5271, %v5270
  %v5331 = vpack.c.b16 %v5273, %v5272
  %v5332 = vpack.c.b16 %v5275, %v5274
  %v5333 = vpack.c.b16 %v5277, %v5276
  %v5334 = vpack.c.b16 %v5279, %v5278
  %v5335 = vpack.c.b16 %v5281, %v5280
  %v5336 = vpack.c.b16 %v5283, %v5282
  %v5337 = vpack.c.b16 %v5285, %v5284
  %v5338 = vpack.c.b16 %v5287, %v5286
  %v5339 = vpack.c.b16 %v5289, %v5288
  %v5340 = vpack.c.b16 %v5291, %v5290
  %v5341 = vpack.c.b16 %v5293, %v5292
  %v5342 = vpack.c.b16 %v5295, %v5294
  %v5343 = vpack.c.b16 %v5297, %v5296
  %v5344 = vpack.c.b16 %v5299, %v5298
  %v5345 = vpack.c.b16 %v5301, %v5300
  %v5346 = vpack.c.b16 %v5303, %v5302
  %v5347 = vpack.c.b16 %v5305, %v5304
  %v5348 = vpack.c.b16 %v5307, %v5306
  %v5349 = vpack.c.b16 %v5309, %v5308
  %v5350 = vpack.c.b16 %v5311, %v5310
  %v5351 = vpack.c.b16 %v5313, %v5312
  %v5352 = vpack.c.b16 %v5315, %v5314
  %v5353 = vpack.c.b16 %v5317, %v5316
  %v5354 = vpack.c.b16 %v5319, %v5318
  %v5355 = vpack.c.b16 %v5321, %v5320
  %v5356 = vpack.c.b16 %v5323, %v5322
  %v5357 = vpack.c.b16 %v5325, %v5324
  %v5406 = vunpack.c.l.b16 %v5246
  %v5407 = vunpack.c.l.b16 %v5247
  %v5408 = vunpack.c.l.b16 %v5248
  %v5409 = vunpack.c.l.b16 %v5249
  %v5410 = vunpack.c.l.b16 %v5250
  %v5411 = vunpack.c.l.b16 %v5251
  %v5412 = vunpack.c.l.b16 %v5252
  %v5413 = vunpack.c.l.b16 %v5253
  %v5414 = vunpack.c.l.b16 %v5254
  %v5415 = vunpack.c.l.b16 %v5255
  %v5416 = vunpack.c.l.b16 %v5256
  %v5417 = vunpack.c.l.b16 %v5257
  %v5418 = vunpack.c.l.b16 %v5258
  %v5419 = vunpack.c.l.b16 %v5259
  %v5420 = vunpack.c.l.b16 %v5260
  %v5421 = vunpack.c.l.b16 %v5261
  %v5422 = vpack.c.b16 %v5407, %v5406
  %v5423 = vpack.c.b16 %v5409, %v5408
  %v5424 = vpack.c.b16 %v5411, %v5410
  %v5425 = vpack.c.b16 %v5413, %v5412
  %v5426 = vpack.c.b16 %v5415, %v5414
  %v5427 = vpack.c.b16 %v5417, %v5416
  %v5428 = vpack.c.b16 %v5419, %v5418
  %v5429 = vpack.c.b16 %v5421, %v5420
  %5438 = vmatprep.subr.bf16.mxu0 0
  %5439 = vmatpush1.bf16.msra.mxu0 %v5429
  %5440 = vmatprep.subr.bf16.mxu0 0
  %5441 = vmatpush1.bf16.msra.mxu0 %v5428
  %5442 = vmatprep.subr.bf16.mxu0 0
  %5443 = vmatpush1.bf16.msra.mxu0 %v5427
  %5444 = vmatprep.subr.bf16.mxu0 0
  %5445 = vmatpush1.bf16.msra.mxu0 %v5426
  %5446 = vmatprep.subr.bf16.mxu0 0
  %5447 = vmatpush1.bf16.msra.mxu0 %v5425
  %5448 = vmatprep.subr.bf16.mxu0 0
  %5449 = vmatpush1.bf16.msra.mxu0 %v5424
  %5450 = vmatprep.subr.bf16.mxu0 0
  %5451 = vmatpush1.bf16.msra.mxu0 %v5423
  %5452 = vmatprep.subr.bf16.mxu0 0
  %5453 = vmatpush1.bf16.msra.mxu0 %v5422
  %5454 = vmatprep.subr.bf16.mxu0 0
  %5455 = vmatpush2.bf16.msra.mxu0 0
  %5456 = vmatprep.subr.bf16.mxu0 0
  %5457 = vmatpush2.bf16.msra.mxu0 0
  %5458 = vmatprep.subr.bf16.mxu0 0
  %5459 = vmatpush2.bf16.msra.mxu0 0
  %5460 = vmatprep.subr.bf16.mxu0 0
  %5461 = vmatpush2.bf16.msra.mxu0 0
  %5462 = vmatprep.subr.bf16.mxu0 0
  %5463 = vmatpush2.bf16.msra.mxu0 0
  %5464 = vmatprep.subr.bf16.mxu0 0
  %5465 = vmatpush2.bf16.msra.mxu0 0
  %5466 = vmatprep.subr.bf16.mxu0 0
  %5467 = vmatpush2.bf16.msra.mxu0 0
  %5468 = vmatprep.subr.bf16.mxu0 0
  %5469 = vmatpush2.bf16.msra.mxu0 0
  %5470 = vmatprep.mubr.bf16.mxu0 0
  %5471 = vmatmul.mubr.bf16.gmra.mxu0 %v5326
  %v5472 = vpop.f32.mrf.mxu0
  %v5473 = vadd.f32 0.0, %v5472
  %v5474 = vpop.f32.mrf.mxu0
  %v5475 = vpop.f32.mrf.mxu0
  %v5476 = vadd.f32 0.0, %v5475
  %v5477 = vpop.f32.mrf.mxu0
  %5478 = vmatprep.mubr.bf16.mxu0 0
  %5479 = vmatmul.mubr.bf16.gmra.mxu0 %v5327
  %v5480 = vpop.f32.mrf.mxu0
  %v5481 = vadd.f32 0.0, %v5480
  %v5482 = vpop.f32.mrf.mxu0
  %v5483 = vpop.f32.mrf.mxu0
  %v5484 = vadd.f32 0.0, %v5483
  %v5485 = vpop.f32.mrf.mxu0
  %5486 = vmatprep.mubr.bf16.mxu0 0
  %5487 = vmatmul.mubr.bf16.gmra.mxu0 %v5328
  %v5488 = vpop.f32.mrf.mxu0
  %v5489 = vadd.f32 0.0, %v5488
  %v5490 = vpop.f32.mrf.mxu0
  %v5491 = vpop.f32.mrf.mxu0
  %v5492 = vadd.f32 0.0, %v5491
  %v5493 = vpop.f32.mrf.mxu0
  %5494 = vmatprep.mubr.bf16.mxu0 0
  %5495 = vmatmul.mubr.bf16.gmra.mxu0 %v5329
  %v5496 = vpop.f32.mrf.mxu0
  %v5497 = vadd.f32 0.0, %v5496
  %v5498 = vpop.f32.mrf.mxu0
  %v5499 = vpop.f32.mrf.mxu0
  %v5500 = vadd.f32 0.0, %v5499
  %v5501 = vpop.f32.mrf.mxu0
  %5502 = vmatprep.mubr.bf16.mxu0 0
  %5503 = vmatmul.mubr.bf16.gmra.mxu0 %v5330
  %v5504 = vpop.f32.mrf.mxu0
  %v5505 = vadd.f32 0.0, %v5504
  %v5506 = vpop.f32.mrf.mxu0
  %v5507 = vpop.f32.mrf.mxu0
  %v5508 = vadd.f32 0.0, %v5507
  %v5509 = vpop.f32.mrf.mxu0
  %5510 = vmatprep.mubr.bf16.mxu0 0
  %5511 = vmatmul.mubr.bf16.gmra.mxu0 %v5331
  %v5512 = vpop.f32.mrf.mxu0
  %v5513 = vadd.f32 0.0, %v5512
  %v5514 = vpop.f32.mrf.mxu0
  %v5515 = vpop.f32.mrf.mxu0
  %v5516 = vadd.f32 0.0, %v5515
  %v5517 = vpop.f32.mrf.mxu0
  %5518 = vmatprep.mubr.bf16.mxu0 0
  %5519 = vmatmul.mubr.bf16.gmra.mxu0 %v5332
  %v5520 = vpop.f32.mrf.mxu0
  %v5521 = vadd.f32 0.0, %v5520
  %v5522 = vpop.f32.mrf.mxu0
  %v5523 = vpop.f32.mrf.mxu0
  %v5524 = vadd.f32 0.0, %v5523
  %v5525 = vpop.f32.mrf.mxu0
  %5526 = vmatprep.mubr.bf16.mxu0 0
  %5527 = vmatmul.mubr.bf16.gmra.mxu0 %v5333
  %v5528 = vpop.f32.mrf.mxu0
  %v5529 = vadd.f32 0.0, %v5528
  %v5530 = vpop.f32.mrf.mxu0
  %v5531 = vpop.f32.mrf.mxu0
  %v5532 = vadd.f32 0.0, %v5531
  %v5533 = vpop.f32.mrf.mxu0
  %5534 = vmatprep.mubr.bf16.mxu0 0
  %5535 = vmatmul.mubr.bf16.gmra.mxu0 %v5334
  %v5536 = vpop.f32.mrf.mxu0
  %v5537 = vadd.f32 0.0, %v5536
  %v5538 = vpop.f32.mrf.mxu0
  %v5539 = vpop.f32.mrf.mxu0
  %v5540 = vadd.f32 0.0, %v5539
  %v5541 = vpop.f32.mrf.mxu0
  %5542 = vmatprep.mubr.bf16.mxu0 0
  %5543 = vmatmul.mubr.bf16.gmra.mxu0 %v5335
  %v5544 = vpop.f32.mrf.mxu0
  %v5545 = vadd.f32 0.0, %v5544
  %v5546 = vpop.f32.mrf.mxu0
  %v5547 = vpop.f32.mrf.mxu0
  %v5548 = vadd.f32 0.0, %v5547
  %v5549 = vpop.f32.mrf.mxu0
  %5550 = vmatprep.mubr.bf16.mxu0 0
  %5551 = vmatmul.mubr.bf16.gmra.mxu0 %v5336
  %v5552 = vpop.f32.mrf.mxu0
  %v5553 = vadd.f32 0.0, %v5552
  %v5554 = vpop.f32.mrf.mxu0
  %v5555 = vpop.f32.mrf.mxu0
  %v5556 = vadd.f32 0.0, %v5555
  %v5557 = vpop.f32.mrf.mxu0
  %5558 = vmatprep.mubr.bf16.mxu0 0
  %5559 = vmatmul.mubr.bf16.gmra.mxu0 %v5337
  %v5560 = vpop.f32.mrf.mxu0
  %v5561 = vadd.f32 0.0, %v5560
  %v5562 = vpop.f32.mrf.mxu0
  %v5563 = vpop.f32.mrf.mxu0
  %v5564 = vadd.f32 0.0, %v5563
  %v5565 = vpop.f32.mrf.mxu0
  %5566 = vmatprep.mubr.bf16.mxu0 0
  %5567 = vmatmul.mubr.bf16.gmra.mxu0 %v5338
  %v5568 = vpop.f32.mrf.mxu0
  %v5569 = vadd.f32 0.0, %v5568
  %v5570 = vpop.f32.mrf.mxu0
  %v5571 = vpop.f32.mrf.mxu0
  %v5572 = vadd.f32 0.0, %v5571
  %v5573 = vpop.f32.mrf.mxu0
  %5574 = vmatprep.mubr.bf16.mxu0 0
  %5575 = vmatmul.mubr.bf16.gmra.mxu0 %v5339
  %v5576 = vpop.f32.mrf.mxu0
  %v5577 = vadd.f32 0.0, %v5576
  %v5578 = vpop.f32.mrf.mxu0
  %v5579 = vpop.f32.mrf.mxu0
  %v5580 = vadd.f32 0.0, %v5579
  %v5581 = vpop.f32.mrf.mxu0
  %5582 = vmatprep.mubr.bf16.mxu0 0
  %5583 = vmatmul.mubr.bf16.gmra.mxu0 %v5340
  %v5584 = vpop.f32.mrf.mxu0
  %v5585 = vadd.f32 0.0, %v5584
  %v5586 = vpop.f32.mrf.mxu0
  %v5587 = vpop.f32.mrf.mxu0
  %v5588 = vadd.f32 0.0, %v5587
  %v5589 = vpop.f32.mrf.mxu0
  %5590 = vmatprep.mubr.bf16.mxu0 0
  %5591 = vmatmul.mubr.bf16.gmra.mxu0 %v5341
  %v5592 = vpop.f32.mrf.mxu0
  %v5593 = vadd.f32 0.0, %v5592
  %v5594 = vpop.f32.mrf.mxu0
  %v5595 = vpop.f32.mrf.mxu0
  %v5596 = vadd.f32 0.0, %v5595
  %v5597 = vpop.f32.mrf.mxu0
  %5598 = vmatprep.mubr.bf16.mxu0 0
  %5599 = vmatmul.mubr.bf16.gmra.mxu0 %v5342
  %v5600 = vpop.f32.mrf.mxu0
  %v5601 = vadd.f32 0.0, %v5600
  %v5602 = vpop.f32.mrf.mxu0
  %v5603 = vpop.f32.mrf.mxu0
  %v5604 = vadd.f32 0.0, %v5603
  %v5605 = vpop.f32.mrf.mxu0
  %5606 = vmatprep.mubr.bf16.mxu0 0
  %5607 = vmatmul.mubr.bf16.gmra.mxu0 %v5343
  %v5608 = vpop.f32.mrf.mxu0
  %v5609 = vadd.f32 0.0, %v5608
  %v5610 = vpop.f32.mrf.mxu0
  %v5611 = vpop.f32.mrf.mxu0
  %v5612 = vadd.f32 0.0, %v5611
  %v5613 = vpop.f32.mrf.mxu0
  %5614 = vmatprep.mubr.bf16.mxu0 0
  %5615 = vmatmul.mubr.bf16.gmra.mxu0 %v5344
  %v5616 = vpop.f32.mrf.mxu0
  %v5617 = vadd.f32 0.0, %v5616
  %v5618 = vpop.f32.mrf.mxu0
  %v5619 = vpop.f32.mrf.mxu0
  %v5620 = vadd.f32 0.0, %v5619
  %v5621 = vpop.f32.mrf.mxu0
  %5622 = vmatprep.mubr.bf16.mxu0 0
  %5623 = vmatmul.mubr.bf16.gmra.mxu0 %v5345
  %v5624 = vpop.f32.mrf.mxu0
  %v5625 = vadd.f32 0.0, %v5624
  %v5626 = vpop.f32.mrf.mxu0
  %v5627 = vpop.f32.mrf.mxu0
  %v5628 = vadd.f32 0.0, %v5627
  %v5629 = vpop.f32.mrf.mxu0
  %5630 = vmatprep.mubr.bf16.mxu0 0
  %5631 = vmatmul.mubr.bf16.gmra.mxu0 %v5346
  %v5632 = vpop.f32.mrf.mxu0
  %v5633 = vadd.f32 0.0, %v5632
  %v5634 = vpop.f32.mrf.mxu0
  %v5635 = vpop.f32.mrf.mxu0
  %v5636 = vadd.f32 0.0, %v5635
  %v5637 = vpop.f32.mrf.mxu0
  %5638 = vmatprep.mubr.bf16.mxu0 0
  %5639 = vmatmul.mubr.bf16.gmra.mxu0 %v5347
  %v5640 = vpop.f32.mrf.mxu0
  %v5641 = vadd.f32 0.0, %v5640
  %v5642 = vpop.f32.mrf.mxu0
  %v5643 = vpop.f32.mrf.mxu0
  %v5644 = vadd.f32 0.0, %v5643
  %v5645 = vpop.f32.mrf.mxu0
  %5646 = vmatprep.mubr.bf16.mxu0 0
  %5647 = vmatmul.mubr.bf16.gmra.mxu0 %v5348
  %v5648 = vpop.f32.mrf.mxu0
  %v5649 = vadd.f32 0.0, %v5648
  %v5650 = vpop.f32.mrf.mxu0
  %v5651 = vpop.f32.mrf.mxu0
  %v5652 = vadd.f32 0.0, %v5651
  %v5653 = vpop.f32.mrf.mxu0
  %5654 = vmatprep.mubr.bf16.mxu0 0
  %5655 = vmatmul.mubr.bf16.gmra.mxu0 %v5349
  %v5656 = vpop.f32.mrf.mxu0
  %v5657 = vadd.f32 0.0, %v5656
  %v5658 = vpop.f32.mrf.mxu0
  %v5659 = vpop.f32.mrf.mxu0
  %v5660 = vadd.f32 0.0, %v5659
  %v5661 = vpop.f32.mrf.mxu0
  %5662 = vmatprep.mubr.bf16.mxu0 0
  %5663 = vmatmul.mubr.bf16.gmra.mxu0 %v5350
  %v5664 = vpop.f32.mrf.mxu0
  %v5665 = vadd.f32 0.0, %v5664
  %v5666 = vpop.f32.mrf.mxu0
  %v5667 = vpop.f32.mrf.mxu0
  %v5668 = vadd.f32 0.0, %v5667
  %v5669 = vpop.f32.mrf.mxu0
  %5670 = vmatprep.mubr.bf16.mxu0 0
  %5671 = vmatmul.mubr.bf16.gmra.mxu0 %v5351
  %v5672 = vpop.f32.mrf.mxu0
  %v5673 = vadd.f32 0.0, %v5672
  %v5674 = vpop.f32.mrf.mxu0
  %v5675 = vpop.f32.mrf.mxu0
  %v5676 = vadd.f32 0.0, %v5675
  %v5677 = vpop.f32.mrf.mxu0
  %5678 = vmatprep.mubr.bf16.mxu0 0
  %5679 = vmatmul.mubr.bf16.gmra.mxu0 %v5352
  %v5680 = vpop.f32.mrf.mxu0
  %v5681 = vadd.f32 0.0, %v5680
  %v5682 = vpop.f32.mrf.mxu0
  %v5683 = vpop.f32.mrf.mxu0
  %v5684 = vadd.f32 0.0, %v5683
  %v5685 = vpop.f32.mrf.mxu0
  %5686 = vmatprep.mubr.bf16.mxu0 0
  %5687 = vmatmul.mubr.bf16.gmra.mxu0 %v5353
  %v5688 = vpop.f32.mrf.mxu0
  %v5689 = vadd.f32 0.0, %v5688
  %v5690 = vpop.f32.mrf.mxu0
  %v5691 = vpop.f32.mrf.mxu0
  %v5692 = vadd.f32 0.0, %v5691
  %v5693 = vpop.f32.mrf.mxu0
  %5694 = vmatprep.mubr.bf16.mxu0 0
  %5695 = vmatmul.mubr.bf16.gmra.mxu0 %v5354
  %v5696 = vpop.f32.mrf.mxu0
  %v5697 = vadd.f32 0.0, %v5696
  %v5698 = vpop.f32.mrf.mxu0
  %v5699 = vpop.f32.mrf.mxu0
  %v5700 = vadd.f32 0.0, %v5699
  %v5701 = vpop.f32.mrf.mxu0
  %5702 = vmatprep.mubr.bf16.mxu0 0
  %5703 = vmatmul.mubr.bf16.gmra.mxu0 %v5355
  %v5704 = vpop.f32.mrf.mxu0
  %v5705 = vadd.f32 0.0, %v5704
  %v5706 = vpop.f32.mrf.mxu0
  %v5707 = vpop.f32.mrf.mxu0
  %v5708 = vadd.f32 0.0, %v5707
  %v5709 = vpop.f32.mrf.mxu0
  %5710 = vmatprep.mubr.bf16.mxu0 0
  %5711 = vmatmul.mubr.bf16.gmra.mxu0 %v5356
  %v5712 = vpop.f32.mrf.mxu0
  %v5713 = vadd.f32 0.0, %v5712
  %v5714 = vpop.f32.mrf.mxu0
  %v5715 = vpop.f32.mrf.mxu0
  %v5716 = vadd.f32 0.0, %v5715
  %v5717 = vpop.f32.mrf.mxu0
  %5718 = vmatprep.mubr.bf16.mxu0 0
  %5719 = vmatmul.mubr.bf16.gmra.mxu0 %v5357
  %v5720 = vpop.f32.mrf.mxu0
  %v5721 = vadd.f32 0.0, %v5720
  %v5722 = vpop.f32.mrf.mxu0
  %v5723 = vpop.f32.mrf.mxu0
  %v5724 = vadd.f32 0.0, %v5723
  %v5725 = vpop.f32.mrf.mxu0
  %5726 = vdwg.mxu0
  %v5727 = vadd.f32 %v5181, %v5473
  %v5728 = vadd.f32 %v5182, %v5476
  %v5729 = vadd.f32 %v5183, %v5481
  %v5730 = vadd.f32 %v5184, %v5484
  %v5731 = vadd.f32 %v5185, %v5489
  %v5732 = vadd.f32 %v5186, %v5492
  %v5733 = vadd.f32 %v5187, %v5497
  %v5734 = vadd.f32 %v5188, %v5500
  %v5735 = vadd.f32 %v5189, %v5505
  %v5736 = vadd.f32 %v5190, %v5508
  %v5737 = vadd.f32 %v5191, %v5513
  %v5738 = vadd.f32 %v5192, %v5516
  %v5739 = vadd.f32 %v5193, %v5521
  %v5740 = vadd.f32 %v5194, %v5524
  %v5741 = vadd.f32 %v5195, %v5529
  %v5742 = vadd.f32 %v5196, %v5532
  %v5743 = vadd.f32 %v5197, %v5537
  %v5744 = vadd.f32 %v5198, %v5540
  %v5745 = vadd.f32 %v5199, %v5545
  %v5746 = vadd.f32 %v5200, %v5548
  %v5747 = vadd.f32 %v5201, %v5553
  %v5748 = vadd.f32 %v5202, %v5556
  %v5749 = vadd.f32 %v5203, %v5561
  %v5750 = vadd.f32 %v5204, %v5564
  %v5751 = vadd.f32 %v5205, %v5569
  %v5752 = vadd.f32 %v5206, %v5572
  %v5753 = vadd.f32 %v5207, %v5577
  %v5754 = vadd.f32 %v5208, %v5580
  %v5755 = vadd.f32 %v5209, %v5585
  %v5756 = vadd.f32 %v5210, %v5588
  %v5757 = vadd.f32 %v5211, %v5593
  %v5758 = vadd.f32 %v5212, %v5596
  %v5759 = vadd.f32 %v5213, %v5601
  %v5760 = vadd.f32 %v5214, %v5604
  %v5761 = vadd.f32 %v5215, %v5609
  %v5762 = vadd.f32 %v5216, %v5612
  %v5763 = vadd.f32 %v5217, %v5617
  %v5764 = vadd.f32 %v5218, %v5620
  %v5765 = vadd.f32 %v5219, %v5625
  %v5766 = vadd.f32 %v5220, %v5628
  %v5767 = vadd.f32 %v5221, %v5633
  %v5768 = vadd.f32 %v5222, %v5636
  %v5769 = vadd.f32 %v5223, %v5641
  %v5770 = vadd.f32 %v5224, %v5644
  %v5771 = vadd.f32 %v5225, %v5649
  %v5772 = vadd.f32 %v5226, %v5652
  %v5773 = vadd.f32 %v5227, %v5657
  %v5774 = vadd.f32 %v5228, %v5660
  %v5775 = vadd.f32 %v5229, %v5665
  %v5776 = vadd.f32 %v5230, %v5668
  %v5777 = vadd.f32 %v5231, %v5673
  %v5778 = vadd.f32 %v5232, %v5676
  %v5779 = vadd.f32 %v5233, %v5681
  %v5780 = vadd.f32 %v5234, %v5684
  %v5781 = vadd.f32 %v5235, %v5689
  %v5782 = vadd.f32 %v5236, %v5692
  %v5783 = vadd.f32 %v5237, %v5697
  %v5784 = vadd.f32 %v5238, %v5700
  %v5785 = vadd.f32 %v5239, %v5705
  %v5786 = vadd.f32 %v5240, %v5708
  %v5787 = vadd.f32 %v5241, %v5713
  %v5788 = vadd.f32 %v5242, %v5716
  %v5789 = vadd.f32 %v5243, %v5721
  %v5790 = vadd.f32 %v5244, %v5724
  %5791 = vst [vmem:[#allocation2] sm:$0xff] %v5727
  %5792 = vst [vmem:[#allocation2 + $0x8] sm:$0xff] %v5728
  %5793 = vst [vmem:[#allocation2 + $0x10] sm:$0xff] %v5729
  %5794 = vst [vmem:[#allocation2 + $0x18] sm:$0xff] %v5730
  %5795 = vst [vmem:[#allocation2 + $0x20] sm:$0xff] %v5731
  %5796 = vst [vmem:[#allocation2 + $0x28] sm:$0xff] %v5732
  %5797 = vst [vmem:[#allocation2 + $0x30] sm:$0xff] %v5733
  %5798 = vst [vmem:[#allocation2 + $0x38] sm:$0xff] %v5734
  %5799 = vst [vmem:[#allocation2 + $0x40] sm:$0xff] %v5735
  %5800 = vst [vmem:[#allocation2 + $0x48] sm:$0xff] %v5736
  %5801 = vst [vmem:[#allocation2 + $0x50] sm:$0xff] %v5737
  %5802 = vst [vmem:[#allocation2 + $0x58] sm:$0xff] %v5738
  %5803 = vst [vmem:[#allocation2 + $0x60] sm:$0xff] %v5739
  %5804 = vst [vmem:[#allocation2 + $0x68] sm:$0xff] %v5740
  %5805 = vst [vmem:[#allocation2 + $0x70] sm:$0xff] %v5741
  %5806 = vst [vmem:[#allocation2 + $0x78] sm:$0xff] %v5742
  %5807 = vst [vmem:[#allocation2 + $0x80] sm:$0xff] %v5743
  %5808 = vst [vmem:[#allocation2 + $0x88] sm:$0xff] %v5744
  %5809 = vst [vmem:[#allocation2 + $0x90] sm:$0xff] %v5745
  %5810 = vst [vmem:[#allocation2 + $0x98] sm:$0xff] %v5746
  %5811 = vst [vmem:[#allocation2 + $0xa0] sm:$0xff] %v5747
  %5812 = vst [vmem:[#allocation2 + $0xa8] sm:$0xff] %v5748
  %5813 = vst [vmem:[#allocation2 + $0xb0] sm:$0xff] %v5749
  %5814 = vst [vmem:[#allocation2 + $0xb8] sm:$0xff] %v5750
  %5815 = vst [vmem:[#allocation2 + $0xc0] sm:$0xff] %v5751
  %5816 = vst [vmem:[#allocation2 + $0xc8] sm:$0xff] %v5752
  %5817 = vst [vmem:[#allocation2 + $0xd0] sm:$0xff] %v5753
  %5818 = vst [vmem:[#allocation2 + $0xd8] sm:$0xff] %v5754
  %5819 = vst [vmem:[#allocation2 + $0xe0] sm:$0xff] %v5755
  %5820 = vst [vmem:[#allocation2 + $0xe8] sm:$0xff] %v5756
  %5821 = vst [vmem:[#allocation2 + $0xf0] sm:$0xff] %v5757
  %5822 = vst [vmem:[#allocation2 + $0xf8] sm:$0xff] %v5758
  %5823 = vst [vmem:[#allocation2 + $0x100] sm:$0xff] %v5759
  %5824 = vst [vmem:[#allocation2 + $0x108] sm:$0xff] %v5760
  %5825 = vst [vmem:[#allocation2 + $0x110] sm:$0xff] %v5761
  %5826 = vst [vmem:[#allocation2 + $0x118] sm:$0xff] %v5762
  %5827 = vst [vmem:[#allocation2 + $0x120] sm:$0xff] %v5763
  %5828 = vst [vmem:[#allocation2 + $0x128] sm:$0xff] %v5764
  %5829 = vst [vmem:[#allocation2 + $0x130] sm:$0xff] %v5765
  %5830 = vst [vmem:[#allocation2 + $0x138] sm:$0xff] %v5766
  %5831 = vst [vmem:[#allocation2 + $0x140] sm:$0xff] %v5767
  %5832 = vst [vmem:[#allocation2 + $0x148] sm:$0xff] %v5768
  %5833 = vst [vmem:[#allocation2 + $0x150] sm:$0xff] %v5769
  %5834 = vst [vmem:[#allocation2 + $0x158] sm:$0xff] %v5770
  %5835 = vst [vmem:[#allocation2 + $0x160] sm:$0xff] %v5771
  %5836 = vst [vmem:[#allocation2 + $0x168] sm:$0xff] %v5772
  %5837 = vst [vmem:[#allocation2 + $0x170] sm:$0xff] %v5773
  %5838 = vst [vmem:[#allocation2 + $0x178] sm:$0xff] %v5774
  %5839 = vst [vmem:[#allocation2 + $0x180] sm:$0xff] %v5775
  %5840 = vst [vmem:[#allocation2 + $0x188] sm:$0xff] %v5776
  %5841 = vst [vmem:[#allocation2 + $0x190] sm:$0xff] %v5777
  %5842 = vst [vmem:[#allocation2 + $0x198] sm:$0xff] %v5778
  %5843 = vst [vmem:[#allocation2 + $0x1a0] sm:$0xff] %v5779
  %5844 = vst [vmem:[#allocation2 + $0x1a8] sm:$0xff] %v5780
  %5845 = vst [vmem:[#allocation2 + $0x1b0] sm:$0xff] %v5781
  %5846 = vst [vmem:[#allocation2 + $0x1b8] sm:$0xff] %v5782
  %5847 = vst [vmem:[#allocation2 + $0x1c0] sm:$0xff] %v5783
  %5848 = vst [vmem:[#allocation2 + $0x1c8] sm:$0xff] %v5784
  %5849 = vst [vmem:[#allocation2 + $0x1d0] sm:$0xff] %v5785
  %5850 = vst [vmem:[#allocation2 + $0x1d8] sm:$0xff] %v5786
  %5851 = vst [vmem:[#allocation2 + $0x1e0] sm:$0xff] %v5787
  %5852 = vst [vmem:[#allocation2 + $0x1e8] sm:$0xff] %v5788
  %5853 = vst [vmem:[#allocation2 + $0x1f0] sm:$0xff] %v5789
  %5854 = vst [vmem:[#allocation2 + $0x1f8] sm:$0xff] %v5790
  %v5855 = vld [vmem:[%s3514] sm:$0xe]
  %v5856 = vld [vmem:[%s3514 + $0x4] sm:$0xf]
  %v5857 = vld [vmem:[%s3514 + $0x8] sm:$0x1]
  %v5858 = vld [vmem:[%s3514 + $0xc] sm:$0xe]
  %v5859 = vld [vmem:[%s3514 + $0x10] sm:$0xf]
  %v5860 = vld [vmem:[%s3514 + $0x14] sm:$0x1]
  %v5861 = vld [vmem:[%s3514 + $0x18] sm:$0xe]
  %v5862 = vld [vmem:[%s3514 + $0x1c] sm:$0xf]
  %v5863 = vld [vmem:[%s3514 + $0x20] sm:$0x1]
  %v5864 = vld [vmem:[%s3514 + $0x24] sm:$0xe]
  %v5865 = vld [vmem:[%s3514 + $0x28] sm:$0xf]
  %v5866 = vld [vmem:[%s3514 + $0x2c] sm:$0x1]
  %v5867 = vld [vmem:[%s3514 + $0x30] sm:$0xe]
  %v5868 = vld [vmem:[%s3514 + $0x34] sm:$0xf]
  %v5869 = vld [vmem:[%s3514 + $0x38] sm:$0x1]
  %v5870 = vld [vmem:[%s3514 + $0x3c] sm:$0xe]
  %v5871 = vld [vmem:[%s3514 + $0x40] sm:$0xf]
  %v5872 = vld [vmem:[%s3514 + $0x44] sm:$0x1]
  %v5873 = vld [vmem:[%s3514 + $0x48] sm:$0xe]
  %v5874 = vld [vmem:[%s3514 + $0x4c] sm:$0xf]
  %v5875 = vld [vmem:[%s3514 + $0x50] sm:$0x1]
  %v5876 = vld [vmem:[%s3514 + $0x54] sm:$0xe]
  %v5877 = vld [vmem:[%s3514 + $0x58] sm:$0xf]
  %v5878 = vld [vmem:[%s3514 + $0x5c] sm:$0x1]
  %v5879 = vld [vmem:[%s3514 + $0x60] sm:$0xe]
  %v5880 = vld [vmem:[%s3514 + $0x64] sm:$0xf]
  %v5881 = vld [vmem:[%s3514 + $0x68] sm:$0x1]
  %v5882 = vld [vmem:[%s3514 + $0x6c] sm:$0xe]
  %v5883 = vld [vmem:[%s3514 + $0x70] sm:$0xf]
  %v5884 = vld [vmem:[%s3514 + $0x74] sm:$0x1]
  %v5885 = vld [vmem:[%s3514 + $0x78] sm:$0xe]
  %v5886 = vld [vmem:[%s3514 + $0x7c] sm:$0xf]
  %v5887 = vld [vmem:[%s3514 + $0x80] sm:$0x1]
  %v5888 = vld [vmem:[%s3514 + $0x84] sm:$0xe]
  %v5889 = vld [vmem:[%s3514 + $0x88] sm:$0xf]
  %v5890 = vld [vmem:[%s3514 + $0x8c] sm:$0x1]
  %v5891 = vld [vmem:[%s3514 + $0x90] sm:$0xe]
  %v5892 = vld [vmem:[%s3514 + $0x94] sm:$0xf]
  %v5893 = vld [vmem:[%s3514 + $0x98] sm:$0x1]
  %v5894 = vld [vmem:[%s3514 + $0x9c] sm:$0xe]
  %v5895 = vld [vmem:[%s3514 + $0xa0] sm:$0xf]
  %v5896 = vld [vmem:[%s3514 + $0xa4] sm:$0x1]
  %v5897 = vld [vmem:[%s3514 + $0xa8] sm:$0xe]
  %v5898 = vld [vmem:[%s3514 + $0xac] sm:$0xf]
  %v5899 = vld [vmem:[%s3514 + $0xb0] sm:$0x1]
  %v5900 = vld [vmem:[%s3514 + $0xb4] sm:$0xe]
  %v5901 = vld [vmem:[%s3514 + $0xb8] sm:$0xf]
  %v5902 = vld [vmem:[%s3514 + $0xbc] sm:$0x1]
  %v5903 = vld [vmem:[%s3514 + $0xd8] sm:$0xe]
  %v5904 = vld [vmem:[%s3514 + $0xdc] sm:$0xf]
  %v5905 = vld [vmem:[%s3514 + $0xe0] sm:$0x1]
  %v5906 = vld [vmem:[%s3514 + $0xe4] sm:$0xe]
  %v5907 = vld [vmem:[%s3514 + $0xe8] sm:$0xf]
  %v5908 = vld [vmem:[%s3514 + $0xec] sm:$0x1]
  %v5909 = vld [vmem:[%s3514 + $0xf0] sm:$0xe]
  %v5910 = vld [vmem:[%s3514 + $0xf4] sm:$0xf]
  %v5911 = vld [vmem:[%s3514 + $0xf8] sm:$0x1]
  %v5912 = vld [vmem:[%s3514 + $0xfc] sm:$0xe]
  %v5913 = vld [vmem:[%s3514 + $0x100] sm:$0xf]
  %v5914 = vld [vmem:[%s3514 + $0x104] sm:$0x1]
  %v5915 = vld [vmem:[%s3514 + $0x108] sm:$0xe]
  %v5916 = vld [vmem:[%s3514 + $0x10c] sm:$0xf]
  %v5917 = vld [vmem:[%s3514 + $0x110] sm:$0x1]
  %v5918 = vld [vmem:[%s3514 + $0x114] sm:$0xe]
  %v5919 = vld [vmem:[%s3514 + $0x118] sm:$0xf]
  %v5920 = vld [vmem:[%s3514 + $0x11c] sm:$0x1]
  %v5921 = vld [vmem:[%s3514 + $0x120] sm:$0xe]
  %v5922 = vld [vmem:[%s3514 + $0x124] sm:$0xf]
  %v5923 = vld [vmem:[%s3514 + $0x128] sm:$0x1]
  %v5924 = vld [vmem:[%s3514 + $0x12c] sm:$0xe]
  %v5925 = vld [vmem:[%s3514 + $0x130] sm:$0xf]
  %v5926 = vld [vmem:[%s3514 + $0x134] sm:$0x1]
  %v5927 = vld [vmem:[%s3514 + $0x138] sm:$0xe]
  %v5928 = vld [vmem:[%s3514 + $0x13c] sm:$0xf]
  %v5929 = vld [vmem:[%s3514 + $0x140] sm:$0x1]
  %v5930 = vld [vmem:[%s3514 + $0x144] sm:$0xe]
  %v5931 = vld [vmem:[%s3514 + $0x148] sm:$0xf]
  %v5932 = vld [vmem:[%s3514 + $0x14c] sm:$0x1]
  %v5933 = vld [vmem:[%s3514 + $0x150] sm:$0xe]
  %v5934 = vld [vmem:[%s3514 + $0x154] sm:$0xf]
  %v5935 = vld [vmem:[%s3514 + $0x158] sm:$0x1]
  %v5936 = vld [vmem:[%s3514 + $0x15c] sm:$0xe]
  %v5937 = vld [vmem:[%s3514 + $0x160] sm:$0xf]
  %v5938 = vld [vmem:[%s3514 + $0x164] sm:$0x1]
  %v5939 = vld [vmem:[%s3514 + $0x168] sm:$0xe]
  %v5940 = vld [vmem:[%s3514 + $0x16c] sm:$0xf]
  %v5941 = vld [vmem:[%s3514 + $0x170] sm:$0x1]
  %v5942 = vld [vmem:[%s3514 + $0x174] sm:$0xe]
  %v5943 = vld [vmem:[%s3514 + $0x178] sm:$0xf]
  %v5944 = vld [vmem:[%s3514 + $0x17c] sm:$0x1]
  %v5945 = vld [vmem:[%s3514 + $0x180] sm:$0xe]
  %v5946 = vld [vmem:[%s3514 + $0x184] sm:$0xf]
  %v5947 = vld [vmem:[%s3514 + $0x188] sm:$0x1]
  %v5948 = vld [vmem:[%s3514 + $0x18c] sm:$0xe]
  %v5949 = vld [vmem:[%s3514 + $0x190] sm:$0xf]
  %v5950 = vld [vmem:[%s3514 + $0x194] sm:$0x1]
  %v6047 = vrot.slane %v5855, 5
  %v6048 = vrot.slane %v6047, 4
  %v6049 = vrot.slane %v5856, 5
  %v6050 = vsel %vm2615, %v6048, %v6049
  %v6051 = vrot.slane %v6049, 4
  %v6052 = vrot.slane %v5857, 5
  %v6053 = vsel %vm2615, %v6051, %v6052
  %v6054 = vrot.slane %v5858, 5
  %v6055 = vrot.slane %v6054, 4
  %v6056 = vrot.slane %v5859, 5
  %v6057 = vsel %vm2615, %v6055, %v6056
  %v6058 = vrot.slane %v6056, 4
  %v6059 = vrot.slane %v5860, 5
  %v6060 = vsel %vm2615, %v6058, %v6059
  %v6061 = vrot.slane %v5861, 5
  %v6062 = vrot.slane %v6061, 4
  %v6063 = vrot.slane %v5862, 5
  %v6064 = vsel %vm2615, %v6062, %v6063
  %v6065 = vrot.slane %v6063, 4
  %v6066 = vrot.slane %v5863, 5
  %v6067 = vsel %vm2615, %v6065, %v6066
  %v6068 = vrot.slane %v5864, 5
  %v6069 = vrot.slane %v6068, 4
  %v6070 = vrot.slane %v5865, 5
  %v6071 = vsel %vm2615, %v6069, %v6070
  %v6072 = vrot.slane %v6070, 4
  %v6073 = vrot.slane %v5866, 5
  %v6074 = vsel %vm2615, %v6072, %v6073
  %v6075 = vrot.slane %v5867, 5
  %v6076 = vrot.slane %v6075, 4
  %v6077 = vrot.slane %v5868, 5
  %v6078 = vsel %vm2615, %v6076, %v6077
  %v6079 = vrot.slane %v6077, 4
  %v6080 = vrot.slane %v5869, 5
  %v6081 = vsel %vm2615, %v6079, %v6080
  %v6082 = vrot.slane %v5870, 5
  %v6083 = vrot.slane %v6082, 4
  %v6084 = vrot.slane %v5871, 5
  %v6085 = vsel %vm2615, %v6083, %v6084
  %v6086 = vrot.slane %v6084, 4
  %v6087 = vrot.slane %v5872, 5
  %v6088 = vsel %vm2615, %v6086, %v6087
  %v6089 = vrot.slane %v5873, 5
  %v6090 = vrot.slane %v6089, 4
  %v6091 = vrot.slane %v5874, 5
  %v6092 = vsel %vm2615, %v6090, %v6091
  %v6093 = vrot.slane %v6091, 4
  %v6094 = vrot.slane %v5875, 5
  %v6095 = vsel %vm2615, %v6093, %v6094
  %v6096 = vrot.slane %v5876, 5
  %v6097 = vrot.slane %v6096, 4
  %v6098 = vrot.slane %v5877, 5
  %v6099 = vsel %vm2615, %v6097, %v6098
  %v6100 = vrot.slane %v6098, 4
  %v6101 = vrot.slane %v5878, 5
  %v6102 = vsel %vm2615, %v6100, %v6101
  %v6103 = vrot.slane %v5879, 5
  %v6104 = vrot.slane %v6103, 4
  %v6105 = vrot.slane %v5880, 5
  %v6106 = vsel %vm2615, %v6104, %v6105
  %v6107 = vrot.slane %v6105, 4
  %v6108 = vrot.slane %v5881, 5
  %v6109 = vsel %vm2615, %v6107, %v6108
  %v6110 = vrot.slane %v5882, 5
  %v6111 = vrot.slane %v6110, 4
  %v6112 = vrot.slane %v5883, 5
  %v6113 = vsel %vm2615, %v6111, %v6112
  %v6114 = vrot.slane %v6112, 4
  %v6115 = vrot.slane %v5884, 5
  %v6116 = vsel %vm2615, %v6114, %v6115
  %v6117 = vrot.slane %v5885, 5
  %v6118 = vrot.slane %v6117, 4
  %v6119 = vrot.slane %v5886, 5
  %v6120 = vsel %vm2615, %v6118, %v6119
  %v6121 = vrot.slane %v6119, 4
  %v6122 = vrot.slane %v5887, 5
  %v6123 = vsel %vm2615, %v6121, %v6122
  %v6124 = vrot.slane %v5888, 5
  %v6125 = vrot.slane %v6124, 4
  %v6126 = vrot.slane %v5889, 5
  %v6127 = vsel %vm2615, %v6125, %v6126
  %v6128 = vrot.slane %v6126, 4
  %v6129 = vrot.slane %v5890, 5
  %v6130 = vsel %vm2615, %v6128, %v6129
  %v6131 = vrot.slane %v5891, 5
  %v6132 = vrot.slane %v6131, 4
  %v6133 = vrot.slane %v5892, 5
  %v6134 = vsel %vm2615, %v6132, %v6133
  %v6135 = vrot.slane %v6133, 4
  %v6136 = vrot.slane %v5893, 5
  %v6137 = vsel %vm2615, %v6135, %v6136
  %v6138 = vrot.slane %v5894, 5
  %v6139 = vrot.slane %v6138, 4
  %v6140 = vrot.slane %v5895, 5
  %v6141 = vsel %vm2615, %v6139, %v6140
  %v6142 = vrot.slane %v6140, 4
  %v6143 = vrot.slane %v5896, 5
  %v6144 = vsel %vm2615, %v6142, %v6143
  %v6145 = vrot.slane %v5897, 5
  %v6146 = vrot.slane %v6145, 4
  %v6147 = vrot.slane %v5898, 5
  %v6148 = vsel %vm2615, %v6146, %v6147
  %v6149 = vrot.slane %v6147, 4
  %v6150 = vrot.slane %v5899, 5
  %v6151 = vsel %vm2615, %v6149, %v6150
  %v6152 = vrot.slane %v5900, 5
  %v6153 = vrot.slane %v6152, 4
  %v6154 = vrot.slane %v5901, 5
  %v6155 = vsel %vm2615, %v6153, %v6154
  %v6156 = vrot.slane %v6154, 4
  %v6157 = vrot.slane %v5902, 5
  %v6158 = vsel %vm2615, %v6156, %v6157
  %v6159 = vrot.slane %v5903, 5
  %v6160 = vrot.slane %v6159, 4
  %v6161 = vrot.slane %v5904, 5
  %v6162 = vsel %vm2615, %v6160, %v6161
  %v6163 = vrot.slane %v6161, 4
  %v6164 = vrot.slane %v5905, 5
  %v6165 = vsel %vm2615, %v6163, %v6164
  %v6166 = vrot.slane %v5906, 5
  %v6167 = vrot.slane %v6166, 4
  %v6168 = vrot.slane %v5907, 5
  %v6169 = vsel %vm2615, %v6167, %v6168
  %v6170 = vrot.slane %v6168, 4
  %v6171 = vrot.slane %v5908, 5
  %v6172 = vsel %vm2615, %v6170, %v6171
  %v6173 = vrot.slane %v5909, 5
  %v6174 = vrot.slane %v6173, 4
  %v6175 = vrot.slane %v5910, 5
  %v6176 = vsel %vm2615, %v6174, %v6175
  %v6177 = vrot.slane %v6175, 4
  %v6178 = vrot.slane %v5911, 5
  %v6179 = vsel %vm2615, %v6177, %v6178
  %v6180 = vrot.slane %v5912, 5
  %v6181 = vrot.slane %v6180, 4
  %v6182 = vrot.slane %v5913, 5
  %v6183 = vsel %vm2615, %v6181, %v6182
  %v6184 = vrot.slane %v6182, 4
  %v6185 = vrot.slane %v5914, 5
  %v6186 = vsel %vm2615, %v6184, %v6185
  %v6187 = vrot.slane %v5915, 5
  %v6188 = vrot.slane %v6187, 4
  %v6189 = vrot.slane %v5916, 5
  %v6190 = vsel %vm2615, %v6188, %v6189
  %v6191 = vrot.slane %v6189, 4
  %v6192 = vrot.slane %v5917, 5
  %v6193 = vsel %vm2615, %v6191, %v6192
  %v6194 = vrot.slane %v5918, 5
  %v6195 = vrot.slane %v6194, 4
  %v6196 = vrot.slane %v5919, 5
  %v6197 = vsel %vm2615, %v6195, %v6196
  %v6198 = vrot.slane %v6196, 4
  %v6199 = vrot.slane %v5920, 5
  %v6200 = vsel %vm2615, %v6198, %v6199
  %v6201 = vrot.slane %v5921, 5
  %v6202 = vrot.slane %v6201, 4
  %v6203 = vrot.slane %v5922, 5
  %v6204 = vsel %vm2615, %v6202, %v6203
  %v6205 = vrot.slane %v6203, 4
  %v6206 = vrot.slane %v5923, 5
  %v6207 = vsel %vm2615, %v6205, %v6206
  %v6208 = vrot.slane %v5924, 5
  %v6209 = vrot.slane %v6208, 4
  %v6210 = vrot.slane %v5925, 5
  %v6211 = vsel %vm2615, %v6209, %v6210
  %v6212 = vrot.slane %v6210, 4
  %v6213 = vrot.slane %v5926, 5
  %v6214 = vsel %vm2615, %v6212, %v6213
  %v6215 = vrot.slane %v5927, 5
  %v6216 = vrot.slane %v6215, 4
  %v6217 = vrot.slane %v5928, 5
  %v6218 = vsel %vm2615, %v6216, %v6217
  %v6219 = vrot.slane %v6217, 4
  %v6220 = vrot.slane %v5929, 5
  %v6221 = vsel %vm2615, %v6219, %v6220
  %v6222 = vrot.slane %v5930, 5
  %v6223 = vrot.slane %v6222, 4
  %v6224 = vrot.slane %v5931, 5
  %v6225 = vsel %vm2615, %v6223, %v6224
  %v6226 = vrot.slane %v6224, 4
  %v6227 = vrot.slane %v5932, 5
  %v6228 = vsel %vm2615, %v6226, %v6227
  %v6229 = vrot.slane %v5933, 5
  %v6230 = vrot.slane %v6229, 4
  %v6231 = vrot.slane %v5934, 5
  %v6232 = vsel %vm2615, %v6230, %v6231
  %v6233 = vrot.slane %v6231, 4
  %v6234 = vrot.slane %v5935, 5
  %v6235 = vsel %vm2615, %v6233, %v6234
  %v6236 = vrot.slane %v5936, 5
  %v6237 = vrot.slane %v6236, 4
  %v6238 = vrot.slane %v5937, 5
  %v6239 = vsel %vm2615, %v6237, %v6238
  %v6240 = vrot.slane %v6238, 4
  %v6241 = vrot.slane %v5938, 5
  %v6242 = vsel %vm2615, %v6240, %v6241
  %v6243 = vrot.slane %v5939, 5
  %v6244 = vrot.slane %v6243, 4
  %v6245 = vrot.slane %v5940, 5
  %v6246 = vsel %vm2615, %v6244, %v6245
  %v6247 = vrot.slane %v6245, 4
  %v6248 = vrot.slane %v5941, 5
  %v6249 = vsel %vm2615, %v6247, %v6248
  %v6250 = vrot.slane %v5942, 5
  %v6251 = vrot.slane %v6250, 4
  %v6252 = vrot.slane %v5943, 5
  %v6253 = vsel %vm2615, %v6251, %v6252
  %v6254 = vrot.slane %v6252, 4
  %v6255 = vrot.slane %v5944, 5
  %v6256 = vsel %vm2615, %v6254, %v6255
  %v6257 = vrot.slane %v5945, 5
  %v6258 = vrot.slane %v6257, 4
  %v6259 = vrot.slane %v5946, 5
  %v6260 = vsel %vm2615, %v6258, %v6259
  %v6261 = vrot.slane %v6259, 4
  %v6262 = vrot.slane %v5947, 5
  %v6263 = vsel %vm2615, %v6261, %v6262
  %v6264 = vrot.slane %v5948, 5
  %v6265 = vrot.slane %v6264, 4
  %v6266 = vrot.slane %v5949, 5
  %v6267 = vsel %vm2615, %v6265, %v6266
  %v6268 = vrot.slane %v6266, 4
  %v6269 = vrot.slane %v5950, 5
  %v6270 = vsel %vm2615, %v6268, %v6269
  %v6271 = vld [vmem:[#allocation2] sm:$0xff]
  %v6272 = vld [vmem:[#allocation2 + $0x8] sm:$0xff]
  %v6273 = vld [vmem:[#allocation2 + $0x10] sm:$0xff]
  %v6274 = vld [vmem:[#allocation2 + $0x18] sm:$0xff]
  %v6275 = vld [vmem:[#allocation2 + $0x20] sm:$0xff]
  %v6276 = vld [vmem:[#allocation2 + $0x28] sm:$0xff]
  %v6277 = vld [vmem:[#allocation2 + $0x30] sm:$0xff]
  %v6278 = vld [vmem:[#allocation2 + $0x38] sm:$0xff]
  %v6279 = vld [vmem:[#allocation2 + $0x40] sm:$0xff]
  %v6280 = vld [vmem:[#allocation2 + $0x48] sm:$0xff]
  %v6281 = vld [vmem:[#allocation2 + $0x50] sm:$0xff]
  %v6282 = vld [vmem:[#allocation2 + $0x58] sm:$0xff]
  %v6283 = vld [vmem:[#allocation2 + $0x60] sm:$0xff]
  %v6284 = vld [vmem:[#allocation2 + $0x68] sm:$0xff]
  %v6285 = vld [vmem:[#allocation2 + $0x70] sm:$0xff]
  %v6286 = vld [vmem:[#allocation2 + $0x78] sm:$0xff]
  %v6287 = vld [vmem:[#allocation2 + $0x80] sm:$0xff]
  %v6288 = vld [vmem:[#allocation2 + $0x88] sm:$0xff]
  %v6289 = vld [vmem:[#allocation2 + $0x90] sm:$0xff]
  %v6290 = vld [vmem:[#allocation2 + $0x98] sm:$0xff]
  %v6291 = vld [vmem:[#allocation2 + $0xa0] sm:$0xff]
  %v6292 = vld [vmem:[#allocation2 + $0xa8] sm:$0xff]
  %v6293 = vld [vmem:[#allocation2 + $0xb0] sm:$0xff]
  %v6294 = vld [vmem:[#allocation2 + $0xb8] sm:$0xff]
  %v6295 = vld [vmem:[#allocation2 + $0xc0] sm:$0xff]
  %v6296 = vld [vmem:[#allocation2 + $0xc8] sm:$0xff]
  %v6297 = vld [vmem:[#allocation2 + $0xd0] sm:$0xff]
  %v6298 = vld [vmem:[#allocation2 + $0xd8] sm:$0xff]
  %v6299 = vld [vmem:[#allocation2 + $0xe0] sm:$0xff]
  %v6300 = vld [vmem:[#allocation2 + $0xe8] sm:$0xff]
  %v6301 = vld [vmem:[#allocation2 + $0xf0] sm:$0xff]
  %v6302 = vld [vmem:[#allocation2 + $0xf8] sm:$0xff]
  %v6303 = vld [vmem:[#allocation2 + $0x100] sm:$0xff]
  %v6304 = vld [vmem:[#allocation2 + $0x108] sm:$0xff]
  %v6305 = vld [vmem:[#allocation2 + $0x110] sm:$0xff]
  %v6306 = vld [vmem:[#allocation2 + $0x118] sm:$0xff]
  %v6307 = vld [vmem:[#allocation2 + $0x120] sm:$0xff]
  %v6308 = vld [vmem:[#allocation2 + $0x128] sm:$0xff]
  %v6309 = vld [vmem:[#allocation2 + $0x130] sm:$0xff]
  %v6310 = vld [vmem:[#allocation2 + $0x138] sm:$0xff]
  %v6311 = vld [vmem:[#allocation2 + $0x140] sm:$0xff]
  %v6312 = vld [vmem:[#allocation2 + $0x148] sm:$0xff]
  %v6313 = vld [vmem:[#allocation2 + $0x150] sm:$0xff]
  %v6314 = vld [vmem:[#allocation2 + $0x158] sm:$0xff]
  %v6315 = vld [vmem:[#allocation2 + $0x160] sm:$0xff]
  %v6316 = vld [vmem:[#allocation2 + $0x168] sm:$0xff]
  %v6317 = vld [vmem:[#allocation2 + $0x170] sm:$0xff]
  %v6318 = vld [vmem:[#allocation2 + $0x178] sm:$0xff]
  %v6319 = vld [vmem:[#allocation2 + $0x180] sm:$0xff]
  %v6320 = vld [vmem:[#allocation2 + $0x188] sm:$0xff]
  %v6321 = vld [vmem:[#allocation2 + $0x190] sm:$0xff]
  %v6322 = vld [vmem:[#allocation2 + $0x198] sm:$0xff]
  %v6323 = vld [vmem:[#allocation2 + $0x1a0] sm:$0xff]
  %v6324 = vld [vmem:[#allocation2 + $0x1a8] sm:$0xff]
  %v6325 = vld [vmem:[#allocation2 + $0x1b0] sm:$0xff]
  %v6326 = vld [vmem:[#allocation2 + $0x1b8] sm:$0xff]
  %v6327 = vld [vmem:[#allocation2 + $0x1c0] sm:$0xff]
  %v6328 = vld [vmem:[#allocation2 + $0x1c8] sm:$0xff]
  %v6329 = vld [vmem:[#allocation2 + $0x1d0] sm:$0xff]
  %v6330 = vld [vmem:[#allocation2 + $0x1d8] sm:$0xff]
  %v6331 = vld [vmem:[#allocation2 + $0x1e0] sm:$0xff]
  %v6332 = vld [vmem:[#allocation2 + $0x1e8] sm:$0xff]
  %v6333 = vld [vmem:[#allocation2 + $0x1f0] sm:$0xff]
  %v6334 = vld [vmem:[#allocation2 + $0x1f8] sm:$0xff]
  %s6335 = scalar_lea.vmem %s1, 320
  %v6336 = vld [vmem:[%s6335] sm:$0xf]
  %v6337 = vld [vmem:[%s6335 + $0x4] sm:$0xf]
  %v6338 = vld [vmem:[%s6335 + $0x8] sm:$0xf]
  %v6339 = vld [vmem:[%s6335 + $0xc] sm:$0xf]
  %v6340 = vld [vmem:[%s6335 + $0x10] sm:$0xf]
  %v6341 = vld [vmem:[%s6335 + $0x14] sm:$0xf]
  %v6342 = vld [vmem:[%s6335 + $0x18] sm:$0xf]
  %v6343 = vld [vmem:[%s6335 + $0x1c] sm:$0xf]
  %v6344 = vld [vmem:[%s6335 + $0x20] sm:$0xf]
  %v6345 = vld [vmem:[%s6335 + $0x24] sm:$0xf]
  %v6346 = vld [vmem:[%s6335 + $0x28] sm:$0xf]
  %v6347 = vld [vmem:[%s6335 + $0x2c] sm:$0xf]
  %v6348 = vld [vmem:[%s6335 + $0x30] sm:$0xf]
  %v6349 = vld [vmem:[%s6335 + $0x34] sm:$0xf]
  %v6350 = vld [vmem:[%s6335 + $0x38] sm:$0xf]
  %v6351 = vld [vmem:[%s6335 + $0x3c] sm:$0xf]
  %v6352 = vunpack.c.l.b16 %v6050
  %v6353 = vunpack.c.l.b16 %v6053
  %v6354 = vunpack.c.l.b16 %v6057
  %v6355 = vunpack.c.l.b16 %v6060
  %v6356 = vunpack.c.l.b16 %v6064
  %v6357 = vunpack.c.l.b16 %v6067
  %v6358 = vunpack.c.l.b16 %v6071
  %v6359 = vunpack.c.l.b16 %v6074
  %v6360 = vunpack.c.l.b16 %v6078
  %v6361 = vunpack.c.l.b16 %v6081
  %v6362 = vunpack.c.l.b16 %v6085
  %v6363 = vunpack.c.l.b16 %v6088
  %v6364 = vunpack.c.l.b16 %v6092
  %v6365 = vunpack.c.l.b16 %v6095
  %v6366 = vunpack.c.l.b16 %v6099
  %v6367 = vunpack.c.l.b16 %v6102
  %v6368 = vunpack.c.l.b16 %v6106
  %v6369 = vunpack.c.l.b16 %v6109
  %v6370 = vunpack.c.l.b16 %v6113
  %v6371 = vunpack.c.l.b16 %v6116
  %v6372 = vunpack.c.l.b16 %v6120
  %v6373 = vunpack.c.l.b16 %v6123
  %v6374 = vunpack.c.l.b16 %v6127
  %v6375 = vunpack.c.l.b16 %v6130
  %v6376 = vunpack.c.l.b16 %v6134
  %v6377 = vunpack.c.l.b16 %v6137
  %v6378 = vunpack.c.l.b16 %v6141
  %v6379 = vunpack.c.l.b16 %v6144
  %v6380 = vunpack.c.l.b16 %v6148
  %v6381 = vunpack.c.l.b16 %v6151
  %v6382 = vunpack.c.l.b16 %v6155
  %v6383 = vunpack.c.l.b16 %v6158
  %v6384 = vunpack.c.l.b16 %v6162
  %v6385 = vunpack.c.l.b16 %v6165
  %v6386 = vunpack.c.l.b16 %v6169
  %v6387 = vunpack.c.l.b16 %v6172
  %v6388 = vunpack.c.l.b16 %v6176
  %v6389 = vunpack.c.l.b16 %v6179
  %v6390 = vunpack.c.l.b16 %v6183
  %v6391 = vunpack.c.l.b16 %v6186
  %v6392 = vunpack.c.l.b16 %v6190
  %v6393 = vunpack.c.l.b16 %v6193
  %v6394 = vunpack.c.l.b16 %v6197
  %v6395 = vunpack.c.l.b16 %v6200
  %v6396 = vunpack.c.l.b16 %v6204
  %v6397 = vunpack.c.l.b16 %v6207
  %v6398 = vunpack.c.l.b16 %v6211
  %v6399 = vunpack.c.l.b16 %v6214
  %v6400 = vunpack.c.l.b16 %v6218
  %v6401 = vunpack.c.l.b16 %v6221
  %v6402 = vunpack.c.l.b16 %v6225
  %v6403 = vunpack.c.l.b16 %v6228
  %v6404 = vunpack.c.l.b16 %v6232
  %v6405 = vunpack.c.l.b16 %v6235
  %v6406 = vunpack.c.l.b16 %v6239
  %v6407 = vunpack.c.l.b16 %v6242
  %v6408 = vunpack.c.l.b16 %v6246
  %v6409 = vunpack.c.l.b16 %v6249
  %v6410 = vunpack.c.l.b16 %v6253
  %v6411 = vunpack.c.l.b16 %v6256
  %v6412 = vunpack.c.l.b16 %v6260
  %v6413 = vunpack.c.l.b16 %v6263
  %v6414 = vunpack.c.l.b16 %v6267
  %v6415 = vunpack.c.l.b16 %v6270
  %v6416 = vpack.c.b16 %v6353, %v6352
  %v6417 = vpack.c.b16 %v6355, %v6354
  %v6418 = vpack.c.b16 %v6357, %v6356
  %v6419 = vpack.c.b16 %v6359, %v6358
  %v6420 = vpack.c.b16 %v6361, %v6360
  %v6421 = vpack.c.b16 %v6363, %v6362
  %v6422 = vpack.c.b16 %v6365, %v6364
  %v6423 = vpack.c.b16 %v6367, %v6366
  %v6424 = vpack.c.b16 %v6369, %v6368
  %v6425 = vpack.c.b16 %v6371, %v6370
  %v6426 = vpack.c.b16 %v6373, %v6372
  %v6427 = vpack.c.b16 %v6375, %v6374
  %v6428 = vpack.c.b16 %v6377, %v6376
  %v6429 = vpack.c.b16 %v6379, %v6378
  %v6430 = vpack.c.b16 %v6381, %v6380
  %v6431 = vpack.c.b16 %v6383, %v6382
  %v6432 = vpack.c.b16 %v6385, %v6384
  %v6433 = vpack.c.b16 %v6387, %v6386
  %v6434 = vpack.c.b16 %v6389, %v6388
  %v6435 = vpack.c.b16 %v6391, %v6390
  %v6436 = vpack.c.b16 %v6393, %v6392
  %v6437 = vpack.c.b16 %v6395, %v6394
  %v6438 = vpack.c.b16 %v6397, %v6396
  %v6439 = vpack.c.b16 %v6399, %v6398
  %v6440 = vpack.c.b16 %v6401, %v6400
  %v6441 = vpack.c.b16 %v6403, %v6402
  %v6442 = vpack.c.b16 %v6405, %v6404
  %v6443 = vpack.c.b16 %v6407, %v6406
  %v6444 = vpack.c.b16 %v6409, %v6408
  %v6445 = vpack.c.b16 %v6411, %v6410
  %v6446 = vpack.c.b16 %v6413, %v6412
  %v6447 = vpack.c.b16 %v6415, %v6414
  %v6496 = vunpack.c.l.b16 %v6336
  %v6497 = vunpack.c.l.b16 %v6337
  %v6498 = vunpack.c.l.b16 %v6338
  %v6499 = vunpack.c.l.b16 %v6339
  %v6500 = vunpack.c.l.b16 %v6340
  %v6501 = vunpack.c.l.b16 %v6341
  %v6502 = vunpack.c.l.b16 %v6342
  %v6503 = vunpack.c.l.b16 %v6343
  %v6504 = vunpack.c.l.b16 %v6344
  %v6505 = vunpack.c.l.b16 %v6345
  %v6506 = vunpack.c.l.b16 %v6346
  %v6507 = vunpack.c.l.b16 %v6347
  %v6508 = vunpack.c.l.b16 %v6348
  %v6509 = vunpack.c.l.b16 %v6349
  %v6510 = vunpack.c.l.b16 %v6350
  %v6511 = vunpack.c.l.b16 %v6351
  %v6512 = vpack.c.b16 %v6497, %v6496
  %v6513 = vpack.c.b16 %v6499, %v6498
  %v6514 = vpack.c.b16 %v6501, %v6500
  %v6515 = vpack.c.b16 %v6503, %v6502
  %v6516 = vpack.c.b16 %v6505, %v6504
  %v6517 = vpack.c.b16 %v6507, %v6506
  %v6518 = vpack.c.b16 %v6509, %v6508
  %v6519 = vpack.c.b16 %v6511, %v6510
  %6528 = vmatprep.subr.bf16.mxu0 0
  %6529 = vmatpush1.bf16.msra.mxu0 %v6519
  %6530 = vmatprep.subr.bf16.mxu0 0
  %6531 = vmatpush1.bf16.msra.mxu0 %v6518
  %6532 = vmatprep.subr.bf16.mxu0 0
  %6533 = vmatpush1.bf16.msra.mxu0 %v6517
  %6534 = vmatprep.subr.bf16.mxu0 0
  %6535 = vmatpush1.bf16.msra.mxu0 %v6516
  %6536 = vmatprep.subr.bf16.mxu0 0
  %6537 = vmatpush1.bf16.msra.mxu0 %v6515
  %6538 = vmatprep.subr.bf16.mxu0 0
  %6539 = vmatpush1.bf16.msra.mxu0 %v6514
  %6540 = vmatprep.subr.bf16.mxu0 0
  %6541 = vmatpush1.bf16.msra.mxu0 %v6513
  %6542 = vmatprep.subr.bf16.mxu0 0
  %6543 = vmatpush1.bf16.msra.mxu0 %v6512
  %6544 = vmatprep.subr.bf16.mxu0 0
  %6545 = vmatpush2.bf16.msra.mxu0 0
  %6546 = vmatprep.subr.bf16.mxu0 0
  %6547 = vmatpush2.bf16.msra.mxu0 0
  %6548 = vmatprep.subr.bf16.mxu0 0
  %6549 = vmatpush2.bf16.msra.mxu0 0
  %6550 = vmatprep.subr.bf16.mxu0 0
  %6551 = vmatpush2.bf16.msra.mxu0 0
  %6552 = vmatprep.subr.bf16.mxu0 0
  %6553 = vmatpush2.bf16.msra.mxu0 0
  %6554 = vmatprep.subr.bf16.mxu0 0
  %6555 = vmatpush2.bf16.msra.mxu0 0
  %6556 = vmatprep.subr.bf16.mxu0 0
  %6557 = vmatpush2.bf16.msra.mxu0 0
  %6558 = vmatprep.subr.bf16.mxu0 0
  %6559 = vmatpush2.bf16.msra.mxu0 0
  %6560 = vmatprep.mubr.bf16.mxu0 0
  %6561 = vmatmul.mubr.bf16.gmra.mxu0 %v6416
  %v6562 = vpop.f32.mrf.mxu0
  %v6563 = vadd.f32 0.0, %v6562
  %v6564 = vpop.f32.mrf.mxu0
  %v6565 = vpop.f32.mrf.mxu0
  %v6566 = vadd.f32 0.0, %v6565
  %v6567 = vpop.f32.mrf.mxu0
  %6568 = vmatprep.mubr.bf16.mxu0 0
  %6569 = vmatmul.mubr.bf16.gmra.mxu0 %v6417
  %v6570 = vpop.f32.mrf.mxu0
  %v6571 = vadd.f32 0.0, %v6570
  %v6572 = vpop.f32.mrf.mxu0
  %v6573 = vpop.f32.mrf.mxu0
  %v6574 = vadd.f32 0.0, %v6573
  %v6575 = vpop.f32.mrf.mxu0
  %6576 = vmatprep.mubr.bf16.mxu0 0
  %6577 = vmatmul.mubr.bf16.gmra.mxu0 %v6418
  %v6578 = vpop.f32.mrf.mxu0
  %v6579 = vadd.f32 0.0, %v6578
  %v6580 = vpop.f32.mrf.mxu0
  %v6581 = vpop.f32.mrf.mxu0
  %v6582 = vadd.f32 0.0, %v6581
  %v6583 = vpop.f32.mrf.mxu0
  %6584 = vmatprep.mubr.bf16.mxu0 0
  %6585 = vmatmul.mubr.bf16.gmra.mxu0 %v6419
  %v6586 = vpop.f32.mrf.mxu0
  %v6587 = vadd.f32 0.0, %v6586
  %v6588 = vpop.f32.mrf.mxu0
  %v6589 = vpop.f32.mrf.mxu0
  %v6590 = vadd.f32 0.0, %v6589
  %v6591 = vpop.f32.mrf.mxu0
  %6592 = vmatprep.mubr.bf16.mxu0 0
  %6593 = vmatmul.mubr.bf16.gmra.mxu0 %v6420
  %v6594 = vpop.f32.mrf.mxu0
  %v6595 = vadd.f32 0.0, %v6594
  %v6596 = vpop.f32.mrf.mxu0
  %v6597 = vpop.f32.mrf.mxu0
  %v6598 = vadd.f32 0.0, %v6597
  %v6599 = vpop.f32.mrf.mxu0
  %6600 = vmatprep.mubr.bf16.mxu0 0
  %6601 = vmatmul.mubr.bf16.gmra.mxu0 %v6421
  %v6602 = vpop.f32.mrf.mxu0
  %v6603 = vadd.f32 0.0, %v6602
  %v6604 = vpop.f32.mrf.mxu0
  %v6605 = vpop.f32.mrf.mxu0
  %v6606 = vadd.f32 0.0, %v6605
  %v6607 = vpop.f32.mrf.mxu0
  %6608 = vmatprep.mubr.bf16.mxu0 0
  %6609 = vmatmul.mubr.bf16.gmra.mxu0 %v6422
  %v6610 = vpop.f32.mrf.mxu0
  %v6611 = vadd.f32 0.0, %v6610
  %v6612 = vpop.f32.mrf.mxu0
  %v6613 = vpop.f32.mrf.mxu0
  %v6614 = vadd.f32 0.0, %v6613
  %v6615 = vpop.f32.mrf.mxu0
  %6616 = vmatprep.mubr.bf16.mxu0 0
  %6617 = vmatmul.mubr.bf16.gmra.mxu0 %v6423
  %v6618 = vpop.f32.mrf.mxu0
  %v6619 = vadd.f32 0.0, %v6618
  %v6620 = vpop.f32.mrf.mxu0
  %v6621 = vpop.f32.mrf.mxu0
  %v6622 = vadd.f32 0.0, %v6621
  %v6623 = vpop.f32.mrf.mxu0
  %6624 = vmatprep.mubr.bf16.mxu0 0
  %6625 = vmatmul.mubr.bf16.gmra.mxu0 %v6424
  %v6626 = vpop.f32.mrf.mxu0
  %v6627 = vadd.f32 0.0, %v6626
  %v6628 = vpop.f32.mrf.mxu0
  %v6629 = vpop.f32.mrf.mxu0
  %v6630 = vadd.f32 0.0, %v6629
  %v6631 = vpop.f32.mrf.mxu0
  %6632 = vmatprep.mubr.bf16.mxu0 0
  %6633 = vmatmul.mubr.bf16.gmra.mxu0 %v6425
  %v6634 = vpop.f32.mrf.mxu0
  %v6635 = vadd.f32 0.0, %v6634
  %v6636 = vpop.f32.mrf.mxu0
  %v6637 = vpop.f32.mrf.mxu0
  %v6638 = vadd.f32 0.0, %v6637
  %v6639 = vpop.f32.mrf.mxu0
  %6640 = vmatprep.mubr.bf16.mxu0 0
  %6641 = vmatmul.mubr.bf16.gmra.mxu0 %v6426
  %v6642 = vpop.f32.mrf.mxu0
  %v6643 = vadd.f32 0.0, %v6642
  %v6644 = vpop.f32.mrf.mxu0
  %v6645 = vpop.f32.mrf.mxu0
  %v6646 = vadd.f32 0.0, %v6645
  %v6647 = vpop.f32.mrf.mxu0
  %6648 = vmatprep.mubr.bf16.mxu0 0
  %6649 = vmatmul.mubr.bf16.gmra.mxu0 %v6427
  %v6650 = vpop.f32.mrf.mxu0
  %v6651 = vadd.f32 0.0, %v6650
  %v6652 = vpop.f32.mrf.mxu0
  %v6653 = vpop.f32.mrf.mxu0
  %v6654 = vadd.f32 0.0, %v6653
  %v6655 = vpop.f32.mrf.mxu0
  %6656 = vmatprep.mubr.bf16.mxu0 0
  %6657 = vmatmul.mubr.bf16.gmra.mxu0 %v6428
  %v6658 = vpop.f32.mrf.mxu0
  %v6659 = vadd.f32 0.0, %v6658
  %v6660 = vpop.f32.mrf.mxu0
  %v6661 = vpop.f32.mrf.mxu0
  %v6662 = vadd.f32 0.0, %v6661
  %v6663 = vpop.f32.mrf.mxu0
  %6664 = vmatprep.mubr.bf16.mxu0 0
  %6665 = vmatmul.mubr.bf16.gmra.mxu0 %v6429
  %v6666 = vpop.f32.mrf.mxu0
  %v6667 = vadd.f32 0.0, %v6666
  %v6668 = vpop.f32.mrf.mxu0
  %v6669 = vpop.f32.mrf.mxu0
  %v6670 = vadd.f32 0.0, %v6669
  %v6671 = vpop.f32.mrf.mxu0
  %6672 = vmatprep.mubr.bf16.mxu0 0
  %6673 = vmatmul.mubr.bf16.gmra.mxu0 %v6430
  %v6674 = vpop.f32.mrf.mxu0
  %v6675 = vadd.f32 0.0, %v6674
  %v6676 = vpop.f32.mrf.mxu0
  %v6677 = vpop.f32.mrf.mxu0
  %v6678 = vadd.f32 0.0, %v6677
  %v6679 = vpop.f32.mrf.mxu0
  %6680 = vmatprep.mubr.bf16.mxu0 0
  %6681 = vmatmul.mubr.bf16.gmra.mxu0 %v6431
  %v6682 = vpop.f32.mrf.mxu0
  %v6683 = vadd.f32 0.0, %v6682
  %v6684 = vpop.f32.mrf.mxu0
  %v6685 = vpop.f32.mrf.mxu0
  %v6686 = vadd.f32 0.0, %v6685
  %v6687 = vpop.f32.mrf.mxu0
  %6688 = vmatprep.mubr.bf16.mxu0 0
  %6689 = vmatmul.mubr.bf16.gmra.mxu0 %v6432
  %v6690 = vpop.f32.mrf.mxu0
  %v6691 = vadd.f32 0.0, %v6690
  %v6692 = vpop.f32.mrf.mxu0
  %v6693 = vpop.f32.mrf.mxu0
  %v6694 = vadd.f32 0.0, %v6693
  %v6695 = vpop.f32.mrf.mxu0
  %6696 = vmatprep.mubr.bf16.mxu0 0
  %6697 = vmatmul.mubr.bf16.gmra.mxu0 %v6433
  %v6698 = vpop.f32.mrf.mxu0
  %v6699 = vadd.f32 0.0, %v6698
  %v6700 = vpop.f32.mrf.mxu0
  %v6701 = vpop.f32.mrf.mxu0
  %v6702 = vadd.f32 0.0, %v6701
  %v6703 = vpop.f32.mrf.mxu0
  %6704 = vmatprep.mubr.bf16.mxu0 0
  %6705 = vmatmul.mubr.bf16.gmra.mxu0 %v6434
  %v6706 = vpop.f32.mrf.mxu0
  %v6707 = vadd.f32 0.0, %v6706
  %v6708 = vpop.f32.mrf.mxu0
  %v6709 = vpop.f32.mrf.mxu0
  %v6710 = vadd.f32 0.0, %v6709
  %v6711 = vpop.f32.mrf.mxu0
  %6712 = vmatprep.mubr.bf16.mxu0 0
  %6713 = vmatmul.mubr.bf16.gmra.mxu0 %v6435
  %v6714 = vpop.f32.mrf.mxu0
  %v6715 = vadd.f32 0.0, %v6714
  %v6716 = vpop.f32.mrf.mxu0
  %v6717 = vpop.f32.mrf.mxu0
  %v6718 = vadd.f32 0.0, %v6717
  %v6719 = vpop.f32.mrf.mxu0
  %6720 = vmatprep.mubr.bf16.mxu0 0
  %6721 = vmatmul.mubr.bf16.gmra.mxu0 %v6436
  %v6722 = vpop.f32.mrf.mxu0
  %v6723 = vadd.f32 0.0, %v6722
  %v6724 = vpop.f32.mrf.mxu0
  %v6725 = vpop.f32.mrf.mxu0
  %v6726 = vadd.f32 0.0, %v6725
  %v6727 = vpop.f32.mrf.mxu0
  %6728 = vmatprep.mubr.bf16.mxu0 0
  %6729 = vmatmul.mubr.bf16.gmra.mxu0 %v6437
  %v6730 = vpop.f32.mrf.mxu0
  %v6731 = vadd.f32 0.0, %v6730
  %v6732 = vpop.f32.mrf.mxu0
  %v6733 = vpop.f32.mrf.mxu0
  %v6734 = vadd.f32 0.0, %v6733
  %v6735 = vpop.f32.mrf.mxu0
  %6736 = vmatprep.mubr.bf16.mxu0 0
  %6737 = vmatmul.mubr.bf16.gmra.mxu0 %v6438
  %v6738 = vpop.f32.mrf.mxu0
  %v6739 = vadd.f32 0.0, %v6738
  %v6740 = vpop.f32.mrf.mxu0
  %v6741 = vpop.f32.mrf.mxu0
  %v6742 = vadd.f32 0.0, %v6741
  %v6743 = vpop.f32.mrf.mxu0
  %6744 = vmatprep.mubr.bf16.mxu0 0
  %6745 = vmatmul.mubr.bf16.gmra.mxu0 %v6439
  %v6746 = vpop.f32.mrf.mxu0
  %v6747 = vadd.f32 0.0, %v6746
  %v6748 = vpop.f32.mrf.mxu0
  %v6749 = vpop.f32.mrf.mxu0
  %v6750 = vadd.f32 0.0, %v6749
  %v6751 = vpop.f32.mrf.mxu0
  %6752 = vmatprep.mubr.bf16.mxu0 0
  %6753 = vmatmul.mubr.bf16.gmra.mxu0 %v6440
  %v6754 = vpop.f32.mrf.mxu0
  %v6755 = vadd.f32 0.0, %v6754
  %v6756 = vpop.f32.mrf.mxu0
  %v6757 = vpop.f32.mrf.mxu0
  %v6758 = vadd.f32 0.0, %v6757
  %v6759 = vpop.f32.mrf.mxu0
  %6760 = vmatprep.mubr.bf16.mxu0 0
  %6761 = vmatmul.mubr.bf16.gmra.mxu0 %v6441
  %v6762 = vpop.f32.mrf.mxu0
  %v6763 = vadd.f32 0.0, %v6762
  %v6764 = vpop.f32.mrf.mxu0
  %v6765 = vpop.f32.mrf.mxu0
  %v6766 = vadd.f32 0.0, %v6765
  %v6767 = vpop.f32.mrf.mxu0
  %6768 = vmatprep.mubr.bf16.mxu0 0
  %6769 = vmatmul.mubr.bf16.gmra.mxu0 %v6442
  %v6770 = vpop.f32.mrf.mxu0
  %v6771 = vadd.f32 0.0, %v6770
  %v6772 = vpop.f32.mrf.mxu0
  %v6773 = vpop.f32.mrf.mxu0
  %v6774 = vadd.f32 0.0, %v6773
  %v6775 = vpop.f32.mrf.mxu0
  %6776 = vmatprep.mubr.bf16.mxu0 0
  %6777 = vmatmul.mubr.bf16.gmra.mxu0 %v6443
  %v6778 = vpop.f32.mrf.mxu0
  %v6779 = vadd.f32 0.0, %v6778
  %v6780 = vpop.f32.mrf.mxu0
  %v6781 = vpop.f32.mrf.mxu0
  %v6782 = vadd.f32 0.0, %v6781
  %v6783 = vpop.f32.mrf.mxu0
  %6784 = vmatprep.mubr.bf16.mxu0 0
  %6785 = vmatmul.mubr.bf16.gmra.mxu0 %v6444
  %v6786 = vpop.f32.mrf.mxu0
  %v6787 = vadd.f32 0.0, %v6786
  %v6788 = vpop.f32.mrf.mxu0
  %v6789 = vpop.f32.mrf.mxu0
  %v6790 = vadd.f32 0.0, %v6789
  %v6791 = vpop.f32.mrf.mxu0
  %6792 = vmatprep.mubr.bf16.mxu0 0
  %6793 = vmatmul.mubr.bf16.gmra.mxu0 %v6445
  %v6794 = vpop.f32.mrf.mxu0
  %v6795 = vadd.f32 0.0, %v6794
  %v6796 = vpop.f32.mrf.mxu0
  %v6797 = vpop.f32.mrf.mxu0
  %v6798 = vadd.f32 0.0, %v6797
  %v6799 = vpop.f32.mrf.mxu0
  %6800 = vmatprep.mubr.bf16.mxu0 0
  %6801 = vmatmul.mubr.bf16.gmra.mxu0 %v6446
  %v6802 = vpop.f32.mrf.mxu0
  %v6803 = vadd.f32 0.0, %v6802
  %v6804 = vpop.f32.mrf.mxu0
  %v6805 = vpop.f32.mrf.mxu0
  %v6806 = vadd.f32 0.0, %v6805
  %v6807 = vpop.f32.mrf.mxu0
  %6808 = vmatprep.mubr.bf16.mxu0 0
  %6809 = vmatmul.mubr.bf16.gmra.mxu0 %v6447
  %v6810 = vpop.f32.mrf.mxu0
  %v6811 = vadd.f32 0.0, %v6810
  %v6812 = vpop.f32.mrf.mxu0
  %v6813 = vpop.f32.mrf.mxu0
  %v6814 = vadd.f32 0.0, %v6813
  %v6815 = vpop.f32.mrf.mxu0
  %6816 = vdwg.mxu0
  %v6817 = vadd.f32 %v6271, %v6563
  %v6818 = vadd.f32 %v6272, %v6566
  %v6819 = vadd.f32 %v6273, %v6571
  %v6820 = vadd.f32 %v6274, %v6574
  %v6821 = vadd.f32 %v6275, %v6579
  %v6822 = vadd.f32 %v6276, %v6582
  %v6823 = vadd.f32 %v6277, %v6587
  %v6824 = vadd.f32 %v6278, %v6590
  %v6825 = vadd.f32 %v6279, %v6595
  %v6826 = vadd.f32 %v6280, %v6598
  %v6827 = vadd.f32 %v6281, %v6603
  %v6828 = vadd.f32 %v6282, %v6606
  %v6829 = vadd.f32 %v6283, %v6611
  %v6830 = vadd.f32 %v6284, %v6614
  %v6831 = vadd.f32 %v6285, %v6619
  %v6832 = vadd.f32 %v6286, %v6622
  %v6833 = vadd.f32 %v6287, %v6627
  %v6834 = vadd.f32 %v6288, %v6630
  %v6835 = vadd.f32 %v6289, %v6635
  %v6836 = vadd.f32 %v6290, %v6638
  %v6837 = vadd.f32 %v6291, %v6643
  %v6838 = vadd.f32 %v6292, %v6646
  %v6839 = vadd.f32 %v6293, %v6651
  %v6840 = vadd.f32 %v6294, %v6654
  %v6841 = vadd.f32 %v6295, %v6659
  %v6842 = vadd.f32 %v6296, %v6662
  %v6843 = vadd.f32 %v6297, %v6667
  %v6844 = vadd.f32 %v6298, %v6670
  %v6845 = vadd.f32 %v6299, %v6675
  %v6846 = vadd.f32 %v6300, %v6678
  %v6847 = vadd.f32 %v6301, %v6683
  %v6848 = vadd.f32 %v6302, %v6686
  %v6849 = vadd.f32 %v6303, %v6691
  %v6850 = vadd.f32 %v6304, %v6694
  %v6851 = vadd.f32 %v6305, %v6699
  %v6852 = vadd.f32 %v6306, %v6702
  %v6853 = vadd.f32 %v6307, %v6707
  %v6854 = vadd.f32 %v6308, %v6710
  %v6855 = vadd.f32 %v6309, %v6715
  %v6856 = vadd.f32 %v6310, %v6718
  %v6857 = vadd.f32 %v6311, %v6723
  %v6858 = vadd.f32 %v6312, %v6726
  %v6859 = vadd.f32 %v6313, %v6731
  %v6860 = vadd.f32 %v6314, %v6734
  %v6861 = vadd.f32 %v6315, %v6739
  %v6862 = vadd.f32 %v6316, %v6742
  %v6863 = vadd.f32 %v6317, %v6747
  %v6864 = vadd.f32 %v6318, %v6750
  %v6865 = vadd.f32 %v6319, %v6755
  %v6866 = vadd.f32 %v6320, %v6758
  %v6867 = vadd.f32 %v6321, %v6763
  %v6868 = vadd.f32 %v6322, %v6766
  %v6869 = vadd.f32 %v6323, %v6771
  %v6870 = vadd.f32 %v6324, %v6774
  %v6871 = vadd.f32 %v6325, %v6779
  %v6872 = vadd.f32 %v6326, %v6782
  %v6873 = vadd.f32 %v6327, %v6787
  %v6874 = vadd.f32 %v6328, %v6790
  %v6875 = vadd.f32 %v6329, %v6795
  %v6876 = vadd.f32 %v6330, %v6798
  %v6877 = vadd.f32 %v6331, %v6803
  %v6878 = vadd.f32 %v6332, %v6806
  %v6879 = vadd.f32 %v6333, %v6811
  %v6880 = vadd.f32 %v6334, %v6814
  %6881 = vst [vmem:[#allocation2] sm:$0xff] %v6817
  %6882 = vst [vmem:[#allocation2 + $0x8] sm:$0xff] %v6818
  %6883 = vst [vmem:[#allocation2 + $0x10] sm:$0xff] %v6819
  %6884 = vst [vmem:[#allocation2 + $0x18] sm:$0xff] %v6820
  %6885 = vst [vmem:[#allocation2 + $0x20] sm:$0xff] %v6821
  %6886 = vst [vmem:[#allocation2 + $0x28] sm:$0xff] %v6822
  %6887 = vst [vmem:[#allocation2 + $0x30] sm:$0xff] %v6823
  %6888 = vst [vmem:[#allocation2 + $0x38] sm:$0xff] %v6824
  %6889 = vst [vmem:[#allocation2 + $0x40] sm:$0xff] %v6825
  %6890 = vst [vmem:[#allocation2 + $0x48] sm:$0xff] %v6826
  %6891 = vst [vmem:[#allocation2 + $0x50] sm:$0xff] %v6827
  %6892 = vst [vmem:[#allocation2 + $0x58] sm:$0xff] %v6828
  %6893 = vst [vmem:[#allocation2 + $0x60] sm:$0xff] %v6829
  %6894 = vst [vmem:[#allocation2 + $0x68] sm:$0xff] %v6830
  %6895 = vst [vmem:[#allocation2 + $0x70] sm:$0xff] %v6831
  %6896 = vst [vmem:[#allocation2 + $0x78] sm:$0xff] %v6832
  %6897 = vst [vmem:[#allocation2 + $0x80] sm:$0xff] %v6833
  %6898 = vst [vmem:[#allocation2 + $0x88] sm:$0xff] %v6834
  %6899 = vst [vmem:[#allocation2 + $0x90] sm:$0xff] %v6835
  %6900 = vst [vmem:[#allocation2 + $0x98] sm:$0xff] %v6836
  %6901 = vst [vmem:[#allocation2 + $0xa0] sm:$0xff] %v6837
  %6902 = vst [vmem:[#allocation2 + $0xa8] sm:$0xff] %v6838
  %6903 = vst [vmem:[#allocation2 + $0xb0] sm:$0xff] %v6839
  %6904 = vst [vmem:[#allocation2 + $0xb8] sm:$0xff] %v6840
  %6905 = vst [vmem:[#allocation2 + $0xc0] sm:$0xff] %v6841
  %6906 = vst [vmem:[#allocation2 + $0xc8] sm:$0xff] %v6842
  %6907 = vst [vmem:[#allocation2 + $0xd0] sm:$0xff] %v6843
  %6908 = vst [vmem:[#allocation2 + $0xd8] sm:$0xff] %v6844
  %6909 = vst [vmem:[#allocation2 + $0xe0] sm:$0xff] %v6845
  %6910 = vst [vmem:[#allocation2 + $0xe8] sm:$0xff] %v6846
  %6911 = vst [vmem:[#allocation2 + $0xf0] sm:$0xff] %v6847
  %6912 = vst [vmem:[#allocation2 + $0xf8] sm:$0xff] %v6848
  %6913 = vst [vmem:[#allocation2 + $0x100] sm:$0xff] %v6849
  %6914 = vst [vmem:[#allocation2 + $0x108] sm:$0xff] %v6850
  %6915 = vst [vmem:[#allocation2 + $0x110] sm:$0xff] %v6851
  %6916 = vst [vmem:[#allocation2 + $0x118] sm:$0xff] %v6852
  %6917 = vst [vmem:[#allocation2 + $0x120] sm:$0xff] %v6853
  %6918 = vst [vmem:[#allocation2 + $0x128] sm:$0xff] %v6854
  %6919 = vst [vmem:[#allocation2 + $0x130] sm:$0xff] %v6855
  %6920 = vst [vmem:[#allocation2 + $0x138] sm:$0xff] %v6856
  %6921 = vst [vmem:[#allocation2 + $0x140] sm:$0xff] %v6857
  %6922 = vst [vmem:[#allocation2 + $0x148] sm:$0xff] %v6858
  %6923 = vst [vmem:[#allocation2 + $0x150] sm:$0xff] %v6859
  %6924 = vst [vmem:[#allocation2 + $0x158] sm:$0xff] %v6860
  %6925 = vst [vmem:[#allocation2 + $0x160] sm:$0xff] %v6861
  %6926 = vst [vmem:[#allocation2 + $0x168] sm:$0xff] %v6862
  %6927 = vst [vmem:[#allocation2 + $0x170] sm:$0xff] %v6863
  %6928 = vst [vmem:[#allocation2 + $0x178] sm:$0xff] %v6864
  %6929 = vst [vmem:[#allocation2 + $0x180] sm:$0xff] %v6865
  %6930 = vst [vmem:[#allocation2 + $0x188] sm:$0xff] %v6866
  %6931 = vst [vmem:[#allocation2 + $0x190] sm:$0xff] %v6867
  %6932 = vst [vmem:[#allocation2 + $0x198] sm:$0xff] %v6868
  %6933 = vst [vmem:[#allocation2 + $0x1a0] sm:$0xff] %v6869
  %6934 = vst [vmem:[#allocation2 + $0x1a8] sm:$0xff] %v6870
  %6935 = vst [vmem:[#allocation2 + $0x1b0] sm:$0xff] %v6871
  %6936 = vst [vmem:[#allocation2 + $0x1b8] sm:$0xff] %v6872
  %6937 = vst [vmem:[#allocation2 + $0x1c0] sm:$0xff] %v6873
  %6938 = vst [vmem:[#allocation2 + $0x1c8] sm:$0xff] %v6874
  %6939 = vst [vmem:[#allocation2 + $0x1d0] sm:$0xff] %v6875
  %6940 = vst [vmem:[#allocation2 + $0x1d8] sm:$0xff] %v6876
  %6941 = vst [vmem:[#allocation2 + $0x1e0] sm:$0xff] %v6877
  %6942 = vst [vmem:[#allocation2 + $0x1e8] sm:$0xff] %v6878
  %6943 = vst [vmem:[#allocation2 + $0x1f0] sm:$0xff] %v6879
  %6944 = vst [vmem:[#allocation2 + $0x1f8] sm:$0xff] %v6880
  %s6945 = scalar_lea.vmem %s0, 24
  %v6946 = vld [vmem:[%s6945] sm:$0xf]
  %v6947 = vld [vmem:[%s6945 + $0x4] sm:$0xf]
  %v6948 = vld [vmem:[%s6945 + $0xc] sm:$0xf]
  %v6949 = vld [vmem:[%s6945 + $0x10] sm:$0xf]
  %v6950 = vld [vmem:[%s6945 + $0x18] sm:$0xf]
  %v6951 = vld [vmem:[%s6945 + $0x1c] sm:$0xf]
  %v6952 = vld [vmem:[%s6945 + $0x24] sm:$0xf]
  %v6953 = vld [vmem:[%s6945 + $0x28] sm:$0xf]
  %v6954 = vld [vmem:[%s6945 + $0x30] sm:$0xf]
  %v6955 = vld [vmem:[%s6945 + $0x34] sm:$0xf]
  %v6956 = vld [vmem:[%s6945 + $0x3c] sm:$0xf]
  %v6957 = vld [vmem:[%s6945 + $0x40] sm:$0xf]
  %v6958 = vld [vmem:[%s6945 + $0x48] sm:$0xf]
  %v6959 = vld [vmem:[%s6945 + $0x4c] sm:$0xf]
  %v6960 = vld [vmem:[%s6945 + $0x54] sm:$0xf]
  %v6961 = vld [vmem:[%s6945 + $0x58] sm:$0xf]
  %v6962 = vld [vmem:[%s6945 + $0x60] sm:$0xf]
  %v6963 = vld [vmem:[%s6945 + $0x64] sm:$0xf]
  %v6964 = vld [vmem:[%s6945 + $0x6c] sm:$0xf]
  %v6965 = vld [vmem:[%s6945 + $0x70] sm:$0xf]
  %v6966 = vld [vmem:[%s6945 + $0x78] sm:$0xf]
  %v6967 = vld [vmem:[%s6945 + $0x7c] sm:$0xf]
  %v6968 = vld [vmem:[%s6945 + $0x84] sm:$0xf]
  %v6969 = vld [vmem:[%s6945 + $0x88] sm:$0xf]
  %v6970 = vld [vmem:[%s6945 + $0x90] sm:$0xf]
  %v6971 = vld [vmem:[%s6945 + $0x94] sm:$0xf]
  %v6972 = vld [vmem:[%s6945 + $0x9c] sm:$0xf]
  %v6973 = vld [vmem:[%s6945 + $0xa0] sm:$0xf]
  %v6974 = vld [vmem:[%s6945 + $0xa8] sm:$0xf]
  %v6975 = vld [vmem:[%s6945 + $0xac] sm:$0xf]
  %v6976 = vld [vmem:[%s6945 + $0xb4] sm:$0xf]
  %v6977 = vld [vmem:[%s6945 + $0xb8] sm:$0xf]
  %v6978 = vld [vmem:[%s6945 + $0xd8] sm:$0xf]
  %v6979 = vld [vmem:[%s6945 + $0xdc] sm:$0xf]
  %v6980 = vld [vmem:[%s6945 + $0xe4] sm:$0xf]
  %v6981 = vld [vmem:[%s6945 + $0xe8] sm:$0xf]
  %v6982 = vld [vmem:[%s6945 + $0xf0] sm:$0xf]
  %v6983 = vld [vmem:[%s6945 + $0xf4] sm:$0xf]
  %v6984 = vld [vmem:[%s6945 + $0xfc] sm:$0xf]
  %v6985 = vld [vmem:[%s6945 + $0x100] sm:$0xf]
  %v6986 = vld [vmem:[%s6945 + $0x108] sm:$0xf]
  %v6987 = vld [vmem:[%s6945 + $0x10c] sm:$0xf]
  %v6988 = vld [vmem:[%s6945 + $0x114] sm:$0xf]
  %v6989 = vld [vmem:[%s6945 + $0x118] sm:$0xf]
  %v6990 = vld [vmem:[%s6945 + $0x120] sm:$0xf]
  %v6991 = vld [vmem:[%s6945 + $0x124] sm:$0xf]
  %v6992 = vld [vmem:[%s6945 + $0x12c] sm:$0xf]
  %v6993 = vld [vmem:[%s6945 + $0x130] sm:$0xf]
  %v6994 = vld [vmem:[%s6945 + $0x138] sm:$0xf]
  %v6995 = vld [vmem:[%s6945 + $0x13c] sm:$0xf]
  %v6996 = vld [vmem:[%s6945 + $0x144] sm:$0xf]
  %v6997 = vld [vmem:[%s6945 + $0x148] sm:$0xf]
  %v6998 = vld [vmem:[%s6945 + $0x150] sm:$0xf]
  %v6999 = vld [vmem:[%s6945 + $0x154] sm:$0xf]
  %v7000 = vld [vmem:[%s6945 + $0x15c] sm:$0xf]
  %v7001 = vld [vmem:[%s6945 + $0x160] sm:$0xf]
  %v7002 = vld [vmem:[%s6945 + $0x168] sm:$0xf]
  %v7003 = vld [vmem:[%s6945 + $0x16c] sm:$0xf]
  %v7004 = vld [vmem:[%s6945 + $0x174] sm:$0xf]
  %v7005 = vld [vmem:[%s6945 + $0x178] sm:$0xf]
  %v7006 = vld [vmem:[%s6945 + $0x180] sm:$0xf]
  %v7007 = vld [vmem:[%s6945 + $0x184] sm:$0xf]
  %v7008 = vld [vmem:[%s6945 + $0x18c] sm:$0xf]
  %v7009 = vld [vmem:[%s6945 + $0x190] sm:$0xf]
  %v7010 = vld [vmem:[#allocation2] sm:$0xff]
  %v7011 = vld [vmem:[#allocation2 + $0x8] sm:$0xff]
  %v7012 = vld [vmem:[#allocation2 + $0x10] sm:$0xff]
  %v7013 = vld [vmem:[#allocation2 + $0x18] sm:$0xff]
  %v7014 = vld [vmem:[#allocation2 + $0x20] sm:$0xff]
  %v7015 = vld [vmem:[#allocation2 + $0x28] sm:$0xff]
  %v7016 = vld [vmem:[#allocation2 + $0x30] sm:$0xff]
  %v7017 = vld [vmem:[#allocation2 + $0x38] sm:$0xff]
  %v7018 = vld [vmem:[#allocation2 + $0x40] sm:$0xff]
  %v7019 = vld [vmem:[#allocation2 + $0x48] sm:$0xff]
  %v7020 = vld [vmem:[#allocation2 + $0x50] sm:$0xff]
  %v7021 = vld [vmem:[#allocation2 + $0x58] sm:$0xff]
  %v7022 = vld [vmem:[#allocation2 + $0x60] sm:$0xff]
  %v7023 = vld [vmem:[#allocation2 + $0x68] sm:$0xff]
  %v7024 = vld [vmem:[#allocation2 + $0x70] sm:$0xff]
  %v7025 = vld [vmem:[#allocation2 + $0x78] sm:$0xff]
  %v7026 = vld [vmem:[#allocation2 + $0x80] sm:$0xff]
  %v7027 = vld [vmem:[#allocation2 + $0x88] sm:$0xff]
  %v7028 = vld [vmem:[#allocation2 + $0x90] sm:$0xff]
  %v7029 = vld [vmem:[#allocation2 + $0x98] sm:$0xff]
  %v7030 = vld [vmem:[#allocation2 + $0xa0] sm:$0xff]
  %v7031 = vld [vmem:[#allocation2 + $0xa8] sm:$0xff]
  %v7032 = vld [vmem:[#allocation2 + $0xb0] sm:$0xff]
  %v7033 = vld [vmem:[#allocation2 + $0xb8] sm:$0xff]
  %v7034 = vld [vmem:[#allocation2 + $0xc0] sm:$0xff]
  %v7035 = vld [vmem:[#allocation2 + $0xc8] sm:$0xff]
  %v7036 = vld [vmem:[#allocation2 + $0xd0] sm:$0xff]
  %v7037 = vld [vmem:[#allocation2 + $0xd8] sm:$0xff]
  %v7038 = vld [vmem:[#allocation2 + $0xe0] sm:$0xff]
  %v7039 = vld [vmem:[#allocation2 + $0xe8] sm:$0xff]
  %v7040 = vld [vmem:[#allocation2 + $0xf0] sm:$0xff]
  %v7041 = vld [vmem:[#allocation2 + $0xf8] sm:$0xff]
  %v7042 = vld [vmem:[#allocation2 + $0x100] sm:$0xff]
  %v7043 = vld [vmem:[#allocation2 + $0x108] sm:$0xff]
  %v7044 = vld [vmem:[#allocation2 + $0x110] sm:$0xff]
  %v7045 = vld [vmem:[#allocation2 + $0x118] sm:$0xff]
  %v7046 = vld [vmem:[#allocation2 + $0x120] sm:$0xff]
  %v7047 = vld [vmem:[#allocation2 + $0x128] sm:$0xff]
  %v7048 = vld [vmem:[#allocation2 + $0x130] sm:$0xff]
  %v7049 = vld [vmem:[#allocation2 + $0x138] sm:$0xff]
  %v7050 = vld [vmem:[#allocation2 + $0x140] sm:$0xff]
  %v7051 = vld [vmem:[#allocation2 + $0x148] sm:$0xff]
  %v7052 = vld [vmem:[#allocation2 + $0x150] sm:$0xff]
  %v7053 = vld [vmem:[#allocation2 + $0x158] sm:$0xff]
  %v7054 = vld [vmem:[#allocation2 + $0x160] sm:$0xff]
  %v7055 = vld [vmem:[#allocation2 + $0x168] sm:$0xff]
  %v7056 = vld [vmem:[#allocation2 + $0x170] sm:$0xff]
  %v7057 = vld [vmem:[#allocation2 + $0x178] sm:$0xff]
  %v7058 = vld [vmem:[#allocation2 + $0x180] sm:$0xff]
  %v7059 = vld [vmem:[#allocation2 + $0x188] sm:$0xff]
  %v7060 = vld [vmem:[#allocation2 + $0x190] sm:$0xff]
  %v7061 = vld [vmem:[#allocation2 + $0x198] sm:$0xff]
  %v7062 = vld [vmem:[#allocation2 + $0x1a0] sm:$0xff]
  %v7063 = vld [vmem:[#allocation2 + $0x1a8] sm:$0xff]
  %v7064 = vld [vmem:[#allocation2 + $0x1b0] sm:$0xff]
  %v7065 = vld [vmem:[#allocation2 + $0x1b8] sm:$0xff]
  %v7066 = vld [vmem:[#allocation2 + $0x1c0] sm:$0xff]
  %v7067 = vld [vmem:[#allocation2 + $0x1c8] sm:$0xff]
  %v7068 = vld [vmem:[#allocation2 + $0x1d0] sm:$0xff]
  %v7069 = vld [vmem:[#allocation2 + $0x1d8] sm:$0xff]
  %v7070 = vld [vmem:[#allocation2 + $0x1e0] sm:$0xff]
  %v7071 = vld [vmem:[#allocation2 + $0x1e8] sm:$0xff]
  %v7072 = vld [vmem:[#allocation2 + $0x1f0] sm:$0xff]
  %v7073 = vld [vmem:[#allocation2 + $0x1f8] sm:$0xff]
  %s7074 = scalar_lea.vmem %s1, 384
  %v7075 = vld [vmem:[%s7074] sm:$0xf]
  %v7076 = vld [vmem:[%s7074 + $0x4] sm:$0xf]
  %v7077 = vld [vmem:[%s7074 + $0x8] sm:$0xf]
  %v7078 = vld [vmem:[%s7074 + $0xc] sm:$0xf]
  %v7079 = vld [vmem:[%s7074 + $0x10] sm:$0xf]
  %v7080 = vld [vmem:[%s7074 + $0x14] sm:$0xf]
  %v7081 = vld [vmem:[%s7074 + $0x18] sm:$0xf]
  %v7082 = vld [vmem:[%s7074 + $0x1c] sm:$0xf]
  %v7083 = vld [vmem:[%s7074 + $0x20] sm:$0xf]
  %v7084 = vld [vmem:[%s7074 + $0x24] sm:$0xf]
  %v7085 = vld [vmem:[%s7074 + $0x28] sm:$0xf]
  %v7086 = vld [vmem:[%s7074 + $0x2c] sm:$0xf]
  %v7087 = vld [vmem:[%s7074 + $0x30] sm:$0xf]
  %v7088 = vld [vmem:[%s7074 + $0x34] sm:$0xf]
  %v7089 = vld [vmem:[%s7074 + $0x38] sm:$0xf]
  %v7090 = vld [vmem:[%s7074 + $0x3c] sm:$0xf]
  %v7155 = vunpack.c.l.b16 %v6946
  %v7156 = vunpack.c.l.b16 %v6947
  %v7157 = vunpack.c.l.b16 %v6948
  %v7158 = vunpack.c.l.b16 %v6949
  %v7159 = vunpack.c.l.b16 %v6950
  %v7160 = vunpack.c.l.b16 %v6951
  %v7161 = vunpack.c.l.b16 %v6952
  %v7162 = vunpack.c.l.b16 %v6953
  %v7163 = vunpack.c.l.b16 %v6954
  %v7164 = vunpack.c.l.b16 %v6955
  %v7165 = vunpack.c.l.b16 %v6956
  %v7166 = vunpack.c.l.b16 %v6957
  %v7167 = vunpack.c.l.b16 %v6958
  %v7168 = vunpack.c.l.b16 %v6959
  %v7169 = vunpack.c.l.b16 %v6960
  %v7170 = vunpack.c.l.b16 %v6961
  %v7171 = vunpack.c.l.b16 %v6962
  %v7172 = vunpack.c.l.b16 %v6963
  %v7173 = vunpack.c.l.b16 %v6964
  %v7174 = vunpack.c.l.b16 %v6965
  %v7175 = vunpack.c.l.b16 %v6966
  %v7176 = vunpack.c.l.b16 %v6967
  %v7177 = vunpack.c.l.b16 %v6968
  %v7178 = vunpack.c.l.b16 %v6969
  %v7179 = vunpack.c.l.b16 %v6970
  %v7180 = vunpack.c.l.b16 %v6971
  %v7181 = vunpack.c.l.b16 %v6972
  %v7182 = vunpack.c.l.b16 %v6973
  %v7183 = vunpack.c.l.b16 %v6974
  %v7184 = vunpack.c.l.b16 %v6975
  %v7185 = vunpack.c.l.b16 %v6976
  %v7186 = vunpack.c.l.b16 %v6977
  %v7187 = vunpack.c.l.b16 %v6978
  %v7188 = vunpack.c.l.b16 %v6979
  %v7189 = vunpack.c.l.b16 %v6980
  %v7190 = vunpack.c.l.b16 %v6981
  %v7191 = vunpack.c.l.b16 %v6982
  %v7192 = vunpack.c.l.b16 %v6983
  %v7193 = vunpack.c.l.b16 %v6984
  %v7194 = vunpack.c.l.b16 %v6985
  %v7195 = vunpack.c.l.b16 %v6986
  %v7196 = vunpack.c.l.b16 %v6987
  %v7197 = vunpack.c.l.b16 %v6988
  %v7198 = vunpack.c.l.b16 %v6989
  %v7199 = vunpack.c.l.b16 %v6990
  %v7200 = vunpack.c.l.b16 %v6991
  %v7201 = vunpack.c.l.b16 %v6992
  %v7202 = vunpack.c.l.b16 %v6993
  %v7203 = vunpack.c.l.b16 %v6994
  %v7204 = vunpack.c.l.b16 %v6995
  %v7205 = vunpack.c.l.b16 %v6996
  %v7206 = vunpack.c.l.b16 %v6997
  %v7207 = vunpack.c.l.b16 %v6998
  %v7208 = vunpack.c.l.b16 %v6999
  %v7209 = vunpack.c.l.b16 %v7000
  %v7210 = vunpack.c.l.b16 %v7001
  %v7211 = vunpack.c.l.b16 %v7002
  %v7212 = vunpack.c.l.b16 %v7003
  %v7213 = vunpack.c.l.b16 %v7004
  %v7214 = vunpack.c.l.b16 %v7005
  %v7215 = vunpack.c.l.b16 %v7006
  %v7216 = vunpack.c.l.b16 %v7007
  %v7217 = vunpack.c.l.b16 %v7008
  %v7218 = vunpack.c.l.b16 %v7009
  %v7219 = vpack.c.b16 %v7156, %v7155
  %v7220 = vpack.c.b16 %v7158, %v7157
  %v7221 = vpack.c.b16 %v7160, %v7159
  %v7222 = vpack.c.b16 %v7162, %v7161
  %v7223 = vpack.c.b16 %v7164, %v7163
  %v7224 = vpack.c.b16 %v7166, %v7165
  %v7225 = vpack.c.b16 %v7168, %v7167
  %v7226 = vpack.c.b16 %v7170, %v7169
  %v7227 = vpack.c.b16 %v7172, %v7171
  %v7228 = vpack.c.b16 %v7174, %v7173
  %v7229 = vpack.c.b16 %v7176, %v7175
  %v7230 = vpack.c.b16 %v7178, %v7177
  %v7231 = vpack.c.b16 %v7180, %v7179
  %v7232 = vpack.c.b16 %v7182, %v7181
  %v7233 = vpack.c.b16 %v7184, %v7183
  %v7234 = vpack.c.b16 %v7186, %v7185
  %v7235 = vpack.c.b16 %v7188, %v7187
  %v7236 = vpack.c.b16 %v7190, %v7189
  %v7237 = vpack.c.b16 %v7192, %v7191
  %v7238 = vpack.c.b16 %v7194, %v7193
  %v7239 = vpack.c.b16 %v7196, %v7195
  %v7240 = vpack.c.b16 %v7198, %v7197
  %v7241 = vpack.c.b16 %v7200, %v7199
  %v7242 = vpack.c.b16 %v7202, %v7201
  %v7243 = vpack.c.b16 %v7204, %v7203
  %v7244 = vpack.c.b16 %v7206, %v7205
  %v7245 = vpack.c.b16 %v7208, %v7207
  %v7246 = vpack.c.b16 %v7210, %v7209
  %v7247 = vpack.c.b16 %v7212, %v7211
  %v7248 = vpack.c.b16 %v7214, %v7213
  %v7249 = vpack.c.b16 %v7216, %v7215
  %v7250 = vpack.c.b16 %v7218, %v7217
  %v7299 = vunpack.c.l.b16 %v7075
  %v7300 = vunpack.c.l.b16 %v7076
  %v7301 = vunpack.c.l.b16 %v7077
  %v7302 = vunpack.c.l.b16 %v7078
  %v7303 = vunpack.c.l.b16 %v7079
  %v7304 = vunpack.c.l.b16 %v7080
  %v7305 = vunpack.c.l.b16 %v7081
  %v7306 = vunpack.c.l.b16 %v7082
  %v7307 = vunpack.c.l.b16 %v7083
  %v7308 = vunpack.c.l.b16 %v7084
  %v7309 = vunpack.c.l.b16 %v7085
  %v7310 = vunpack.c.l.b16 %v7086
  %v7311 = vunpack.c.l.b16 %v7087
  %v7312 = vunpack.c.l.b16 %v7088
  %v7313 = vunpack.c.l.b16 %v7089
  %v7314 = vunpack.c.l.b16 %v7090
  %v7315 = vpack.c.b16 %v7300, %v7299
  %v7316 = vpack.c.b16 %v7302, %v7301
  %v7317 = vpack.c.b16 %v7304, %v7303
  %v7318 = vpack.c.b16 %v7306, %v7305
  %v7319 = vpack.c.b16 %v7308, %v7307
  %v7320 = vpack.c.b16 %v7310, %v7309
  %v7321 = vpack.c.b16 %v7312, %v7311
  %v7322 = vpack.c.b16 %v7314, %v7313
  %7331 = vmatprep.subr.bf16.mxu0 0
  %7332 = vmatpush1.bf16.msra.mxu0 %v7322
  %7333 = vmatprep.subr.bf16.mxu0 0
  %7334 = vmatpush1.bf16.msra.mxu0 %v7321
  %7335 = vmatprep.subr.bf16.mxu0 0
  %7336 = vmatpush1.bf16.msra.mxu0 %v7320
  %7337 = vmatprep.subr.bf16.mxu0 0
  %7338 = vmatpush1.bf16.msra.mxu0 %v7319
  %7339 = vmatprep.subr.bf16.mxu0 0
  %7340 = vmatpush1.bf16.msra.mxu0 %v7318
  %7341 = vmatprep.subr.bf16.mxu0 0
  %7342 = vmatpush1.bf16.msra.mxu0 %v7317
  %7343 = vmatprep.subr.bf16.mxu0 0
  %7344 = vmatpush1.bf16.msra.mxu0 %v7316
  %7345 = vmatprep.subr.bf16.mxu0 0
  %7346 = vmatpush1.bf16.msra.mxu0 %v7315
  %7347 = vmatprep.subr.bf16.mxu0 0
  %7348 = vmatpush2.bf16.msra.mxu0 0
  %7349 = vmatprep.subr.bf16.mxu0 0
  %7350 = vmatpush2.bf16.msra.mxu0 0
  %7351 = vmatprep.subr.bf16.mxu0 0
  %7352 = vmatpush2.bf16.msra.mxu0 0
  %7353 = vmatprep.subr.bf16.mxu0 0
  %7354 = vmatpush2.bf16.msra.mxu0 0
  %7355 = vmatprep.subr.bf16.mxu0 0
  %7356 = vmatpush2.bf16.msra.mxu0 0
  %7357 = vmatprep.subr.bf16.mxu0 0
  %7358 = vmatpush2.bf16.msra.mxu0 0
  %7359 = vmatprep.subr.bf16.mxu0 0
  %7360 = vmatpush2.bf16.msra.mxu0 0
  %7361 = vmatprep.subr.bf16.mxu0 0
  %7362 = vmatpush2.bf16.msra.mxu0 0
  %7363 = vmatprep.mubr.bf16.mxu0 0
  %7364 = vmatmul.mubr.bf16.gmra.mxu0 %v7219
  %v7365 = vpop.f32.mrf.mxu0
  %v7366 = vadd.f32 0.0, %v7365
  %v7367 = vpop.f32.mrf.mxu0
  %v7368 = vpop.f32.mrf.mxu0
  %v7369 = vadd.f32 0.0, %v7368
  %v7370 = vpop.f32.mrf.mxu0
  %7371 = vmatprep.mubr.bf16.mxu0 0
  %7372 = vmatmul.mubr.bf16.gmra.mxu0 %v7220
  %v7373 = vpop.f32.mrf.mxu0
  %v7374 = vadd.f32 0.0, %v7373
  %v7375 = vpop.f32.mrf.mxu0
  %v7376 = vpop.f32.mrf.mxu0
  %v7377 = vadd.f32 0.0, %v7376
  %v7378 = vpop.f32.mrf.mxu0
  %7379 = vmatprep.mubr.bf16.mxu0 0
  %7380 = vmatmul.mubr.bf16.gmra.mxu0 %v7221
  %v7381 = vpop.f32.mrf.mxu0
  %v7382 = vadd.f32 0.0, %v7381
  %v7383 = vpop.f32.mrf.mxu0
  %v7384 = vpop.f32.mrf.mxu0
  %v7385 = vadd.f32 0.0, %v7384
  %v7386 = vpop.f32.mrf.mxu0
  %7387 = vmatprep.mubr.bf16.mxu0 0
  %7388 = vmatmul.mubr.bf16.gmra.mxu0 %v7222
  %v7389 = vpop.f32.mrf.mxu0
  %v7390 = vadd.f32 0.0, %v7389
  %v7391 = vpop.f32.mrf.mxu0
  %v7392 = vpop.f32.mrf.mxu0
  %v7393 = vadd.f32 0.0, %v7392
  %v7394 = vpop.f32.mrf.mxu0
  %7395 = vmatprep.mubr.bf16.mxu0 0
  %7396 = vmatmul.mubr.bf16.gmra.mxu0 %v7223
  %v7397 = vpop.f32.mrf.mxu0
  %v7398 = vadd.f32 0.0, %v7397
  %v7399 = vpop.f32.mrf.mxu0
  %v7400 = vpop.f32.mrf.mxu0
  %v7401 = vadd.f32 0.0, %v7400
  %v7402 = vpop.f32.mrf.mxu0
  %7403 = vmatprep.mubr.bf16.mxu0 0
  %7404 = vmatmul.mubr.bf16.gmra.mxu0 %v7224
  %v7405 = vpop.f32.mrf.mxu0
  %v7406 = vadd.f32 0.0, %v7405
  %v7407 = vpop.f32.mrf.mxu0
  %v7408 = vpop.f32.mrf.mxu0
  %v7409 = vadd.f32 0.0, %v7408
  %v7410 = vpop.f32.mrf.mxu0
  %7411 = vmatprep.mubr.bf16.mxu0 0
  %7412 = vmatmul.mubr.bf16.gmra.mxu0 %v7225
  %v7413 = vpop.f32.mrf.mxu0
  %v7414 = vadd.f32 0.0, %v7413
  %v7415 = vpop.f32.mrf.mxu0
  %v7416 = vpop.f32.mrf.mxu0
  %v7417 = vadd.f32 0.0, %v7416
  %v7418 = vpop.f32.mrf.mxu0
  %7419 = vmatprep.mubr.bf16.mxu0 0
  %7420 = vmatmul.mubr.bf16.gmra.mxu0 %v7226
  %v7421 = vpop.f32.mrf.mxu0
  %v7422 = vadd.f32 0.0, %v7421
  %v7423 = vpop.f32.mrf.mxu0
  %v7424 = vpop.f32.mrf.mxu0
  %v7425 = vadd.f32 0.0, %v7424
  %v7426 = vpop.f32.mrf.mxu0
  %7427 = vmatprep.mubr.bf16.mxu0 0
  %7428 = vmatmul.mubr.bf16.gmra.mxu0 %v7227
  %v7429 = vpop.f32.mrf.mxu0
  %v7430 = vadd.f32 0.0, %v7429
  %v7431 = vpop.f32.mrf.mxu0
  %v7432 = vpop.f32.mrf.mxu0
  %v7433 = vadd.f32 0.0, %v7432
  %v7434 = vpop.f32.mrf.mxu0
  %7435 = vmatprep.mubr.bf16.mxu0 0
  %7436 = vmatmul.mubr.bf16.gmra.mxu0 %v7228
  %v7437 = vpop.f32.mrf.mxu0
  %v7438 = vadd.f32 0.0, %v7437
  %v7439 = vpop.f32.mrf.mxu0
  %v7440 = vpop.f32.mrf.mxu0
  %v7441 = vadd.f32 0.0, %v7440
  %v7442 = vpop.f32.mrf.mxu0
  %7443 = vmatprep.mubr.bf16.mxu0 0
  %7444 = vmatmul.mubr.bf16.gmra.mxu0 %v7229
  %v7445 = vpop.f32.mrf.mxu0
  %v7446 = vadd.f32 0.0, %v7445
  %v7447 = vpop.f32.mrf.mxu0
  %v7448 = vpop.f32.mrf.mxu0
  %v7449 = vadd.f32 0.0, %v7448
  %v7450 = vpop.f32.mrf.mxu0
  %7451 = vmatprep.mubr.bf16.mxu0 0
  %7452 = vmatmul.mubr.bf16.gmra.mxu0 %v7230
  %v7453 = vpop.f32.mrf.mxu0
  %v7454 = vadd.f32 0.0, %v7453
  %v7455 = vpop.f32.mrf.mxu0
  %v7456 = vpop.f32.mrf.mxu0
  %v7457 = vadd.f32 0.0, %v7456
  %v7458 = vpop.f32.mrf.mxu0
  %7459 = vmatprep.mubr.bf16.mxu0 0
  %7460 = vmatmul.mubr.bf16.gmra.mxu0 %v7231
  %v7461 = vpop.f32.mrf.mxu0
  %v7462 = vadd.f32 0.0, %v7461
  %v7463 = vpop.f32.mrf.mxu0
  %v7464 = vpop.f32.mrf.mxu0
  %v7465 = vadd.f32 0.0, %v7464
  %v7466 = vpop.f32.mrf.mxu0
  %7467 = vmatprep.mubr.bf16.mxu0 0
  %7468 = vmatmul.mubr.bf16.gmra.mxu0 %v7232
  %v7469 = vpop.f32.mrf.mxu0
  %v7470 = vadd.f32 0.0, %v7469
  %v7471 = vpop.f32.mrf.mxu0
  %v7472 = vpop.f32.mrf.mxu0
  %v7473 = vadd.f32 0.0, %v7472
  %v7474 = vpop.f32.mrf.mxu0
  %7475 = vmatprep.mubr.bf16.mxu0 0
  %7476 = vmatmul.mubr.bf16.gmra.mxu0 %v7233
  %v7477 = vpop.f32.mrf.mxu0
  %v7478 = vadd.f32 0.0, %v7477
  %v7479 = vpop.f32.mrf.mxu0
  %v7480 = vpop.f32.mrf.mxu0
  %v7481 = vadd.f32 0.0, %v7480
  %v7482 = vpop.f32.mrf.mxu0
  %7483 = vmatprep.mubr.bf16.mxu0 0
  %7484 = vmatmul.mubr.bf16.gmra.mxu0 %v7234
  %v7485 = vpop.f32.mrf.mxu0
  %v7486 = vadd.f32 0.0, %v7485
  %v7487 = vpop.f32.mrf.mxu0
  %v7488 = vpop.f32.mrf.mxu0
  %v7489 = vadd.f32 0.0, %v7488
  %v7490 = vpop.f32.mrf.mxu0
  %7491 = vmatprep.mubr.bf16.mxu0 0
  %7492 = vmatmul.mubr.bf16.gmra.mxu0 %v7235
  %v7493 = vpop.f32.mrf.mxu0
  %v7494 = vadd.f32 0.0, %v7493
  %v7495 = vpop.f32.mrf.mxu0
  %v7496 = vpop.f32.mrf.mxu0
  %v7497 = vadd.f32 0.0, %v7496
  %v7498 = vpop.f32.mrf.mxu0
  %7499 = vmatprep.mubr.bf16.mxu0 0
  %7500 = vmatmul.mubr.bf16.gmra.mxu0 %v7236
  %v7501 = vpop.f32.mrf.mxu0
  %v7502 = vadd.f32 0.0, %v7501
  %v7503 = vpop.f32.mrf.mxu0
  %v7504 = vpop.f32.mrf.mxu0
  %v7505 = vadd.f32 0.0, %v7504
  %v7506 = vpop.f32.mrf.mxu0
  %7507 = vmatprep.mubr.bf16.mxu0 0
  %7508 = vmatmul.mubr.bf16.gmra.mxu0 %v7237
  %v7509 = vpop.f32.mrf.mxu0
  %v7510 = vadd.f32 0.0, %v7509
  %v7511 = vpop.f32.mrf.mxu0
  %v7512 = vpop.f32.mrf.mxu0
  %v7513 = vadd.f32 0.0, %v7512
  %v7514 = vpop.f32.mrf.mxu0
  %7515 = vmatprep.mubr.bf16.mxu0 0
  %7516 = vmatmul.mubr.bf16.gmra.mxu0 %v7238
  %v7517 = vpop.f32.mrf.mxu0
  %v7518 = vadd.f32 0.0, %v7517
  %v7519 = vpop.f32.mrf.mxu0
  %v7520 = vpop.f32.mrf.mxu0
  %v7521 = vadd.f32 0.0, %v7520
  %v7522 = vpop.f32.mrf.mxu0
  %7523 = vmatprep.mubr.bf16.mxu0 0
  %7524 = vmatmul.mubr.bf16.gmra.mxu0 %v7239
  %v7525 = vpop.f32.mrf.mxu0
  %v7526 = vadd.f32 0.0, %v7525
  %v7527 = vpop.f32.mrf.mxu0
  %v7528 = vpop.f32.mrf.mxu0
  %v7529 = vadd.f32 0.0, %v7528
  %v7530 = vpop.f32.mrf.mxu0
  %7531 = vmatprep.mubr.bf16.mxu0 0
  %7532 = vmatmul.mubr.bf16.gmra.mxu0 %v7240
  %v7533 = vpop.f32.mrf.mxu0
  %v7534 = vadd.f32 0.0, %v7533
  %v7535 = vpop.f32.mrf.mxu0
  %v7536 = vpop.f32.mrf.mxu0
  %v7537 = vadd.f32 0.0, %v7536
  %v7538 = vpop.f32.mrf.mxu0
  %7539 = vmatprep.mubr.bf16.mxu0 0
  %7540 = vmatmul.mubr.bf16.gmra.mxu0 %v7241
  %v7541 = vpop.f32.mrf.mxu0
  %v7542 = vadd.f32 0.0, %v7541
  %v7543 = vpop.f32.mrf.mxu0
  %v7544 = vpop.f32.mrf.mxu0
  %v7545 = vadd.f32 0.0, %v7544
  %v7546 = vpop.f32.mrf.mxu0
  %7547 = vmatprep.mubr.bf16.mxu0 0
  %7548 = vmatmul.mubr.bf16.gmra.mxu0 %v7242
  %v7549 = vpop.f32.mrf.mxu0
  %v7550 = vadd.f32 0.0, %v7549
  %v7551 = vpop.f32.mrf.mxu0
  %v7552 = vpop.f32.mrf.mxu0
  %v7553 = vadd.f32 0.0, %v7552
  %v7554 = vpop.f32.mrf.mxu0
  %7555 = vmatprep.mubr.bf16.mxu0 0
  %7556 = vmatmul.mubr.bf16.gmra.mxu0 %v7243
  %v7557 = vpop.f32.mrf.mxu0
  %v7558 = vadd.f32 0.0, %v7557
  %v7559 = vpop.f32.mrf.mxu0
  %v7560 = vpop.f32.mrf.mxu0
  %v7561 = vadd.f32 0.0, %v7560
  %v7562 = vpop.f32.mrf.mxu0
  %7563 = vmatprep.mubr.bf16.mxu0 0
  %7564 = vmatmul.mubr.bf16.gmra.mxu0 %v7244
  %v7565 = vpop.f32.mrf.mxu0
  %v7566 = vadd.f32 0.0, %v7565
  %v7567 = vpop.f32.mrf.mxu0
  %v7568 = vpop.f32.mrf.mxu0
  %v7569 = vadd.f32 0.0, %v7568
  %v7570 = vpop.f32.mrf.mxu0
  %7571 = vmatprep.mubr.bf16.mxu0 0
  %7572 = vmatmul.mubr.bf16.gmra.mxu0 %v7245
  %v7573 = vpop.f32.mrf.mxu0
  %v7574 = vadd.f32 0.0, %v7573
  %v7575 = vpop.f32.mrf.mxu0
  %v7576 = vpop.f32.mrf.mxu0
  %v7577 = vadd.f32 0.0, %v7576
  %v7578 = vpop.f32.mrf.mxu0
  %7579 = vmatprep.mubr.bf16.mxu0 0
  %7580 = vmatmul.mubr.bf16.gmra.mxu0 %v7246
  %v7581 = vpop.f32.mrf.mxu0
  %v7582 = vadd.f32 0.0, %v7581
  %v7583 = vpop.f32.mrf.mxu0
  %v7584 = vpop.f32.mrf.mxu0
  %v7585 = vadd.f32 0.0, %v7584
  %v7586 = vpop.f32.mrf.mxu0
  %7587 = vmatprep.mubr.bf16.mxu0 0
  %7588 = vmatmul.mubr.bf16.gmra.mxu0 %v7247
  %v7589 = vpop.f32.mrf.mxu0
  %v7590 = vadd.f32 0.0, %v7589
  %v7591 = vpop.f32.mrf.mxu0
  %v7592 = vpop.f32.mrf.mxu0
  %v7593 = vadd.f32 0.0, %v7592
  %v7594 = vpop.f32.mrf.mxu0
  %7595 = vmatprep.mubr.bf16.mxu0 0
  %7596 = vmatmul.mubr.bf16.gmra.mxu0 %v7248
  %v7597 = vpop.f32.mrf.mxu0
  %v7598 = vadd.f32 0.0, %v7597
  %v7599 = vpop.f32.mrf.mxu0
  %v7600 = vpop.f32.mrf.mxu0
  %v7601 = vadd.f32 0.0, %v7600
  %v7602 = vpop.f32.mrf.mxu0
  %7603 = vmatprep.mubr.bf16.mxu0 0
  %7604 = vmatmul.mubr.bf16.gmra.mxu0 %v7249
  %v7605 = vpop.f32.mrf.mxu0
  %v7606 = vadd.f32 0.0, %v7605
  %v7607 = vpop.f32.mrf.mxu0
  %v7608 = vpop.f32.mrf.mxu0
  %v7609 = vadd.f32 0.0, %v7608
  %v7610 = vpop.f32.mrf.mxu0
  %7611 = vmatprep.mubr.bf16.mxu0 0
  %7612 = vmatmul.mubr.bf16.gmra.mxu0 %v7250
  %v7613 = vpop.f32.mrf.mxu0
  %v7614 = vadd.f32 0.0, %v7613
  %v7615 = vpop.f32.mrf.mxu0
  %v7616 = vpop.f32.mrf.mxu0
  %v7617 = vadd.f32 0.0, %v7616
  %v7618 = vpop.f32.mrf.mxu0
  %7619 = vdwg.mxu0
  %v7620 = vadd.f32 %v7010, %v7366
  %v7621 = vadd.f32 %v7011, %v7369
  %v7622 = vadd.f32 %v7012, %v7374
  %v7623 = vadd.f32 %v7013, %v7377
  %v7624 = vadd.f32 %v7014, %v7382
  %v7625 = vadd.f32 %v7015, %v7385
  %v7626 = vadd.f32 %v7016, %v7390
  %v7627 = vadd.f32 %v7017, %v7393
  %v7628 = vadd.f32 %v7018, %v7398
  %v7629 = vadd.f32 %v7019, %v7401
  %v7630 = vadd.f32 %v7020, %v7406
  %v7631 = vadd.f32 %v7021, %v7409
  %v7632 = vadd.f32 %v7022, %v7414
  %v7633 = vadd.f32 %v7023, %v7417
  %v7634 = vadd.f32 %v7024, %v7422
  %v7635 = vadd.f32 %v7025, %v7425
  %v7636 = vadd.f32 %v7026, %v7430
  %v7637 = vadd.f32 %v7027, %v7433
  %v7638 = vadd.f32 %v7028, %v7438
  %v7639 = vadd.f32 %v7029, %v7441
  %v7640 = vadd.f32 %v7030, %v7446
  %v7641 = vadd.f32 %v7031, %v7449
  %v7642 = vadd.f32 %v7032, %v7454
  %v7643 = vadd.f32 %v7033, %v7457
  %v7644 = vadd.f32 %v7034, %v7462
  %v7645 = vadd.f32 %v7035, %v7465
  %v7646 = vadd.f32 %v7036, %v7470
  %v7647 = vadd.f32 %v7037, %v7473
  %v7648 = vadd.f32 %v7038, %v7478
  %v7649 = vadd.f32 %v7039, %v7481
  %v7650 = vadd.f32 %v7040, %v7486
  %v7651 = vadd.f32 %v7041, %v7489
  %v7652 = vadd.f32 %v7042, %v7494
  %v7653 = vadd.f32 %v7043, %v7497
  %v7654 = vadd.f32 %v7044, %v7502
  %v7655 = vadd.f32 %v7045, %v7505
  %v7656 = vadd.f32 %v7046, %v7510
  %v7657 = vadd.f32 %v7047, %v7513
  %v7658 = vadd.f32 %v7048, %v7518
  %v7659 = vadd.f32 %v7049, %v7521
  %v7660 = vadd.f32 %v7050, %v7526
  %v7661 = vadd.f32 %v7051, %v7529
  %v7662 = vadd.f32 %v7052, %v7534
  %v7663 = vadd.f32 %v7053, %v7537
  %v7664 = vadd.f32 %v7054, %v7542
  %v7665 = vadd.f32 %v7055, %v7545
  %v7666 = vadd.f32 %v7056, %v7550
  %v7667 = vadd.f32 %v7057, %v7553
  %v7668 = vadd.f32 %v7058, %v7558
  %v7669 = vadd.f32 %v7059, %v7561
  %v7670 = vadd.f32 %v7060, %v7566
  %v7671 = vadd.f32 %v7061, %v7569
  %v7672 = vadd.f32 %v7062, %v7574
  %v7673 = vadd.f32 %v7063, %v7577
  %v7674 = vadd.f32 %v7064, %v7582
  %v7675 = vadd.f32 %v7065, %v7585
  %v7676 = vadd.f32 %v7066, %v7590
  %v7677 = vadd.f32 %v7067, %v7593
  %v7678 = vadd.f32 %v7068, %v7598
  %v7679 = vadd.f32 %v7069, %v7601
  %v7680 = vadd.f32 %v7070, %v7606
  %v7681 = vadd.f32 %v7071, %v7609
  %v7682 = vadd.f32 %v7072, %v7614
  %v7683 = vadd.f32 %v7073, %v7617
  %7684 = vst [vmem:[#allocation2] sm:$0xff] %v7620
  %7685 = vst [vmem:[#allocation2 + $0x8] sm:$0xff] %v7621
  %7686 = vst [vmem:[#allocation2 + $0x10] sm:$0xff] %v7622
  %7687 = vst [vmem:[#allocation2 + $0x18] sm:$0xff] %v7623
  %7688 = vst [vmem:[#allocation2 + $0x20] sm:$0xff] %v7624
  %7689 = vst [vmem:[#allocation2 + $0x28] sm:$0xff] %v7625
  %7690 = vst [vmem:[#allocation2 + $0x30] sm:$0xff] %v7626
  %7691 = vst [vmem:[#allocation2 + $0x38] sm:$0xff] %v7627
  %7692 = vst [vmem:[#allocation2 + $0x40] sm:$0xff] %v7628
  %7693 = vst [vmem:[#allocation2 + $0x48] sm:$0xff] %v7629
  %7694 = vst [vmem:[#allocation2 + $0x50] sm:$0xff] %v7630
  %7695 = vst [vmem:[#allocation2 + $0x58] sm:$0xff] %v7631
  %7696 = vst [vmem:[#allocation2 + $0x60] sm:$0xff] %v7632
  %7697 = vst [vmem:[#allocation2 + $0x68] sm:$0xff] %v7633
  %7698 = vst [vmem:[#allocation2 + $0x70] sm:$0xff] %v7634
  %7699 = vst [vmem:[#allocation2 + $0x78] sm:$0xff] %v7635
  %7700 = vst [vmem:[#allocation2 + $0x80] sm:$0xff] %v7636
  %7701 = vst [vmem:[#allocation2 + $0x88] sm:$0xff] %v7637
  %7702 = vst [vmem:[#allocation2 + $0x90] sm:$0xff] %v7638
  %7703 = vst [vmem:[#allocation2 + $0x98] sm:$0xff] %v7639
  %7704 = vst [vmem:[#allocation2 + $0xa0] sm:$0xff] %v7640
  %7705 = vst [vmem:[#allocation2 + $0xa8] sm:$0xff] %v7641
  %7706 = vst [vmem:[#allocation2 + $0xb0] sm:$0xff] %v7642
  %7707 = vst [vmem:[#allocation2 + $0xb8] sm:$0xff] %v7643
  %7708 = vst [vmem:[#allocation2 + $0xc0] sm:$0xff] %v7644
  %7709 = vst [vmem:[#allocation2 + $0xc8] sm:$0xff] %v7645
  %7710 = vst [vmem:[#allocation2 + $0xd0] sm:$0xff] %v7646
  %7711 = vst [vmem:[#allocation2 + $0xd8] sm:$0xff] %v7647
  %7712 = vst [vmem:[#allocation2 + $0xe0] sm:$0xff] %v7648
  %7713 = vst [vmem:[#allocation2 + $0xe8] sm:$0xff] %v7649
  %7714 = vst [vmem:[#allocation2 + $0xf0] sm:$0xff] %v7650
  %7715 = vst [vmem:[#allocation2 + $0xf8] sm:$0xff] %v7651
  %7716 = vst [vmem:[#allocation2 + $0x100] sm:$0xff] %v7652
  %7717 = vst [vmem:[#allocation2 + $0x108] sm:$0xff] %v7653
  %7718 = vst [vmem:[#allocation2 + $0x110] sm:$0xff] %v7654
  %7719 = vst [vmem:[#allocation2 + $0x118] sm:$0xff] %v7655
  %7720 = vst [vmem:[#allocation2 + $0x120] sm:$0xff] %v7656
  %7721 = vst [vmem:[#allocation2 + $0x128] sm:$0xff] %v7657
  %7722 = vst [vmem:[#allocation2 + $0x130] sm:$0xff] %v7658
  %7723 = vst [vmem:[#allocation2 + $0x138] sm:$0xff] %v7659
  %7724 = vst [vmem:[#allocation2 + $0x140] sm:$0xff] %v7660
  %7725 = vst [vmem:[#allocation2 + $0x148] sm:$0xff] %v7661
  %7726 = vst [vmem:[#allocation2 + $0x150] sm:$0xff] %v7662
  %7727 = vst [vmem:[#allocation2 + $0x158] sm:$0xff] %v7663
  %7728 = vst [vmem:[#allocation2 + $0x160] sm:$0xff] %v7664
  %7729 = vst [vmem:[#allocation2 + $0x168] sm:$0xff] %v7665
  %7730 = vst [vmem:[#allocation2 + $0x170] sm:$0xff] %v7666
  %7731 = vst [vmem:[#allocation2 + $0x178] sm:$0xff] %v7667
  %7732 = vst [vmem:[#allocation2 + $0x180] sm:$0xff] %v7668
  %7733 = vst [vmem:[#allocation2 + $0x188] sm:$0xff] %v7669
  %7734 = vst [vmem:[#allocation2 + $0x190] sm:$0xff] %v7670
  %7735 = vst [vmem:[#allocation2 + $0x198] sm:$0xff] %v7671
  %7736 = vst [vmem:[#allocation2 + $0x1a0] sm:$0xff] %v7672
  %7737 = vst [vmem:[#allocation2 + $0x1a8] sm:$0xff] %v7673
  %7738 = vst [vmem:[#allocation2 + $0x1b0] sm:$0xff] %v7674
  %7739 = vst [vmem:[#allocation2 + $0x1b8] sm:$0xff] %v7675
  %7740 = vst [vmem:[#allocation2 + $0x1c0] sm:$0xff] %v7676
  %7741 = vst [vmem:[#allocation2 + $0x1c8] sm:$0xff] %v7677
  %7742 = vst [vmem:[#allocation2 + $0x1d0] sm:$0xff] %v7678
  %7743 = vst [vmem:[#allocation2 + $0x1d8] sm:$0xff] %v7679
  %7744 = vst [vmem:[#allocation2 + $0x1e0] sm:$0xff] %v7680
  %7745 = vst [vmem:[#allocation2 + $0x1e8] sm:$0xff] %v7681
  %7746 = vst [vmem:[#allocation2 + $0x1f0] sm:$0xff] %v7682
  %7747 = vst [vmem:[#allocation2 + $0x1f8] sm:$0xff] %v7683
  %v7748 = vld [vmem:[%s6945] sm:$0xf]
  %v7749 = vld [vmem:[%s6945 + $0x4] sm:$0xf]
  %v7750 = vld [vmem:[%s6945 + $0x8] sm:$0x1]
  %v7751 = vld [vmem:[%s6945 + $0xc] sm:$0xf]
  %v7752 = vld [vmem:[%s6945 + $0x10] sm:$0xf]
  %v7753 = vld [vmem:[%s6945 + $0x14] sm:$0x1]
  %v7754 = vld [vmem:[%s6945 + $0x18] sm:$0xf]
  %v7755 = vld [vmem:[%s6945 + $0x1c] sm:$0xf]
  %v7756 = vld [vmem:[%s6945 + $0x20] sm:$0x1]
  %v7757 = vld [vmem:[%s6945 + $0x24] sm:$0xf]
  %v7758 = vld [vmem:[%s6945 + $0x28] sm:$0xf]
  %v7759 = vld [vmem:[%s6945 + $0x2c] sm:$0x1]
  %v7760 = vld [vmem:[%s6945 + $0x30] sm:$0xf]
  %v7761 = vld [vmem:[%s6945 + $0x34] sm:$0xf]
  %v7762 = vld [vmem:[%s6945 + $0x38] sm:$0x1]
  %v7763 = vld [vmem:[%s6945 + $0x3c] sm:$0xf]
  %v7764 = vld [vmem:[%s6945 + $0x40] sm:$0xf]
  %v7765 = vld [vmem:[%s6945 + $0x44] sm:$0x1]
  %v7766 = vld [vmem:[%s6945 + $0x48] sm:$0xf]
  %v7767 = vld [vmem:[%s6945 + $0x4c] sm:$0xf]
  %v7768 = vld [vmem:[%s6945 + $0x50] sm:$0x1]
  %v7769 = vld [vmem:[%s6945 + $0x54] sm:$0xf]
  %v7770 = vld [vmem:[%s6945 + $0x58] sm:$0xf]
  %v7771 = vld [vmem:[%s6945 + $0x5c] sm:$0x1]
  %v7772 = vld [vmem:[%s6945 + $0x60] sm:$0xf]
  %v7773 = vld [vmem:[%s6945 + $0x64] sm:$0xf]
  %v7774 = vld [vmem:[%s6945 + $0x68] sm:$0x1]
  %v7775 = vld [vmem:[%s6945 + $0x6c] sm:$0xf]
  %v7776 = vld [vmem:[%s6945 + $0x70] sm:$0xf]
  %v7777 = vld [vmem:[%s6945 + $0x74] sm:$0x1]
  %v7778 = vld [vmem:[%s6945 + $0x78] sm:$0xf]
  %v7779 = vld [vmem:[%s6945 + $0x7c] sm:$0xf]
  %v7780 = vld [vmem:[%s6945 + $0x80] sm:$0x1]
  %v7781 = vld [vmem:[%s6945 + $0x84] sm:$0xf]
  %v7782 = vld [vmem:[%s6945 + $0x88] sm:$0xf]
  %v7783 = vld [vmem:[%s6945 + $0x8c] sm:$0x1]
  %v7784 = vld [vmem:[%s6945 + $0x90] sm:$0xf]
  %v7785 = vld [vmem:[%s6945 + $0x94] sm:$0xf]
  %v7786 = vld [vmem:[%s6945 + $0x98] sm:$0x1]
  %v7787 = vld [vmem:[%s6945 + $0x9c] sm:$0xf]
  %v7788 = vld [vmem:[%s6945 + $0xa0] sm:$0xf]
  %v7789 = vld [vmem:[%s6945 + $0xa4] sm:$0x1]
  %v7790 = vld [vmem:[%s6945 + $0xa8] sm:$0xf]
  %v7791 = vld [vmem:[%s6945 + $0xac] sm:$0xf]
  %v7792 = vld [vmem:[%s6945 + $0xb0] sm:$0x1]
  %v7793 = vld [vmem:[%s6945 + $0xb4] sm:$0xf]
  %v7794 = vld [vmem:[%s6945 + $0xb8] sm:$0xf]
  %v7795 = vld [vmem:[%s6945 + $0xbc] sm:$0x1]
  %v7796 = vld [vmem:[%s6945 + $0xd8] sm:$0xf]
  %v7797 = vld [vmem:[%s6945 + $0xdc] sm:$0xf]
  %v7798 = vld [vmem:[%s6945 + $0xe0] sm:$0x1]
  %v7799 = vld [vmem:[%s6945 + $0xe4] sm:$0xf]
  %v7800 = vld [vmem:[%s6945 + $0xe8] sm:$0xf]
  %v7801 = vld [vmem:[%s6945 + $0xec] sm:$0x1]
  %v7802 = vld [vmem:[%s6945 + $0xf0] sm:$0xf]
  %v7803 = vld [vmem:[%s6945 + $0xf4] sm:$0xf]
  %v7804 = vld [vmem:[%s6945 + $0xf8] sm:$0x1]
  %v7805 = vld [vmem:[%s6945 + $0xfc] sm:$0xf]
  %v7806 = vld [vmem:[%s6945 + $0x100] sm:$0xf]
  %v7807 = vld [vmem:[%s6945 + $0x104] sm:$0x1]
  %v7808 = vld [vmem:[%s6945 + $0x108] sm:$0xf]
  %v7809 = vld [vmem:[%s6945 + $0x10c] sm:$0xf]
  %v7810 = vld [vmem:[%s6945 + $0x110] sm:$0x1]
  %v7811 = vld [vmem:[%s6945 + $0x114] sm:$0xf]
  %v7812 = vld [vmem:[%s6945 + $0x118] sm:$0xf]
  %v7813 = vld [vmem:[%s6945 + $0x11c] sm:$0x1]
  %v7814 = vld [vmem:[%s6945 + $0x120] sm:$0xf]
  %v7815 = vld [vmem:[%s6945 + $0x124] sm:$0xf]
  %v7816 = vld [vmem:[%s6945 + $0x128] sm:$0x1]
  %v7817 = vld [vmem:[%s6945 + $0x12c] sm:$0xf]
  %v7818 = vld [vmem:[%s6945 + $0x130] sm:$0xf]
  %v7819 = vld [vmem:[%s6945 + $0x134] sm:$0x1]
  %v7820 = vld [vmem:[%s6945 + $0x138] sm:$0xf]
  %v7821 = vld [vmem:[%s6945 + $0x13c] sm:$0xf]
  %v7822 = vld [vmem:[%s6945 + $0x140] sm:$0x1]
  %v7823 = vld [vmem:[%s6945 + $0x144] sm:$0xf]
  %v7824 = vld [vmem:[%s6945 + $0x148] sm:$0xf]
  %v7825 = vld [vmem:[%s6945 + $0x14c] sm:$0x1]
  %v7826 = vld [vmem:[%s6945 + $0x150] sm:$0xf]
  %v7827 = vld [vmem:[%s6945 + $0x154] sm:$0xf]
  %v7828 = vld [vmem:[%s6945 + $0x158] sm:$0x1]
  %v7829 = vld [vmem:[%s6945 + $0x15c] sm:$0xf]
  %v7830 = vld [vmem:[%s6945 + $0x160] sm:$0xf]
  %v7831 = vld [vmem:[%s6945 + $0x164] sm:$0x1]
  %v7832 = vld [vmem:[%s6945 + $0x168] sm:$0xf]
  %v7833 = vld [vmem:[%s6945 + $0x16c] sm:$0xf]
  %v7834 = vld [vmem:[%s6945 + $0x170] sm:$0x1]
  %v7835 = vld [vmem:[%s6945 + $0x174] sm:$0xf]
  %v7836 = vld [vmem:[%s6945 + $0x178] sm:$0xf]
  %v7837 = vld [vmem:[%s6945 + $0x17c] sm:$0x1]
  %v7838 = vld [vmem:[%s6945 + $0x180] sm:$0xf]
  %v7839 = vld [vmem:[%s6945 + $0x184] sm:$0xf]
  %v7840 = vld [vmem:[%s6945 + $0x188] sm:$0x1]
  %v7841 = vld [vmem:[%s6945 + $0x18c] sm:$0xf]
  %v7842 = vld [vmem:[%s6945 + $0x190] sm:$0xf]
  %v7843 = vld [vmem:[%s6945 + $0x194] sm:$0x1]
  %v7845 = vshrl.u32 %v7748, 16
  %v7847 = vrot.slane %v7845, 4
  %v7848 = vshll.u32 %v7748, 16
  %v7850 = vrot.slane %v7848, 5
  %v7851 = vor.u32 %v7847, %v7850
  %v7852 = vrot.slane %v7851, 4
  %v7854 = vshll.u32 %v7749, 16
  %v7856 = vrot.slane %v7854, 5
  %v7857 = vsel %vm978, %v7852, %v7856
  %v7858 = vshrl.u32 %v7749, 16
  %v7860 = vrot.slane %v7858, 4
  %v7861 = vor.u32 %v7860, %v7856
  %v7862 = vrot.slane %v7861, 4
  %v7864 = vshll.u32 %v7750, 16
  %v7866 = vrot.slane %v7864, 5
  %v7867 = vsel %vm978, %v7862, %v7866
  %v7869 = vshrl.u32 %v7751, 16
  %v7871 = vrot.slane %v7869, 4
  %v7872 = vshll.u32 %v7751, 16
  %v7874 = vrot.slane %v7872, 5
  %v7875 = vor.u32 %v7871, %v7874
  %v7876 = vrot.slane %v7875, 4
  %v7878 = vshll.u32 %v7752, 16
  %v7880 = vrot.slane %v7878, 5
  %v7881 = vsel %vm978, %v7876, %v7880
  %v7882 = vshrl.u32 %v7752, 16
  %v7884 = vrot.slane %v7882, 4
  %v7885 = vor.u32 %v7884, %v7880
  %v7886 = vrot.slane %v7885, 4
  %v7888 = vshll.u32 %v7753, 16
  %v7890 = vrot.slane %v7888, 5
  %v7891 = vsel %vm978, %v7886, %v7890
  %v7893 = vshrl.u32 %v7754, 16
  %v7895 = vrot.slane %v7893, 4
  %v7896 = vshll.u32 %v7754, 16
  %v7898 = vrot.slane %v7896, 5
  %v7899 = vor.u32 %v7895, %v7898
  %v7900 = vrot.slane %v7899, 4
  %v7902 = vshll.u32 %v7755, 16
  %v7904 = vrot.slane %v7902, 5
  %v7905 = vsel %vm978, %v7900, %v7904
  %v7906 = vshrl.u32 %v7755, 16
  %v7908 = vrot.slane %v7906, 4
  %v7909 = vor.u32 %v7908, %v7904
  %v7910 = vrot.slane %v7909, 4
  %v7912 = vshll.u32 %v7756, 16
  %v7914 = vrot.slane %v7912, 5
  %v7915 = vsel %vm978, %v7910, %v7914
  %v7917 = vshrl.u32 %v7757, 16
  %v7919 = vrot.slane %v7917, 4
  %v7920 = vshll.u32 %v7757, 16
  %v7922 = vrot.slane %v7920, 5
  %v7923 = vor.u32 %v7919, %v7922
  %v7924 = vrot.slane %v7923, 4
  %v7926 = vshll.u32 %v7758, 16
  %v7928 = vrot.slane %v7926, 5
  %v7929 = vsel %vm978, %v7924, %v7928
  %v7930 = vshrl.u32 %v7758, 16
  %v7932 = vrot.slane %v7930, 4
  %v7933 = vor.u32 %v7932, %v7928
  %v7934 = vrot.slane %v7933, 4
  %v7936 = vshll.u32 %v7759, 16
  %v7938 = vrot.slane %v7936, 5
  %v7939 = vsel %vm978, %v7934, %v7938
  %v7941 = vshrl.u32 %v7760, 16
  %v7943 = vrot.slane %v7941, 4
  %v7944 = vshll.u32 %v7760, 16
  %v7946 = vrot.slane %v7944, 5
  %v7947 = vor.u32 %v7943, %v7946
  %v7948 = vrot.slane %v7947, 4
  %v7950 = vshll.u32 %v7761, 16
  %v7952 = vrot.slane %v7950, 5
  %v7953 = vsel %vm978, %v7948, %v7952
  %v7954 = vshrl.u32 %v7761, 16
  %v7956 = vrot.slane %v7954, 4
  %v7957 = vor.u32 %v7956, %v7952
  %v7958 = vrot.slane %v7957, 4
  %v7960 = vshll.u32 %v7762, 16
  %v7962 = vrot.slane %v7960, 5
  %v7963 = vsel %vm978, %v7958, %v7962
  %v7965 = vshrl.u32 %v7763, 16
  %v7967 = vrot.slane %v7965, 4
  %v7968 = vshll.u32 %v7763, 16
  %v7970 = vrot.slane %v7968, 5
  %v7971 = vor.u32 %v7967, %v7970
  %v7972 = vrot.slane %v7971, 4
  %v7974 = vshll.u32 %v7764, 16
  %v7976 = vrot.slane %v7974, 5
  %v7977 = vsel %vm978, %v7972, %v7976
  %v7978 = vshrl.u32 %v7764, 16
  %v7980 = vrot.slane %v7978, 4
  %v7981 = vor.u32 %v7980, %v7976
  %v7982 = vrot.slane %v7981, 4
  %v7984 = vshll.u32 %v7765, 16
  %v7986 = vrot.slane %v7984, 5
  %v7987 = vsel %vm978, %v7982, %v7986
  %v7989 = vshrl.u32 %v7766, 16
  %v7991 = vrot.slane %v7989, 4
  %v7992 = vshll.u32 %v7766, 16
  %v7994 = vrot.slane %v7992, 5
  %v7995 = vor.u32 %v7991, %v7994
  %v7996 = vrot.slane %v7995, 4
  %v7998 = vshll.u32 %v7767, 16
  %v8000 = vrot.slane %v7998, 5
  %v8001 = vsel %vm978, %v7996, %v8000
  %v8002 = vshrl.u32 %v7767, 16
  %v8004 = vrot.slane %v8002, 4
  %v8005 = vor.u32 %v8004, %v8000
  %v8006 = vrot.slane %v8005, 4
  %v8008 = vshll.u32 %v7768, 16
  %v8010 = vrot.slane %v8008, 5
  %v8011 = vsel %vm978, %v8006, %v8010
  %v8013 = vshrl.u32 %v7769, 16
  %v8015 = vrot.slane %v8013, 4
  %v8016 = vshll.u32 %v7769, 16
  %v8018 = vrot.slane %v8016, 5
  %v8019 = vor.u32 %v8015, %v8018
  %v8020 = vrot.slane %v8019, 4
  %v8022 = vshll.u32 %v7770, 16
  %v8024 = vrot.slane %v8022, 5
  %v8025 = vsel %vm978, %v8020, %v8024
  %v8026 = vshrl.u32 %v7770, 16
  %v8028 = vrot.slane %v8026, 4
  %v8029 = vor.u32 %v8028, %v8024
  %v8030 = vrot.slane %v8029, 4
  %v8032 = vshll.u32 %v7771, 16
  %v8034 = vrot.slane %v8032, 5
  %v8035 = vsel %vm978, %v8030, %v8034
  %v8037 = vshrl.u32 %v7772, 16
  %v8039 = vrot.slane %v8037, 4
  %v8040 = vshll.u32 %v7772, 16
  %v8042 = vrot.slane %v8040, 5
  %v8043 = vor.u32 %v8039, %v8042
  %v8044 = vrot.slane %v8043, 4
  %v8046 = vshll.u32 %v7773, 16
  %v8048 = vrot.slane %v8046, 5
  %v8049 = vsel %vm978, %v8044, %v8048
  %v8050 = vshrl.u32 %v7773, 16
  %v8052 = vrot.slane %v8050, 4
  %v8053 = vor.u32 %v8052, %v8048
  %v8054 = vrot.slane %v8053, 4
  %v8056 = vshll.u32 %v7774, 16
  %v8058 = vrot.slane %v8056, 5
  %v8059 = vsel %vm978, %v8054, %v8058
  %v8061 = vshrl.u32 %v7775, 16
  %v8063 = vrot.slane %v8061, 4
  %v8064 = vshll.u32 %v7775, 16
  %v8066 = vrot.slane %v8064, 5
  %v8067 = vor.u32 %v8063, %v8066
  %v8068 = vrot.slane %v8067, 4
  %v8070 = vshll.u32 %v7776, 16
  %v8072 = vrot.slane %v8070, 5
  %v8073 = vsel %vm978, %v8068, %v8072
  %v8074 = vshrl.u32 %v7776, 16
  %v8076 = vrot.slane %v8074, 4
  %v8077 = vor.u32 %v8076, %v8072
  %v8078 = vrot.slane %v8077, 4
  %v8080 = vshll.u32 %v7777, 16
  %v8082 = vrot.slane %v8080, 5
  %v8083 = vsel %vm978, %v8078, %v8082
  %v8085 = vshrl.u32 %v7778, 16
  %v8087 = vrot.slane %v8085, 4
  %v8088 = vshll.u32 %v7778, 16
  %v8090 = vrot.slane %v8088, 5
  %v8091 = vor.u32 %v8087, %v8090
  %v8092 = vrot.slane %v8091, 4
  %v8094 = vshll.u32 %v7779, 16
  %v8096 = vrot.slane %v8094, 5
  %v8097 = vsel %vm978, %v8092, %v8096
  %v8098 = vshrl.u32 %v7779, 16
  %v8100 = vrot.slane %v8098, 4
  %v8101 = vor.u32 %v8100, %v8096
  %v8102 = vrot.slane %v8101, 4
  %v8104 = vshll.u32 %v7780, 16
  %v8106 = vrot.slane %v8104, 5
  %v8107 = vsel %vm978, %v8102, %v8106
  %v8109 = vshrl.u32 %v7781, 16
  %v8111 = vrot.slane %v8109, 4
  %v8112 = vshll.u32 %v7781, 16
  %v8114 = vrot.slane %v8112, 5
  %v8115 = vor.u32 %v8111, %v8114
  %v8116 = vrot.slane %v8115, 4
  %v8118 = vshll.u32 %v7782, 16
  %v8120 = vrot.slane %v8118, 5
  %v8121 = vsel %vm978, %v8116, %v8120
  %v8122 = vshrl.u32 %v7782, 16
  %v8124 = vrot.slane %v8122, 4
  %v8125 = vor.u32 %v8124, %v8120
  %v8126 = vrot.slane %v8125, 4
  %v8128 = vshll.u32 %v7783, 16
  %v8130 = vrot.slane %v8128, 5
  %v8131 = vsel %vm978, %v8126, %v8130
  %v8133 = vshrl.u32 %v7784, 16
  %v8135 = vrot.slane %v8133, 4
  %v8136 = vshll.u32 %v7784, 16
  %v8138 = vrot.slane %v8136, 5
  %v8139 = vor.u32 %v8135, %v8138
  %v8140 = vrot.slane %v8139, 4
  %v8142 = vshll.u32 %v7785, 16
  %v8144 = vrot.slane %v8142, 5
  %v8145 = vsel %vm978, %v8140, %v8144
  %v8146 = vshrl.u32 %v7785, 16
  %v8148 = vrot.slane %v8146, 4
  %v8149 = vor.u32 %v8148, %v8144
  %v8150 = vrot.slane %v8149, 4
  %v8152 = vshll.u32 %v7786, 16
  %v8154 = vrot.slane %v8152, 5
  %v8155 = vsel %vm978, %v8150, %v8154
  %v8157 = vshrl.u32 %v7787, 16
  %v8159 = vrot.slane %v8157, 4
  %v8160 = vshll.u32 %v7787, 16
  %v8162 = vrot.slane %v8160, 5
  %v8163 = vor.u32 %v8159, %v8162
  %v8164 = vrot.slane %v8163, 4
  %v8166 = vshll.u32 %v7788, 16
  %v8168 = vrot.slane %v8166, 5
  %v8169 = vsel %vm978, %v8164, %v8168
  %v8170 = vshrl.u32 %v7788, 16
  %v8172 = vrot.slane %v8170, 4
  %v8173 = vor.u32 %v8172, %v8168
  %v8174 = vrot.slane %v8173, 4
  %v8176 = vshll.u32 %v7789, 16
  %v8178 = vrot.slane %v8176, 5
  %v8179 = vsel %vm978, %v8174, %v8178
  %v8181 = vshrl.u32 %v7790, 16
  %v8183 = vrot.slane %v8181, 4
  %v8184 = vshll.u32 %v7790, 16
  %v8186 = vrot.slane %v8184, 5
  %v8187 = vor.u32 %v8183, %v8186
  %v8188 = vrot.slane %v8187, 4
  %v8190 = vshll.u32 %v7791, 16
  %v8192 = vrot.slane %v8190, 5
  %v8193 = vsel %vm978, %v8188, %v8192
  %v8194 = vshrl.u32 %v7791, 16
  %v8196 = vrot.slane %v8194, 4
  %v8197 = vor.u32 %v8196, %v8192
  %v8198 = vrot.slane %v8197, 4
  %v8200 = vshll.u32 %v7792, 16
  %v8202 = vrot.slane %v8200, 5
  %v8203 = vsel %vm978, %v8198, %v8202
  %v8205 = vshrl.u32 %v7793, 16
  %v8207 = vrot.slane %v8205, 4
  %v8208 = vshll.u32 %v7793, 16
  %v8210 = vrot.slane %v8208, 5
  %v8211 = vor.u32 %v8207, %v8210
  %v8212 = vrot.slane %v8211, 4
  %v8214 = vshll.u32 %v7794, 16
  %v8216 = vrot.slane %v8214, 5
  %v8217 = vsel %vm978, %v8212, %v8216
  %v8218 = vshrl.u32 %v7794, 16
  %v8220 = vrot.slane %v8218, 4
  %v8221 = vor.u32 %v8220, %v8216
  %v8222 = vrot.slane %v8221, 4
  %v8224 = vshll.u32 %v7795, 16
  %v8226 = vrot.slane %v8224, 5
  %v8227 = vsel %vm978, %v8222, %v8226
  %v8229 = vshrl.u32 %v7796, 16
  %v8231 = vrot.slane %v8229, 4
  %v8232 = vshll.u32 %v7796, 16
  %v8234 = vrot.slane %v8232, 5
  %v8235 = vor.u32 %v8231, %v8234
  %v8236 = vrot.slane %v8235, 4
  %v8238 = vshll.u32 %v7797, 16
  %v8240 = vrot.slane %v8238, 5
  %v8241 = vsel %vm978, %v8236, %v8240
  %v8242 = vshrl.u32 %v7797, 16
  %v8244 = vrot.slane %v8242, 4
  %v8245 = vor.u32 %v8244, %v8240
  %v8246 = vrot.slane %v8245, 4
  %v8248 = vshll.u32 %v7798, 16
  %v8250 = vrot.slane %v8248, 5
  %v8251 = vsel %vm978, %v8246, %v8250
  %v8253 = vshrl.u32 %v7799, 16
  %v8255 = vrot.slane %v8253, 4
  %v8256 = vshll.u32 %v7799, 16
  %v8258 = vrot.slane %v8256, 5
  %v8259 = vor.u32 %v8255, %v8258
  %v8260 = vrot.slane %v8259, 4
  %v8262 = vshll.u32 %v7800, 16
  %v8264 = vrot.slane %v8262, 5
  %v8265 = vsel %vm978, %v8260, %v8264
  %v8266 = vshrl.u32 %v7800, 16
  %v8268 = vrot.slane %v8266, 4
  %v8269 = vor.u32 %v8268, %v8264
  %v8270 = vrot.slane %v8269, 4
  %v8272 = vshll.u32 %v7801, 16
  %v8274 = vrot.slane %v8272, 5
  %v8275 = vsel %vm978, %v8270, %v8274
  %v8277 = vshrl.u32 %v7802, 16
  %v8279 = vrot.slane %v8277, 4
  %v8280 = vshll.u32 %v7802, 16
  %v8282 = vrot.slane %v8280, 5
  %v8283 = vor.u32 %v8279, %v8282
  %v8284 = vrot.slane %v8283, 4
  %v8286 = vshll.u32 %v7803, 16
  %v8288 = vrot.slane %v8286, 5
  %v8289 = vsel %vm978, %v8284, %v8288
  %v8290 = vshrl.u32 %v7803, 16
  %v8292 = vrot.slane %v8290, 4
  %v8293 = vor.u32 %v8292, %v8288
  %v8294 = vrot.slane %v8293, 4
  %v8296 = vshll.u32 %v7804, 16
  %v8298 = vrot.slane %v8296, 5
  %v8299 = vsel %vm978, %v8294, %v8298
  %v8301 = vshrl.u32 %v7805, 16
  %v8303 = vrot.slane %v8301, 4
  %v8304 = vshll.u32 %v7805, 16
  %v8306 = vrot.slane %v8304, 5
  %v8307 = vor.u32 %v8303, %v8306
  %v8308 = vrot.slane %v8307, 4
  %v8310 = vshll.u32 %v7806, 16
  %v8312 = vrot.slane %v8310, 5
  %v8313 = vsel %vm978, %v8308, %v8312
  %v8314 = vshrl.u32 %v7806, 16
  %v8316 = vrot.slane %v8314, 4
  %v8317 = vor.u32 %v8316, %v8312
  %v8318 = vrot.slane %v8317, 4
  %v8320 = vshll.u32 %v7807, 16
  %v8322 = vrot.slane %v8320, 5
  %v8323 = vsel %vm978, %v8318, %v8322
  %v8325 = vshrl.u32 %v7808, 16
  %v8327 = vrot.slane %v8325, 4
  %v8328 = vshll.u32 %v7808, 16
  %v8330 = vrot.slane %v8328, 5
  %v8331 = vor.u32 %v8327, %v8330
  %v8332 = vrot.slane %v8331, 4
  %v8334 = vshll.u32 %v7809, 16
  %v8336 = vrot.slane %v8334, 5
  %v8337 = vsel %vm978, %v8332, %v8336
  %v8338 = vshrl.u32 %v7809, 16
  %v8340 = vrot.slane %v8338, 4
  %v8341 = vor.u32 %v8340, %v8336
  %v8342 = vrot.slane %v8341, 4
  %v8344 = vshll.u32 %v7810, 16
  %v8346 = vrot.slane %v8344, 5
  %v8347 = vsel %vm978, %v8342, %v8346
  %v8349 = vshrl.u32 %v7811, 16
  %v8351 = vrot.slane %v8349, 4
  %v8352 = vshll.u32 %v7811, 16
  %v8354 = vrot.slane %v8352, 5
  %v8355 = vor.u32 %v8351, %v8354
  %v8356 = vrot.slane %v8355, 4
  %v8358 = vshll.u32 %v7812, 16
  %v8360 = vrot.slane %v8358, 5
  %v8361 = vsel %vm978, %v8356, %v8360
  %v8362 = vshrl.u32 %v7812, 16
  %v8364 = vrot.slane %v8362, 4
  %v8365 = vor.u32 %v8364, %v8360
  %v8366 = vrot.slane %v8365, 4
  %v8368 = vshll.u32 %v7813, 16
  %v8370 = vrot.slane %v8368, 5
  %v8371 = vsel %vm978, %v8366, %v8370
  %v8373 = vshrl.u32 %v7814, 16
  %v8375 = vrot.slane %v8373, 4
  %v8376 = vshll.u32 %v7814, 16
  %v8378 = vrot.slane %v8376, 5
  %v8379 = vor.u32 %v8375, %v8378
  %v8380 = vrot.slane %v8379, 4
  %v8382 = vshll.u32 %v7815, 16
  %v8384 = vrot.slane %v8382, 5
  %v8385 = vsel %vm978, %v8380, %v8384
  %v8386 = vshrl.u32 %v7815, 16
  %v8388 = vrot.slane %v8386, 4
  %v8389 = vor.u32 %v8388, %v8384
  %v8390 = vrot.slane %v8389, 4
  %v8392 = vshll.u32 %v7816, 16
  %v8394 = vrot.slane %v8392, 5
  %v8395 = vsel %vm978, %v8390, %v8394
  %v8397 = vshrl.u32 %v7817, 16
  %v8399 = vrot.slane %v8397, 4
  %v8400 = vshll.u32 %v7817, 16
  %v8402 = vrot.slane %v8400, 5
  %v8403 = vor.u32 %v8399, %v8402
  %v8404 = vrot.slane %v8403, 4
  %v8406 = vshll.u32 %v7818, 16
  %v8408 = vrot.slane %v8406, 5
  %v8409 = vsel %vm978, %v8404, %v8408
  %v8410 = vshrl.u32 %v7818, 16
  %v8412 = vrot.slane %v8410, 4
  %v8413 = vor.u32 %v8412, %v8408
  %v8414 = vrot.slane %v8413, 4
  %v8416 = vshll.u32 %v7819, 16
  %v8418 = vrot.slane %v8416, 5
  %v8419 = vsel %vm978, %v8414, %v8418
  %v8421 = vshrl.u32 %v7820, 16
  %v8423 = vrot.slane %v8421, 4
  %v8424 = vshll.u32 %v7820, 16
  %v8426 = vrot.slane %v8424, 5
  %v8427 = vor.u32 %v8423, %v8426
  %v8428 = vrot.slane %v8427, 4
  %v8430 = vshll.u32 %v7821, 16
  %v8432 = vrot.slane %v8430, 5
  %v8433 = vsel %vm978, %v8428, %v8432
  %v8434 = vshrl.u32 %v7821, 16
  %v8436 = vrot.slane %v8434, 4
  %v8437 = vor.u32 %v8436, %v8432
  %v8438 = vrot.slane %v8437, 4
  %v8440 = vshll.u32 %v7822, 16
  %v8442 = vrot.slane %v8440, 5
  %v8443 = vsel %vm978, %v8438, %v8442
  %v8445 = vshrl.u32 %v7823, 16
  %v8447 = vrot.slane %v8445, 4
  %v8448 = vshll.u32 %v7823, 16
  %v8450 = vrot.slane %v8448, 5
  %v8451 = vor.u32 %v8447, %v8450
  %v8452 = vrot.slane %v8451, 4
  %v8454 = vshll.u32 %v7824, 16
  %v8456 = vrot.slane %v8454, 5
  %v8457 = vsel %vm978, %v8452, %v8456
  %v8458 = vshrl.u32 %v7824, 16
  %v8460 = vrot.slane %v8458, 4
  %v8461 = vor.u32 %v8460, %v8456
  %v8462 = vrot.slane %v8461, 4
  %v8464 = vshll.u32 %v7825, 16
  %v8466 = vrot.slane %v8464, 5
  %v8467 = vsel %vm978, %v8462, %v8466
  %v8469 = vshrl.u32 %v7826, 16
  %v8471 = vrot.slane %v8469, 4
  %v8472 = vshll.u32 %v7826, 16
  %v8474 = vrot.slane %v8472, 5
  %v8475 = vor.u32 %v8471, %v8474
  %v8476 = vrot.slane %v8475, 4
  %v8478 = vshll.u32 %v7827, 16
  %v8480 = vrot.slane %v8478, 5
  %v8481 = vsel %vm978, %v8476, %v8480
  %v8482 = vshrl.u32 %v7827, 16
  %v8484 = vrot.slane %v8482, 4
  %v8485 = vor.u32 %v8484, %v8480
  %v8486 = vrot.slane %v8485, 4
  %v8488 = vshll.u32 %v7828, 16
  %v8490 = vrot.slane %v8488, 5
  %v8491 = vsel %vm978, %v8486, %v8490
  %v8493 = vshrl.u32 %v7829, 16
  %v8495 = vrot.slane %v8493, 4
  %v8496 = vshll.u32 %v7829, 16
  %v8498 = vrot.slane %v8496, 5
  %v8499 = vor.u32 %v8495, %v8498
  %v8500 = vrot.slane %v8499, 4
  %v8502 = vshll.u32 %v7830, 16
  %v8504 = vrot.slane %v8502, 5
  %v8505 = vsel %vm978, %v8500, %v8504
  %v8506 = vshrl.u32 %v7830, 16
  %v8508 = vrot.slane %v8506, 4
  %v8509 = vor.u32 %v8508, %v8504
  %v8510 = vrot.slane %v8509, 4
  %v8512 = vshll.u32 %v7831, 16
  %v8514 = vrot.slane %v8512, 5
  %v8515 = vsel %vm978, %v8510, %v8514
  %v8517 = vshrl.u32 %v7832, 16
  %v8519 = vrot.slane %v8517, 4
  %v8520 = vshll.u32 %v7832, 16
  %v8522 = vrot.slane %v8520, 5
  %v8523 = vor.u32 %v8519, %v8522
  %v8524 = vrot.slane %v8523, 4
  %v8526 = vshll.u32 %v7833, 16
  %v8528 = vrot.slane %v8526, 5
  %v8529 = vsel %vm978, %v8524, %v8528
  %v8530 = vshrl.u32 %v7833, 16
  %v8532 = vrot.slane %v8530, 4
  %v8533 = vor.u32 %v8532, %v8528
  %v8534 = vrot.slane %v8533, 4
  %v8536 = vshll.u32 %v7834, 16
  %v8538 = vrot.slane %v8536, 5
  %v8539 = vsel %vm978, %v8534, %v8538
  %v8541 = vshrl.u32 %v7835, 16
  %v8543 = vrot.slane %v8541, 4
  %v8544 = vshll.u32 %v7835, 16
  %v8546 = vrot.slane %v8544, 5
  %v8547 = vor.u32 %v8543, %v8546
  %v8548 = vrot.slane %v8547, 4
  %v8550 = vshll.u32 %v7836, 16
  %v8552 = vrot.slane %v8550, 5
  %v8553 = vsel %vm978, %v8548, %v8552
  %v8554 = vshrl.u32 %v7836, 16
  %v8556 = vrot.slane %v8554, 4
  %v8557 = vor.u32 %v8556, %v8552
  %v8558 = vrot.slane %v8557, 4
  %v8560 = vshll.u32 %v7837, 16
  %v8562 = vrot.slane %v8560, 5
  %v8563 = vsel %vm978, %v8558, %v8562
  %v8565 = vshrl.u32 %v7838, 16
  %v8567 = vrot.slane %v8565, 4
  %v8568 = vshll.u32 %v7838, 16
  %v8570 = vrot.slane %v8568, 5
  %v8571 = vor.u32 %v8567, %v8570
  %v8572 = vrot.slane %v8571, 4
  %v8574 = vshll.u32 %v7839, 16
  %v8576 = vrot.slane %v8574, 5
  %v8577 = vsel %vm978, %v8572, %v8576
  %v8578 = vshrl.u32 %v7839, 16
  %v8580 = vrot.slane %v8578, 4
  %v8581 = vor.u32 %v8580, %v8576
  %v8582 = vrot.slane %v8581, 4
  %v8584 = vshll.u32 %v7840, 16
  %v8586 = vrot.slane %v8584, 5
  %v8587 = vsel %vm978, %v8582, %v8586
  %v8589 = vshrl.u32 %v7841, 16
  %v8591 = vrot.slane %v8589, 4
  %v8592 = vshll.u32 %v7841, 16
  %v8594 = vrot.slane %v8592, 5
  %v8595 = vor.u32 %v8591, %v8594
  %v8596 = vrot.slane %v8595, 4
  %v8598 = vshll.u32 %v7842, 16
  %v8600 = vrot.slane %v8598, 5
  %v8601 = vsel %vm978, %v8596, %v8600
  %v8602 = vshrl.u32 %v7842, 16
  %v8604 = vrot.slane %v8602, 4
  %v8605 = vor.u32 %v8604, %v8600
  %v8606 = vrot.slane %v8605, 4
  %v8608 = vshll.u32 %v7843, 16
  %v8610 = vrot.slane %v8608, 5
  %v8611 = vsel %vm978, %v8606, %v8610
  %v8612 = vld [vmem:[#allocation2] sm:$0xff]
  %v8613 = vld [vmem:[#allocation2 + $0x8] sm:$0xff]
  %v8614 = vld [vmem:[#allocation2 + $0x10] sm:$0xff]
  %v8615 = vld [vmem:[#allocation2 + $0x18] sm:$0xff]
  %v8616 = vld [vmem:[#allocation2 + $0x20] sm:$0xff]
  %v8617 = vld [vmem:[#allocation2 + $0x28] sm:$0xff]
  %v8618 = vld [vmem:[#allocation2 + $0x30] sm:$0xff]
  %v8619 = vld [vmem:[#allocation2 + $0x38] sm:$0xff]
  %v8620 = vld [vmem:[#allocation2 + $0x40] sm:$0xff]
  %v8621 = vld [vmem:[#allocation2 + $0x48] sm:$0xff]
  %v8622 = vld [vmem:[#allocation2 + $0x50] sm:$0xff]
  %v8623 = vld [vmem:[#allocation2 + $0x58] sm:$0xff]
  %v8624 = vld [vmem:[#allocation2 + $0x60] sm:$0xff]
  %v8625 = vld [vmem:[#allocation2 + $0x68] sm:$0xff]
  %v8626 = vld [vmem:[#allocation2 + $0x70] sm:$0xff]
  %v8627 = vld [vmem:[#allocation2 + $0x78] sm:$0xff]
  %v8628 = vld [vmem:[#allocation2 + $0x80] sm:$0xff]
  %v8629 = vld [vmem:[#allocation2 + $0x88] sm:$0xff]
  %v8630 = vld [vmem:[#allocation2 + $0x90] sm:$0xff]
  %v8631 = vld [vmem:[#allocation2 + $0x98] sm:$0xff]
  %v8632 = vld [vmem:[#allocation2 + $0xa0] sm:$0xff]
  %v8633 = vld [vmem:[#allocation2 + $0xa8] sm:$0xff]
  %v8634 = vld [vmem:[#allocation2 + $0xb0] sm:$0xff]
  %v8635 = vld [vmem:[#allocation2 + $0xb8] sm:$0xff]
  %v8636 = vld [vmem:[#allocation2 + $0xc0] sm:$0xff]
  %v8637 = vld [vmem:[#allocation2 + $0xc8] sm:$0xff]
  %v8638 = vld [vmem:[#allocation2 + $0xd0] sm:$0xff]
  %v8639 = vld [vmem:[#allocation2 + $0xd8] sm:$0xff]
  %v8640 = vld [vmem:[#allocation2 + $0xe0] sm:$0xff]
  %v8641 = vld [vmem:[#allocation2 + $0xe8] sm:$0xff]
  %v8642 = vld [vmem:[#allocation2 + $0xf0] sm:$0xff]
  %v8643 = vld [vmem:[#allocation2 + $0xf8] sm:$0xff]
  %v8644 = vld [vmem:[#allocation2 + $0x100] sm:$0xff]
  %v8645 = vld [vmem:[#allocation2 + $0x108] sm:$0xff]
  %v8646 = vld [vmem:[#allocation2 + $0x110] sm:$0xff]
  %v8647 = vld [vmem:[#allocation2 + $0x118] sm:$0xff]
  %v8648 = vld [vmem:[#allocation2 + $0x120] sm:$0xff]
  %v8649 = vld [vmem:[#allocation2 + $0x128] sm:$0xff]
  %v8650 = vld [vmem:[#allocation2 + $0x130] sm:$0xff]
  %v8651 = vld [vmem:[#allocation2 + $0x138] sm:$0xff]
  %v8652 = vld [vmem:[#allocation2 + $0x140] sm:$0xff]
  %v8653 = vld [vmem:[#allocation2 + $0x148] sm:$0xff]
  %v8654 = vld [vmem:[#allocation2 + $0x150] sm:$0xff]
  %v8655 = vld [vmem:[#allocation2 + $0x158] sm:$0xff]
  %v8656 = vld [vmem:[#allocation2 + $0x160] sm:$0xff]
  %v8657 = vld [vmem:[#allocation2 + $0x168] sm:$0xff]
  %v8658 = vld [vmem:[#allocation2 + $0x170] sm:$0xff]
  %v8659 = vld [vmem:[#allocation2 + $0x178] sm:$0xff]
  %v8660 = vld [vmem:[#allocation2 + $0x180] sm:$0xff]
  %v8661 = vld [vmem:[#allocation2 + $0x188] sm:$0xff]
  %v8662 = vld [vmem:[#allocation2 + $0x190] sm:$0xff]
  %v8663 = vld [vmem:[#allocation2 + $0x198] sm:$0xff]
  %v8664 = vld [vmem:[#allocation2 + $0x1a0] sm:$0xff]
  %v8665 = vld [vmem:[#allocation2 + $0x1a8] sm:$0xff]
  %v8666 = vld [vmem:[#allocation2 + $0x1b0] sm:$0xff]
  %v8667 = vld [vmem:[#allocation2 + $0x1b8] sm:$0xff]
  %v8668 = vld [vmem:[#allocation2 + $0x1c0] sm:$0xff]
  %v8669 = vld [vmem:[#allocation2 + $0x1c8] sm:$0xff]
  %v8670 = vld [vmem:[#allocation2 + $0x1d0] sm:$0xff]
  %v8671 = vld [vmem:[#allocation2 + $0x1d8] sm:$0xff]
  %v8672 = vld [vmem:[#allocation2 + $0x1e0] sm:$0xff]
  %v8673 = vld [vmem:[#allocation2 + $0x1e8] sm:$0xff]
  %v8674 = vld [vmem:[#allocation2 + $0x1f0] sm:$0xff]
  %v8675 = vld [vmem:[#allocation2 + $0x1f8] sm:$0xff]
  %s8676 = scalar_lea.vmem %s1, 448
  %v8677 = vld [vmem:[%s8676] sm:$0xf]
  %v8678 = vld [vmem:[%s8676 + $0x4] sm:$0xf]
  %v8679 = vld [vmem:[%s8676 + $0x8] sm:$0xf]
  %v8680 = vld [vmem:[%s8676 + $0xc] sm:$0xf]
  %v8681 = vld [vmem:[%s8676 + $0x10] sm:$0xf]
  %v8682 = vld [vmem:[%s8676 + $0x14] sm:$0xf]
  %v8683 = vld [vmem:[%s8676 + $0x18] sm:$0xf]
  %v8684 = vld [vmem:[%s8676 + $0x1c] sm:$0xf]
  %v8685 = vld [vmem:[%s8676 + $0x20] sm:$0xf]
  %v8686 = vld [vmem:[%s8676 + $0x24] sm:$0xf]
  %v8687 = vld [vmem:[%s8676 + $0x28] sm:$0xf]
  %v8688 = vld [vmem:[%s8676 + $0x2c] sm:$0xf]
  %v8689 = vld [vmem:[%s8676 + $0x30] sm:$0xf]
  %v8690 = vld [vmem:[%s8676 + $0x34] sm:$0xf]
  %v8691 = vld [vmem:[%s8676 + $0x38] sm:$0xf]
  %v8692 = vld [vmem:[%s8676 + $0x3c] sm:$0xf]
  %v8693 = vunpack.c.l.b16 %v7857
  %v8694 = vunpack.c.l.b16 %v7867
  %v8695 = vunpack.c.l.b16 %v7881
  %v8696 = vunpack.c.l.b16 %v7891
  %v8697 = vunpack.c.l.b16 %v7905
  %v8698 = vunpack.c.l.b16 %v7915
  %v8699 = vunpack.c.l.b16 %v7929
  %v8700 = vunpack.c.l.b16 %v7939
  %v8701 = vunpack.c.l.b16 %v7953
  %v8702 = vunpack.c.l.b16 %v7963
  %v8703 = vunpack.c.l.b16 %v7977
  %v8704 = vunpack.c.l.b16 %v7987
  %v8705 = vunpack.c.l.b16 %v8001
  %v8706 = vunpack.c.l.b16 %v8011
  %v8707 = vunpack.c.l.b16 %v8025
  %v8708 = vunpack.c.l.b16 %v8035
  %v8709 = vunpack.c.l.b16 %v8049
  %v8710 = vunpack.c.l.b16 %v8059
  %v8711 = vunpack.c.l.b16 %v8073
  %v8712 = vunpack.c.l.b16 %v8083
  %v8713 = vunpack.c.l.b16 %v8097
  %v8714 = vunpack.c.l.b16 %v8107
  %v8715 = vunpack.c.l.b16 %v8121
  %v8716 = vunpack.c.l.b16 %v8131
  %v8717 = vunpack.c.l.b16 %v8145
  %v8718 = vunpack.c.l.b16 %v8155
  %v8719 = vunpack.c.l.b16 %v8169
  %v8720 = vunpack.c.l.b16 %v8179
  %v8721 = vunpack.c.l.b16 %v8193
  %v8722 = vunpack.c.l.b16 %v8203
  %v8723 = vunpack.c.l.b16 %v8217
  %v8724 = vunpack.c.l.b16 %v8227
  %v8725 = vunpack.c.l.b16 %v8241
  %v8726 = vunpack.c.l.b16 %v8251
  %v8727 = vunpack.c.l.b16 %v8265
  %v8728 = vunpack.c.l.b16 %v8275
  %v8729 = vunpack.c.l.b16 %v8289
  %v8730 = vunpack.c.l.b16 %v8299
  %v8731 = vunpack.c.l.b16 %v8313
  %v8732 = vunpack.c.l.b16 %v8323
  %v8733 = vunpack.c.l.b16 %v8337
  %v8734 = vunpack.c.l.b16 %v8347
  %v8735 = vunpack.c.l.b16 %v8361
  %v8736 = vunpack.c.l.b16 %v8371
  %v8737 = vunpack.c.l.b16 %v8385
  %v8738 = vunpack.c.l.b16 %v8395
  %v8739 = vunpack.c.l.b16 %v8409
  %v8740 = vunpack.c.l.b16 %v8419
  %v8741 = vunpack.c.l.b16 %v8433
  %v8742 = vunpack.c.l.b16 %v8443
  %v8743 = vunpack.c.l.b16 %v8457
  %v8744 = vunpack.c.l.b16 %v8467
  %v8745 = vunpack.c.l.b16 %v8481
  %v8746 = vunpack.c.l.b16 %v8491
  %v8747 = vunpack.c.l.b16 %v8505
  %v8748 = vunpack.c.l.b16 %v8515
  %v8749 = vunpack.c.l.b16 %v8529
  %v8750 = vunpack.c.l.b16 %v8539
  %v8751 = vunpack.c.l.b16 %v8553
  %v8752 = vunpack.c.l.b16 %v8563
  %v8753 = vunpack.c.l.b16 %v8577
  %v8754 = vunpack.c.l.b16 %v8587
  %v8755 = vunpack.c.l.b16 %v8601
  %v8756 = vunpack.c.l.b16 %v8611
  %v8757 = vpack.c.b16 %v8694, %v8693
  %v8758 = vpack.c.b16 %v8696, %v8695
  %v8759 = vpack.c.b16 %v8698, %v8697
  %v8760 = vpack.c.b16 %v8700, %v8699
  %v8761 = vpack.c.b16 %v8702, %v8701
  %v8762 = vpack.c.b16 %v8704, %v8703
  %v8763 = vpack.c.b16 %v8706, %v8705
  %v8764 = vpack.c.b16 %v8708, %v8707
  %v8765 = vpack.c.b16 %v8710, %v8709
  %v8766 = vpack.c.b16 %v8712, %v8711
  %v8767 = vpack.c.b16 %v8714, %v8713
  %v8768 = vpack.c.b16 %v8716, %v8715
  %v8769 = vpack.c.b16 %v8718, %v8717
  %v8770 = vpack.c.b16 %v8720, %v8719
  %v8771 = vpack.c.b16 %v8722, %v8721
  %v8772 = vpack.c.b16 %v8724, %v8723
  %v8773 = vpack.c.b16 %v8726, %v8725
  %v8774 = vpack.c.b16 %v8728, %v8727
  %v8775 = vpack.c.b16 %v8730, %v8729
  %v8776 = vpack.c.b16 %v8732, %v8731
  %v8777 = vpack.c.b16 %v8734, %v8733
  %v8778 = vpack.c.b16 %v8736, %v8735
  %v8779 = vpack.c.b16 %v8738, %v8737
  %v8780 = vpack.c.b16 %v8740, %v8739
  %v8781 = vpack.c.b16 %v8742, %v8741
  %v8782 = vpack.c.b16 %v8744, %v8743
  %v8783 = vpack.c.b16 %v8746, %v8745
  %v8784 = vpack.c.b16 %v8748, %v8747
  %v8785 = vpack.c.b16 %v8750, %v8749
  %v8786 = vpack.c.b16 %v8752, %v8751
  %v8787 = vpack.c.b16 %v8754, %v8753
  %v8788 = vpack.c.b16 %v8756, %v8755
  %v8837 = vunpack.c.l.b16 %v8677
  %v8838 = vunpack.c.l.b16 %v8678
  %v8839 = vunpack.c.l.b16 %v8679
  %v8840 = vunpack.c.l.b16 %v8680
  %v8841 = vunpack.c.l.b16 %v8681
  %v8842 = vunpack.c.l.b16 %v8682
  %v8843 = vunpack.c.l.b16 %v8683
  %v8844 = vunpack.c.l.b16 %v8684
  %v8845 = vunpack.c.l.b16 %v8685
  %v8846 = vunpack.c.l.b16 %v8686
  %v8847 = vunpack.c.l.b16 %v8687
  %v8848 = vunpack.c.l.b16 %v8688
  %v8849 = vunpack.c.l.b16 %v8689
  %v8850 = vunpack.c.l.b16 %v8690
  %v8851 = vunpack.c.l.b16 %v8691
  %v8852 = vunpack.c.l.b16 %v8692
  %v8853 = vpack.c.b16 %v8838, %v8837
  %v8854 = vpack.c.b16 %v8840, %v8839
  %v8855 = vpack.c.b16 %v8842, %v8841
  %v8856 = vpack.c.b16 %v8844, %v8843
  %v8857 = vpack.c.b16 %v8846, %v8845
  %v8858 = vpack.c.b16 %v8848, %v8847
  %v8859 = vpack.c.b16 %v8850, %v8849
  %v8860 = vpack.c.b16 %v8852, %v8851
  %8869 = vmatprep.subr.bf16.mxu0 0
  %8870 = vmatpush1.bf16.msra.mxu0 %v8860
  %8871 = vmatprep.subr.bf16.mxu0 0
  %8872 = vmatpush1.bf16.msra.mxu0 %v8859
  %8873 = vmatprep.subr.bf16.mxu0 0
  %8874 = vmatpush1.bf16.msra.mxu0 %v8858
  %8875 = vmatprep.subr.bf16.mxu0 0
  %8876 = vmatpush1.bf16.msra.mxu0 %v8857
  %8877 = vmatprep.subr.bf16.mxu0 0
  %8878 = vmatpush1.bf16.msra.mxu0 %v8856
  %8879 = vmatprep.subr.bf16.mxu0 0
  %8880 = vmatpush1.bf16.msra.mxu0 %v8855
  %8881 = vmatprep.subr.bf16.mxu0 0
  %8882 = vmatpush1.bf16.msra.mxu0 %v8854
  %8883 = vmatprep.subr.bf16.mxu0 0
  %8884 = vmatpush1.bf16.msra.mxu0 %v8853
  %8885 = vmatprep.subr.bf16.mxu0 0
  %8886 = vmatpush2.bf16.msra.mxu0 0
  %8887 = vmatprep.subr.bf16.mxu0 0
  %8888 = vmatpush2.bf16.msra.mxu0 0
  %8889 = vmatprep.subr.bf16.mxu0 0
  %8890 = vmatpush2.bf16.msra.mxu0 0
  %8891 = vmatprep.subr.bf16.mxu0 0
  %8892 = vmatpush2.bf16.msra.mxu0 0
  %8893 = vmatprep.subr.bf16.mxu0 0
  %8894 = vmatpush2.bf16.msra.mxu0 0
  %8895 = vmatprep.subr.bf16.mxu0 0
  %8896 = vmatpush2.bf16.msra.mxu0 0
  %8897 = vmatprep.subr.bf16.mxu0 0
  %8898 = vmatpush2.bf16.msra.mxu0 0
  %8899 = vmatprep.subr.bf16.mxu0 0
  %8900 = vmatpush2.bf16.msra.mxu0 0
  %8901 = vmatprep.mubr.bf16.mxu0 0
  %8902 = vmatmul.mubr.bf16.gmra.mxu0 %v8757
  %v8903 = vpop.f32.mrf.mxu0
  %v8904 = vadd.f32 0.0, %v8903
  %v8905 = vpop.f32.mrf.mxu0
  %v8906 = vpop.f32.mrf.mxu0
  %v8907 = vadd.f32 0.0, %v8906
  %v8908 = vpop.f32.mrf.mxu0
  %8909 = vmatprep.mubr.bf16.mxu0 0
  %8910 = vmatmul.mubr.bf16.gmra.mxu0 %v8758
  %v8911 = vpop.f32.mrf.mxu0
  %v8912 = vadd.f32 0.0, %v8911
  %v8913 = vpop.f32.mrf.mxu0
  %v8914 = vpop.f32.mrf.mxu0
  %v8915 = vadd.f32 0.0, %v8914
  %v8916 = vpop.f32.mrf.mxu0
  %8917 = vmatprep.mubr.bf16.mxu0 0
  %8918 = vmatmul.mubr.bf16.gmra.mxu0 %v8759
  %v8919 = vpop.f32.mrf.mxu0
  %v8920 = vadd.f32 0.0, %v8919
  %v8921 = vpop.f32.mrf.mxu0
  %v8922 = vpop.f32.mrf.mxu0
  %v8923 = vadd.f32 0.0, %v8922
  %v8924 = vpop.f32.mrf.mxu0
  %8925 = vmatprep.mubr.bf16.mxu0 0
  %8926 = vmatmul.mubr.bf16.gmra.mxu0 %v8760
  %v8927 = vpop.f32.mrf.mxu0
  %v8928 = vadd.f32 0.0, %v8927
  %v8929 = vpop.f32.mrf.mxu0
  %v8930 = vpop.f32.mrf.mxu0
  %v8931 = vadd.f32 0.0, %v8930
  %v8932 = vpop.f32.mrf.mxu0
  %8933 = vmatprep.mubr.bf16.mxu0 0
  %8934 = vmatmul.mubr.bf16.gmra.mxu0 %v8761
  %v8935 = vpop.f32.mrf.mxu0
  %v8936 = vadd.f32 0.0, %v8935
  %v8937 = vpop.f32.mrf.mxu0
  %v8938 = vpop.f32.mrf.mxu0
  %v8939 = vadd.f32 0.0, %v8938
  %v8940 = vpop.f32.mrf.mxu0
  %8941 = vmatprep.mubr.bf16.mxu0 0
  %8942 = vmatmul.mubr.bf16.gmra.mxu0 %v8762
  %v8943 = vpop.f32.mrf.mxu0
  %v8944 = vadd.f32 0.0, %v8943
  %v8945 = vpop.f32.mrf.mxu0
  %v8946 = vpop.f32.mrf.mxu0
  %v8947 = vadd.f32 0.0, %v8946
  %v8948 = vpop.f32.mrf.mxu0
  %8949 = vmatprep.mubr.bf16.mxu0 0
  %8950 = vmatmul.mubr.bf16.gmra.mxu0 %v8763
  %v8951 = vpop.f32.mrf.mxu0
  %v8952 = vadd.f32 0.0, %v8951
  %v8953 = vpop.f32.mrf.mxu0
  %v8954 = vpop.f32.mrf.mxu0
  %v8955 = vadd.f32 0.0, %v8954
  %v8956 = vpop.f32.mrf.mxu0
  %8957 = vmatprep.mubr.bf16.mxu0 0
  %8958 = vmatmul.mubr.bf16.gmra.mxu0 %v8764
  %v8959 = vpop.f32.mrf.mxu0
  %v8960 = vadd.f32 0.0, %v8959
  %v8961 = vpop.f32.mrf.mxu0
  %v8962 = vpop.f32.mrf.mxu0
  %v8963 = vadd.f32 0.0, %v8962
  %v8964 = vpop.f32.mrf.mxu0
  %8965 = vmatprep.mubr.bf16.mxu0 0
  %8966 = vmatmul.mubr.bf16.gmra.mxu0 %v8765
  %v8967 = vpop.f32.mrf.mxu0
  %v8968 = vadd.f32 0.0, %v8967
  %v8969 = vpop.f32.mrf.mxu0
  %v8970 = vpop.f32.mrf.mxu0
  %v8971 = vadd.f32 0.0, %v8970
  %v8972 = vpop.f32.mrf.mxu0
  %8973 = vmatprep.mubr.bf16.mxu0 0
  %8974 = vmatmul.mubr.bf16.gmra.mxu0 %v8766
  %v8975 = vpop.f32.mrf.mxu0
  %v8976 = vadd.f32 0.0, %v8975
  %v8977 = vpop.f32.mrf.mxu0
  %v8978 = vpop.f32.mrf.mxu0
  %v8979 = vadd.f32 0.0, %v8978
  %v8980 = vpop.f32.mrf.mxu0
  %8981 = vmatprep.mubr.bf16.mxu0 0
  %8982 = vmatmul.mubr.bf16.gmra.mxu0 %v8767
  %v8983 = vpop.f32.mrf.mxu0
  %v8984 = vadd.f32 0.0, %v8983
  %v8985 = vpop.f32.mrf.mxu0
  %v8986 = vpop.f32.mrf.mxu0
  %v8987 = vadd.f32 0.0, %v8986
  %v8988 = vpop.f32.mrf.mxu0
  %8989 = vmatprep.mubr.bf16.mxu0 0
  %8990 = vmatmul.mubr.bf16.gmra.mxu0 %v8768
  %v8991 = vpop.f32.mrf.mxu0
  %v8992 = vadd.f32 0.0, %v8991
  %v8993 = vpop.f32.mrf.mxu0
  %v8994 = vpop.f32.mrf.mxu0
  %v8995 = vadd.f32 0.0, %v8994
  %v8996 = vpop.f32.mrf.mxu0
  %8997 = vmatprep.mubr.bf16.mxu0 0
  %8998 = vmatmul.mubr.bf16.gmra.mxu0 %v8769
  %v8999 = vpop.f32.mrf.mxu0
  %v9000 = vadd.f32 0.0, %v8999
  %v9001 = vpop.f32.mrf.mxu0
  %v9002 = vpop.f32.mrf.mxu0
  %v9003 = vadd.f32 0.0, %v9002
  %v9004 = vpop.f32.mrf.mxu0
  %9005 = vmatprep.mubr.bf16.mxu0 0
  %9006 = vmatmul.mubr.bf16.gmra.mxu0 %v8770
  %v9007 = vpop.f32.mrf.mxu0
  %v9008 = vadd.f32 0.0, %v9007
  %v9009 = vpop.f32.mrf.mxu0
  %v9010 = vpop.f32.mrf.mxu0
  %v9011 = vadd.f32 0.0, %v9010
  %v9012 = vpop.f32.mrf.mxu0
  %9013 = vmatprep.mubr.bf16.mxu0 0
  %9014 = vmatmul.mubr.bf16.gmra.mxu0 %v8771
  %v9015 = vpop.f32.mrf.mxu0
  %v9016 = vadd.f32 0.0, %v9015
  %v9017 = vpop.f32.mrf.mxu0
  %v9018 = vpop.f32.mrf.mxu0
  %v9019 = vadd.f32 0.0, %v9018
  %v9020 = vpop.f32.mrf.mxu0
  %9021 = vmatprep.mubr.bf16.mxu0 0
  %9022 = vmatmul.mubr.bf16.gmra.mxu0 %v8772
  %v9023 = vpop.f32.mrf.mxu0
  %v9024 = vadd.f32 0.0, %v9023
  %v9025 = vpop.f32.mrf.mxu0
  %v9026 = vpop.f32.mrf.mxu0
  %v9027 = vadd.f32 0.0, %v9026
  %v9028 = vpop.f32.mrf.mxu0
  %9029 = vmatprep.mubr.bf16.mxu0 0
  %9030 = vmatmul.mubr.bf16.gmra.mxu0 %v8773
  %v9031 = vpop.f32.mrf.mxu0
  %v9032 = vadd.f32 0.0, %v9031
  %v9033 = vpop.f32.mrf.mxu0
  %v9034 = vpop.f32.mrf.mxu0
  %v9035 = vadd.f32 0.0, %v9034
  %v9036 = vpop.f32.mrf.mxu0
  %9037 = vmatprep.mubr.bf16.mxu0 0
  %9038 = vmatmul.mubr.bf16.gmra.mxu0 %v8774
  %v9039 = vpop.f32.mrf.mxu0
  %v9040 = vadd.f32 0.0, %v9039
  %v9041 = vpop.f32.mrf.mxu0
  %v9042 = vpop.f32.mrf.mxu0
  %v9043 = vadd.f32 0.0, %v9042
  %v9044 = vpop.f32.mrf.mxu0
  %9045 = vmatprep.mubr.bf16.mxu0 0
  %9046 = vmatmul.mubr.bf16.gmra.mxu0 %v8775
  %v9047 = vpop.f32.mrf.mxu0
  %v9048 = vadd.f32 0.0, %v9047
  %v9049 = vpop.f32.mrf.mxu0
  %v9050 = vpop.f32.mrf.mxu0
  %v9051 = vadd.f32 0.0, %v9050
  %v9052 = vpop.f32.mrf.mxu0
  %9053 = vmatprep.mubr.bf16.mxu0 0
  %9054 = vmatmul.mubr.bf16.gmra.mxu0 %v8776
  %v9055 = vpop.f32.mrf.mxu0
  %v9056 = vadd.f32 0.0, %v9055
  %v9057 = vpop.f32.mrf.mxu0
  %v9058 = vpop.f32.mrf.mxu0
  %v9059 = vadd.f32 0.0, %v9058
  %v9060 = vpop.f32.mrf.mxu0
  %9061 = vmatprep.mubr.bf16.mxu0 0
  %9062 = vmatmul.mubr.bf16.gmra.mxu0 %v8777
  %v9063 = vpop.f32.mrf.mxu0
  %v9064 = vadd.f32 0.0, %v9063
  %v9065 = vpop.f32.mrf.mxu0
  %v9066 = vpop.f32.mrf.mxu0
  %v9067 = vadd.f32 0.0, %v9066
  %v9068 = vpop.f32.mrf.mxu0
  %9069 = vmatprep.mubr.bf16.mxu0 0
  %9070 = vmatmul.mubr.bf16.gmra.mxu0 %v8778
  %v9071 = vpop.f32.mrf.mxu0
  %v9072 = vadd.f32 0.0, %v9071
  %v9073 = vpop.f32.mrf.mxu0
  %v9074 = vpop.f32.mrf.mxu0
  %v9075 = vadd.f32 0.0, %v9074
  %v9076 = vpop.f32.mrf.mxu0
  %9077 = vmatprep.mubr.bf16.mxu0 0
  %9078 = vmatmul.mubr.bf16.gmra.mxu0 %v8779
  %v9079 = vpop.f32.mrf.mxu0
  %v9080 = vadd.f32 0.0, %v9079
  %v9081 = vpop.f32.mrf.mxu0
  %v9082 = vpop.f32.mrf.mxu0
  %v9083 = vadd.f32 0.0, %v9082
  %v9084 = vpop.f32.mrf.mxu0
  %9085 = vmatprep.mubr.bf16.mxu0 0
  %9086 = vmatmul.mubr.bf16.gmra.mxu0 %v8780
  %v9087 = vpop.f32.mrf.mxu0
  %v9088 = vadd.f32 0.0, %v9087
  %v9089 = vpop.f32.mrf.mxu0
  %v9090 = vpop.f32.mrf.mxu0
  %v9091 = vadd.f32 0.0, %v9090
  %v9092 = vpop.f32.mrf.mxu0
  %9093 = vmatprep.mubr.bf16.mxu0 0
  %9094 = vmatmul.mubr.bf16.gmra.mxu0 %v8781
  %v9095 = vpop.f32.mrf.mxu0
  %v9096 = vadd.f32 0.0, %v9095
  %v9097 = vpop.f32.mrf.mxu0
  %v9098 = vpop.f32.mrf.mxu0
  %v9099 = vadd.f32 0.0, %v9098
  %v9100 = vpop.f32.mrf.mxu0
  %9101 = vmatprep.mubr.bf16.mxu0 0
  %9102 = vmatmul.mubr.bf16.gmra.mxu0 %v8782
  %v9103 = vpop.f32.mrf.mxu0
  %v9104 = vadd.f32 0.0, %v9103
  %v9105 = vpop.f32.mrf.mxu0
  %v9106 = vpop.f32.mrf.mxu0
  %v9107 = vadd.f32 0.0, %v9106
  %v9108 = vpop.f32.mrf.mxu0
  %9109 = vmatprep.mubr.bf16.mxu0 0
  %9110 = vmatmul.mubr.bf16.gmra.mxu0 %v8783
  %v9111 = vpop.f32.mrf.mxu0
  %v9112 = vadd.f32 0.0, %v9111
  %v9113 = vpop.f32.mrf.mxu0
  %v9114 = vpop.f32.mrf.mxu0
  %v9115 = vadd.f32 0.0, %v9114
  %v9116 = vpop.f32.mrf.mxu0
  %9117 = vmatprep.mubr.bf16.mxu0 0
  %9118 = vmatmul.mubr.bf16.gmra.mxu0 %v8784
  %v9119 = vpop.f32.mrf.mxu0
  %v9120 = vadd.f32 0.0, %v9119
  %v9121 = vpop.f32.mrf.mxu0
  %v9122 = vpop.f32.mrf.mxu0
  %v9123 = vadd.f32 0.0, %v9122
  %v9124 = vpop.f32.mrf.mxu0
  %9125 = vmatprep.mubr.bf16.mxu0 0
  %9126 = vmatmul.mubr.bf16.gmra.mxu0 %v8785
  %v9127 = vpop.f32.mrf.mxu0
  %v9128 = vadd.f32 0.0, %v9127
  %v9129 = vpop.f32.mrf.mxu0
  %v9130 = vpop.f32.mrf.mxu0
  %v9131 = vadd.f32 0.0, %v9130
  %v9132 = vpop.f32.mrf.mxu0
  %9133 = vmatprep.mubr.bf16.mxu0 0
  %9134 = vmatmul.mubr.bf16.gmra.mxu0 %v8786
  %v9135 = vpop.f32.mrf.mxu0
  %v9136 = vadd.f32 0.0, %v9135
  %v9137 = vpop.f32.mrf.mxu0
  %v9138 = vpop.f32.mrf.mxu0
  %v9139 = vadd.f32 0.0, %v9138
  %v9140 = vpop.f32.mrf.mxu0
  %9141 = vmatprep.mubr.bf16.mxu0 0
  %9142 = vmatmul.mubr.bf16.gmra.mxu0 %v8787
  %v9143 = vpop.f32.mrf.mxu0
  %v9144 = vadd.f32 0.0, %v9143
  %v9145 = vpop.f32.mrf.mxu0
  %v9146 = vpop.f32.mrf.mxu0
  %v9147 = vadd.f32 0.0, %v9146
  %v9148 = vpop.f32.mrf.mxu0
  %9149 = vmatprep.mubr.bf16.mxu0 0
  %9150 = vmatmul.mubr.bf16.gmra.mxu0 %v8788
  %v9151 = vpop.f32.mrf.mxu0
  %v9152 = vadd.f32 0.0, %v9151
  %v9153 = vpop.f32.mrf.mxu0
  %v9154 = vpop.f32.mrf.mxu0
  %v9155 = vadd.f32 0.0, %v9154
  %v9156 = vpop.f32.mrf.mxu0
  %9157 = vdwg.mxu0
  %v9158 = vadd.f32 %v8612, %v8904
  %v9159 = vadd.f32 %v8613, %v8907
  %v9160 = vadd.f32 %v8614, %v8912
  %v9161 = vadd.f32 %v8615, %v8915
  %v9162 = vadd.f32 %v8616, %v8920
  %v9163 = vadd.f32 %v8617, %v8923
  %v9164 = vadd.f32 %v8618, %v8928
  %v9165 = vadd.f32 %v8619, %v8931
  %v9166 = vadd.f32 %v8620, %v8936
  %v9167 = vadd.f32 %v8621, %v8939
  %v9168 = vadd.f32 %v8622, %v8944
  %v9169 = vadd.f32 %v8623, %v8947
  %v9170 = vadd.f32 %v8624, %v8952
  %v9171 = vadd.f32 %v8625, %v8955
  %v9172 = vadd.f32 %v8626, %v8960
  %v9173 = vadd.f32 %v8627, %v8963
  %v9174 = vadd.f32 %v8628, %v8968
  %v9175 = vadd.f32 %v8629, %v8971
  %v9176 = vadd.f32 %v8630, %v8976
  %v9177 = vadd.f32 %v8631, %v8979
  %v9178 = vadd.f32 %v8632, %v8984
  %v9179 = vadd.f32 %v8633, %v8987
  %v9180 = vadd.f32 %v8634, %v8992
  %v9181 = vadd.f32 %v8635, %v8995
  %v9182 = vadd.f32 %v8636, %v9000
  %v9183 = vadd.f32 %v8637, %v9003
  %v9184 = vadd.f32 %v8638, %v9008
  %v9185 = vadd.f32 %v8639, %v9011
  %v9186 = vadd.f32 %v8640, %v9016
  %v9187 = vadd.f32 %v8641, %v9019
  %v9188 = vadd.f32 %v8642, %v9024
  %v9189 = vadd.f32 %v8643, %v9027
  %v9190 = vadd.f32 %v8644, %v9032
  %v9191 = vadd.f32 %v8645, %v9035
  %v9192 = vadd.f32 %v8646, %v9040
  %v9193 = vadd.f32 %v8647, %v9043
  %v9194 = vadd.f32 %v8648, %v9048
  %v9195 = vadd.f32 %v8649, %v9051
  %v9196 = vadd.f32 %v8650, %v9056
  %v9197 = vadd.f32 %v8651, %v9059
  %v9198 = vadd.f32 %v8652, %v9064
  %v9199 = vadd.f32 %v8653, %v9067
  %v9200 = vadd.f32 %v8654, %v9072
  %v9201 = vadd.f32 %v8655, %v9075
  %v9202 = vadd.f32 %v8656, %v9080
  %v9203 = vadd.f32 %v8657, %v9083
  %v9204 = vadd.f32 %v8658, %v9088
  %v9205 = vadd.f32 %v8659, %v9091
  %v9206 = vadd.f32 %v8660, %v9096
  %v9207 = vadd.f32 %v8661, %v9099
  %v9208 = vadd.f32 %v8662, %v9104
  %v9209 = vadd.f32 %v8663, %v9107
  %v9210 = vadd.f32 %v8664, %v9112
  %v9211 = vadd.f32 %v8665, %v9115
  %v9212 = vadd.f32 %v8666, %v9120
  %v9213 = vadd.f32 %v8667, %v9123
  %v9214 = vadd.f32 %v8668, %v9128
  %v9215 = vadd.f32 %v8669, %v9131
  %v9216 = vadd.f32 %v8670, %v9136
  %v9217 = vadd.f32 %v8671, %v9139
  %v9218 = vadd.f32 %v8672, %v9144
  %v9219 = vadd.f32 %v8673, %v9147
  %v9220 = vadd.f32 %v8674, %v9152
  %v9221 = vadd.f32 %v8675, %v9155
  %9222 = vst [vmem:[#allocation2] sm:$0xff] %v9158
  %9223 = vst [vmem:[#allocation2 + $0x8] sm:$0xff] %v9159
  %9224 = vst [vmem:[#allocation2 + $0x10] sm:$0xff] %v9160
  %9225 = vst [vmem:[#allocation2 + $0x18] sm:$0xff] %v9161
  %9226 = vst [vmem:[#allocation2 + $0x20] sm:$0xff] %v9162
  %9227 = vst [vmem:[#allocation2 + $0x28] sm:$0xff] %v9163
  %9228 = vst [vmem:[#allocation2 + $0x30] sm:$0xff] %v9164
  %9229 = vst [vmem:[#allocation2 + $0x38] sm:$0xff] %v9165
  %9230 = vst [vmem:[#allocation2 + $0x40] sm:$0xff] %v9166
  %9231 = vst [vmem:[#allocation2 + $0x48] sm:$0xff] %v9167
  %9232 = vst [vmem:[#allocation2 + $0x50] sm:$0xff] %v9168
  %9233 = vst [vmem:[#allocation2 + $0x58] sm:$0xff] %v9169
  %9234 = vst [vmem:[#allocation2 + $0x60] sm:$0xff] %v9170
  %9235 = vst [vmem:[#allocation2 + $0x68] sm:$0xff] %v9171
  %9236 = vst [vmem:[#allocation2 + $0x70] sm:$0xff] %v9172
  %9237 = vst [vmem:[#allocation2 + $0x78] sm:$0xff] %v9173
  %9238 = vst [vmem:[#allocation2 + $0x80] sm:$0xff] %v9174
  %9239 = vst [vmem:[#allocation2 + $0x88] sm:$0xff] %v9175
  %9240 = vst [vmem:[#allocation2 + $0x90] sm:$0xff] %v9176
  %9241 = vst [vmem:[#allocation2 + $0x98] sm:$0xff] %v9177
  %9242 = vst [vmem:[#allocation2 + $0xa0] sm:$0xff] %v9178
  %9243 = vst [vmem:[#allocation2 + $0xa8] sm:$0xff] %v9179
  %9244 = vst [vmem:[#allocation2 + $0xb0] sm:$0xff] %v9180
  %9245 = vst [vmem:[#allocation2 + $0xb8] sm:$0xff] %v9181
  %9246 = vst [vmem:[#allocation2 + $0xc0] sm:$0xff] %v9182
  %9247 = vst [vmem:[#allocation2 + $0xc8] sm:$0xff] %v9183
  %9248 = vst [vmem:[#allocation2 + $0xd0] sm:$0xff] %v9184
  %9249 = vst [vmem:[#allocation2 + $0xd8] sm:$0xff] %v9185
  %9250 = vst [vmem:[#allocation2 + $0xe0] sm:$0xff] %v9186
  %9251 = vst [vmem:[#allocation2 + $0xe8] sm:$0xff] %v9187
  %9252 = vst [vmem:[#allocation2 + $0xf0] sm:$0xff] %v9188
  %9253 = vst [vmem:[#allocation2 + $0xf8] sm:$0xff] %v9189
  %9254 = vst [vmem:[#allocation2 + $0x100] sm:$0xff] %v9190
  %9255 = vst [vmem:[#allocation2 + $0x108] sm:$0xff] %v9191
  %9256 = vst [vmem:[#allocation2 + $0x110] sm:$0xff] %v9192
  %9257 = vst [vmem:[#allocation2 + $0x118] sm:$0xff] %v9193
  %9258 = vst [vmem:[#allocation2 + $0x120] sm:$0xff] %v9194
  %9259 = vst [vmem:[#allocation2 + $0x128] sm:$0xff] %v9195
  %9260 = vst [vmem:[#allocation2 + $0x130] sm:$0xff] %v9196
  %9261 = vst [vmem:[#allocation2 + $0x138] sm:$0xff] %v9197
  %9262 = vst [vmem:[#allocation2 + $0x140] sm:$0xff] %v9198
  %9263 = vst [vmem:[#allocation2 + $0x148] sm:$0xff] %v9199
  %9264 = vst [vmem:[#allocation2 + $0x150] sm:$0xff] %v9200
  %9265 = vst [vmem:[#allocation2 + $0x158] sm:$0xff] %v9201
  %9266 = vst [vmem:[#allocation2 + $0x160] sm:$0xff] %v9202
  %9267 = vst [vmem:[#allocation2 + $0x168] sm:$0xff] %v9203
  %9268 = vst [vmem:[#allocation2 + $0x170] sm:$0xff] %v9204
  %9269 = vst [vmem:[#allocation2 + $0x178] sm:$0xff] %v9205
  %9270 = vst [vmem:[#allocation2 + $0x180] sm:$0xff] %v9206
  %9271 = vst [vmem:[#allocation2 + $0x188] sm:$0xff] %v9207
  %9272 = vst [vmem:[#allocation2 + $0x190] sm:$0xff] %v9208
  %9273 = vst [vmem:[#allocation2 + $0x198] sm:$0xff] %v9209
  %9274 = vst [vmem:[#allocation2 + $0x1a0] sm:$0xff] %v9210
  %9275 = vst [vmem:[#allocation2 + $0x1a8] sm:$0xff] %v9211
  %9276 = vst [vmem:[#allocation2 + $0x1b0] sm:$0xff] %v9212
  %9277 = vst [vmem:[#allocation2 + $0x1b8] sm:$0xff] %v9213
  %9278 = vst [vmem:[#allocation2 + $0x1c0] sm:$0xff] %v9214
  %9279 = vst [vmem:[#allocation2 + $0x1c8] sm:$0xff] %v9215
  %9280 = vst [vmem:[#allocation2 + $0x1d0] sm:$0xff] %v9216
  %9281 = vst [vmem:[#allocation2 + $0x1d8] sm:$0xff] %v9217
  %9282 = vst [vmem:[#allocation2 + $0x1e0] sm:$0xff] %v9218
  %9283 = vst [vmem:[#allocation2 + $0x1e8] sm:$0xff] %v9219
  %9284 = vst [vmem:[#allocation2 + $0x1f0] sm:$0xff] %v9220
  %9285 = vst [vmem:[#allocation2 + $0x1f8] sm:$0xff] %v9221
  %v9286 = vld [vmem:[%s6945] sm:$0xe]
  %v9287 = vld [vmem:[%s6945 + $0x4] sm:$0xf]
  %v9288 = vld [vmem:[%s6945 + $0x8] sm:$0x1]
  %v9289 = vld [vmem:[%s6945 + $0xc] sm:$0xe]
  %v9290 = vld [vmem:[%s6945 + $0x10] sm:$0xf]
  %v9291 = vld [vmem:[%s6945 + $0x14] sm:$0x1]
  %v9292 = vld [vmem:[%s6945 + $0x18] sm:$0xe]
  %v9293 = vld [vmem:[%s6945 + $0x1c] sm:$0xf]
  %v9294 = vld [vmem:[%s6945 + $0x20] sm:$0x1]
  %v9295 = vld [vmem:[%s6945 + $0x24] sm:$0xe]
  %v9296 = vld [vmem:[%s6945 + $0x28] sm:$0xf]
  %v9297 = vld [vmem:[%s6945 + $0x2c] sm:$0x1]
  %v9298 = vld [vmem:[%s6945 + $0x30] sm:$0xe]
  %v9299 = vld [vmem:[%s6945 + $0x34] sm:$0xf]
  %v9300 = vld [vmem:[%s6945 + $0x38] sm:$0x1]
  %v9301 = vld [vmem:[%s6945 + $0x3c] sm:$0xe]
  %v9302 = vld [vmem:[%s6945 + $0x40] sm:$0xf]
  %v9303 = vld [vmem:[%s6945 + $0x44] sm:$0x1]
  %v9304 = vld [vmem:[%s6945 + $0x48] sm:$0xe]
  %v9305 = vld [vmem:[%s6945 + $0x4c] sm:$0xf]
  %v9306 = vld [vmem:[%s6945 + $0x50] sm:$0x1]
  %v9307 = vld [vmem:[%s6945 + $0x54] sm:$0xe]
  %v9308 = vld [vmem:[%s6945 + $0x58] sm:$0xf]
  %v9309 = vld [vmem:[%s6945 + $0x5c] sm:$0x1]
  %v9310 = vld [vmem:[%s6945 + $0x60] sm:$0xe]
  %v9311 = vld [vmem:[%s6945 + $0x64] sm:$0xf]
  %v9312 = vld [vmem:[%s6945 + $0x68] sm:$0x1]
  %v9313 = vld [vmem:[%s6945 + $0x6c] sm:$0xe]
  %v9314 = vld [vmem:[%s6945 + $0x70] sm:$0xf]
  %v9315 = vld [vmem:[%s6945 + $0x74] sm:$0x1]
  %v9316 = vld [vmem:[%s6945 + $0x78] sm:$0xe]
  %v9317 = vld [vmem:[%s6945 + $0x7c] sm:$0xf]
  %v9318 = vld [vmem:[%s6945 + $0x80] sm:$0x1]
  %v9319 = vld [vmem:[%s6945 + $0x84] sm:$0xe]
  %v9320 = vld [vmem:[%s6945 + $0x88] sm:$0xf]
  %v9321 = vld [vmem:[%s6945 + $0x8c] sm:$0x1]
  %v9322 = vld [vmem:[%s6945 + $0x90] sm:$0xe]
  %v9323 = vld [vmem:[%s6945 + $0x94] sm:$0xf]
  %v9324 = vld [vmem:[%s6945 + $0x98] sm:$0x1]
  %v9325 = vld [vmem:[%s6945 + $0x9c] sm:$0xe]
  %v9326 = vld [vmem:[%s6945 + $0xa0] sm:$0xf]
  %v9327 = vld [vmem:[%s6945 + $0xa4] sm:$0x1]
  %v9328 = vld [vmem:[%s6945 + $0xa8] sm:$0xe]
  %v9329 = vld [vmem:[%s6945 + $0xac] sm:$0xf]
  %v9330 = vld [vmem:[%s6945 + $0xb0] sm:$0x1]
  %v9331 = vld [vmem:[%s6945 + $0xb4] sm:$0xe]
  %v9332 = vld [vmem:[%s6945 + $0xb8] sm:$0xf]
  %v9333 = vld [vmem:[%s6945 + $0xbc] sm:$0x1]
  %v9334 = vld [vmem:[%s6945 + $0xd8] sm:$0xe]
  %v9335 = vld [vmem:[%s6945 + $0xdc] sm:$0xf]
  %v9336 = vld [vmem:[%s6945 + $0xe0] sm:$0x1]
  %v9337 = vld [vmem:[%s6945 + $0xe4] sm:$0xe]
  %v9338 = vld [vmem:[%s6945 + $0xe8] sm:$0xf]
  %v9339 = vld [vmem:[%s6945 + $0xec] sm:$0x1]
  %v9340 = vld [vmem:[%s6945 + $0xf0] sm:$0xe]
  %v9341 = vld [vmem:[%s6945 + $0xf4] sm:$0xf]
  %v9342 = vld [vmem:[%s6945 + $0xf8] sm:$0x1]
  %v9343 = vld [vmem:[%s6945 + $0xfc] sm:$0xe]
  %v9344 = vld [vmem:[%s6945 + $0x100] sm:$0xf]
  %v9345 = vld [vmem:[%s6945 + $0x104] sm:$0x1]
  %v9346 = vld [vmem:[%s6945 + $0x108] sm:$0xe]
  %v9347 = vld [vmem:[%s6945 + $0x10c] sm:$0xf]
  %v9348 = vld [vmem:[%s6945 + $0x110] sm:$0x1]
  %v9349 = vld [vmem:[%s6945 + $0x114] sm:$0xe]
  %v9350 = vld [vmem:[%s6945 + $0x118] sm:$0xf]
  %v9351 = vld [vmem:[%s6945 + $0x11c] sm:$0x1]
  %v9352 = vld [vmem:[%s6945 + $0x120] sm:$0xe]
  %v9353 = vld [vmem:[%s6945 + $0x124] sm:$0xf]
  %v9354 = vld [vmem:[%s6945 + $0x128] sm:$0x1]
  %v9355 = vld [vmem:[%s6945 + $0x12c] sm:$0xe]
  %v9356 = vld [vmem:[%s6945 + $0x130] sm:$0xf]
  %v9357 = vld [vmem:[%s6945 + $0x134] sm:$0x1]
  %v9358 = vld [vmem:[%s6945 + $0x138] sm:$0xe]
  %v9359 = vld [vmem:[%s6945 + $0x13c] sm:$0xf]
  %v9360 = vld [vmem:[%s6945 + $0x140] sm:$0x1]
  %v9361 = vld [vmem:[%s6945 + $0x144] sm:$0xe]
  %v9362 = vld [vmem:[%s6945 + $0x148] sm:$0xf]
  %v9363 = vld [vmem:[%s6945 + $0x14c] sm:$0x1]
  %v9364 = vld [vmem:[%s6945 + $0x150] sm:$0xe]
  %v9365 = vld [vmem:[%s6945 + $0x154] sm:$0xf]
  %v9366 = vld [vmem:[%s6945 + $0x158] sm:$0x1]
  %v9367 = vld [vmem:[%s6945 + $0x15c] sm:$0xe]
  %v9368 = vld [vmem:[%s6945 + $0x160] sm:$0xf]
  %v9369 = vld [vmem:[%s6945 + $0x164] sm:$0x1]
  %v9370 = vld [vmem:[%s6945 + $0x168] sm:$0xe]
  %v9371 = vld [vmem:[%s6945 + $0x16c] sm:$0xf]
  %v9372 = vld [vmem:[%s6945 + $0x170] sm:$0x1]
  %v9373 = vld [vmem:[%s6945 + $0x174] sm:$0xe]
  %v9374 = vld [vmem:[%s6945 + $0x178] sm:$0xf]
  %v9375 = vld [vmem:[%s6945 + $0x17c] sm:$0x1]
  %v9376 = vld [vmem:[%s6945 + $0x180] sm:$0xe]
  %v9377 = vld [vmem:[%s6945 + $0x184] sm:$0xf]
  %v9378 = vld [vmem:[%s6945 + $0x188] sm:$0x1]
  %v9379 = vld [vmem:[%s6945 + $0x18c] sm:$0xe]
  %v9380 = vld [vmem:[%s6945 + $0x190] sm:$0xf]
  %v9381 = vld [vmem:[%s6945 + $0x194] sm:$0x1]
  %v9478 = vrot.slane %v9286, 5
  %v9479 = vrot.slane %v9478, 4
  %v9480 = vrot.slane %v9287, 5
  %v9481 = vsel %vm2615, %v9479, %v9480
  %v9482 = vrot.slane %v9480, 4
  %v9483 = vrot.slane %v9288, 5
  %v9484 = vsel %vm2615, %v9482, %v9483
  %v9485 = vrot.slane %v9289, 5
  %v9486 = vrot.slane %v9485, 4
  %v9487 = vrot.slane %v9290, 5
  %v9488 = vsel %vm2615, %v9486, %v9487
  %v9489 = vrot.slane %v9487, 4
  %v9490 = vrot.slane %v9291, 5
  %v9491 = vsel %vm2615, %v9489, %v9490
  %v9492 = vrot.slane %v9292, 5
  %v9493 = vrot.slane %v9492, 4
  %v9494 = vrot.slane %v9293, 5
  %v9495 = vsel %vm2615, %v9493, %v9494
  %v9496 = vrot.slane %v9494, 4
  %v9497 = vrot.slane %v9294, 5
  %v9498 = vsel %vm2615, %v9496, %v9497
  %v9499 = vrot.slane %v9295, 5
  %v9500 = vrot.slane %v9499, 4
  %v9501 = vrot.slane %v9296, 5
  %v9502 = vsel %vm2615, %v9500, %v9501
  %v9503 = vrot.slane %v9501, 4
  %v9504 = vrot.slane %v9297, 5
  %v9505 = vsel %vm2615, %v9503, %v9504
  %v9506 = vrot.slane %v9298, 5
  %v9507 = vrot.slane %v9506, 4
  %v9508 = vrot.slane %v9299, 5
  %v9509 = vsel %vm2615, %v9507, %v9508
  %v9510 = vrot.slane %v9508, 4
  %v9511 = vrot.slane %v9300, 5
  %v9512 = vsel %vm2615, %v9510, %v9511
  %v9513 = vrot.slane %v9301, 5
  %v9514 = vrot.slane %v9513, 4
  %v9515 = vrot.slane %v9302, 5
  %v9516 = vsel %vm2615, %v9514, %v9515
  %v9517 = vrot.slane %v9515, 4
  %v9518 = vrot.slane %v9303, 5
  %v9519 = vsel %vm2615, %v9517, %v9518
  %v9520 = vrot.slane %v9304, 5
  %v9521 = vrot.slane %v9520, 4
  %v9522 = vrot.slane %v9305, 5
  %v9523 = vsel %vm2615, %v9521, %v9522
  %v9524 = vrot.slane %v9522, 4
  %v9525 = vrot.slane %v9306, 5
  %v9526 = vsel %vm2615, %v9524, %v9525
  %v9527 = vrot.slane %v9307, 5
  %v9528 = vrot.slane %v9527, 4
  %v9529 = vrot.slane %v9308, 5
  %v9530 = vsel %vm2615, %v9528, %v9529
  %v9531 = vrot.slane %v9529, 4
  %v9532 = vrot.slane %v9309, 5
  %v9533 = vsel %vm2615, %v9531, %v9532
  %v9534 = vrot.slane %v9310, 5
  %v9535 = vrot.slane %v9534, 4
  %v9536 = vrot.slane %v9311, 5
  %v9537 = vsel %vm2615, %v9535, %v9536
  %v9538 = vrot.slane %v9536, 4
  %v9539 = vrot.slane %v9312, 5
  %v9540 = vsel %vm2615, %v9538, %v9539
  %v9541 = vrot.slane %v9313, 5
  %v9542 = vrot.slane %v9541, 4
  %v9543 = vrot.slane %v9314, 5
  %v9544 = vsel %vm2615, %v9542, %v9543
  %v9545 = vrot.slane %v9543, 4
  %v9546 = vrot.slane %v9315, 5
  %v9547 = vsel %vm2615, %v9545, %v9546
  %v9548 = vrot.slane %v9316, 5
  %v9549 = vrot.slane %v9548, 4
  %v9550 = vrot.slane %v9317, 5
  %v9551 = vsel %vm2615, %v9549, %v9550
  %v9552 = vrot.slane %v9550, 4
  %v9553 = vrot.slane %v9318, 5
  %v9554 = vsel %vm2615, %v9552, %v9553
  %v9555 = vrot.slane %v9319, 5
  %v9556 = vrot.slane %v9555, 4
  %v9557 = vrot.slane %v9320, 5
  %v9558 = vsel %vm2615, %v9556, %v9557
  %v9559 = vrot.slane %v9557, 4
  %v9560 = vrot.slane %v9321, 5
  %v9561 = vsel %vm2615, %v9559, %v9560
  %v9562 = vrot.slane %v9322, 5
  %v9563 = vrot.slane %v9562, 4
  %v9564 = vrot.slane %v9323, 5
  %v9565 = vsel %vm2615, %v9563, %v9564
  %v9566 = vrot.slane %v9564, 4
  %v9567 = vrot.slane %v9324, 5
  %v9568 = vsel %vm2615, %v9566, %v9567
  %v9569 = vrot.slane %v9325, 5
  %v9570 = vrot.slane %v9569, 4
  %v9571 = vrot.slane %v9326, 5
  %v9572 = vsel %vm2615, %v9570, %v9571
  %v9573 = vrot.slane %v9571, 4
  %v9574 = vrot.slane %v9327, 5
  %v9575 = vsel %vm2615, %v9573, %v9574
  %v9576 = vrot.slane %v9328, 5
  %v9577 = vrot.slane %v9576, 4
  %v9578 = vrot.slane %v9329, 5
  %v9579 = vsel %vm2615, %v9577, %v9578
  %v9580 = vrot.slane %v9578, 4
  %v9581 = vrot.slane %v9330, 5
  %v9582 = vsel %vm2615, %v9580, %v9581
  %v9583 = vrot.slane %v9331, 5
  %v9584 = vrot.slane %v9583, 4
  %v9585 = vrot.slane %v9332, 5
  %v9586 = vsel %vm2615, %v9584, %v9585
  %v9587 = vrot.slane %v9585, 4
  %v9588 = vrot.slane %v9333, 5
  %v9589 = vsel %vm2615, %v9587, %v9588
  %v9590 = vrot.slane %v9334, 5
  %v9591 = vrot.slane %v9590, 4
  %v9592 = vrot.slane %v9335, 5
  %v9593 = vsel %vm2615, %v9591, %v9592
  %v9594 = vrot.slane %v9592, 4
  %v9595 = vrot.slane %v9336, 5
  %v9596 = vsel %vm2615, %v9594, %v9595
  %v9597 = vrot.slane %v9337, 5
  %v9598 = vrot.slane %v9597, 4
  %v9599 = vrot.slane %v9338, 5
  %v9600 = vsel %vm2615, %v9598, %v9599
  %v9601 = vrot.slane %v9599, 4
  %v9602 = vrot.slane %v9339, 5
  %v9603 = vsel %vm2615, %v9601, %v9602
  %v9604 = vrot.slane %v9340, 5
  %v9605 = vrot.slane %v9604, 4
  %v9606 = vrot.slane %v9341, 5
  %v9607 = vsel %vm2615, %v9605, %v9606
  %v9608 = vrot.slane %v9606, 4
  %v9609 = vrot.slane %v9342, 5
  %v9610 = vsel %vm2615, %v9608, %v9609
  %v9611 = vrot.slane %v9343, 5
  %v9612 = vrot.slane %v9611, 4
  %v9613 = vrot.slane %v9344, 5
  %v9614 = vsel %vm2615, %v9612, %v9613
  %v9615 = vrot.slane %v9613, 4
  %v9616 = vrot.slane %v9345, 5
  %v9617 = vsel %vm2615, %v9615, %v9616
  %v9618 = vrot.slane %v9346, 5
  %v9619 = vrot.slane %v9618, 4
  %v9620 = vrot.slane %v9347, 5
  %v9621 = vsel %vm2615, %v9619, %v9620
  %v9622 = vrot.slane %v9620, 4
  %v9623 = vrot.slane %v9348, 5
  %v9624 = vsel %vm2615, %v9622, %v9623
  %v9625 = vrot.slane %v9349, 5
  %v9626 = vrot.slane %v9625, 4
  %v9627 = vrot.slane %v9350, 5
  %v9628 = vsel %vm2615, %v9626, %v9627
  %v9629 = vrot.slane %v9627, 4
  %v9630 = vrot.slane %v9351, 5
  %v9631 = vsel %vm2615, %v9629, %v9630
  %v9632 = vrot.slane %v9352, 5
  %v9633 = vrot.slane %v9632, 4
  %v9634 = vrot.slane %v9353, 5
  %v9635 = vsel %vm2615, %v9633, %v9634
  %v9636 = vrot.slane %v9634, 4
  %v9637 = vrot.slane %v9354, 5
  %v9638 = vsel %vm2615, %v9636, %v9637
  %v9639 = vrot.slane %v9355, 5
  %v9640 = vrot.slane %v9639, 4
  %v9641 = vrot.slane %v9356, 5
  %v9642 = vsel %vm2615, %v9640, %v9641
  %v9643 = vrot.slane %v9641, 4
  %v9644 = vrot.slane %v9357, 5
  %v9645 = vsel %vm2615, %v9643, %v9644
  %v9646 = vrot.slane %v9358, 5
  %v9647 = vrot.slane %v9646, 4
  %v9648 = vrot.slane %v9359, 5
  %v9649 = vsel %vm2615, %v9647, %v9648
  %v9650 = vrot.slane %v9648, 4
  %v9651 = vrot.slane %v9360, 5
  %v9652 = vsel %vm2615, %v9650, %v9651
  %v9653 = vrot.slane %v9361, 5
  %v9654 = vrot.slane %v9653, 4
  %v9655 = vrot.slane %v9362, 5
  %v9656 = vsel %vm2615, %v9654, %v9655
  %v9657 = vrot.slane %v9655, 4
  %v9658 = vrot.slane %v9363, 5
  %v9659 = vsel %vm2615, %v9657, %v9658
  %v9660 = vrot.slane %v9364, 5
  %v9661 = vrot.slane %v9660, 4
  %v9662 = vrot.slane %v9365, 5
  %v9663 = vsel %vm2615, %v9661, %v9662
  %v9664 = vrot.slane %v9662, 4
  %v9665 = vrot.slane %v9366, 5
  %v9666 = vsel %vm2615, %v9664, %v9665
  %v9667 = vrot.slane %v9367, 5
  %v9668 = vrot.slane %v9667, 4
  %v9669 = vrot.slane %v9368, 5
  %v9670 = vsel %vm2615, %v9668, %v9669
  %v9671 = vrot.slane %v9669, 4
  %v9672 = vrot.slane %v9369, 5
  %v9673 = vsel %vm2615, %v9671, %v9672
  %v9674 = vrot.slane %v9370, 5
  %v9675 = vrot.slane %v9674, 4
  %v9676 = vrot.slane %v9371, 5
  %v9677 = vsel %vm2615, %v9675, %v9676
  %v9678 = vrot.slane %v9676, 4
  %v9679 = vrot.slane %v9372, 5
  %v9680 = vsel %vm2615, %v9678, %v9679
  %v9681 = vrot.slane %v9373, 5
  %v9682 = vrot.slane %v9681, 4
  %v9683 = vrot.slane %v9374, 5
  %v9684 = vsel %vm2615, %v9682, %v9683
  %v9685 = vrot.slane %v9683, 4
  %v9686 = vrot.slane %v9375, 5
  %v9687 = vsel %vm2615, %v9685, %v9686
  %v9688 = vrot.slane %v9376, 5
  %v9689 = vrot.slane %v9688, 4
  %v9690 = vrot.slane %v9377, 5
  %v9691 = vsel %vm2615, %v9689, %v9690
  %v9692 = vrot.slane %v9690, 4
  %v9693 = vrot.slane %v9378, 5
  %v9694 = vsel %vm2615, %v9692, %v9693
  %v9695 = vrot.slane %v9379, 5
  %v9696 = vrot.slane %v9695, 4
  %v9697 = vrot.slane %v9380, 5
  %v9698 = vsel %vm2615, %v9696, %v9697
  %v9699 = vrot.slane %v9697, 4
  %v9700 = vrot.slane %v9381, 5
  %v9701 = vsel %vm2615, %v9699, %v9700
  %v9702 = vld [vmem:[#allocation2] sm:$0xff]
  %v9703 = vld [vmem:[#allocation2 + $0x8] sm:$0xff]
  %v9704 = vld [vmem:[#allocation2 + $0x10] sm:$0xff]
  %v9705 = vld [vmem:[#allocation2 + $0x18] sm:$0xff]
  %v9706 = vld [vmem:[#allocation2 + $0x20] sm:$0xff]
  %v9707 = vld [vmem:[#allocation2 + $0x28] sm:$0xff]
  %v9708 = vld [vmem:[#allocation2 + $0x30] sm:$0xff]
  %v9709 = vld [vmem:[#allocation2 + $0x38] sm:$0xff]
  %v9710 = vld [vmem:[#allocation2 + $0x40] sm:$0xff]
  %v9711 = vld [vmem:[#allocation2 + $0x48] sm:$0xff]
  %v9712 = vld [vmem:[#allocation2 + $0x50] sm:$0xff]
  %v9713 = vld [vmem:[#allocation2 + $0x58] sm:$0xff]
  %v9714 = vld [vmem:[#allocation2 + $0x60] sm:$0xff]
  %v9715 = vld [vmem:[#allocation2 + $0x68] sm:$0xff]
  %v9716 = vld [vmem:[#allocation2 + $0x70] sm:$0xff]
  %v9717 = vld [vmem:[#allocation2 + $0x78] sm:$0xff]
  %v9718 = vld [vmem:[#allocation2 + $0x80] sm:$0xff]
  %v9719 = vld [vmem:[#allocation2 + $0x88] sm:$0xff]
  %v9720 = vld [vmem:[#allocation2 + $0x90] sm:$0xff]
  %v9721 = vld [vmem:[#allocation2 + $0x98] sm:$0xff]
  %v9722 = vld [vmem:[#allocation2 + $0xa0] sm:$0xff]
  %v9723 = vld [vmem:[#allocation2 + $0xa8] sm:$0xff]
  %v9724 = vld [vmem:[#allocation2 + $0xb0] sm:$0xff]
  %v9725 = vld [vmem:[#allocation2 + $0xb8] sm:$0xff]
  %v9726 = vld [vmem:[#allocation2 + $0xc0] sm:$0xff]
  %v9727 = vld [vmem:[#allocation2 + $0xc8] sm:$0xff]
  %v9728 = vld [vmem:[#allocation2 + $0xd0] sm:$0xff]
  %v9729 = vld [vmem:[#allocation2 + $0xd8] sm:$0xff]
  %v9730 = vld [vmem:[#allocation2 + $0xe0] sm:$0xff]
  %v9731 = vld [vmem:[#allocation2 + $0xe8] sm:$0xff]
  %v9732 = vld [vmem:[#allocation2 + $0xf0] sm:$0xff]
  %v9733 = vld [vmem:[#allocation2 + $0xf8] sm:$0xff]
  %v9734 = vld [vmem:[#allocation2 + $0x100] sm:$0xff]
  %v9735 = vld [vmem:[#allocation2 + $0x108] sm:$0xff]
  %v9736 = vld [vmem:[#allocation2 + $0x110] sm:$0xff]
  %v9737 = vld [vmem:[#allocation2 + $0x118] sm:$0xff]
  %v9738 = vld [vmem:[#allocation2 + $0x120] sm:$0xff]
  %v9739 = vld [vmem:[#allocation2 + $0x128] sm:$0xff]
  %v9740 = vld [vmem:[#allocation2 + $0x130] sm:$0xff]
  %v9741 = vld [vmem:[#allocation2 + $0x138] sm:$0xff]
  %v9742 = vld [vmem:[#allocation2 + $0x140] sm:$0xff]
  %v9743 = vld [vmem:[#allocation2 + $0x148] sm:$0xff]
  %v9744 = vld [vmem:[#allocation2 + $0x150] sm:$0xff]
  %v9745 = vld [vmem:[#allocation2 + $0x158] sm:$0xff]
  %v9746 = vld [vmem:[#allocation2 + $0x160] sm:$0xff]
  %v9747 = vld [vmem:[#allocation2 + $0x168] sm:$0xff]
  %v9748 = vld [vmem:[#allocation2 + $0x170] sm:$0xff]
  %v9749 = vld [vmem:[#allocation2 + $0x178] sm:$0xff]
  %v9750 = vld [vmem:[#allocation2 + $0x180] sm:$0xff]
  %v9751 = vld [vmem:[#allocation2 + $0x188] sm:$0xff]
  %v9752 = vld [vmem:[#allocation2 + $0x190] sm:$0xff]
  %v9753 = vld [vmem:[#allocation2 + $0x198] sm:$0xff]
  %v9754 = vld [vmem:[#allocation2 + $0x1a0] sm:$0xff]
  %v9755 = vld [vmem:[#allocation2 + $0x1a8] sm:$0xff]
  %v9756 = vld [vmem:[#allocation2 + $0x1b0] sm:$0xff]
  %v9757 = vld [vmem:[#allocation2 + $0x1b8] sm:$0xff]
  %v9758 = vld [vmem:[#allocation2 + $0x1c0] sm:$0xff]
  %v9759 = vld [vmem:[#allocation2 + $0x1c8] sm:$0xff]
  %v9760 = vld [vmem:[#allocation2 + $0x1d0] sm:$0xff]
  %v9761 = vld [vmem:[#allocation2 + $0x1d8] sm:$0xff]
  %v9762 = vld [vmem:[#allocation2 + $0x1e0] sm:$0xff]
  %v9763 = vld [vmem:[#allocation2 + $0x1e8] sm:$0xff]
  %v9764 = vld [vmem:[#allocation2 + $0x1f0] sm:$0xff]
  %v9765 = vld [vmem:[#allocation2 + $0x1f8] sm:$0xff]
  %s9766 = scalar_lea.vmem %s1, 512
  %v9767 = vld [vmem:[%s9766] sm:$0xf]
  %v9768 = vld [vmem:[%s9766 + $0x4] sm:$0xf]
  %v9769 = vld [vmem:[%s9766 + $0x8] sm:$0xf]
  %v9770 = vld [vmem:[%s9766 + $0xc] sm:$0xf]
  %v9771 = vld [vmem:[%s9766 + $0x10] sm:$0xf]
  %v9772 = vld [vmem:[%s9766 + $0x14] sm:$0xf]
  %v9773 = vld [vmem:[%s9766 + $0x18] sm:$0xf]
  %v9774 = vld [vmem:[%s9766 + $0x1c] sm:$0xf]
  %v9775 = vld [vmem:[%s9766 + $0x20] sm:$0xf]
  %v9776 = vld [vmem:[%s9766 + $0x24] sm:$0xf]
  %v9777 = vld [vmem:[%s9766 + $0x28] sm:$0xf]
  %v9778 = vld [vmem:[%s9766 + $0x2c] sm:$0xf]
  %v9779 = vld [vmem:[%s9766 + $0x30] sm:$0xf]
  %v9780 = vld [vmem:[%s9766 + $0x34] sm:$0xf]
  %v9781 = vld [vmem:[%s9766 + $0x38] sm:$0xf]
  %v9782 = vld [vmem:[%s9766 + $0x3c] sm:$0xf]
  %v9783 = vunpack.c.l.b16 %v9481
  %v9784 = vunpack.c.l.b16 %v9484
  %v9785 = vunpack.c.l.b16 %v9488
  %v9786 = vunpack.c.l.b16 %v9491
  %v9787 = vunpack.c.l.b16 %v9495
  %v9788 = vunpack.c.l.b16 %v9498
  %v9789 = vunpack.c.l.b16 %v9502
  %v9790 = vunpack.c.l.b16 %v9505
  %v9791 = vunpack.c.l.b16 %v9509
  %v9792 = vunpack.c.l.b16 %v9512
  %v9793 = vunpack.c.l.b16 %v9516
  %v9794 = vunpack.c.l.b16 %v9519
  %v9795 = vunpack.c.l.b16 %v9523
  %v9796 = vunpack.c.l.b16 %v9526
  %v9797 = vunpack.c.l.b16 %v9530
  %v9798 = vunpack.c.l.b16 %v9533
  %v9799 = vunpack.c.l.b16 %v9537
  %v9800 = vunpack.c.l.b16 %v9540
  %v9801 = vunpack.c.l.b16 %v9544
  %v9802 = vunpack.c.l.b16 %v9547
  %v9803 = vunpack.c.l.b16 %v9551
  %v9804 = vunpack.c.l.b16 %v9554
  %v9805 = vunpack.c.l.b16 %v9558
  %v9806 = vunpack.c.l.b16 %v9561
  %v9807 = vunpack.c.l.b16 %v9565
  %v9808 = vunpack.c.l.b16 %v9568
  %v9809 = vunpack.c.l.b16 %v9572
  %v9810 = vunpack.c.l.b16 %v9575
  %v9811 = vunpack.c.l.b16 %v9579
  %v9812 = vunpack.c.l.b16 %v9582
  %v9813 = vunpack.c.l.b16 %v9586
  %v9814 = vunpack.c.l.b16 %v9589
  %v9815 = vunpack.c.l.b16 %v9593
  %v9816 = vunpack.c.l.b16 %v9596
  %v9817 = vunpack.c.l.b16 %v9600
  %v9818 = vunpack.c.l.b16 %v9603
  %v9819 = vunpack.c.l.b16 %v9607
  %v9820 = vunpack.c.l.b16 %v9610
  %v9821 = vunpack.c.l.b16 %v9614
  %v9822 = vunpack.c.l.b16 %v9617
  %v9823 = vunpack.c.l.b16 %v9621
  %v9824 = vunpack.c.l.b16 %v9624
  %v9825 = vunpack.c.l.b16 %v9628
  %v9826 = vunpack.c.l.b16 %v9631
  %v9827 = vunpack.c.l.b16 %v9635
  %v9828 = vunpack.c.l.b16 %v9638
  %v9829 = vunpack.c.l.b16 %v9642
  %v9830 = vunpack.c.l.b16 %v9645
  %v9831 = vunpack.c.l.b16 %v9649
  %v9832 = vunpack.c.l.b16 %v9652
  %v9833 = vunpack.c.l.b16 %v9656
  %v9834 = vunpack.c.l.b16 %v9659
  %v9835 = vunpack.c.l.b16 %v9663
  %v9836 = vunpack.c.l.b16 %v9666
  %v9837 = vunpack.c.l.b16 %v9670
  %v9838 = vunpack.c.l.b16 %v9673
  %v9839 = vunpack.c.l.b16 %v9677
  %v9840 = vunpack.c.l.b16 %v9680
  %v9841 = vunpack.c.l.b16 %v9684
  %v9842 = vunpack.c.l.b16 %v9687
  %v9843 = vunpack.c.l.b16 %v9691
  %v9844 = vunpack.c.l.b16 %v9694
  %v9845 = vunpack.c.l.b16 %v9698
  %v9846 = vunpack.c.l.b16 %v9701
  %v9847 = vpack.c.b16 %v9784, %v9783
  %v9848 = vpack.c.b16 %v9786, %v9785
  %v9849 = vpack.c.b16 %v9788, %v9787
  %v9850 = vpack.c.b16 %v9790, %v9789
  %v9851 = vpack.c.b16 %v9792, %v9791
  %v9852 = vpack.c.b16 %v9794, %v9793
  %v9853 = vpack.c.b16 %v9796, %v9795
  %v9854 = vpack.c.b16 %v9798, %v9797
  %v9855 = vpack.c.b16 %v9800, %v9799
  %v9856 = vpack.c.b16 %v9802, %v9801
  %v9857 = vpack.c.b16 %v9804, %v9803
  %v9858 = vpack.c.b16 %v9806, %v9805
  %v9859 = vpack.c.b16 %v9808, %v9807
  %v9860 = vpack.c.b16 %v9810, %v9809
  %v9861 = vpack.c.b16 %v9812, %v9811
  %v9862 = vpack.c.b16 %v9814, %v9813
  %v9863 = vpack.c.b16 %v9816, %v9815
  %v9864 = vpack.c.b16 %v9818, %v9817
  %v9865 = vpack.c.b16 %v9820, %v9819
  %v9866 = vpack.c.b16 %v9822, %v9821
  %v9867 = vpack.c.b16 %v9824, %v9823
  %v9868 = vpack.c.b16 %v9826, %v9825
  %v9869 = vpack.c.b16 %v9828, %v9827
  %v9870 = vpack.c.b16 %v9830, %v9829
  %v9871 = vpack.c.b16 %v9832, %v9831
  %v9872 = vpack.c.b16 %v9834, %v9833
  %v9873 = vpack.c.b16 %v9836, %v9835
  %v9874 = vpack.c.b16 %v9838, %v9837
  %v9875 = vpack.c.b16 %v9840, %v9839
  %v9876 = vpack.c.b16 %v9842, %v9841
  %v9877 = vpack.c.b16 %v9844, %v9843
  %v9878 = vpack.c.b16 %v9846, %v9845
  %v9927 = vunpack.c.l.b16 %v9767
  %v9928 = vunpack.c.l.b16 %v9768
  %v9929 = vunpack.c.l.b16 %v9769
  %v9930 = vunpack.c.l.b16 %v9770
  %v9931 = vunpack.c.l.b16 %v9771
  %v9932 = vunpack.c.l.b16 %v9772
  %v9933 = vunpack.c.l.b16 %v9773
  %v9934 = vunpack.c.l.b16 %v9774
  %v9935 = vunpack.c.l.b16 %v9775
  %v9936 = vunpack.c.l.b16 %v9776
  %v9937 = vunpack.c.l.b16 %v9777
  %v9938 = vunpack.c.l.b16 %v9778
  %v9939 = vunpack.c.l.b16 %v9779
  %v9940 = vunpack.c.l.b16 %v9780
  %v9941 = vunpack.c.l.b16 %v9781
  %v9942 = vunpack.c.l.b16 %v9782
  %v9943 = vpack.c.b16 %v9928, %v9927
  %v9944 = vpack.c.b16 %v9930, %v9929
  %v9945 = vpack.c.b16 %v9932, %v9931
  %v9946 = vpack.c.b16 %v9934, %v9933
  %v9947 = vpack.c.b16 %v9936, %v9935
  %v9948 = vpack.c.b16 %v9938, %v9937
  %v9949 = vpack.c.b16 %v9940, %v9939
  %v9950 = vpack.c.b16 %v9942, %v9941
  %9959 = vmatprep.subr.bf16.mxu0 0
  %9960 = vmatpush1.bf16.msra.mxu0 %v9950
  %9961 = vmatprep.subr.bf16.mxu0 0
  %9962 = vmatpush1.bf16.msra.mxu0 %v9949
  %9963 = vmatprep.subr.bf16.mxu0 0
  %9964 = vmatpush1.bf16.msra.mxu0 %v9948
  %9965 = vmatprep.subr.bf16.mxu0 0
  %9966 = vmatpush1.bf16.msra.mxu0 %v9947
  %9967 = vmatprep.subr.bf16.mxu0 0
  %9968 = vmatpush1.bf16.msra.mxu0 %v9946
  %9969 = vmatprep.subr.bf16.mxu0 0
  %9970 = vmatpush1.bf16.msra.mxu0 %v9945
  %9971 = vmatprep.subr.bf16.mxu0 0
  %9972 = vmatpush1.bf16.msra.mxu0 %v9944
  %9973 = vmatprep.subr.bf16.mxu0 0
  %9974 = vmatpush1.bf16.msra.mxu0 %v9943
  %9975 = vmatprep.subr.bf16.mxu0 0
  %9976 = vmatpush2.bf16.msra.mxu0 0
  %9977 = vmatprep.subr.bf16.mxu0 0
  %9978 = vmatpush2.bf16.msra.mxu0 0
  %9979 = vmatprep.subr.bf16.mxu0 0
  %9980 = vmatpush2.bf16.msra.mxu0 0
  %9981 = vmatprep.subr.bf16.mxu0 0
  %9982 = vmatpush2.bf16.msra.mxu0 0
  %9983 = vmatprep.subr.bf16.mxu0 0
  %9984 = vmatpush2.bf16.msra.mxu0 0
  %9985 = vmatprep.subr.bf16.mxu0 0
  %9986 = vmatpush2.bf16.msra.mxu0 0
  %9987 = vmatprep.subr.bf16.mxu0 0
  %9988 = vmatpush2.bf16.msra.mxu0 0
  %9989 = vmatprep.subr.bf16.mxu0 0
  %9990 = vmatpush2.bf16.msra.mxu0 0
  %9991 = vmatprep.mubr.bf16.mxu0 0
  %9992 = vmatmul.mubr.bf16.gmra.mxu0 %v9847
  %v9993 = vpop.f32.mrf.mxu0
  %v9994 = vadd.f32 0.0, %v9993
  %v9995 = vpop.f32.mrf.mxu0
  %v9996 = vpop.f32.mrf.mxu0
  %v9997 = vadd.f32 0.0, %v9996
  %v9998 = vpop.f32.mrf.mxu0
  %9999 = vmatprep.mubr.bf16.mxu0 0
  %10000 = vmatmul.mubr.bf16.gmra.mxu0 %v9848
  %v10001 = vpop.f32.mrf.mxu0
  %v10002 = vadd.f32 0.0, %v10001
  %v10003 = vpop.f32.mrf.mxu0
  %v10004 = vpop.f32.mrf.mxu0
  %v10005 = vadd.f32 0.0, %v10004
  %v10006 = vpop.f32.mrf.mxu0
  %10007 = vmatprep.mubr.bf16.mxu0 0
  %10008 = vmatmul.mubr.bf16.gmra.mxu0 %v9849
  %v10009 = vpop.f32.mrf.mxu0
  %v10010 = vadd.f32 0.0, %v10009
  %v10011 = vpop.f32.mrf.mxu0
  %v10012 = vpop.f32.mrf.mxu0
  %v10013 = vadd.f32 0.0, %v10012
  %v10014 = vpop.f32.mrf.mxu0
  %10015 = vmatprep.mubr.bf16.mxu0 0
  %10016 = vmatmul.mubr.bf16.gmra.mxu0 %v9850
  %v10017 = vpop.f32.mrf.mxu0
  %v10018 = vadd.f32 0.0, %v10017
  %v10019 = vpop.f32.mrf.mxu0
  %v10020 = vpop.f32.mrf.mxu0
  %v10021 = vadd.f32 0.0, %v10020
  %v10022 = vpop.f32.mrf.mxu0
  %10023 = vmatprep.mubr.bf16.mxu0 0
  %10024 = vmatmul.mubr.bf16.gmra.mxu0 %v9851
  %v10025 = vpop.f32.mrf.mxu0
  %v10026 = vadd.f32 0.0, %v10025
  %v10027 = vpop.f32.mrf.mxu0
  %v10028 = vpop.f32.mrf.mxu0
  %v10029 = vadd.f32 0.0, %v10028
  %v10030 = vpop.f32.mrf.mxu0
  %10031 = vmatprep.mubr.bf16.mxu0 0
  %10032 = vmatmul.mubr.bf16.gmra.mxu0 %v9852
  %v10033 = vpop.f32.mrf.mxu0
  %v10034 = vadd.f32 0.0, %v10033
  %v10035 = vpop.f32.mrf.mxu0
  %v10036 = vpop.f32.mrf.mxu0
  %v10037 = vadd.f32 0.0, %v10036
  %v10038 = vpop.f32.mrf.mxu0
  %10039 = vmatprep.mubr.bf16.mxu0 0
  %10040 = vmatmul.mubr.bf16.gmra.mxu0 %v9853
  %v10041 = vpop.f32.mrf.mxu0
  %v10042 = vadd.f32 0.0, %v10041
  %v10043 = vpop.f32.mrf.mxu0
  %v10044 = vpop.f32.mrf.mxu0
  %v10045 = vadd.f32 0.0, %v10044
  %v10046 = vpop.f32.mrf.mxu0
  %10047 = vmatprep.mubr.bf16.mxu0 0
  %10048 = vmatmul.mubr.bf16.gmra.mxu0 %v9854
  %v10049 = vpop.f32.mrf.mxu0
  %v10050 = vadd.f32 0.0, %v10049
  %v10051 = vpop.f32.mrf.mxu0
  %v10052 = vpop.f32.mrf.mxu0
  %v10053 = vadd.f32 0.0, %v10052
  %v10054 = vpop.f32.mrf.mxu0
  %10055 = vmatprep.mubr.bf16.mxu0 0
  %10056 = vmatmul.mubr.bf16.gmra.mxu0 %v9855
  %v10057 = vpop.f32.mrf.mxu0
  %v10058 = vadd.f32 0.0, %v10057
  %v10059 = vpop.f32.mrf.mxu0
  %v10060 = vpop.f32.mrf.mxu0
  %v10061 = vadd.f32 0.0, %v10060
  %v10062 = vpop.f32.mrf.mxu0
  %10063 = vmatprep.mubr.bf16.mxu0 0
  %10064 = vmatmul.mubr.bf16.gmra.mxu0 %v9856
  %v10065 = vpop.f32.mrf.mxu0
  %v10066 = vadd.f32 0.0, %v10065
  %v10067 = vpop.f32.mrf.mxu0
  %v10068 = vpop.f32.mrf.mxu0
  %v10069 = vadd.f32 0.0, %v10068
  %v10070 = vpop.f32.mrf.mxu0
  %10071 = vmatprep.mubr.bf16.mxu0 0
  %10072 = vmatmul.mubr.bf16.gmra.mxu0 %v9857
  %v10073 = vpop.f32.mrf.mxu0
  %v10074 = vadd.f32 0.0, %v10073
  %v10075 = vpop.f32.mrf.mxu0
  %v10076 = vpop.f32.mrf.mxu0
  %v10077 = vadd.f32 0.0, %v10076
  %v10078 = vpop.f32.mrf.mxu0
  %10079 = vmatprep.mubr.bf16.mxu0 0
  %10080 = vmatmul.mubr.bf16.gmra.mxu0 %v9858
  %v10081 = vpop.f32.mrf.mxu0
  %v10082 = vadd.f32 0.0, %v10081
  %v10083 = vpop.f32.mrf.mxu0
  %v10084 = vpop.f32.mrf.mxu0
  %v10085 = vadd.f32 0.0, %v10084
  %v10086 = vpop.f32.mrf.mxu0
  %10087 = vmatprep.mubr.bf16.mxu0 0
  %10088 = vmatmul.mubr.bf16.gmra.mxu0 %v9859
  %v10089 = vpop.f32.mrf.mxu0
  %v10090 = vadd.f32 0.0, %v10089
  %v10091 = vpop.f32.mrf.mxu0
  %v10092 = vpop.f32.mrf.mxu0
  %v10093 = vadd.f32 0.0, %v10092
  %v10094 = vpop.f32.mrf.mxu0
  %10095 = vmatprep.mubr.bf16.mxu0 0
  %10096 = vmatmul.mubr.bf16.gmra.mxu0 %v9860
  %v10097 = vpop.f32.mrf.mxu0
  %v10098 = vadd.f32 0.0, %v10097
  %v10099 = vpop.f32.mrf.mxu0
  %v10100 = vpop.f32.mrf.mxu0
  %v10101 = vadd.f32 0.0, %v10100
  %v10102 = vpop.f32.mrf.mxu0
  %10103 = vmatprep.mubr.bf16.mxu0 0
  %10104 = vmatmul.mubr.bf16.gmra.mxu0 %v9861
  %v10105 = vpop.f32.mrf.mxu0
  %v10106 = vadd.f32 0.0, %v10105
  %v10107 = vpop.f32.mrf.mxu0
  %v10108 = vpop.f32.mrf.mxu0
  %v10109 = vadd.f32 0.0, %v10108
  %v10110 = vpop.f32.mrf.mxu0
  %10111 = vmatprep.mubr.bf16.mxu0 0
  %10112 = vmatmul.mubr.bf16.gmra.mxu0 %v9862
  %v10113 = vpop.f32.mrf.mxu0
  %v10114 = vadd.f32 0.0, %v10113
  %v10115 = vpop.f32.mrf.mxu0
  %v10116 = vpop.f32.mrf.mxu0
  %v10117 = vadd.f32 0.0, %v10116
  %v10118 = vpop.f32.mrf.mxu0
  %10119 = vmatprep.mubr.bf16.mxu0 0
  %10120 = vmatmul.mubr.bf16.gmra.mxu0 %v9863
  %v10121 = vpop.f32.mrf.mxu0
  %v10122 = vadd.f32 0.0, %v10121
  %v10123 = vpop.f32.mrf.mxu0
  %v10124 = vpop.f32.mrf.mxu0
  %v10125 = vadd.f32 0.0, %v10124
  %v10126 = vpop.f32.mrf.mxu0
  %10127 = vmatprep.mubr.bf16.mxu0 0
  %10128 = vmatmul.mubr.bf16.gmra.mxu0 %v9864
  %v10129 = vpop.f32.mrf.mxu0
  %v10130 = vadd.f32 0.0, %v10129
  %v10131 = vpop.f32.mrf.mxu0
  %v10132 = vpop.f32.mrf.mxu0
  %v10133 = vadd.f32 0.0, %v10132
  %v10134 = vpop.f32.mrf.mxu0
  %10135 = vmatprep.mubr.bf16.mxu0 0
  %10136 = vmatmul.mubr.bf16.gmra.mxu0 %v9865
  %v10137 = vpop.f32.mrf.mxu0
  %v10138 = vadd.f32 0.0, %v10137
  %v10139 = vpop.f32.mrf.mxu0
  %v10140 = vpop.f32.mrf.mxu0
  %v10141 = vadd.f32 0.0, %v10140
  %v10142 = vpop.f32.mrf.mxu0
  %10143 = vmatprep.mubr.bf16.mxu0 0
  %10144 = vmatmul.mubr.bf16.gmra.mxu0 %v9866
  %v10145 = vpop.f32.mrf.mxu0
  %v10146 = vadd.f32 0.0, %v10145
  %v10147 = vpop.f32.mrf.mxu0
  %v10148 = vpop.f32.mrf.mxu0
  %v10149 = vadd.f32 0.0, %v10148
  %v10150 = vpop.f32.mrf.mxu0
  %10151 = vmatprep.mubr.bf16.mxu0 0
  %10152 = vmatmul.mubr.bf16.gmra.mxu0 %v9867
  %v10153 = vpop.f32.mrf.mxu0
  %v10154 = vadd.f32 0.0, %v10153
  %v10155 = vpop.f32.mrf.mxu0
  %v10156 = vpop.f32.mrf.mxu0
  %v10157 = vadd.f32 0.0, %v10156
  %v10158 = vpop.f32.mrf.mxu0
  %10159 = vmatprep.mubr.bf16.mxu0 0
  %10160 = vmatmul.mubr.bf16.gmra.mxu0 %v9868
  %v10161 = vpop.f32.mrf.mxu0
  %v10162 = vadd.f32 0.0, %v10161
  %v10163 = vpop.f32.mrf.mxu0
  %v10164 = vpop.f32.mrf.mxu0
  %v10165 = vadd.f32 0.0, %v10164
  %v10166 = vpop.f32.mrf.mxu0
  %10167 = vmatprep.mubr.bf16.mxu0 0
  %10168 = vmatmul.mubr.bf16.gmra.mxu0 %v9869
  %v10169 = vpop.f32.mrf.mxu0
  %v10170 = vadd.f32 0.0, %v10169
  %v10171 = vpop.f32.mrf.mxu0
  %v10172 = vpop.f32.mrf.mxu0
  %v10173 = vadd.f32 0.0, %v10172
  %v10174 = vpop.f32.mrf.mxu0
  %10175 = vmatprep.mubr.bf16.mxu0 0
  %10176 = vmatmul.mubr.bf16.gmra.mxu0 %v9870
  %v10177 = vpop.f32.mrf.mxu0
  %v10178 = vadd.f32 0.0, %v10177
  %v10179 = vpop.f32.mrf.mxu0
  %v10180 = vpop.f32.mrf.mxu0
  %v10181 = vadd.f32 0.0, %v10180
  %v10182 = vpop.f32.mrf.mxu0
  %10183 = vmatprep.mubr.bf16.mxu0 0
  %10184 = vmatmul.mubr.bf16.gmra.mxu0 %v9871
  %v10185 = vpop.f32.mrf.mxu0
  %v10186 = vadd.f32 0.0, %v10185
  %v10187 = vpop.f32.mrf.mxu0
  %v10188 = vpop.f32.mrf.mxu0
  %v10189 = vadd.f32 0.0, %v10188
  %v10190 = vpop.f32.mrf.mxu0
  %10191 = vmatprep.mubr.bf16.mxu0 0
  %10192 = vmatmul.mubr.bf16.gmra.mxu0 %v9872
  %v10193 = vpop.f32.mrf.mxu0
  %v10194 = vadd.f32 0.0, %v10193
  %v10195 = vpop.f32.mrf.mxu0
  %v10196 = vpop.f32.mrf.mxu0
  %v10197 = vadd.f32 0.0, %v10196
  %v10198 = vpop.f32.mrf.mxu0
  %10199 = vmatprep.mubr.bf16.mxu0 0
  %10200 = vmatmul.mubr.bf16.gmra.mxu0 %v9873
  %v10201 = vpop.f32.mrf.mxu0
  %v10202 = vadd.f32 0.0, %v10201
  %v10203 = vpop.f32.mrf.mxu0
  %v10204 = vpop.f32.mrf.mxu0
  %v10205 = vadd.f32 0.0, %v10204
  %v10206 = vpop.f32.mrf.mxu0
  %10207 = vmatprep.mubr.bf16.mxu0 0
  %10208 = vmatmul.mubr.bf16.gmra.mxu0 %v9874
  %v10209 = vpop.f32.mrf.mxu0
  %v10210 = vadd.f32 0.0, %v10209
  %v10211 = vpop.f32.mrf.mxu0
  %v10212 = vpop.f32.mrf.mxu0
  %v10213 = vadd.f32 0.0, %v10212
  %v10214 = vpop.f32.mrf.mxu0
  %10215 = vmatprep.mubr.bf16.mxu0 0
  %10216 = vmatmul.mubr.bf16.gmra.mxu0 %v9875
  %v10217 = vpop.f32.mrf.mxu0
  %v10218 = vadd.f32 0.0, %v10217
  %v10219 = vpop.f32.mrf.mxu0
  %v10220 = vpop.f32.mrf.mxu0
  %v10221 = vadd.f32 0.0, %v10220
  %v10222 = vpop.f32.mrf.mxu0
  %10223 = vmatprep.mubr.bf16.mxu0 0
  %10224 = vmatmul.mubr.bf16.gmra.mxu0 %v9876
  %v10225 = vpop.f32.mrf.mxu0
  %v10226 = vadd.f32 0.0, %v10225
  %v10227 = vpop.f32.mrf.mxu0
  %v10228 = vpop.f32.mrf.mxu0
  %v10229 = vadd.f32 0.0, %v10228
  %v10230 = vpop.f32.mrf.mxu0
  %10231 = vmatprep.mubr.bf16.mxu0 0
  %10232 = vmatmul.mubr.bf16.gmra.mxu0 %v9877
  %v10233 = vpop.f32.mrf.mxu0
  %v10234 = vadd.f32 0.0, %v10233
  %v10235 = vpop.f32.mrf.mxu0
  %v10236 = vpop.f32.mrf.mxu0
  %v10237 = vadd.f32 0.0, %v10236
  %v10238 = vpop.f32.mrf.mxu0
  %10239 = vmatprep.mubr.bf16.mxu0 0
  %10240 = vmatmul.mubr.bf16.gmra.mxu0 %v9878
  %v10241 = vpop.f32.mrf.mxu0
  %v10242 = vadd.f32 0.0, %v10241
  %v10243 = vpop.f32.mrf.mxu0
  %v10244 = vpop.f32.mrf.mxu0
  %v10245 = vadd.f32 0.0, %v10244
  %v10246 = vpop.f32.mrf.mxu0
  %10247 = vdwg.mxu0
  %v10248 = vadd.f32 %v9702, %v9994
  %v10249 = vadd.f32 %v9703, %v9997
  %v10250 = vadd.f32 %v9704, %v10002
  %v10251 = vadd.f32 %v9705, %v10005
  %v10252 = vadd.f32 %v9706, %v10010
  %v10253 = vadd.f32 %v9707, %v10013
  %v10254 = vadd.f32 %v9708, %v10018
  %v10255 = vadd.f32 %v9709, %v10021
  %v10256 = vadd.f32 %v9710, %v10026
  %v10257 = vadd.f32 %v9711, %v10029
  %v10258 = vadd.f32 %v9712, %v10034
  %v10259 = vadd.f32 %v9713, %v10037
  %v10260 = vadd.f32 %v9714, %v10042
  %v10261 = vadd.f32 %v9715, %v10045
  %v10262 = vadd.f32 %v9716, %v10050
  %v10263 = vadd.f32 %v9717, %v10053
  %v10264 = vadd.f32 %v9718, %v10058
  %v10265 = vadd.f32 %v9719, %v10061
  %v10266 = vadd.f32 %v9720, %v10066
  %v10267 = vadd.f32 %v9721, %v10069
  %v10268 = vadd.f32 %v9722, %v10074
  %v10269 = vadd.f32 %v9723, %v10077
  %v10270 = vadd.f32 %v9724, %v10082
  %v10271 = vadd.f32 %v9725, %v10085
  %v10272 = vadd.f32 %v9726, %v10090
  %v10273 = vadd.f32 %v9727, %v10093
  %v10274 = vadd.f32 %v9728, %v10098
  %v10275 = vadd.f32 %v9729, %v10101
  %v10276 = vadd.f32 %v9730, %v10106
  %v10277 = vadd.f32 %v9731, %v10109
  %v10278 = vadd.f32 %v9732, %v10114
  %v10279 = vadd.f32 %v9733, %v10117
  %v10280 = vadd.f32 %v9734, %v10122
  %v10281 = vadd.f32 %v9735, %v10125
  %v10282 = vadd.f32 %v9736, %v10130
  %v10283 = vadd.f32 %v9737, %v10133
  %v10284 = vadd.f32 %v9738, %v10138
  %v10285 = vadd.f32 %v9739, %v10141
  %v10286 = vadd.f32 %v9740, %v10146
  %v10287 = vadd.f32 %v9741, %v10149
  %v10288 = vadd.f32 %v9742, %v10154
  %v10289 = vadd.f32 %v9743, %v10157
  %v10290 = vadd.f32 %v9744, %v10162
  %v10291 = vadd.f32 %v9745, %v10165
  %v10292 = vadd.f32 %v9746, %v10170
  %v10293 = vadd.f32 %v9747, %v10173
  %v10294 = vadd.f32 %v9748, %v10178
  %v10295 = vadd.f32 %v9749, %v10181
  %v10296 = vadd.f32 %v9750, %v10186
  %v10297 = vadd.f32 %v9751, %v10189
  %v10298 = vadd.f32 %v9752, %v10194
  %v10299 = vadd.f32 %v9753, %v10197
  %v10300 = vadd.f32 %v9754, %v10202
  %v10301 = vadd.f32 %v9755, %v10205
  %v10302 = vadd.f32 %v9756, %v10210
  %v10303 = vadd.f32 %v9757, %v10213
  %v10304 = vadd.f32 %v9758, %v10218
  %v10305 = vadd.f32 %v9759, %v10221
  %v10306 = vadd.f32 %v9760, %v10226
  %v10307 = vadd.f32 %v9761, %v10229
  %v10308 = vadd.f32 %v9762, %v10234
  %v10309 = vadd.f32 %v9763, %v10237
  %v10310 = vadd.f32 %v9764, %v10242
  %v10311 = vadd.f32 %v9765, %v10245
  %10312 = vst [vmem:[#allocation2] sm:$0xff] %v10248
  %10313 = vst [vmem:[#allocation2 + $0x8] sm:$0xff] %v10249
  %10314 = vst [vmem:[#allocation2 + $0x10] sm:$0xff] %v10250
  %10315 = vst [vmem:[#allocation2 + $0x18] sm:$0xff] %v10251
  %10316 = vst [vmem:[#allocation2 + $0x20] sm:$0xff] %v10252
  %10317 = vst [vmem:[#allocation2 + $0x28] sm:$0xff] %v10253
  %10318 = vst [vmem:[#allocation2 + $0x30] sm:$0xff] %v10254
  %10319 = vst [vmem:[#allocation2 + $0x38] sm:$0xff] %v10255
  %10320 = vst [vmem:[#allocation2 + $0x40] sm:$0xff] %v10256
  %10321 = vst [vmem:[#allocation2 + $0x48] sm:$0xff] %v10257
  %10322 = vst [vmem:[#allocation2 + $0x50] sm:$0xff] %v10258
  %10323 = vst [vmem:[#allocation2 + $0x58] sm:$0xff] %v10259
  %10324 = vst [vmem:[#allocation2 + $0x60] sm:$0xff] %v10260
  %10325 = vst [vmem:[#allocation2 + $0x68] sm:$0xff] %v10261
  %10326 = vst [vmem:[#allocation2 + $0x70] sm:$0xff] %v10262
  %10327 = vst [vmem:[#allocation2 + $0x78] sm:$0xff] %v10263
  %10328 = vst [vmem:[#allocation2 + $0x80] sm:$0xff] %v10264
  %10329 = vst [vmem:[#allocation2 + $0x88] sm:$0xff] %v10265
  %10330 = vst [vmem:[#allocation2 + $0x90] sm:$0xff] %v10266
  %10331 = vst [vmem:[#allocation2 + $0x98] sm:$0xff] %v10267
  %10332 = vst [vmem:[#allocation2 + $0xa0] sm:$0xff] %v10268
  %10333 = vst [vmem:[#allocation2 + $0xa8] sm:$0xff] %v10269
  %10334 = vst [vmem:[#allocation2 + $0xb0] sm:$0xff] %v10270
  %10335 = vst [vmem:[#allocation2 + $0xb8] sm:$0xff] %v10271
  %10336 = vst [vmem:[#allocation2 + $0xc0] sm:$0xff] %v10272
  %10337 = vst [vmem:[#allocation2 + $0xc8] sm:$0xff] %v10273
  %10338 = vst [vmem:[#allocation2 + $0xd0] sm:$0xff] %v10274
  %10339 = vst [vmem:[#allocation2 + $0xd8] sm:$0xff] %v10275
  %10340 = vst [vmem:[#allocation2 + $0xe0] sm:$0xff] %v10276
  %10341 = vst [vmem:[#allocation2 + $0xe8] sm:$0xff] %v10277
  %10342 = vst [vmem:[#allocation2 + $0xf0] sm:$0xff] %v10278
  %10343 = vst [vmem:[#allocation2 + $0xf8] sm:$0xff] %v10279
  %10344 = vst [vmem:[#allocation2 + $0x100] sm:$0xff] %v10280
  %10345 = vst [vmem:[#allocation2 + $0x108] sm:$0xff] %v10281
  %10346 = vst [vmem:[#allocation2 + $0x110] sm:$0xff] %v10282
  %10347 = vst [vmem:[#allocation2 + $0x118] sm:$0xff] %v10283
  %10348 = vst [vmem:[#allocation2 + $0x120] sm:$0xff] %v10284
  %10349 = vst [vmem:[#allocation2 + $0x128] sm:$0xff] %v10285
  %10350 = vst [vmem:[#allocation2 + $0x130] sm:$0xff] %v10286
  %10351 = vst [vmem:[#allocation2 + $0x138] sm:$0xff] %v10287
  %10352 = vst [vmem:[#allocation2 + $0x140] sm:$0xff] %v10288
  %10353 = vst [vmem:[#allocation2 + $0x148] sm:$0xff] %v10289
  %10354 = vst [vmem:[#allocation2 + $0x150] sm:$0xff] %v10290
  %10355 = vst [vmem:[#allocation2 + $0x158] sm:$0xff] %v10291
  %10356 = vst [vmem:[#allocation2 + $0x160] sm:$0xff] %v10292
  %10357 = vst [vmem:[#allocation2 + $0x168] sm:$0xff] %v10293
  %10358 = vst [vmem:[#allocation2 + $0x170] sm:$0xff] %v10294
  %10359 = vst [vmem:[#allocation2 + $0x178] sm:$0xff] %v10295
  %10360 = vst [vmem:[#allocation2 + $0x180] sm:$0xff] %v10296
  %10361 = vst [vmem:[#allocation2 + $0x188] sm:$0xff] %v10297
  %10362 = vst [vmem:[#allocation2 + $0x190] sm:$0xff] %v10298
  %10363 = vst [vmem:[#allocation2 + $0x198] sm:$0xff] %v10299
  %10364 = vst [vmem:[#allocation2 + $0x1a0] sm:$0xff] %v10300
  %10365 = vst [vmem:[#allocation2 + $0x1a8] sm:$0xff] %v10301
  %10366 = vst [vmem:[#allocation2 + $0x1b0] sm:$0xff] %v10302
  %10367 = vst [vmem:[#allocation2 + $0x1b8] sm:$0xff] %v10303
  %10368 = vst [vmem:[#allocation2 + $0x1c0] sm:$0xff] %v10304
  %10369 = vst [vmem:[#allocation2 + $0x1c8] sm:$0xff] %v10305
  %10370 = vst [vmem:[#allocation2 + $0x1d0] sm:$0xff] %v10306
  %10371 = vst [vmem:[#allocation2 + $0x1d8] sm:$0xff] %v10307
  %10372 = vst [vmem:[#allocation2 + $0x1e0] sm:$0xff] %v10308
  %10373 = vst [vmem:[#allocation2 + $0x1e8] sm:$0xff] %v10309
  %10374 = vst [vmem:[#allocation2 + $0x1f0] sm:$0xff] %v10310
  %10375 = vst [vmem:[#allocation2 + $0x1f8] sm:$0xff] %v10311
  %v10376 = vld [vmem:[#allocation2] sm:$0xff]
  %v10377 = vld [vmem:[#allocation2 + $0x8] sm:$0xff]
  %v10378 = vld [vmem:[#allocation2 + $0x10] sm:$0xff]
  %v10379 = vld [vmem:[#allocation2 + $0x18] sm:$0xff]
  %v10380 = vld [vmem:[#allocation2 + $0x20] sm:$0xff]
  %v10381 = vld [vmem:[#allocation2 + $0x28] sm:$0xff]
  %v10382 = vld [vmem:[#allocation2 + $0x30] sm:$0xff]
  %v10383 = vld [vmem:[#allocation2 + $0x38] sm:$0xff]
  %v10384 = vld [vmem:[#allocation2 + $0x40] sm:$0xff]
  %v10385 = vld [vmem:[#allocation2 + $0x48] sm:$0xff]
  %v10386 = vld [vmem:[#allocation2 + $0x50] sm:$0xff]
  %v10387 = vld [vmem:[#allocation2 + $0x58] sm:$0xff]
  %v10388 = vld [vmem:[#allocation2 + $0x60] sm:$0xff]
  %v10389 = vld [vmem:[#allocation2 + $0x68] sm:$0xff]
  %v10390 = vld [vmem:[#allocation2 + $0x70] sm:$0xff]
  %v10391 = vld [vmem:[#allocation2 + $0x78] sm:$0xff]
  %v10392 = vld [vmem:[#allocation2 + $0x80] sm:$0xff]
  %v10393 = vld [vmem:[#allocation2 + $0x88] sm:$0xff]
  %v10394 = vld [vmem:[#allocation2 + $0x90] sm:$0xff]
  %v10395 = vld [vmem:[#allocation2 + $0x98] sm:$0xff]
  %v10396 = vld [vmem:[#allocation2 + $0xa0] sm:$0xff]
  %v10397 = vld [vmem:[#allocation2 + $0xa8] sm:$0xff]
  %v10398 = vld [vmem:[#allocation2 + $0xb0] sm:$0xff]
  %v10399 = vld [vmem:[#allocation2 + $0xb8] sm:$0xff]
  %v10400 = vld [vmem:[#allocation2 + $0xc0] sm:$0xff]
  %v10401 = vld [vmem:[#allocation2 + $0xc8] sm:$0xff]
  %v10402 = vld [vmem:[#allocation2 + $0xd0] sm:$0xff]
  %v10403 = vld [vmem:[#allocation2 + $0xd8] sm:$0xff]
  %v10404 = vld [vmem:[#allocation2 + $0xe0] sm:$0xff]
  %v10405 = vld [vmem:[#allocation2 + $0xe8] sm:$0xff]
  %v10406 = vld [vmem:[#allocation2 + $0xf0] sm:$0xff]
  %v10407 = vld [vmem:[#allocation2 + $0xf8] sm:$0xff]
  %v10408 = vld [vmem:[#allocation2 + $0x100] sm:$0xff]
  %v10409 = vld [vmem:[#allocation2 + $0x108] sm:$0xff]
  %v10410 = vld [vmem:[#allocation2 + $0x110] sm:$0xff]
  %v10411 = vld [vmem:[#allocation2 + $0x118] sm:$0xff]
  %v10412 = vld [vmem:[#allocation2 + $0x120] sm:$0xff]
  %v10413 = vld [vmem:[#allocation2 + $0x128] sm:$0xff]
  %v10414 = vld [vmem:[#allocation2 + $0x130] sm:$0xff]
  %v10415 = vld [vmem:[#allocation2 + $0x138] sm:$0xff]
  %v10416 = vld [vmem:[#allocation2 + $0x140] sm:$0xff]
  %v10417 = vld [vmem:[#allocation2 + $0x148] sm:$0xff]
  %v10418 = vld [vmem:[#allocation2 + $0x150] sm:$0xff]
  %v10419 = vld [vmem:[#allocation2 + $0x158] sm:$0xff]
  %v10420 = vld [vmem:[#allocation2 + $0x160] sm:$0xff]
  %v10421 = vld [vmem:[#allocation2 + $0x168] sm:$0xff]
  %v10422 = vld [vmem:[#allocation2 + $0x170] sm:$0xff]
  %v10423 = vld [vmem:[#allocation2 + $0x178] sm:$0xff]
  %v10424 = vld [vmem:[#allocation2 + $0x180] sm:$0xff]
  %v10425 = vld [vmem:[#allocation2 + $0x188] sm:$0xff]
  %v10426 = vld [vmem:[#allocation2 + $0x190] sm:$0xff]
  %v10427 = vld [vmem:[#allocation2 + $0x198] sm:$0xff]
  %v10428 = vld [vmem:[#allocation2 + $0x1a0] sm:$0xff]
  %v10429 = vld [vmem:[#allocation2 + $0x1a8] sm:$0xff]
  %v10430 = vld [vmem:[#allocation2 + $0x1b0] sm:$0xff]
  %v10431 = vld [vmem:[#allocation2 + $0x1b8] sm:$0xff]
  %v10432 = vld [vmem:[#allocation2 + $0x1c0] sm:$0xff]
  %v10433 = vld [vmem:[#allocation2 + $0x1c8] sm:$0xff]
  %v10434 = vld [vmem:[#allocation2 + $0x1d0] sm:$0xff]
  %v10435 = vld [vmem:[#allocation2 + $0x1d8] sm:$0xff]
  %v10436 = vld [vmem:[#allocation2 + $0x1e0] sm:$0xff]
  %v10437 = vld [vmem:[#allocation2 + $0x1e8] sm:$0xff]
  %v10438 = vld [vmem:[#allocation2 + $0x1f0] sm:$0xff]
  %v10439 = vld [vmem:[#allocation2 + $0x1f8] sm:$0xff]
  %v10440 = vld [vmem:[%s2] sm:$0x1]
  %v10442 = vlaneseq
  %v10443 = vshrl.u32 %v10442, 7
  %v10444 = vsub.s32 0, %v10443
  %v10445 = vrot.slane %v10440, %v10444
  %v10447 = vadd.f32 %v10376, %v10445
  %v10448 = vadd.f32 %v10377, %v10445
  %v10449 = vadd.f32 %v10378, %v10445
  %v10450 = vadd.f32 %v10379, %v10445
  %v10451 = vadd.f32 %v10380, %v10445
  %v10452 = vadd.f32 %v10381, %v10445
  %v10453 = vadd.f32 %v10382, %v10445
  %v10454 = vadd.f32 %v10383, %v10445
  %v10455 = vadd.f32 %v10384, %v10445
  %v10456 = vadd.f32 %v10385, %v10445
  %v10457 = vadd.f32 %v10386, %v10445
  %v10458 = vadd.f32 %v10387, %v10445
  %v10459 = vadd.f32 %v10388, %v10445
  %v10460 = vadd.f32 %v10389, %v10445
  %v10461 = vadd.f32 %v10390, %v10445
  %v10462 = vadd.f32 %v10391, %v10445
  %v10463 = vadd.f32 %v10392, %v10445
  %v10464 = vadd.f32 %v10393, %v10445
  %v10465 = vadd.f32 %v10394, %v10445
  %v10466 = vadd.f32 %v10395, %v10445
  %v10467 = vadd.f32 %v10396, %v10445
  %v10468 = vadd.f32 %v10397, %v10445
  %v10469 = vadd.f32 %v10398, %v10445
  %v10470 = vadd.f32 %v10399, %v10445
  %v10471 = vadd.f32 %v10400, %v10445
  %v10472 = vadd.f32 %v10401, %v10445
  %v10473 = vadd.f32 %v10402, %v10445
  %v10474 = vadd.f32 %v10403, %v10445
  %v10475 = vadd.f32 %v10404, %v10445
  %v10476 = vadd.f32 %v10405, %v10445
  %v10477 = vadd.f32 %v10406, %v10445
  %v10478 = vadd.f32 %v10407, %v10445
  %v10479 = vadd.f32 %v10408, %v10445
  %v10480 = vadd.f32 %v10409, %v10445
  %v10481 = vadd.f32 %v10410, %v10445
  %v10482 = vadd.f32 %v10411, %v10445
  %v10483 = vadd.f32 %v10412, %v10445
  %v10484 = vadd.f32 %v10413, %v10445
  %v10485 = vadd.f32 %v10414, %v10445
  %v10486 = vadd.f32 %v10415, %v10445
  %v10487 = vadd.f32 %v10416, %v10445
  %v10488 = vadd.f32 %v10417, %v10445
  %v10489 = vadd.f32 %v10418, %v10445
  %v10490 = vadd.f32 %v10419, %v10445
  %v10491 = vadd.f32 %v10420, %v10445
  %v10492 = vadd.f32 %v10421, %v10445
  %v10493 = vadd.f32 %v10422, %v10445
  %v10494 = vadd.f32 %v10423, %v10445
  %v10495 = vadd.f32 %v10424, %v10445
  %v10496 = vadd.f32 %v10425, %v10445
  %v10497 = vadd.f32 %v10426, %v10445
  %v10498 = vadd.f32 %v10427, %v10445
  %v10499 = vadd.f32 %v10428, %v10445
  %v10500 = vadd.f32 %v10429, %v10445
  %v10501 = vadd.f32 %v10430, %v10445
  %v10502 = vadd.f32 %v10431, %v10445
  %v10503 = vadd.f32 %v10432, %v10445
  %v10504 = vadd.f32 %v10433, %v10445
  %v10505 = vadd.f32 %v10434, %v10445
  %v10506 = vadd.f32 %v10435, %v10445
  %v10507 = vadd.f32 %v10436, %v10445
  %v10508 = vadd.f32 %v10437, %v10445
  %v10509 = vadd.f32 %v10438, %v10445
  %v10510 = vadd.f32 %v10439, %v10445
  %v10511 = vmax.f32 %v10447, 0.0
  %v10512 = vmax.f32 %v10448, 0.0
  %v10513 = vmax.f32 %v10449, 0.0
  %v10514 = vmax.f32 %v10450, 0.0
  %v10515 = vmax.f32 %v10451, 0.0
  %v10516 = vmax.f32 %v10452, 0.0
  %v10517 = vmax.f32 %v10453, 0.0
  %v10518 = vmax.f32 %v10454, 0.0
  %v10519 = vmax.f32 %v10455, 0.0
  %v10520 = vmax.f32 %v10456, 0.0
  %v10521 = vmax.f32 %v10457, 0.0
  %v10522 = vmax.f32 %v10458, 0.0
  %v10523 = vmax.f32 %v10459, 0.0
  %v10524 = vmax.f32 %v10460, 0.0
  %v10525 = vmax.f32 %v10461, 0.0
  %v10526 = vmax.f32 %v10462, 0.0
  %v10527 = vmax.f32 %v10463, 0.0
  %v10528 = vmax.f32 %v10464, 0.0
  %v10529 = vmax.f32 %v10465, 0.0
  %v10530 = vmax.f32 %v10466, 0.0
  %v10531 = vmax.f32 %v10467, 0.0
  %v10532 = vmax.f32 %v10468, 0.0
  %v10533 = vmax.f32 %v10469, 0.0
  %v10534 = vmax.f32 %v10470, 0.0
  %v10535 = vmax.f32 %v10471, 0.0
  %v10536 = vmax.f32 %v10472, 0.0
  %v10537 = vmax.f32 %v10473, 0.0
  %v10538 = vmax.f32 %v10474, 0.0
  %v10539 = vmax.f32 %v10475, 0.0
  %v10540 = vmax.f32 %v10476, 0.0
  %v10541 = vmax.f32 %v10477, 0.0
  %v10542 = vmax.f32 %v10478, 0.0
  %v10543 = vmax.f32 %v10479, 0.0
  %v10544 = vmax.f32 %v10480, 0.0
  %v10545 = vmax.f32 %v10481, 0.0
  %v10546 = vmax.f32 %v10482, 0.0
  %v10547 = vmax.f32 %v10483, 0.0
  %v10548 = vmax.f32 %v10484, 0.0
  %v10549 = vmax.f32 %v10485, 0.0
  %v10550 = vmax.f32 %v10486, 0.0
  %v10551 = vmax.f32 %v10487, 0.0
  %v10552 = vmax.f32 %v10488, 0.0
  %v10553 = vmax.f32 %v10489, 0.0
  %v10554 = vmax.f32 %v10490, 0.0
  %v10555 = vmax.f32 %v10491, 0.0
  %v10556 = vmax.f32 %v10492, 0.0
  %v10557 = vmax.f32 %v10493, 0.0
  %v10558 = vmax.f32 %v10494, 0.0
  %v10559 = vmax.f32 %v10495, 0.0
  %v10560 = vmax.f32 %v10496, 0.0
  %v10561 = vmax.f32 %v10497, 0.0
  %v10562 = vmax.f32 %v10498, 0.0
  %v10563 = vmax.f32 %v10499, 0.0
  %v10564 = vmax.f32 %v10500, 0.0
  %v10565 = vmax.f32 %v10501, 0.0
  %v10566 = vmax.f32 %v10502, 0.0
  %v10567 = vmax.f32 %v10503, 0.0
  %v10568 = vmax.f32 %v10504, 0.0
  %v10569 = vmax.f32 %v10505, 0.0
  %v10570 = vmax.f32 %v10506, 0.0
  %v10571 = vmax.f32 %v10507, 0.0
  %v10572 = vmax.f32 %v10508, 0.0
  %v10573 = vmax.f32 %v10509, 0.0
  %v10574 = vmax.f32 %v10510, 0.0
  %v10575 = vpack.c.bf16 %v10512, %v10511
  %v10576 = vpack.c.bf16 %v10514, %v10513
  %v10577 = vpack.c.bf16 %v10516, %v10515
  %v10578 = vpack.c.bf16 %v10518, %v10517
  %v10579 = vpack.c.bf16 %v10520, %v10519
  %v10580 = vpack.c.bf16 %v10522, %v10521
  %v10581 = vpack.c.bf16 %v10524, %v10523
  %v10582 = vpack.c.bf16 %v10526, %v10525
  %v10583 = vpack.c.bf16 %v10528, %v10527
  %v10584 = vpack.c.bf16 %v10530, %v10529
  %v10585 = vpack.c.bf16 %v10532, %v10531
  %v10586 = vpack.c.bf16 %v10534, %v10533
  %v10587 = vpack.c.bf16 %v10536, %v10535
  %v10588 = vpack.c.bf16 %v10538, %v10537
  %v10589 = vpack.c.bf16 %v10540, %v10539
  %v10590 = vpack.c.bf16 %v10542, %v10541
  %v10591 = vpack.c.bf16 %v10544, %v10543
  %v10592 = vpack.c.bf16 %v10546, %v10545
  %v10593 = vpack.c.bf16 %v10548, %v10547
  %v10594 = vpack.c.bf16 %v10550, %v10549
  %v10595 = vpack.c.bf16 %v10552, %v10551
  %v10596 = vpack.c.bf16 %v10554, %v10553
  %v10597 = vpack.c.bf16 %v10556, %v10555
  %v10598 = vpack.c.bf16 %v10558, %v10557
  %v10599 = vpack.c.bf16 %v10560, %v10559
  %v10600 = vpack.c.bf16 %v10562, %v10561
  %v10601 = vpack.c.bf16 %v10564, %v10563
  %v10602 = vpack.c.bf16 %v10566, %v10565
  %v10603 = vpack.c.bf16 %v10568, %v10567
  %v10604 = vpack.c.bf16 %v10570, %v10569
  %v10605 = vpack.c.bf16 %v10572, %v10571
  %v10606 = vpack.c.bf16 %v10574, %v10573
  %v10639 = vunpack.c.l.b16 %v10575
  %v10640 = vunpack.c.h.b16 %v10575
  %v10641 = vunpack.c.l.b16 %v10576
  %v10642 = vunpack.c.h.b16 %v10576
  %v10643 = vunpack.c.l.b16 %v10577
  %v10644 = vunpack.c.h.b16 %v10577
  %v10645 = vunpack.c.l.b16 %v10578
  %v10646 = vunpack.c.h.b16 %v10578
  %v10647 = vunpack.c.l.b16 %v10579
  %v10648 = vunpack.c.h.b16 %v10579
  %v10649 = vunpack.c.l.b16 %v10580
  %v10650 = vunpack.c.h.b16 %v10580
  %v10651 = vunpack.c.l.b16 %v10581
  %v10652 = vunpack.c.h.b16 %v10581
  %v10653 = vunpack.c.l.b16 %v10582
  %v10654 = vunpack.c.h.b16 %v10582
  %v10655 = vunpack.c.l.b16 %v10583
  %v10656 = vunpack.c.h.b16 %v10583
  %v10657 = vunpack.c.l.b16 %v10584
  %v10658 = vunpack.c.h.b16 %v10584
  %v10659 = vunpack.c.l.b16 %v10585
  %v10660 = vunpack.c.h.b16 %v10585
  %v10661 = vunpack.c.l.b16 %v10586
  %v10662 = vunpack.c.h.b16 %v10586
  %v10663 = vunpack.c.l.b16 %v10587
  %v10664 = vunpack.c.h.b16 %v10587
  %v10665 = vunpack.c.l.b16 %v10588
  %v10666 = vunpack.c.h.b16 %v10588
  %v10667 = vunpack.c.l.b16 %v10589
  %v10668 = vunpack.c.h.b16 %v10589
  %v10669 = vunpack.c.l.b16 %v10590
  %v10670 = vunpack.c.h.b16 %v10590
  %v10671 = vunpack.c.l.b16 %v10591
  %v10672 = vunpack.c.h.b16 %v10591
  %v10673 = vunpack.c.l.b16 %v10592
  %v10674 = vunpack.c.h.b16 %v10592
  %v10675 = vunpack.c.l.b16 %v10593
  %v10676 = vunpack.c.h.b16 %v10593
  %v10677 = vunpack.c.l.b16 %v10594
  %v10678 = vunpack.c.h.b16 %v10594
  %v10679 = vunpack.c.l.b16 %v10595
  %v10680 = vunpack.c.h.b16 %v10595
  %v10681 = vunpack.c.l.b16 %v10596
  %v10682 = vunpack.c.h.b16 %v10596
  %v10683 = vunpack.c.l.b16 %v10597
  %v10684 = vunpack.c.h.b16 %v10597
  %v10685 = vunpack.c.l.b16 %v10598
  %v10686 = vunpack.c.h.b16 %v10598
  %v10687 = vunpack.c.l.b16 %v10599
  %v10688 = vunpack.c.h.b16 %v10599
  %v10689 = vunpack.c.l.b16 %v10600
  %v10690 = vunpack.c.h.b16 %v10600
  %v10691 = vunpack.c.l.b16 %v10601
  %v10692 = vunpack.c.h.b16 %v10601
  %v10693 = vunpack.c.l.b16 %v10602
  %v10694 = vunpack.c.h.b16 %v10602
  %v10695 = vunpack.c.l.b16 %v10603
  %v10696 = vunpack.c.h.b16 %v10603
  %v10697 = vunpack.c.l.b16 %v10604
  %v10698 = vunpack.c.h.b16 %v10604
  %v10699 = vunpack.c.l.b16 %v10605
  %v10700 = vunpack.c.h.b16 %v10605
  %v10701 = vunpack.c.l.b16 %v10606
  %v10702 = vunpack.c.h.b16 %v10606
  %v10703 = vpack.c.b16 %v10639, %v10639
  %v10704 = vpack.c.b16 %v10640, %v10640
  %v10705 = vpack.c.b16 %v10641, %v10641
  %v10706 = vpack.c.b16 %v10642, %v10642
  %v10707 = vpack.c.b16 %v10643, %v10643
  %v10708 = vpack.c.b16 %v10644, %v10644
  %v10709 = vpack.c.b16 %v10645, %v10645
  %v10710 = vpack.c.b16 %v10646, %v10646
  %v10711 = vpack.c.b16 %v10647, %v10647
  %v10712 = vpack.c.b16 %v10648, %v10648
  %v10713 = vpack.c.b16 %v10649, %v10649
  %v10714 = vpack.c.b16 %v10650, %v10650
  %v10715 = vpack.c.b16 %v10651, %v10651
  %v10716 = vpack.c.b16 %v10652, %v10652
  %v10717 = vpack.c.b16 %v10653, %v10653
  %v10718 = vpack.c.b16 %v10654, %v10654
  %v10719 = vpack.c.b16 %v10655, %v10655
  %v10720 = vpack.c.b16 %v10656, %v10656
  %v10721 = vpack.c.b16 %v10657, %v10657
  %v10722 = vpack.c.b16 %v10658, %v10658
  %v10723 = vpack.c.b16 %v10659, %v10659
  %v10724 = vpack.c.b16 %v10660, %v10660
  %v10725 = vpack.c.b16 %v10661, %v10661
  %v10726 = vpack.c.b16 %v10662, %v10662
  %v10727 = vpack.c.b16 %v10663, %v10663
  %v10728 = vpack.c.b16 %v10664, %v10664
  %v10729 = vpack.c.b16 %v10665, %v10665
  %v10730 = vpack.c.b16 %v10666, %v10666
  %v10731 = vpack.c.b16 %v10667, %v10667
  %v10732 = vpack.c.b16 %v10668, %v10668
  %v10733 = vpack.c.b16 %v10669, %v10669
  %v10734 = vpack.c.b16 %v10670, %v10670
  %v10735 = vpack.c.b16 %v10671, %v10671
  %v10736 = vpack.c.b16 %v10672, %v10672
  %v10737 = vpack.c.b16 %v10673, %v10673
  %v10738 = vpack.c.b16 %v10674, %v10674
  %v10739 = vpack.c.b16 %v10675, %v10675
  %v10740 = vpack.c.b16 %v10676, %v10676
  %v10741 = vpack.c.b16 %v10677, %v10677
  %v10742 = vpack.c.b16 %v10678, %v10678
  %v10743 = vpack.c.b16 %v10679, %v10679
  %v10744 = vpack.c.b16 %v10680, %v10680
  %v10745 = vpack.c.b16 %v10681, %v10681
  %v10746 = vpack.c.b16 %v10682, %v10682
  %v10747 = vpack.c.b16 %v10683, %v10683
  %v10748 = vpack.c.b16 %v10684, %v10684
  %v10749 = vpack.c.b16 %v10685, %v10685
  %v10750 = vpack.c.b16 %v10686, %v10686
  %v10751 = vpack.c.b16 %v10687, %v10687
  %v10752 = vpack.c.b16 %v10688, %v10688
  %v10753 = vpack.c.b16 %v10689, %v10689
  %v10754 = vpack.c.b16 %v10690, %v10690
  %v10755 = vpack.c.b16 %v10691, %v10691
  %v10756 = vpack.c.b16 %v10692, %v10692
  %v10757 = vpack.c.b16 %v10693, %v10693
  %v10758 = vpack.c.b16 %v10694, %v10694
  %v10759 = vpack.c.b16 %v10695, %v10695
  %v10760 = vpack.c.b16 %v10696, %v10696
  %v10761 = vpack.c.b16 %v10697, %v10697
  %v10762 = vpack.c.b16 %v10698, %v10698
  %v10763 = vpack.c.b16 %v10699, %v10699
  %v10764 = vpack.c.b16 %v10700, %v10700
  %v10765 = vpack.c.b16 %v10701, %v10701
  %v10766 = vpack.c.b16 %v10702, %v10702
  %10831 = vst [vmem:[%s3] sm:$0xf] %v10703
  %10832 = vst [vmem:[%s3 + $0x4] sm:$0xf] %v10704
  %10833 = vst [vmem:[%s3 + $0x8] sm:$0xf] %v10705
  %10834 = vst [vmem:[%s3 + $0xc] sm:$0xf] %v10706
  %10835 = vst [vmem:[%s3 + $0x10] sm:$0xf] %v10707
  %10836 = vst [vmem:[%s3 + $0x14] sm:$0xf] %v10708
  %10837 = vst [vmem:[%s3 + $0x18] sm:$0xf] %v10709
  %10838 = vst [vmem:[%s3 + $0x1c] sm:$0xf] %v10710
  %10839 = vst [vmem:[%s3 + $0x20] sm:$0xf] %v10711
  %10840 = vst [vmem:[%s3 + $0x24] sm:$0xf] %v10712
  %10841 = vst [vmem:[%s3 + $0x28] sm:$0xf] %v10713
  %10842 = vst [vmem:[%s3 + $0x2c] sm:$0xf] %v10714
  %10843 = vst [vmem:[%s3 + $0x30] sm:$0xf] %v10715
  %10844 = vst [vmem:[%s3 + $0x34] sm:$0xf] %v10716
  %10845 = vst [vmem:[%s3 + $0x38] sm:$0xf] %v10717
  %10846 = vst [vmem:[%s3 + $0x3c] sm:$0xf] %v10718
  %10847 = vst [vmem:[%s3 + $0x40] sm:$0xf] %v10719
  %10848 = vst [vmem:[%s3 + $0x44] sm:$0xf] %v10720
  %10849 = vst [vmem:[%s3 + $0x48] sm:$0xf] %v10721
  %10850 = vst [vmem:[%s3 + $0x4c] sm:$0xf] %v10722
  %10851 = vst [vmem:[%s3 + $0x50] sm:$0xf] %v10723
  %10852 = vst [vmem:[%s3 + $0x54] sm:$0xf] %v10724
  %10853 = vst [vmem:[%s3 + $0x58] sm:$0xf] %v10725
  %10854 = vst [vmem:[%s3 + $0x5c] sm:$0xf] %v10726
  %10855 = vst [vmem:[%s3 + $0x60] sm:$0xf] %v10727
  %10856 = vst [vmem:[%s3 + $0x64] sm:$0xf] %v10728
  %10857 = vst [vmem:[%s3 + $0x68] sm:$0xf] %v10729
  %10858 = vst [vmem:[%s3 + $0x6c] sm:$0xf] %v10730
  %10859 = vst [vmem:[%s3 + $0x70] sm:$0xf] %v10731
  %10860 = vst [vmem:[%s3 + $0x74] sm:$0xf] %v10732
  %10861 = vst [vmem:[%s3 + $0x78] sm:$0xf] %v10733
  %10862 = vst [vmem:[%s3 + $0x7c] sm:$0xf] %v10734
  %10863 = vst [vmem:[%s3 + $0x80] sm:$0xf] %v10735
  %10864 = vst [vmem:[%s3 + $0x84] sm:$0xf] %v10736
  %10865 = vst [vmem:[%s3 + $0x88] sm:$0xf] %v10737
  %10866 = vst [vmem:[%s3 + $0x8c] sm:$0xf] %v10738
  %10867 = vst [vmem:[%s3 + $0x90] sm:$0xf] %v10739
  %10868 = vst [vmem:[%s3 + $0x94] sm:$0xf] %v10740
  %10869 = vst [vmem:[%s3 + $0x98] sm:$0xf] %v10741
  %10870 = vst [vmem:[%s3 + $0x9c] sm:$0xf] %v10742
  %10871 = vst [vmem:[%s3 + $0xa0] sm:$0xf] %v10743
  %10872 = vst [vmem:[%s3 + $0xa4] sm:$0xf] %v10744
  %10873 = vst [vmem:[%s3 + $0xa8] sm:$0xf] %v10745
  %10874 = vst [vmem:[%s3 + $0xac] sm:$0xf] %v10746
  %10875 = vst [vmem:[%s3 + $0xb0] sm:$0xf] %v10747
  %10876 = vst [vmem:[%s3 + $0xb4] sm:$0xf] %v10748
  %10877 = vst [vmem:[%s3 + $0xb8] sm:$0xf] %v10749
  %10878 = vst [vmem:[%s3 + $0xbc] sm:$0xf] %v10750
  %10879 = vst [vmem:[%s3 + $0xc0] sm:$0xf] %v10751
  %10880 = vst [vmem:[%s3 + $0xc4] sm:$0xf] %v10752
  %10881 = vst [vmem:[%s3 + $0xc8] sm:$0xf] %v10753
  %10882 = vst [vmem:[%s3 + $0xcc] sm:$0xf] %v10754
  %10883 = vst [vmem:[%s3 + $0xd0] sm:$0xf] %v10755
  %10884 = vst [vmem:[%s3 + $0xd4] sm:$0xf] %v10756
  %10885 = vst [vmem:[%s3 + $0xd8] sm:$0xf] %v10757
  %10886 = vst [vmem:[%s3 + $0xdc] sm:$0xf] %v10758
  %10887 = vst [vmem:[%s3 + $0xe0] sm:$0xf] %v10759
  %10888 = vst [vmem:[%s3 + $0xe4] sm:$0xf] %v10760
  %10889 = vst [vmem:[%s3 + $0xe8] sm:$0xf] %v10761
  %10890 = vst [vmem:[%s3 + $0xec] sm:$0xf] %v10762
  %10891 = vst [vmem:[%s3 + $0xf0] sm:$0xf] %v10763
  %10892 = vst [vmem:[%s3 + $0xf4] sm:$0xf] %v10764
  %10893 = vst [vmem:[%s3 + $0xf8] sm:$0xf] %v10765
  %10894 = vst [vmem:[%s3 + $0xfc] sm:$0xf] %v10766
  // Predicated region
  $region14: #{residual_block_forward.4} parent=0 // pred_check
    _
  $region15: #{residual_block_forward.4} parent=0 // pred_check_branch
    %10896 = sbr.rel (0) target = $region17
  $region16: #{residual_block_forward.4} parent=0 // pred_region
    _
  $region17: #{residual_block_forward.4} parent=0 // pred_fallthru
    _
  // Predicated region
  $region18: #{residual_block_forward.4} parent=0 // pred_check
    _
  $region19: #{residual_block_forward.4} parent=0 // pred_check_branch
    %10898 = sbr.rel (0) target = $region21
  $region20: #{residual_block_forward.4} parent=0 // pred_region
    _
  $region21: #{residual_block_forward.4} parent=0 // pred_fallthru
    _

</llo_original>
